<compile_context>
chip_gen: v7x
topology: tpu7x:2x2x1
jax: 0.10.0
libtpu: 0.0.40
codegen_flags: <defaults>
</compile_context>

<pallas_src>
import jax
import jax.numpy as jnp
from jax import lax
from jax.experimental import pallas as pl
from jax.experimental.pallas import tpu as pltpu

EPS = 1e-5
LANE = 128

# Tap order for the conv1 K-concatenation: center tap FIRST so the skip branch can read
# it as cols[:, :Cin] (lane offset 0).
_TAPS = [(1, 1)] + [(kh, kw) for kh in range(3) for kw in range(3) if (kh, kw) != (1, 1)]


# ---------------------------------------------------------------------------
# Fused Pallas kernel (built per static config)
# ---------------------------------------------------------------------------
def _make_resblock_kernel(Wr, Cin, Cpad, MB, has_proj):
    """MB = rows per grid step (NB images x R rows); Wr = flat spatial row width."""

    def kernel(*refs):
        if has_proj:
            (cols_ref, mask_ref, w1_ref, b1_ref, w2_ref, b2_ref, ws_ref,
             o_ref, g_ref) = refs
        else:
            cols_ref, mask_ref, w1_ref, b1_ref, w2_ref, b2_ref, o_ref, g_ref = refs

        # ---- conv1: single (MB, 9*Cin) x (9*Cin, Cpad) matmul + folded BN1 + ReLU ----
        cols = cols_ref[...]                                     # bf16
        h1 = jnp.dot(cols, w1_ref[...], preferred_element_type=jnp.float32)
        h1 = jnp.maximum(h1 + b1_ref[...], 0.0) * mask_ref[...]  # zero garbage rows/cols

        # ---- h1 -> flat padded bf16 scratch (border-only zeroing) -----------------
        # Only the top (Wr+1) rows need an explicit zero; all other border rows/columns
        # are written as masked zeros by the contiguous store below (the masked garbage
        # columns wrap around onto exactly the border positions).  Runs EVERY step.
        g_ref[0:Wr + 1, :] = jnp.zeros((Wr + 1, Cpad), jnp.bfloat16)
        g_ref[Wr + 1:Wr + 1 + MB, :] = h1.astype(jnp.bfloat16)

        # ---- conv2 (3x3, stride 1, pad 1) + folded BN2 (+ folded skip shift) ------
        # Each tap is a contiguous sublane-offset slice of the flat scratch (no 2D
        # slice+reshape relayouts, no per-tap casts).  Accumulator starts from the
        # folded BN shift instead of zeros.
        acc = jnp.broadcast_to(b2_ref[...], (MB, Cpad))
        for kh in range(3):
            for kw in range(3):
                off = kh * Wr + kw
                tap = g_ref[off:off + MB, :]                     # bf16
                acc = acc + jnp.dot(tap, w2_ref[kh * 3 + kw],
                                    preferred_element_type=jnp.float32)

        # ---- skip + residual add + final ReLU (lane-dense bf16 store) -------------
        xs = cols[:, :Cin]                                       # center tap = skip input
        if has_proj:
            skip = jnp.dot(xs, ws_ref[...], preferred_element_type=jnp.float32)
            o_ref[...] = jnp.maximum(acc + skip, 0.0).astype(o_ref.dtype)
        else:
            # identity skip: plain VPU add (no eye-matrix matmul).  Only the first
            # Cin (== Cout) lanes carry real channels; fix them with a second narrow
            # masked store; pad lanes keep the (discarded) skip-free value.
            o_ref[...] = jnp.maximum(acc, 0.0).astype(o_ref.dtype)
            o_ref[:, :Cin] = jnp.maximum(
                acc[:, :Cin] + xs.astype(jnp.float32), 0.0).astype(o_ref.dtype)

    return kernel


# ---------------------------------------------------------------------------
# Glue: BN folding, flat-layout im2col, single pallas_call
# ---------------------------------------------------------------------------
def fold_bn(bn):
    gamma, beta, mean, var = bn
    scale = gamma / jnp.sqrt(var + EPS)
    shift = beta - mean * scale
    return scale.reshape(1, -1), shift.reshape(1, -1)


def resblock_pallas(x_nchw, params, stride):
    s = int(stride)
    x = jnp.transpose(x_nchw, (0, 2, 3, 1)).astype(jnp.float32)      # NCHW -> NHWC
    N, H, W, Cin = x.shape
    Cout = params["w1"].shape[-1]
    has_proj = params.get("w_skip") is not None
    if not has_proj:
        assert s == 1 and Cin == Cout, "identity skip needs stride==1 and Cin==Cout"

    Ho = (H + 2 - 3) // s + 1
    Wo = (W + 2 - 3) // s + 1
    Cpad = max(LANE, ((Cout + LANE - 1) // LANE) * LANE)             # lane-dense channels

    # flat spatial layout: row index = ho*Wr + wo, Wr = Wo+2 (room for conv2's halo),
    # R rows per image padded to a multiple of 8 (sublane-aligned blocks).
    Wr = Wo + 2
    R = ((Ho + 2) * Wr + 7) // 8 * 8

    # Collapse batch into the matmul M dimension, keeping the f32 accumulator at a few
    # hundred rows per step.
    NB = 1
    for d in range(1, N + 1):
        if N % d == 0 and d * R <= 512:
            NB = d
    MB = NB * R
    grid = (N // NB,)
    # TODO(synk): for ResNet-scale spatial sizes (R >> 512) additionally tile rows of a
    # single image over the grid (halo-aware) instead of whole images per step.

    # ---- wrapper-side conv1 im2col in the flat layout (K = 9*Cin, center tap first) --
    xpad = jnp.pad(x, ((0, 0), (1, 1), (1, 1), (0, 0)))
    taps = []
    for kh, kw in _TAPS:
        t = lax.slice(xpad, (0, kh, kw, 0),
                      (N, kh + s * (Ho - 1) + 1, kw + s * (Wo - 1) + 1, Cin),
                      (1, s, s, 1))                                  # (N, Ho, Wo, Cin)
        t = jnp.pad(t, ((0, 0), (0, 0), (0, Wr - Wo), (0, 0)))       # width -> Wr
        t = t.reshape(N, Ho * Wr, Cin)
        t = jnp.pad(t, ((0, 0), (0, R - Ho * Wr), (0, 0)))           # rows  -> R
        taps.append(t)
    K1 = 9 * Cin
    cols = jnp.concatenate(taps, axis=-1).reshape(N * R, K1).astype(jnp.bfloat16)

    # valid-row mask: 1 at real output positions, 0 at pad columns/rows.
    r_idx = jnp.arange(R)
    row_ok = ((r_idx // Wr) < Ho) & ((r_idx % Wr) < Wo)
    mask = jnp.tile(row_ok.astype(jnp.float32), (N,)).reshape(N * R, 1)

    # ---- fold BN into conv weights (bf16) and per-channel shifts (f32) ----
    cpd = Cpad - Cout
    sc1, sh1 = fold_bn(params["bn1"])
    sc2, sh2 = fold_bn(params["bn2"])
    w1 = jnp.concatenate([params["w1"][kh, kw] for kh, kw in _TAPS], axis=0) * sc1
    w1 = jnp.pad(w1, ((0, 0), (0, cpd))).astype(jnp.bfloat16)        # (9*Cin, Cpad)
    w2 = jnp.pad(params["w2"].reshape(9, Cout, Cout) * sc2,
                 ((0, 0), (0, cpd), (0, cpd))).astype(jnp.bfloat16)  # (9, Cpad, Cpad)
    b1 = jnp.pad(sh1, ((0, 0), (0, cpd)))                            # (1, Cpad) f32
    b2 = sh2
    ws = None
    if has_proj:
        scs, shs = fold_bn(params["bn_skip"])
        ws = jnp.pad(params["w_skip"].reshape(Cin, Cout) * scs,
                     ((0, 0), (0, cpd))).astype(jnp.bfloat16)        # (Cin, Cpad)
        b2 = b2 + shs                                                # fold skip shift
    b2 = jnp.pad(b2, ((0, 0), (0, cpd)))                             # (1, Cpad) f32

    kernel = _make_resblock_kernel(Wr, Cin, Cpad, MB, has_proj)

    def run(const_pipe):
        def const_spec(shape):
            return pl.BlockSpec(shape, lambda i: (0,) * len(shape), **const_pipe)

        in_specs = [
            pl.BlockSpec((MB, K1), lambda i: (i, 0)),    # conv1 im2col (bf16)
            pl.BlockSpec((MB, 1), lambda i: (i, 0)),     # valid-row mask
            const_spec((K1, Cpad)),                      # w1  (BN1 folded, bf16)
            const_spec((1, Cpad)),                       # shift1
            const_spec((9, Cpad, Cpad)),                 # w2  (BN2 folded, bf16)
            const_spec((1, Cpad)),                       # shift2 (+ skip shift)
        ]
        args = [cols, mask, w1, b1, w2, b2]
        if has_proj:
            in_specs.append(const_spec((Cin, Cpad)))     # skip 1x1 weight (bf16)
            args.append(ws)

        return pl.pallas_call(
            kernel,
            out_shape=jax.ShapeDtypeStruct((N * R, Cpad), jnp.bfloat16),
            grid=grid,
            in_specs=in_specs,
            out_specs=pl.BlockSpec((MB, Cpad), lambda i: (i, 0)),
            scratch_shapes=[pltpu.VMEM((MB + 2 * Wr + 8, Cpad), jnp.bfloat16)],
            compiler_params=pltpu.CompilerParams(
                dimension_semantics=("parallel",),
                # tiny footprint at these shapes; re-derive when scaling (64 MiB on v7x)
                vmem_limit_bytes=32 * 1024 * 1024,
            ),
        )(*args)

    # Single-buffer the constant operands (constant index_map => double-buffering them is
    # pure VMEM waste).  Fall back silently if this pipeline mode is unsupported.
    if hasattr(pl, "Buffered"):
        try:
            out = run(dict(pipeline_mode=pl.Buffered(1)))
        except Exception:
            out = run({})
    else:
        out = run({})

    out = out.reshape(N, R, Cpad)[:, :Ho * Wr, :Cout]
    out = out.reshape(N, Ho, Wr, Cout)[:, :, :Wo, :]
    return jnp.transpose(out, (0, 3, 1, 2)).astype(jnp.float32)      # NHWC -> NCHW


# ---------------------------------------------------------------------------
# Pure-JAX reference (mirrors the PyTorch forward, eval-mode BN)
# ---------------------------------------------------------------------------
def resblock_ref(x_nchw, params, stride):
    x = jnp.transpose(x_nchw, (0, 2, 3, 1)).astype(jnp.float32)

    def conv(inp, w, s, pad):
        return lax.conv_general_dilated(
            inp, w, (s, s), pad,
            dimension_numbers=("NHWC", "HWIO", "NHWC"),
            precision=lax.Precision.HIGHEST)

    def bn(inp, bnp):
        gamma, beta, mean, var = bnp
        return (inp - mean) / jnp.sqrt(var + EPS) * gamma + beta

    out = jax.nn.relu(bn(conv(x, params["w1"], stride, ((1, 1), (1, 1))), params["bn1"]))
    out = bn(conv(out, params["w2"], 1, ((1, 1), (1, 1))), params["bn2"])
    if params.get("w_skip") is not None:
        identity = bn(conv(x, params["w_skip"], stride, ((0, 0), (0, 0))), params["bn_skip"])
    else:
        identity = x
    out = jax.nn.relu(out + identity)
    return jnp.transpose(out, (0, 3, 1, 2))


# ---------------------------------------------------------------------------
# Deterministic parameter construction
# ---------------------------------------------------------------------------
def make_bn(c, off):
    gamma = 0.9 + 0.05 * (jnp.arange(c, dtype=jnp.float32) + off)
    beta = -0.02 + 0.01 * jnp.arange(c, dtype=jnp.float32)
    mean = 0.03 * jnp.arange(c, dtype=jnp.float32)
    var = 1.0 + 0.1 * jnp.arange(c, dtype=jnp.float32)
    return (gamma, beta, mean, var)


def make_params(key, cin, cout, stride):
    k1, k2, k3 = jax.random.split(key, 3)
    params = {
        "w1": 0.1 * jax.random.normal(k1, (3, 3, cin, cout), jnp.float32),   # HWIO
        "bn1": make_bn(cout, 0.0),
        "w2": 0.1 * jax.random.normal(k2, (3, 3, cout, cout), jnp.float32),
        "bn2": make_bn(cout, 1.0),
        "w_skip": None,
    }
    if stride != 1 or cin != cout:
        params["w_skip"] = 0.1 * jax.random.normal(k3, (1, 1, cin, cout), jnp.float32)
        params["bn_skip"] = make_bn(cout, 2.0)
    return params


if __name__ == "__main__":
    key = jax.random.PRNGKey(0)
    kx1, kx2, kp1, kp2 = jax.random.split(key, 4)

    # bf16 inputs/weights/skip/output with f32 accumulation -> bf16-level tolerance
    ATOL, RTOL = 3e-2, 3e-2

    # Case 1: projection skip (in=4 -> out=8, stride=2), x: (2, 4, 16, 16) NCHW
    x1 = jax.random.normal(kx1, (2, 4, 16, 16), jnp.float32)
    p1 = make_params(kp1, 4, 8, stride=2)
    out1 = jax.block_until_ready(resblock_pallas(x1, p1, stride=2))
    ref1 = resblock_ref(x1, p1, stride=2)
    assert out1.shape == (2, 8, 8, 8)
    assert jnp.allclose(out1, ref1, atol=ATOL, rtol=RTOL), \
        float(jnp.max(jnp.abs(out1 - ref1)))

    # Case 2: identity skip (in=out=8, stride=1), x: (2, 8, 16, 16) NCHW
    x2 = jax.random.normal(kx2, (2, 8, 16, 16), jnp.float32)
    p2 = make_params(kp2, 8, 8, stride=1)
    out2 = jax.block_until_ready(resblock_pallas(x2, p2, stride=1))
    ref2 = resblock_ref(x2, p2, stride=1)
    assert out2.shape == (2, 8, 16, 16)
    assert jnp.allclose(out2, ref2, atol=ATOL, rtol=RTOL), \
        float(jnp.max(jnp.abs(out2 - ref2)))

    print("KERNEL_OK")
</pallas_src>

<mosaic_0001>
module attributes {stable_mosaic.version = 11 : i64} {
  func.func @kernel(%arg0: i32, %arg1: memref<208x36xbf16, #tpu.memory_space<vmem>>, %arg2: memref<208x1xf32, #tpu.memory_space<vmem>>, %arg3: memref<36x128xbf16, #tpu.memory_space<vmem>>, %arg4: memref<1x128xf32, #tpu.memory_space<vmem>>, %arg5: memref<9x128x128xbf16, #tpu.memory_space<vmem>>, %arg6: memref<1x128xf32, #tpu.memory_space<vmem>>, %arg7: memref<4x128xbf16, #tpu.memory_space<vmem>>, %arg8: memref<208x128xbf16, #tpu.memory_space<vmem>>, %arg9: memref<236x128xbf16, #tpu.memory_space<vmem>>) attributes {dimension_semantics = [#tpu.dimension_semantics<parallel>], iteration_bounds = array<i64: 1>, scalar_prefetch = 0 : i64, scratch_operands = 1 : i64, tpu.core_type = #tpu.core_type<tc>, window_params = [{transform_indices = @transform_0, window_bounds = array<i64: 208, 36>}, {transform_indices = @transform_1, window_bounds = array<i64: 208, 1>}, {pipeline_mode = #tpu.pipeline_mode<synchronous>, transform_indices = @transform_2, window_bounds = array<i64: 36, 128>}, {pipeline_mode = #tpu.pipeline_mode<synchronous>, transform_indices = @transform_3, window_bounds = array<i64: 1, 128>}, {pipeline_mode = #tpu.pipeline_mode<synchronous>, transform_indices = @transform_4, window_bounds = array<i64: 9, 128, 128>}, {pipeline_mode = #tpu.pipeline_mode<synchronous>, transform_indices = @transform_5, window_bounds = array<i64: 1, 128>}, {pipeline_mode = #tpu.pipeline_mode<synchronous>, transform_indices = @transform_6, window_bounds = array<i64: 4, 128>}, {transform_indices = @transform_7, window_bounds = array<i64: 208, 128>}]} {
    %c0 = arith.constant 0 : index
    %c0_0 = arith.constant 0 : index
    %0 = vector.load %arg1[%c0, %c0_0] : memref<208x36xbf16, #tpu.memory_space<vmem>>, vector<208x36xbf16>
    %c0_1 = arith.constant 0 : index
    %c0_2 = arith.constant 0 : index
    %1 = vector.load %arg3[%c0_1, %c0_2] : memref<36x128xbf16, #tpu.memory_space<vmem>>, vector<36x128xbf16>
    %cst = arith.constant dense<0.000000e+00> : vector<208x128xf32>
    %2 = tpu.matmul %0, %1, %cst {dimension_numbers = #tpu.dot_dimension_numbers<[1], [0], [0], [1], [0, 0, 1, 1], [], []>} : vector<208x36xbf16>, vector<36x128xbf16>, vector<208x128xf32> -> vector<208x128xf32>
    %c0_3 = arith.constant 0 : index
    %c0_4 = arith.constant 0 : index
    %3 = vector.load %arg4[%c0_3, %c0_4] : memref<1x128xf32, #tpu.memory_space<vmem>>, vector<1x128xf32>
    %4 = vector.broadcast %3 : vector<1x128xf32> to vector<208x128xf32>
    %5 = arith.addf %2, %4 : vector<208x128xf32>
    %cst_5 = arith.constant 0.000000e+00 : f32
    %6 = vector.broadcast %cst_5 : f32 to vector<208x128xf32>
    %7 = arith.maximumf %5, %6 : vector<208x128xf32>
    %c0_6 = arith.constant 0 : index
    %c0_7 = arith.constant 0 : index
    %8 = vector.load %arg2[%c0_6, %c0_7] : memref<208x1xf32, #tpu.memory_space<vmem>>, vector<208x1xf32>
    %9 = vector.broadcast %8 : vector<208x1xf32> to vector<208x128xf32>
    %10 = arith.mulf %7, %9 : vector<208x128xf32>
    %cst_8 = arith.constant 0.000000e+00 : bf16
    %11 = vector.broadcast %cst_8 : bf16 to vector<11x128xbf16>
    %c0_9 = arith.constant 0 : index
    %c0_10 = arith.constant 0 : index
    %12 = vector.load %arg9[%c0_9, %c0_10] : memref<236x128xbf16, #tpu.memory_space<vmem>>, vector<11x128xbf16>
    tpu.vector_store %arg9[%c0_9, %c0_10], %11 {strides = array<i32>} : memref<236x128xbf16, #tpu.memory_space<vmem>>, vector<11x128xbf16>,
    %13 = arith.truncf %10 : vector<208x128xf32> to vector<208x128xbf16>
    %c11 = arith.constant 11 : index
    %c0_11 = arith.constant 0 : index
    %14 = vector.load %arg9[%c11, %c0_11] : memref<236x128xbf16, #tpu.memory_space<vmem>>, vector<208x128xbf16>
    tpu.vector_store %arg9[%c11, %c0_11], %13 {strides = array<i32>} : memref<236x128xbf16, #tpu.memory_space<vmem>>, vector<208x128xbf16>,
    %c0_12 = arith.constant 0 : index
    %c0_13 = arith.constant 0 : index
    %15 = vector.load %arg6[%c0_12, %c0_13] : memref<1x128xf32, #tpu.memory_space<vmem>>, vector<1x128xf32>
    %16 = vector.shape_cast %15 : vector<1x128xf32> to vector<1x128xf32>
    %17 = vector.broadcast %16 : vector<1x128xf32> to vector<208x128xf32>
    %c0_14 = arith.constant 0 : index
    %c0_15 = arith.constant 0 : index
    %18 = vector.load %arg9[%c0_14, %c0_15] : memref<236x128xbf16, #tpu.memory_space<vmem>>, vector<208x128xbf16>
    %c0_16 = arith.constant 0 : index
    %c0_17 = arith.constant 0 : index
    %c0_18 = arith.constant 0 : index
    %19 = vector.load %arg5[%c0_16, %c0_17, %c0_18] : memref<9x128x128xbf16, #tpu.memory_space<vmem>>, vector<1x128x128xbf16>
    %20 = vector.shape_cast %19 : vector<1x128x128xbf16> to vector<128x128xbf16>
    %cst_19 = arith.constant dense<0.000000e+00> : vector<208x128xf32>
    %21 = tpu.matmul %18, %20, %cst_19 {dimension_numbers = #tpu.dot_dimension_numbers<[1], [0], [0], [1], [0, 0, 1, 1], [], []>} : vector<208x128xbf16>, vector<128x128xbf16>, vector<208x128xf32> -> vector<208x128xf32>
    %22 = arith.addf %17, %21 : vector<208x128xf32>
    %c1 = arith.constant 1 : index
    %c0_20 = arith.constant 0 : index
    %23 = vector.load %arg9[%c1, %c0_20] : memref<236x128xbf16, #tpu.memory_space<vmem>>, vector<208x128xbf16>
    %c1_21 = arith.constant 1 : index
    %c0_22 = arith.constant 0 : index
    %c0_23 = arith.constant 0 : index
    %24 = vector.load %arg5[%c1_21, %c0_22, %c0_23] : memref<9x128x128xbf16, #tpu.memory_space<vmem>>, vector<1x128x128xbf16>
    %25 = vector.shape_cast %24 : vector<1x128x128xbf16> to vector<128x128xbf16>
    %cst_24 = arith.constant dense<0.000000e+00> : vector<208x128xf32>
    %26 = tpu.matmul %23, %25, %cst_24 {dimension_numbers = #tpu.dot_dimension_numbers<[1], [0], [0], [1], [0, 0, 1, 1], [], []>} : vector<208x128xbf16>, vector<128x128xbf16>, vector<208x128xf32> -> vector<208x128xf32>
    %27 = arith.addf %22, %26 : vector<208x128xf32>
    %c2 = arith.constant 2 : index
    %c0_25 = arith.constant 0 : index
    %28 = vector.load %arg9[%c2, %c0_25] : memref<236x128xbf16, #tpu.memory_space<vmem>>, vector<208x128xbf16>
    %c2_26 = arith.constant 2 : index
    %c0_27 = arith.constant 0 : index
    %c0_28 = arith.constant 0 : index
    %29 = vector.load %arg5[%c2_26, %c0_27, %c0_28] : memref<9x128x128xbf16, #tpu.memory_space<vmem>>, vector<1x128x128xbf16>
    %30 = vector.shape_cast %29 : vector<1x128x128xbf16> to vector<128x128xbf16>
    %cst_29 = arith.constant dense<0.000000e+00> : vector<208x128xf32>
    %31 = tpu.matmul %28, %30, %cst_29 {dimension_numbers = #tpu.dot_dimension_numbers<[1], [0], [0], [1], [0, 0, 1, 1], [], []>} : vector<208x128xbf16>, vector<128x128xbf16>, vector<208x128xf32> -> vector<208x128xf32>
    %32 = arith.addf %27, %31 : vector<208x128xf32>
    %c10 = arith.constant 10 : index
    %c0_30 = arith.constant 0 : index
    %33 = vector.load %arg9[%c10, %c0_30] : memref<236x128xbf16, #tpu.memory_space<vmem>>, vector<208x128xbf16>
    %c3 = arith.constant 3 : index
    %c0_31 = arith.constant 0 : index
    %c0_32 = arith.constant 0 : index
    %34 = vector.load %arg5[%c3, %c0_31, %c0_32] : memref<9x128x128xbf16, #tpu.memory_space<vmem>>, vector<1x128x128xbf16>
    %35 = vector.shape_cast %34 : vector<1x128x128xbf16> to vector<128x128xbf16>
    %cst_33 = arith.constant dense<0.000000e+00> : vector<208x128xf32>
    %36 = tpu.matmul %33, %35, %cst_33 {dimension_numbers = #tpu.dot_dimension_numbers<[1], [0], [0], [1], [0, 0, 1, 1], [], []>} : vector<208x128xbf16>, vector<128x128xbf16>, vector<208x128xf32> -> vector<208x128xf32>
    %37 = arith.addf %32, %36 : vector<208x128xf32>
    %c11_34 = arith.constant 11 : index
    %c0_35 = arith.constant 0 : index
    %38 = vector.load %arg9[%c11_34, %c0_35] : memref<236x128xbf16, #tpu.memory_space<vmem>>, vector<208x128xbf16>
    %c4 = arith.constant 4 : index
    %c0_36 = arith.constant 0 : index
    %c0_37 = arith.constant 0 : index
    %39 = vector.load %arg5[%c4, %c0_36, %c0_37] : memref<9x128x128xbf16, #tpu.memory_space<vmem>>, vector<1x128x128xbf16>
    %40 = vector.shape_cast %39 : vector<1x128x128xbf16> to vector<128x128xbf16>
    %cst_38 = arith.constant dense<0.000000e+00> : vector<208x128xf32>
    %41 = tpu.matmul %38, %40, %cst_38 {dimension_numbers = #tpu.dot_dimension_numbers<[1], [0], [0], [1], [0, 0, 1, 1], [], []>} : vector<208x128xbf16>, vector<128x128xbf16>, vector<208x128xf32> -> vector<208x128xf32>
    %42 = arith.addf %37, %41 : vector<208x128xf32>
    %c12 = arith.constant 12 : index
    %c0_39 = arith.constant 0 : index
    %43 = vector.load %arg9[%c12, %c0_39] : memref<236x128xbf16, #tpu.memory_space<vmem>>, vector<208x128xbf16>
    %c5 = arith.constant 5 : index
    %c0_40 = arith.constant 0 : index
    %c0_41 = arith.constant 0 : index
    %44 = vector.load %arg5[%c5, %c0_40, %c0_41] : memref<9x128x128xbf16, #tpu.memory_space<vmem>>, vector<1x128x128xbf16>
    %45 = vector.shape_cast %44 : vector<1x128x128xbf16> to vector<128x128xbf16>
    %cst_42 = arith.constant dense<0.000000e+00> : vector<208x128xf32>
    %46 = tpu.matmul %43, %45, %cst_42 {dimension_numbers = #tpu.dot_dimension_numbers<[1], [0], [0], [1], [0, 0, 1, 1], [], []>} : vector<208x128xbf16>, vector<128x128xbf16>, vector<208x128xf32> -> vector<208x128xf32>
    %47 = arith.addf %42, %46 : vector<208x128xf32>
    %c20 = arith.constant 20 : index
    %c0_43 = arith.constant 0 : index
    %48 = vector.load %arg9[%c20, %c0_43] : memref<236x128xbf16, #tpu.memory_space<vmem>>, vector<208x128xbf16>
    %c6 = arith.constant 6 : index
    %c0_44 = arith.constant 0 : index
    %c0_45 = arith.constant 0 : index
    %49 = vector.load %arg5[%c6, %c0_44, %c0_45] : memref<9x128x128xbf16, #tpu.memory_space<vmem>>, vector<1x128x128xbf16>
    %50 = vector.shape_cast %49 : vector<1x128x128xbf16> to vector<128x128xbf16>
    %cst_46 = arith.constant dense<0.000000e+00> : vector<208x128xf32>
    %51 = tpu.matmul %48, %50, %cst_46 {dimension_numbers = #tpu.dot_dimension_numbers<[1], [0], [0], [1], [0, 0, 1, 1], [], []>} : vector<208x128xbf16>, vector<128x128xbf16>, vector<208x128xf32> -> vector<208x128xf32>
    %52 = arith.addf %47, %51 : vector<208x128xf32>
    %c21 = arith.constant 21 : index
    %c0_47 = arith.constant 0 : index
    %53 = vector.load %arg9[%c21, %c0_47] : memref<236x128xbf16, #tpu.memory_space<vmem>>, vector<208x128xbf16>
    %c7 = arith.constant 7 : index
    %c0_48 = arith.constant 0 : index
    %c0_49 = arith.constant 0 : index
    %54 = vector.load %arg5[%c7, %c0_48, %c0_49] : memref<9x128x128xbf16, #tpu.memory_space<vmem>>, vector<1x128x128xbf16>
    %55 = vector.shape_cast %54 : vector<1x128x128xbf16> to vector<128x128xbf16>
    %cst_50 = arith.constant dense<0.000000e+00> : vector<208x128xf32>
    %56 = tpu.matmul %53, %55, %cst_50 {dimension_numbers = #tpu.dot_dimension_numbers<[1], [0], [0], [1], [0, 0, 1, 1], [], []>} : vector<208x128xbf16>, vector<128x128xbf16>, vector<208x128xf32> -> vector<208x128xf32>
    %57 = arith.addf %52, %56 : vector<208x128xf32>
    %c22 = arith.constant 22 : index
    %c0_51 = arith.constant 0 : index
    %58 = vector.load %arg9[%c22, %c0_51] : memref<236x128xbf16, #tpu.memory_space<vmem>>, vector<208x128xbf16>
    %c8 = arith.constant 8 : index
    %c0_52 = arith.constant 0 : index
    %c0_53 = arith.constant 0 : index
    %59 = vector.load %arg5[%c8, %c0_52, %c0_53] : memref<9x128x128xbf16, #tpu.memory_space<vmem>>, vector<1x128x128xbf16>
    %60 = vector.shape_cast %59 : vector<1x128x128xbf16> to vector<128x128xbf16>
    %cst_54 = arith.constant dense<0.000000e+00> : vector<208x128xf32>
    %61 = tpu.matmul %58, %60, %cst_54 {dimension_numbers = #tpu.dot_dimension_numbers<[1], [0], [0], [1], [0, 0, 1, 1], [], []>} : vector<208x128xbf16>, vector<128x128xbf16>, vector<208x128xf32> -> vector<208x128xf32>
    %62 = arith.addf %57, %61 : vector<208x128xf32>
    %63 = vector.extract_strided_slice %0 {offsets = [0, 0], sizes = [208, 4], strides = [1, 1]} : vector<208x36xbf16> to vector<208x4xbf16>
    %c0_55 = arith.constant 0 : index
    %c0_56 = arith.constant 0 : index
    %64 = vector.load %arg7[%c0_55, %c0_56] : memref<4x128xbf16, #tpu.memory_space<vmem>>, vector<4x128xbf16>
    %cst_57 = arith.constant dense<0.000000e+00> : vector<208x128xf32>
    %65 = tpu.matmul %63, %64, %cst_57 {dimension_numbers = #tpu.dot_dimension_numbers<[1], [0], [0], [1], [0, 0, 1, 1], [], []>} : vector<208x4xbf16>, vector<4x128xbf16>, vector<208x128xf32> -> vector<208x128xf32>
    %66 = arith.addf %62, %65 : vector<208x128xf32>
    %cst_58 = arith.constant 0.000000e+00 : f32
    %67 = vector.broadcast %cst_58 : f32 to vector<208x128xf32>
    %68 = arith.maximumf %66, %67 : vector<208x128xf32>
    %69 = arith.truncf %68 : vector<208x128xf32> to vector<208x128xbf16>
    %c0_59 = arith.constant 0 : index
    %c0_60 = arith.constant 0 : index
    %70 = vector.load %arg8[%c0_59, %c0_60] : memref<208x128xbf16, #tpu.memory_space<vmem>>, vector<208x128xbf16>
    tpu.vector_store %arg8[%c0_59, %c0_60], %69 {strides = array<i32>} : memref<208x128xbf16, #tpu.memory_space<vmem>>, vector<208x128xbf16>,
    return
  }
  func.func @transform_0(%arg0: i32) -> (i32, i32) {
    %c0_i32 = arith.constant 0 : i32
    %c0_i32_0 = arith.constant 0 : i32
    return %arg0, %c0_i32 : i32, i32
  }
  func.func @transform_1(%arg0: i32) -> (i32, i32) {
    %c0_i32 = arith.constant 0 : i32
    %c0_i32_0 = arith.constant 0 : i32
    return %arg0, %c0_i32 : i32, i32
  }
  func.func @transform_2(%arg0: i32) -> (i32, i32) {
    %c0_i32 = arith.constant 0 : i32
    %c0_i32_0 = arith.constant 0 : i32
    %c0_i32_1 = arith.constant 0 : i32
    return %c0_i32, %c0_i32_0 : i32, i32
  }
  func.func @transform_3(%arg0: i32) -> (i32, i32) {
    %c0_i32 = arith.constant 0 : i32
    %c0_i32_0 = arith.constant 0 : i32
    %c0_i32_1 = arith.constant 0 : i32
    return %c0_i32, %c0_i32_0 : i32, i32
  }
  func.func @transform_4(%arg0: i32) -> (i32, i32, i32) {
    %c0_i32 = arith.constant 0 : i32
    %c0_i32_0 = arith.constant 0 : i32
    %c0_i32_1 = arith.constant 0 : i32
    %c0_i32_2 = arith.constant 0 : i32
    return %c0_i32, %c0_i32_0, %c0_i32_1 : i32, i32, i32
  }
  func.func @transform_5(%arg0: i32) -> (i32, i32) {
    %c0_i32 = arith.constant 0 : i32
    %c0_i32_0 = arith.constant 0 : i32
    %c0_i32_1 = arith.constant 0 : i32
    return %c0_i32, %c0_i32_0 : i32, i32
  }
  func.func @transform_6(%arg0: i32) -> (i32, i32) {
    %c0_i32 = arith.constant 0 : i32
    %c0_i32_0 = arith.constant 0 : i32
    %c0_i32_1 = arith.constant 0 : i32
    return %c0_i32, %c0_i32_0 : i32, i32
  }
  func.func @transform_7(%arg0: i32) -> (i32, i32) {
    %c0_i32 = arith.constant 0 : i32
    %c0_i32_0 = arith.constant 0 : i32
    return %arg0, %c0_i32 : i32, i32
  }
}

module attributes {stable_mosaic.version = 11 : i64} {
  func.func @kernel(%arg0: i32, %arg1: memref<208x36xbf16, #tpu.memory_space<vmem>>, %arg2: memref<208x1xf32, #tpu.memory_space<vmem>>, %arg3: memref<36x128xbf16, #tpu.memory_space<vmem>>, %arg4: memref<1x128xf32, #tpu.memory_space<vmem>>, %arg5: memref<9x128x128xbf16, #tpu.memory_space<vmem>>, %arg6: memref<1x128xf32, #tpu.memory_space<vmem>>, %arg7: memref<4x128xbf16, #tpu.memory_space<vmem>>, %arg8: memref<208x128xbf16, #tpu.memory_space<vmem>>, %arg9: memref<236x128xbf16, #tpu.memory_space<vmem>>) attributes {dimension_semantics = [#tpu.dimension_semantics<parallel>], iteration_bounds = array<i64: 1>, scalar_prefetch = 0 : i64, scratch_operands = 1 : i64, tpu.core_type = #tpu.core_type<tc>, window_params = [{transform_indices = @transform_0, window_bounds = array<i64: 208, 36>}, {transform_indices = @transform_1, window_bounds = array<i64: 208, 1>}, {pipeline_mode = #tpu.pipeline_mode<synchronous>, transform_indices = @transform_2, window_bounds = array<i64: 36, 128>}, {pipeline_mode = #tpu.pipeline_mode<synchronous>, transform_indices = @transform_3, window_bounds = array<i64: 1, 128>}, {pipeline_mode = #tpu.pipeline_mode<synchronous>, transform_indices = @transform_4, window_bounds = array<i64: 9, 128, 128>}, {pipeline_mode = #tpu.pipeline_mode<synchronous>, transform_indices = @transform_5, window_bounds = array<i64: 1, 128>}, {pipeline_mode = #tpu.pipeline_mode<synchronous>, transform_indices = @transform_6, window_bounds = array<i64: 4, 128>}, {transform_indices = @transform_7, window_bounds = array<i64: 208, 128>}]} {
    %c0 = arith.constant 0 : index
    %c0_0 = arith.constant 0 : index
    %0 = vector.load %arg1[%c0, %c0_0] : memref<208x36xbf16, #tpu.memory_space<vmem>>, vector<208x36xbf16>
    %c0_1 = arith.constant 0 : index
    %c0_2 = arith.constant 0 : index
    %1 = vector.load %arg3[%c0_1, %c0_2] : memref<36x128xbf16, #tpu.memory_space<vmem>>, vector<36x128xbf16>
    %cst = arith.constant dense<0.000000e+00> : vector<208x128xf32>
    %2 = tpu.matmul %0, %1, %cst {dimension_numbers = #tpu.dot_dimension_numbers<[1], [0], [0], [1], [0, 0, 1, 1], [], []>} : vector<208x36xbf16>, vector<36x128xbf16>, vector<208x128xf32> -> vector<208x128xf32>
    %c0_3 = arith.constant 0 : index
    %c0_4 = arith.constant 0 : index
    %3 = vector.load %arg4[%c0_3, %c0_4] : memref<1x128xf32, #tpu.memory_space<vmem>>, vector<1x128xf32>
    %4 = vector.broadcast %3 : vector<1x128xf32> to vector<208x128xf32>
    %5 = arith.addf %2, %4 : vector<208x128xf32>
    %cst_5 = arith.constant 0.000000e+00 : f32
    %6 = vector.broadcast %cst_5 : f32 to vector<208x128xf32>
    %7 = arith.maximumf %5, %6 : vector<208x128xf32>
    %c0_6 = arith.constant 0 : index
    %c0_7 = arith.constant 0 : index
    %8 = vector.load %arg2[%c0_6, %c0_7] : memref<208x1xf32, #tpu.memory_space<vmem>>, vector<208x1xf32>
    %9 = vector.broadcast %8 : vector<208x1xf32> to vector<208x128xf32>
    %10 = arith.mulf %7, %9 : vector<208x128xf32>
    %cst_8 = arith.constant 0.000000e+00 : bf16
    %11 = vector.broadcast %cst_8 : bf16 to vector<11x128xbf16>
    %c0_9 = arith.constant 0 : index
    %c0_10 = arith.constant 0 : index
    %12 = vector.load %arg9[%c0_9, %c0_10] : memref<236x128xbf16, #tpu.memory_space<vmem>>, vector<11x128xbf16>
    tpu.vector_store %arg9[%c0_9, %c0_10], %11 {strides = array<i32>} : memref<236x128xbf16, #tpu.memory_space<vmem>>, vector<11x128xbf16>,
    %13 = arith.truncf %10 : vector<208x128xf32> to vector<208x128xbf16>
    %c11 = arith.constant 11 : index
    %c0_11 = arith.constant 0 : index
    %14 = vector.load %arg9[%c11, %c0_11] : memref<236x128xbf16, #tpu.memory_space<vmem>>, vector<208x128xbf16>
    tpu.vector_store %arg9[%c11, %c0_11], %13 {strides = array<i32>} : memref<236x128xbf16, #tpu.memory_space<vmem>>, vector<208x128xbf16>,
    %c0_12 = arith.constant 0 : index
    %c0_13 = arith.constant 0 : index
    %15 = vector.load %arg6[%c0_12, %c0_13] : memref<1x128xf32, #tpu.memory_space<vmem>>, vector<1x128xf32>
    %16 = vector.shape_cast %15 : vector<1x128xf32> to vector<1x128xf32>
    %17 = vector.broadcast %16 : vector<1x128xf32> to vector<208x128xf32>
    %c0_14 = arith.constant 0 : index
    %c0_15 = arith.constant 0 : index
    %18 = vector.load %arg9[%c0_14, %c0_15] : memref<236x128xbf16, #tpu.memory_space<vmem>>, vector<208x128xbf16>
    %c0_16 = arith.constant 0 : index
    %c0_17 = arith.constant 0 : index
    %c0_18 = arith.constant 0 : index
    %19 = vector.load %arg5[%c0_16, %c0_17, %c0_18] : memref<9x128x128xbf16, #tpu.memory_space<vmem>>, vector<1x128x128xbf16>
    %20 = vector.shape_cast %19 : vector<1x128x128xbf16> to vector<128x128xbf16>
    %cst_19 = arith.constant dense<0.000000e+00> : vector<208x128xf32>
    %21 = tpu.matmul %18, %20, %cst_19 {dimension_numbers = #tpu.dot_dimension_numbers<[1], [0], [0], [1], [0, 0, 1, 1], [], []>} : vector<208x128xbf16>, vector<128x128xbf16>, vector<208x128xf32> -> vector<208x128xf32>
    %22 = arith.addf %17, %21 : vector<208x128xf32>
    %c1 = arith.constant 1 : index
    %c0_20 = arith.constant 0 : index
    %23 = vector.load %arg9[%c1, %c0_20] : memref<236x128xbf16, #tpu.memory_space<vmem>>, vector<208x128xbf16>
    %c1_21 = arith.constant 1 : index
    %c0_22 = arith.constant 0 : index
    %c0_23 = arith.constant 0 : index
    %24 = vector.load %arg5[%c1_21, %c0_22, %c0_23] : memref<9x128x128xbf16, #tpu.memory_space<vmem>>, vector<1x128x128xbf16>
    %25 = vector.shape_cast %24 : vector<1x128x128xbf16> to vector<128x128xbf16>
    %cst_24 = arith.constant dense<0.000000e+00> : vector<208x128xf32>
    %26 = tpu.matmul %23, %25, %cst_24 {dimension_numbers = #tpu.dot_dimension_numbers<[1], [0], [0], [1], [0, 0, 1, 1], [], []>} : vector<208x128xbf16>, vector<128x128xbf16>, vector<208x128xf32> -> vector<208x128xf32>
    %27 = arith.addf %22, %26 : vector<208x128xf32>
    %c2 = arith.constant 2 : index
    %c0_25 = arith.constant 0 : index
    %28 = vector.load %arg9[%c2, %c0_25] : memref<236x128xbf16, #tpu.memory_space<vmem>>, vector<208x128xbf16>
    %c2_26 = arith.constant 2 : index
    %c0_27 = arith.constant 0 : index
    %c0_28 = arith.constant 0 : index
    %29 = vector.load %arg5[%c2_26, %c0_27, %c0_28] : memref<9x128x128xbf16, #tpu.memory_space<vmem>>, vector<1x128x128xbf16>
    %30 = vector.shape_cast %29 : vector<1x128x128xbf16> to vector<128x128xbf16>
    %cst_29 = arith.constant dense<0.000000e+00> : vector<208x128xf32>
    %31 = tpu.matmul %28, %30, %cst_29 {dimension_numbers = #tpu.dot_dimension_numbers<[1], [0], [0], [1], [0, 0, 1, 1], [], []>} : vector<208x128xbf16>, vector<128x128xbf16>, vector<208x128xf32> -> vector<208x128xf32>
    %32 = arith.addf %27, %31 : vector<208x128xf32>
    %c10 = arith.constant 10 : index
    %c0_30 = arith.constant 0 : index
    %33 = vector.load %arg9[%c10, %c0_30] : memref<236x128xbf16, #tpu.memory_space<vmem>>, vector<208x128xbf16>
    %c3 = arith.constant 3 : index
    %c0_31 = arith.constant 0 : index
    %c0_32 = arith.constant 0 : index
    %34 = vector.load %arg5[%c3, %c0_31, %c0_32] : memref<9x128x128xbf16, #tpu.memory_space<vmem>>, vector<1x128x128xbf16>
    %35 = vector.shape_cast %34 : vector<1x128x128xbf16> to vector<128x128xbf16>
    %cst_33 = arith.constant dense<0.000000e+00> : vector<208x128xf32>
    %36 = tpu.matmul %33, %35, %cst_33 {dimension_numbers = #tpu.dot_dimension_numbers<[1], [0], [0], [1], [0, 0, 1, 1], [], []>} : vector<208x128xbf16>, vector<128x128xbf16>, vector<208x128xf32> -> vector<208x128xf32>
    %37 = arith.addf %32, %36 : vector<208x128xf32>
    %c11_34 = arith.constant 11 : index
    %c0_35 = arith.constant 0 : index
    %38 = vector.load %arg9[%c11_34, %c0_35] : memref<236x128xbf16, #tpu.memory_space<vmem>>, vector<208x128xbf16>
    %c4 = arith.constant 4 : index
    %c0_36 = arith.constant 0 : index
    %c0_37 = arith.constant 0 : index
    %39 = vector.load %arg5[%c4, %c0_36, %c0_37] : memref<9x128x128xbf16, #tpu.memory_space<vmem>>, vector<1x128x128xbf16>
    %40 = vector.shape_cast %39 : vector<1x128x128xbf16> to vector<128x128xbf16>
    %cst_38 = arith.constant dense<0.000000e+00> : vector<208x128xf32>
    %41 = tpu.matmul %38, %40, %cst_38 {dimension_numbers = #tpu.dot_dimension_numbers<[1], [0], [0], [1], [0, 0, 1, 1], [], []>} : vector<208x128xbf16>, vector<128x128xbf16>, vector<208x128xf32> -> vector<208x128xf32>
    %42 = arith.addf %37, %41 : vector<208x128xf32>
    %c12 = arith.constant 12 : index
    %c0_39 = arith.constant 0 : index
    %43 = vector.load %arg9[%c12, %c0_39] : memref<236x128xbf16, #tpu.memory_space<vmem>>, vector<208x128xbf16>
    %c5 = arith.constant 5 : index
    %c0_40 = arith.constant 0 : index
    %c0_41 = arith.constant 0 : index
    %44 = vector.load %arg5[%c5, %c0_40, %c0_41] : memref<9x128x128xbf16, #tpu.memory_space<vmem>>, vector<1x128x128xbf16>
    %45 = vector.shape_cast %44 : vector<1x128x128xbf16> to vector<128x128xbf16>
    %cst_42 = arith.constant dense<0.000000e+00> : vector<208x128xf32>
    %46 = tpu.matmul %43, %45, %cst_42 {dimension_numbers = #tpu.dot_dimension_numbers<[1], [0], [0], [1], [0, 0, 1, 1], [], []>} : vector<208x128xbf16>, vector<128x128xbf16>, vector<208x128xf32> -> vector<208x128xf32>
    %47 = arith.addf %42, %46 : vector<208x128xf32>
    %c20 = arith.constant 20 : index
    %c0_43 = arith.constant 0 : index
    %48 = vector.load %arg9[%c20, %c0_43] : memref<236x128xbf16, #tpu.memory_space<vmem>>, vector<208x128xbf16>
    %c6 = arith.constant 6 : index
    %c0_44 = arith.constant 0 : index
    %c0_45 = arith.constant 0 : index
    %49 = vector.load %arg5[%c6, %c0_44, %c0_45] : memref<9x128x128xbf16, #tpu.memory_space<vmem>>, vector<1x128x128xbf16>
    %50 = vector.shape_cast %49 : vector<1x128x128xbf16> to vector<128x128xbf16>
    %cst_46 = arith.constant dense<0.000000e+00> : vector<208x128xf32>
    %51 = tpu.matmul %48, %50, %cst_46 {dimension_numbers = #tpu.dot_dimension_numbers<[1], [0], [0], [1], [0, 0, 1, 1], [], []>} : vector<208x128xbf16>, vector<128x128xbf16>, vector<208x128xf32> -> vector<208x128xf32>
    %52 = arith.addf %47, %51 : vector<208x128xf32>
    %c21 = arith.constant 21 : index
    %c0_47 = arith.constant 0 : index
    %53 = vector.load %arg9[%c21, %c0_47] : memref<236x128xbf16, #tpu.memory_space<vmem>>, vector<208x128xbf16>
    %c7 = arith.constant 7 : index
    %c0_48 = arith.constant 0 : index
    %c0_49 = arith.constant 0 : index
    %54 = vector.load %arg5[%c7, %c0_48, %c0_49] : memref<9x128x128xbf16, #tpu.memory_space<vmem>>, vector<1x128x128xbf16>
    %55 = vector.shape_cast %54 : vector<1x128x128xbf16> to vector<128x128xbf16>
    %cst_50 = arith.constant dense<0.000000e+00> : vector<208x128xf32>
    %56 = tpu.matmul %53, %55, %cst_50 {dimension_numbers = #tpu.dot_dimension_numbers<[1], [0], [0], [1], [0, 0, 1, 1], [], []>} : vector<208x128xbf16>, vector<128x128xbf16>, vector<208x128xf32> -> vector<208x128xf32>
    %57 = arith.addf %52, %56 : vector<208x128xf32>
    %c22 = arith.constant 22 : index
    %c0_51 = arith.constant 0 : index
    %58 = vector.load %arg9[%c22, %c0_51] : memref<236x128xbf16, #tpu.memory_space<vmem>>, vector<208x128xbf16>
    %c8 = arith.constant 8 : index
    %c0_52 = arith.constant 0 : index
    %c0_53 = arith.constant 0 : index
    %59 = vector.load %arg5[%c8, %c0_52, %c0_53] : memref<9x128x128xbf16, #tpu.memory_space<vmem>>, vector<1x128x128xbf16>
    %60 = vector.shape_cast %59 : vector<1x128x128xbf16> to vector<128x128xbf16>
    %cst_54 = arith.constant dense<0.000000e+00> : vector<208x128xf32>
    %61 = tpu.matmul %58, %60, %cst_54 {dimension_numbers = #tpu.dot_dimension_numbers<[1], [0], [0], [1], [0, 0, 1, 1], [], []>} : vector<208x128xbf16>, vector<128x128xbf16>, vector<208x128xf32> -> vector<208x128xf32>
    %62 = arith.addf %57, %61 : vector<208x128xf32>
    %63 = vector.extract_strided_slice %0 {offsets = [0, 0], sizes = [208, 4], strides = [1, 1]} : vector<208x36xbf16> to vector<208x4xbf16>
    %c0_55 = arith.constant 0 : index
    %c0_56 = arith.constant 0 : index
    %64 = vector.load %arg7[%c0_55, %c0_56] : memref<4x128xbf16, #tpu.memory_space<vmem>>, vector<4x128xbf16>
    %cst_57 = arith.constant dense<0.000000e+00> : vector<208x128xf32>
    %65 = tpu.matmul %63, %64, %cst_57 {dimension_numbers = #tpu.dot_dimension_numbers<[1], [0], [0], [1], [0, 0, 1, 1], [], []>} : vector<208x4xbf16>, vector<4x128xbf16>, vector<208x128xf32> -> vector<208x128xf32>
    %66 = arith.addf %62, %65 : vector<208x128xf32>
    %cst_58 = arith.constant 0.000000e+00 : f32
    %67 = vector.broadcast %cst_58 : f32 to vector<208x128xf32>
    %68 = arith.maximumf %66, %67 : vector<208x128xf32>
    %69 = arith.truncf %68 : vector<208x128xf32> to vector<208x128xbf16>
    %c0_59 = arith.constant 0 : index
    %c0_60 = arith.constant 0 : index
    %70 = vector.load %arg8[%c0_59, %c0_60] : memref<208x128xbf16, #tpu.memory_space<vmem>>, vector<208x128xbf16>
    tpu.vector_store %arg8[%c0_59, %c0_60], %69 {strides = array<i32>} : memref<208x128xbf16, #tpu.memory_space<vmem>>, vector<208x128xbf16>,
    return
  }
  func.func @transform_0(%arg0: i32) -> (i32, i32) {
    %c0_i32 = arith.constant 0 : i32
    %c0_i32_0 = arith.constant 0 : i32
    return %arg0, %c0_i32 : i32, i32
  }
  func.func @transform_1(%arg0: i32) -> (i32, i32) {
    %c0_i32 = arith.constant 0 : i32
    %c0_i32_0 = arith.constant 0 : i32
    return %arg0, %c0_i32 : i32, i32
  }
  func.func @transform_2(%arg0: i32) -> (i32, i32) {
    %c0_i32 = arith.constant 0 : i32
    %c0_i32_0 = arith.constant 0 : i32
    %c0_i32_1 = arith.constant 0 : i32
    return %c0_i32, %c0_i32_0 : i32, i32
  }
  func.func @transform_3(%arg0: i32) -> (i32, i32) {
    %c0_i32 = arith.constant 0 : i32
    %c0_i32_0 = arith.constant 0 : i32
    %c0_i32_1 = arith.constant 0 : i32
    return %c0_i32, %c0_i32_0 : i32, i32
  }
  func.func @transform_4(%arg0: i32) -> (i32, i32, i32) {
    %c0_i32 = arith.constant 0 : i32
    %c0_i32_0 = arith.constant 0 : i32
    %c0_i32_1 = arith.constant 0 : i32
    %c0_i32_2 = arith.constant 0 : i32
    return %c0_i32, %c0_i32_0, %c0_i32_1 : i32, i32, i32
  }
  func.func @transform_5(%arg0: i32) -> (i32, i32) {
    %c0_i32 = arith.constant 0 : i32
    %c0_i32_0 = arith.constant 0 : i32
    %c0_i32_1 = arith.constant 0 : i32
    return %c0_i32, %c0_i32_0 : i32, i32
  }
  func.func @transform_6(%arg0: i32) -> (i32, i32) {
    %c0_i32 = arith.constant 0 : i32
    %c0_i32_0 = arith.constant 0 : i32
    %c0_i32_1 = arith.constant 0 : i32
    return %c0_i32, %c0_i32_0 : i32, i32
  }
  func.func @transform_7(%arg0: i32) -> (i32, i32) {
    %c0_i32 = arith.constant 0 : i32
    %c0_i32_0 = arith.constant 0 : i32
    return %arg0, %c0_i32 : i32, i32
  }
}

</mosaic_0001>

<llo_original>
// kernel: tpu_custom_call.1
$region0: #{tpu_custom_call.1}
  #allocation0 [shape = 'u32[]', space=smem, size = 0x4, offset = 0x4, fixed_abs, tag = 'smem constant byte address 0x4 - core index']
  #allocation1 [shape = 'u32[144,128]{1,0:T(1,128)}', space=vmem, size = 0x12000, scoped, tag = 'internal scratch']
  #allocation2 [shape = 'bf16[236,128]{1,0:T(8,128)(2,1)}', space=vmem, size = 0xf000, scoped, tag = 'scratch operand']
  %s0 = inlined_call_operand.vmem [shape: bf16[208,36], index: 0, kind: input, shape index: {}]
  %s1 = inlined_call_operand.vmem [shape: f32[208,1], index: 1, kind: input, shape index: {}]
  %s2 = inlined_call_operand.vmem [shape: bf16[36,128], index: 2, kind: input, shape index: {}]
  %s3 = inlined_call_operand.vmem [shape: f32[1,128], index: 3, kind: input, shape index: {}]
  %s4 = inlined_call_operand.hbm [shape: bf16[9,128,128], index: 4, kind: input, shape index: {}]
  %s5 = inlined_call_operand.vmem [shape: f32[1,128], index: 5, kind: input, shape index: {}]
  %s6 = inlined_call_operand.vmem [shape: bf16[4,128], index: 6, kind: input, shape index: {}]
  %s7 = inlined_call_operand.hbm [shape: bf16[208,128], index: 7, kind: output, shape index: {}]
  %s8 = sld [smem:[#allocation0]]
  $region42: #{tpu_custom_call.1} parent=0
    _
  %s10 = ssub.s32 1, %s8
  %s11 = scalar_select 0, %s10, %s8
  $region1: #{tpu_custom_call.1} parent=0
    #allocation3 [shape = 'u8[294912]{0}', space=vmem, size = 0x48000, scoped, tag = 'input window, operand 4, single buffered']
    #allocation4 [shape = 's32[1]{0}', space=sflag, size = 0x4, scoped, tag = 'scoped memory for tpu_custom_call.1']
    #allocation5 [shape = 's32[1]{0}', space=sflag, size = 0x4, scoped, tag = 'scoped memory for tpu_custom_call.1']
    #allocation6 [shape = 'u8[53248]{0}', space=vmem, size = 0xd000, scoped, tag = 'output window, operand 0, single buffered']
    %12 = vsyncpa [#allocation4], 0
    %13 = vsyncpa [#allocation5], 0
    // Predicated region
    $region2: #{tpu_custom_call.1} parent=1 // pred_check
      _
    $region3: #{tpu_custom_call.1} parent=1 // pred_check_branch
      %15 = sbr.rel (0) target = $region5
    $region4: #{tpu_custom_call.1} parent=1 // pred_region
      _
    $region5: #{tpu_custom_call.1} parent=1 // pred_fallthru
      _
    // Predicated region
    $region6: #{tpu_custom_call.1} parent=1 // pred_check
      _
    $region7: #{tpu_custom_call.1} parent=1 // pred_check_branch
      %17 = sbr.rel (0) target = $region9
    $region8: #{tpu_custom_call.1} parent=1 // pred_region
      _
    $region9: #{tpu_custom_call.1} parent=1 // pred_fallthru
      _
    // Predicated region
    $region10: #{tpu_custom_call.1} parent=1 // pred_check
      _
    $region11: #{tpu_custom_call.1} parent=1 // pred_check_branch
      %19 = sbr.rel (0) target = $region13
    $region12: #{tpu_custom_call.1} parent=1 // pred_region
      _
    $region13: #{tpu_custom_call.1} parent=1 // pred_fallthru
      _
    // Predicated region
    $region14: #{tpu_custom_call.1} parent=1 // pred_check
      _
    $region15: #{tpu_custom_call.1} parent=1 // pred_check_branch
      %21 = sbr.rel (0) target = $region17
    $region16: #{tpu_custom_call.1} parent=1 // pred_region
      _
    $region17: #{tpu_custom_call.1} parent=1 // pred_fallthru
      _
    // Predicated region
    $region18: #{tpu_custom_call.1} parent=1 // pred_check
      _
    $region19: #{tpu_custom_call.1} parent=1 // pred_check_branch
      %23 = sbr.rel (0) target = $region21
    $region20: #{tpu_custom_call.1} parent=1 // pred_region
      %s25 = ssub.s32 9216, 9216
      %26 = vsyncadd [#allocation4], %s25
      %s27 = sshll.u32 [#allocation3], 4
      %s28 = int_to_ptr.vmem [resolvable:$true] %s27
      %33 = dma.hbm_to_vmem [thread:$0]  %s4, 9216, %s28, [#allocation4], 64, 64, 4
    $region21: #{tpu_custom_call.1} parent=1 // pred_fallthru
      _
    // Predicated region
    $region22: #{tpu_custom_call.1} parent=1 // pred_check
      _
    $region23: #{tpu_custom_call.1} parent=1 // pred_check_branch
      %35 = sbr.rel (0) target = $region25
    $region24: #{tpu_custom_call.1} parent=1 // pred_region
      _
    $region25: #{tpu_custom_call.1} parent=1 // pred_fallthru
      _
    // Predicated region
    $region26: #{tpu_custom_call.1} parent=1 // pred_check
      _
    $region27: #{tpu_custom_call.1} parent=1 // pred_check_branch
      %37 = sbr.rel (0) target = $region29
    $region28: #{tpu_custom_call.1} parent=1 // pred_region
      _
    $region29: #{tpu_custom_call.1} parent=1 // pred_fallthru
      _
    // Predicated region
    $region30: #{tpu_custom_call.1} parent=1 // pred_check
      _
    $region31: #{tpu_custom_call.1} parent=1 // pred_check_branch
      %39 = sbr.rel (0) target = $region33
    $region32: #{tpu_custom_call.1} parent=1 // pred_region
      %40 = dma.done [#allocation4], 9216
    $region33: #{tpu_custom_call.1} parent=1 // pred_fallthru
      _
    %v42 = vld [vmem:[%s0] sm:$0xf]
    %v43 = vld [vmem:[%s0 + $0x4] sm:$0xf]
    %v44 = vld [vmem:[%s0 + $0x8] sm:$0xf]
    %v45 = vld [vmem:[%s0 + $0xc] sm:$0xf]
    %v46 = vld [vmem:[%s0 + $0x10] sm:$0xf]
    %v47 = vld [vmem:[%s0 + $0x14] sm:$0xf]
    %v48 = vld [vmem:[%s0 + $0x18] sm:$0xf]
    %v49 = vld [vmem:[%s0 + $0x1c] sm:$0xf]
    %v50 = vld [vmem:[%s0 + $0x20] sm:$0xf]
    %v51 = vld [vmem:[%s0 + $0x24] sm:$0xf]
    %v52 = vld [vmem:[%s0 + $0x28] sm:$0xf]
    %v53 = vld [vmem:[%s0 + $0x2c] sm:$0xf]
    %v54 = vld [vmem:[%s0 + $0x30] sm:$0xf]
    %v55 = vld [vmem:[%s0 + $0x34] sm:$0xf]
    %v56 = vld [vmem:[%s0 + $0x38] sm:$0xf]
    %v57 = vld [vmem:[%s0 + $0x3c] sm:$0xf]
    %v58 = vld [vmem:[%s0 + $0x40] sm:$0xf]
    %v59 = vld [vmem:[%s0 + $0x44] sm:$0xf]
    %v60 = vld [vmem:[%s0 + $0x48] sm:$0xf]
    %v61 = vld [vmem:[%s0 + $0x4c] sm:$0xf]
    %v62 = vld [vmem:[%s0 + $0x50] sm:$0xf]
    %v63 = vld [vmem:[%s0 + $0x54] sm:$0xf]
    %v64 = vld [vmem:[%s0 + $0x58] sm:$0xf]
    %v65 = vld [vmem:[%s0 + $0x5c] sm:$0xf]
    %v66 = vld [vmem:[%s0 + $0x60] sm:$0xf]
    %v67 = vld [vmem:[%s0 + $0x64] sm:$0xf]
    %v68 = vld [vmem:[%s2] sm:$0xf]
    %v69 = vld [vmem:[%s2 + $0x4] sm:$0xf]
    %v70 = vld [vmem:[%s2 + $0x8] sm:$0xf]
    %v71 = vld [vmem:[%s2 + $0xc] sm:$0xf]
    %v72 = vld [vmem:[%s2 + $0x10] sm:$0x3]
    %v73 = vld [vmem:[%s3] sm:$0x1]
    %v75 = vlaneseq
    %v76 = vshrl.u32 %v75, 7
    %v77 = vsub.s32 0, %v76
    %v78 = vrot.slane %v73, %v77
    %v106 = vunpack.c.l.b16 %v42
    %v107 = vunpack.c.l.b16 %v43
    %v108 = vunpack.c.l.b16 %v44
    %v109 = vunpack.c.l.b16 %v45
    %v110 = vunpack.c.l.b16 %v46
    %v111 = vunpack.c.l.b16 %v47
    %v112 = vunpack.c.l.b16 %v48
    %v113 = vunpack.c.l.b16 %v49
    %v114 = vunpack.c.l.b16 %v50
    %v115 = vunpack.c.l.b16 %v51
    %v116 = vunpack.c.l.b16 %v52
    %v117 = vunpack.c.l.b16 %v53
    %v118 = vunpack.c.l.b16 %v54
    %v119 = vunpack.c.l.b16 %v55
    %v120 = vunpack.c.l.b16 %v56
    %v121 = vunpack.c.l.b16 %v57
    %v122 = vunpack.c.l.b16 %v58
    %v123 = vunpack.c.l.b16 %v59
    %v124 = vunpack.c.l.b16 %v60
    %v125 = vunpack.c.l.b16 %v61
    %v126 = vunpack.c.l.b16 %v62
    %v127 = vunpack.c.l.b16 %v63
    %v128 = vunpack.c.l.b16 %v64
    %v129 = vunpack.c.l.b16 %v65
    %v130 = vunpack.c.l.b16 %v66
    %v131 = vunpack.c.l.b16 %v67
    %v132 = vpack.c.b16 %v107, %v106
    %v133 = vpack.c.b16 %v109, %v108
    %v134 = vpack.c.b16 %v111, %v110
    %v135 = vpack.c.b16 %v113, %v112
    %v136 = vpack.c.b16 %v115, %v114
    %v137 = vpack.c.b16 %v117, %v116
    %v138 = vpack.c.b16 %v119, %v118
    %v139 = vpack.c.b16 %v121, %v120
    %v140 = vpack.c.b16 %v123, %v122
    %v141 = vpack.c.b16 %v125, %v124
    %v142 = vpack.c.b16 %v127, %v126
    %v143 = vpack.c.b16 %v129, %v128
    %v144 = vpack.c.b16 %v131, %v130
    %v150 = vunpack.c.l.b16 %v68
    %v151 = vunpack.c.l.b16 %v69
    %v152 = vunpack.c.l.b16 %v70
    %v153 = vunpack.c.l.b16 %v71
    %v154 = vunpack.c.l.b16 %v72
    %v155 = vpack.c.b16 %v151, %v150
    %v156 = vpack.c.b16 %v153, %v152
    %v157 = vpack.c.b16 %v154, %v154
    %vm160 = vcmask 293888
    %v162 = vsel %vm160, %v132, 0
    %v165 = vsel %vm160, %v133, 0
    %v168 = vsel %vm160, %v134, 0
    %v171 = vsel %vm160, %v135, 0
    %v174 = vsel %vm160, %v136, 0
    %v177 = vsel %vm160, %v137, 0
    %v180 = vsel %vm160, %v138, 0
    %v183 = vsel %vm160, %v139, 0
    %v186 = vsel %vm160, %v140, 0
    %v189 = vsel %vm160, %v141, 0
    %v192 = vsel %vm160, %v142, 0
    %v195 = vsel %vm160, %v143, 0
    %v198 = vsel %vm160, %v144, 0
    %vm200 = vcmask 1041408
    %v202 = vsel %vm200, %v157, 0
    %204 = vmatprep.subr.bf16.mxu0 0
    %205 = vmatpush1.bf16.msra.mxu0 %v155
    %206 = vmatprep.subr.bf16.mxu0 0
    %207 = vmatpush1.bf16.msra.mxu0 %v156
    %208 = vmatprep.subr.bf16.mxu0 0
    %209 = vmatpush1.bf16.msra.mxu0 %v202
    %210 = vmatprep.subr.bf16.mxu0 0
    %211 = vmatpush1.bf16.msra.mxu0 0
    %212 = vmatprep.subr.bf16.mxu0 0
    %213 = vmatpush1.bf16.msra.mxu0 0
    %214 = vmatprep.subr.bf16.mxu0 0
    %215 = vmatpush1.bf16.msra.mxu0 0
    %216 = vmatprep.subr.bf16.mxu0 0
    %217 = vmatpush1.bf16.msra.mxu0 0
    %218 = vmatprep.subr.bf16.mxu0 0
    %219 = vmatpush1.bf16.msra.mxu0 0
    %220 = vmatprep.subr.bf16.mxu0 0
    %221 = vmatpush1.bf16.msra.mxu0 0
    %222 = vmatprep.subr.bf16.mxu0 0
    %223 = vmatpush1.bf16.msra.mxu0 0
    %224 = vmatprep.subr.bf16.mxu0 0
    %225 = vmatpush1.bf16.msra.mxu0 0
    %226 = vmatprep.subr.bf16.mxu0 0
    %227 = vmatpush1.bf16.msra.mxu0 0
    %228 = vmatprep.subr.bf16.mxu0 0
    %229 = vmatpush1.bf16.msra.mxu0 0
    %230 = vmatprep.subr.bf16.mxu0 0
    %231 = vmatpush1.bf16.msra.mxu0 0
    %232 = vmatprep.subr.bf16.mxu0 0
    %233 = vmatpush1.bf16.msra.mxu0 0
    %234 = vmatprep.subr.bf16.mxu0 0
    %235 = vmatpush1.bf16.msra.mxu0 0
    %236 = vmatprep.mubr.bf16.mxu0 0
    %237 = vmatmul.mubr.bf16.gmra.mrb[0].mxu0 %v162
    %v238 = vpop.f32.mrb[0].mxu0
    %v239 = vadd.f32 %v78, %v238
    %v240 = vpop.f32.mrb[0].mxu0
    %v241 = vpop.f32.mrb[0].mxu0
    %v242 = vadd.f32 %v78, %v241
    %v243 = vpop.f32.mrb[0].mxu0
    %244 = vmatprep.mubr.bf16.mxu0 0
    %245 = vmatmul.mubr.bf16.gmra.mrb[0].mxu0 %v165
    %v246 = vpop.f32.mrb[0].mxu0
    %v247 = vadd.f32 %v78, %v246
    %v248 = vpop.f32.mrb[0].mxu0
    %v249 = vpop.f32.mrb[0].mxu0
    %v250 = vadd.f32 %v78, %v249
    %v251 = vpop.f32.mrb[0].mxu0
    %252 = vmatprep.mubr.bf16.mxu0 0
    %253 = vmatmul.mubr.bf16.gmra.mrb[0].mxu0 %v168
    %v254 = vpop.f32.mrb[0].mxu0
    %v255 = vadd.f32 %v78, %v254
    %v256 = vpop.f32.mrb[0].mxu0
    %v257 = vpop.f32.mrb[0].mxu0
    %v258 = vadd.f32 %v78, %v257
    %v259 = vpop.f32.mrb[0].mxu0
    %260 = vmatprep.mubr.bf16.mxu0 0
    %261 = vmatmul.mubr.bf16.gmra.mrb[0].mxu0 %v171
    %v262 = vpop.f32.mrb[0].mxu0
    %v263 = vadd.f32 %v78, %v262
    %v264 = vpop.f32.mrb[0].mxu0
    %v265 = vpop.f32.mrb[0].mxu0
    %v266 = vadd.f32 %v78, %v265
    %v267 = vpop.f32.mrb[0].mxu0
    %268 = vmatprep.mubr.bf16.mxu0 0
    %269 = vmatmul.mubr.bf16.gmra.mrb[0].mxu0 %v174
    %v270 = vpop.f32.mrb[0].mxu0
    %v271 = vadd.f32 %v78, %v270
    %v272 = vpop.f32.mrb[0].mxu0
    %v273 = vpop.f32.mrb[0].mxu0
    %v274 = vadd.f32 %v78, %v273
    %v275 = vpop.f32.mrb[0].mxu0
    %276 = vmatprep.mubr.bf16.mxu0 0
    %277 = vmatmul.mubr.bf16.gmra.mrb[0].mxu0 %v177
    %v278 = vpop.f32.mrb[0].mxu0
    %v279 = vadd.f32 %v78, %v278
    %v280 = vpop.f32.mrb[0].mxu0
    %v281 = vpop.f32.mrb[0].mxu0
    %v282 = vadd.f32 %v78, %v281
    %v283 = vpop.f32.mrb[0].mxu0
    %284 = vmatprep.mubr.bf16.mxu0 0
    %285 = vmatmul.mubr.bf16.gmra.mrb[0].mxu0 %v180
    %v286 = vpop.f32.mrb[0].mxu0
    %v287 = vadd.f32 %v78, %v286
    %v288 = vpop.f32.mrb[0].mxu0
    %v289 = vpop.f32.mrb[0].mxu0
    %v290 = vadd.f32 %v78, %v289
    %v291 = vpop.f32.mrb[0].mxu0
    %292 = vmatprep.mubr.bf16.mxu0 0
    %293 = vmatmul.mubr.bf16.gmra.mrb[0].mxu0 %v183
    %v294 = vpop.f32.mrb[0].mxu0
    %v295 = vadd.f32 %v78, %v294
    %v296 = vpop.f32.mrb[0].mxu0
    %v297 = vpop.f32.mrb[0].mxu0
    %v298 = vadd.f32 %v78, %v297
    %v299 = vpop.f32.mrb[0].mxu0
    %300 = vmatprep.mubr.bf16.mxu0 0
    %301 = vmatmul.mubr.bf16.gmra.mrb[0].mxu0 %v186
    %v302 = vpop.f32.mrb[0].mxu0
    %v303 = vadd.f32 %v78, %v302
    %v304 = vpop.f32.mrb[0].mxu0
    %v305 = vpop.f32.mrb[0].mxu0
    %v306 = vadd.f32 %v78, %v305
    %v307 = vpop.f32.mrb[0].mxu0
    %308 = vmatprep.mubr.bf16.mxu0 0
    %309 = vmatmul.mubr.bf16.gmra.mrb[0].mxu0 %v189
    %v310 = vpop.f32.mrb[0].mxu0
    %v311 = vadd.f32 %v78, %v310
    %v312 = vpop.f32.mrb[0].mxu0
    %v313 = vpop.f32.mrb[0].mxu0
    %v314 = vadd.f32 %v78, %v313
    %v315 = vpop.f32.mrb[0].mxu0
    %316 = vmatprep.mubr.bf16.mxu0 0
    %317 = vmatmul.mubr.bf16.gmra.mrb[0].mxu0 %v192
    %v318 = vpop.f32.mrb[0].mxu0
    %v319 = vadd.f32 %v78, %v318
    %v320 = vpop.f32.mrb[0].mxu0
    %v321 = vpop.f32.mrb[0].mxu0
    %v322 = vadd.f32 %v78, %v321
    %v323 = vpop.f32.mrb[0].mxu0
    %324 = vmatprep.mubr.bf16.mxu0 0
    %325 = vmatmul.mubr.bf16.gmra.mrb[0].mxu0 %v195
    %v326 = vpop.f32.mrb[0].mxu0
    %v327 = vadd.f32 %v78, %v326
    %v328 = vpop.f32.mrb[0].mxu0
    %v329 = vpop.f32.mrb[0].mxu0
    %v330 = vadd.f32 %v78, %v329
    %v331 = vpop.f32.mrb[0].mxu0
    %332 = vmatprep.mubr.bf16.mxu0 0
    %333 = vmatmul.mubr.bf16.gmra.mrb[0].mxu0 %v198
    %v334 = vpop.f32.mrb[0].mxu0
    %v335 = vadd.f32 %v78, %v334
    %v336 = vpop.f32.mrb[0].mxu0
    %v337 = vpop.f32.mrb[0].mxu0
    %v338 = vadd.f32 %v78, %v337
    %v339 = vpop.f32.mrb[0].mxu0
    %340 = vdwg.mxu0
    %v341 = vmax.f32 %v239, 0.0
    %v342 = vmax.f32 %v242, 0.0
    %v343 = vmax.f32 %v247, 0.0
    %v344 = vmax.f32 %v250, 0.0
    %v345 = vmax.f32 %v255, 0.0
    %v346 = vmax.f32 %v258, 0.0
    %v347 = vmax.f32 %v263, 0.0
    %v348 = vmax.f32 %v266, 0.0
    %v349 = vmax.f32 %v271, 0.0
    %v350 = vmax.f32 %v274, 0.0
    %v351 = vmax.f32 %v279, 0.0
    %v352 = vmax.f32 %v282, 0.0
    %v353 = vmax.f32 %v287, 0.0
    %v354 = vmax.f32 %v290, 0.0
    %v355 = vmax.f32 %v295, 0.0
    %v356 = vmax.f32 %v298, 0.0
    %v357 = vmax.f32 %v303, 0.0
    %v358 = vmax.f32 %v306, 0.0
    %v359 = vmax.f32 %v311, 0.0
    %v360 = vmax.f32 %v314, 0.0
    %v361 = vmax.f32 %v319, 0.0
    %v362 = vmax.f32 %v322, 0.0
    %v363 = vmax.f32 %v327, 0.0
    %v364 = vmax.f32 %v330, 0.0
    %v365 = vmax.f32 %v335, 0.0
    %v366 = vmax.f32 %v338, 0.0
    %v367 = vld [vmem:[%s1] sm:$0xff]
    %v368 = vld [vmem:[%s1 + $0x8] sm:$0xff]
    %v369 = vld [vmem:[%s1 + $0x10] sm:$0xff]
    %v370 = vld [vmem:[%s1 + $0x18] sm:$0xff]
    %v371 = vld [vmem:[%s1 + $0x20] sm:$0xff]
    %v372 = vld [vmem:[%s1 + $0x28] sm:$0xff]
    %v373 = vld [vmem:[%s1 + $0x30] sm:$0xff]
    %v374 = vld [vmem:[%s1 + $0x38] sm:$0xff]
    %v375 = vld [vmem:[%s1 + $0x40] sm:$0xff]
    %v376 = vld [vmem:[%s1 + $0x48] sm:$0xff]
    %v377 = vld [vmem:[%s1 + $0x50] sm:$0xff]
    %v378 = vld [vmem:[%s1 + $0x58] sm:$0xff]
    %v379 = vld [vmem:[%s1 + $0x60] sm:$0xff]
    %v380 = vld [vmem:[%s1 + $0x68] sm:$0xff]
    %v381 = vld [vmem:[%s1 + $0x70] sm:$0xff]
    %v382 = vld [vmem:[%s1 + $0x78] sm:$0xff]
    %v383 = vld [vmem:[%s1 + $0x80] sm:$0xff]
    %v384 = vld [vmem:[%s1 + $0x88] sm:$0xff]
    %v385 = vld [vmem:[%s1 + $0x90] sm:$0xff]
    %v386 = vld [vmem:[%s1 + $0x98] sm:$0xff]
    %v387 = vld [vmem:[%s1 + $0xa0] sm:$0xff]
    %v388 = vld [vmem:[%s1 + $0xa8] sm:$0xff]
    %v389 = vld [vmem:[%s1 + $0xb0] sm:$0xff]
    %v390 = vld [vmem:[%s1 + $0xb8] sm:$0xff]
    %v391 = vld [vmem:[%s1 + $0xc0] sm:$0xff]
    %v392 = vld [vmem:[%s1 + $0xc8] sm:$0xff]
    %394 = vset.pattern.permute.xlu0 0
    %395 = vperm.xlu0 %394, %v367
    %v396 = vpop.permute.xlu0 %395
    %399 = vset.pattern.permute.xlu0 0
    %400 = vperm.xlu0 %399, %v368
    %v401 = vpop.permute.xlu0 %400
    %404 = vset.pattern.permute.xlu0 0
    %405 = vperm.xlu0 %404, %v369
    %v406 = vpop.permute.xlu0 %405
    %409 = vset.pattern.permute.xlu0 0
    %410 = vperm.xlu0 %409, %v370
    %v411 = vpop.permute.xlu0 %410
    %414 = vset.pattern.permute.xlu0 0
    %415 = vperm.xlu0 %414, %v371
    %v416 = vpop.permute.xlu0 %415
    %419 = vset.pattern.permute.xlu0 0
    %420 = vperm.xlu0 %419, %v372
    %v421 = vpop.permute.xlu0 %420
    %424 = vset.pattern.permute.xlu0 0
    %425 = vperm.xlu0 %424, %v373
    %v426 = vpop.permute.xlu0 %425
    %429 = vset.pattern.permute.xlu0 0
    %430 = vperm.xlu0 %429, %v374
    %v431 = vpop.permute.xlu0 %430
    %434 = vset.pattern.permute.xlu0 0
    %435 = vperm.xlu0 %434, %v375
    %v436 = vpop.permute.xlu0 %435
    %439 = vset.pattern.permute.xlu0 0
    %440 = vperm.xlu0 %439, %v376
    %v441 = vpop.permute.xlu0 %440
    %444 = vset.pattern.permute.xlu0 0
    %445 = vperm.xlu0 %444, %v377
    %v446 = vpop.permute.xlu0 %445
    %449 = vset.pattern.permute.xlu0 0
    %450 = vperm.xlu0 %449, %v378
    %v451 = vpop.permute.xlu0 %450
    %454 = vset.pattern.permute.xlu0 0
    %455 = vperm.xlu0 %454, %v379
    %v456 = vpop.permute.xlu0 %455
    %459 = vset.pattern.permute.xlu0 0
    %460 = vperm.xlu0 %459, %v380
    %v461 = vpop.permute.xlu0 %460
    %464 = vset.pattern.permute.xlu0 0
    %465 = vperm.xlu0 %464, %v381
    %v466 = vpop.permute.xlu0 %465
    %469 = vset.pattern.permute.xlu0 0
    %470 = vperm.xlu0 %469, %v382
    %v471 = vpop.permute.xlu0 %470
    %474 = vset.pattern.permute.xlu0 0
    %475 = vperm.xlu0 %474, %v383
    %v476 = vpop.permute.xlu0 %475
    %479 = vset.pattern.permute.xlu0 0
    %480 = vperm.xlu0 %479, %v384
    %v481 = vpop.permute.xlu0 %480
    %484 = vset.pattern.permute.xlu0 0
    %485 = vperm.xlu0 %484, %v385
    %v486 = vpop.permute.xlu0 %485
    %489 = vset.pattern.permute.xlu0 0
    %490 = vperm.xlu0 %489, %v386
    %v491 = vpop.permute.xlu0 %490
    %494 = vset.pattern.permute.xlu0 0
    %495 = vperm.xlu0 %494, %v387
    %v496 = vpop.permute.xlu0 %495
    %499 = vset.pattern.permute.xlu0 0
    %500 = vperm.xlu0 %499, %v388
    %v501 = vpop.permute.xlu0 %500
    %504 = vset.pattern.permute.xlu0 0
    %505 = vperm.xlu0 %504, %v389
    %v506 = vpop.permute.xlu0 %505
    %509 = vset.pattern.permute.xlu0 0
    %510 = vperm.xlu0 %509, %v390
    %v511 = vpop.permute.xlu0 %510
    %514 = vset.pattern.permute.xlu0 0
    %515 = vperm.xlu0 %514, %v391
    %v516 = vpop.permute.xlu0 %515
    %519 = vset.pattern.permute.xlu0 0
    %520 = vperm.xlu0 %519, %v392
    %v521 = vpop.permute.xlu0 %520
    %v523 = vmul.f32 %v341, %v396
    %v524 = vmul.f32 %v342, %v401
    %v525 = vmul.f32 %v343, %v406
    %v526 = vmul.f32 %v344, %v411
    %v527 = vmul.f32 %v345, %v416
    %v528 = vmul.f32 %v346, %v421
    %v529 = vmul.f32 %v347, %v426
    %v530 = vmul.f32 %v348, %v431
    %v531 = vmul.f32 %v349, %v436
    %v532 = vmul.f32 %v350, %v441
    %v533 = vmul.f32 %v351, %v446
    %v534 = vmul.f32 %v352, %v451
    %v535 = vmul.f32 %v353, %v456
    %v536 = vmul.f32 %v354, %v461
    %v537 = vmul.f32 %v355, %v466
    %v538 = vmul.f32 %v356, %v471
    %v539 = vmul.f32 %v357, %v476
    %v540 = vmul.f32 %v358, %v481
    %v541 = vmul.f32 %v359, %v486
    %v542 = vmul.f32 %v360, %v491
    %v543 = vmul.f32 %v361, %v496
    %v544 = vmul.f32 %v362, %v501
    %v545 = vmul.f32 %v363, %v506
    %v546 = vmul.f32 %v364, %v511
    %v547 = vmul.f32 %v365, %v516
    %v548 = vmul.f32 %v366, %v521
    %549 = vst [vmem:[#allocation2] sm:$0xf] 0
    %vm550 = vcmask 1041408
    %vm551 = vsmask.f32 1280
    %vm552 = vmand %vm550, %vm551
    %v553 = vld [vmem:[#allocation2 + $0x4] sm:$0x3]
    %v554 = vsel %vm552, 0, %v553
    %555 = vst [vmem:[#allocation2 + $0x4] sm:$0x3] %v554
    %v556 = vpack.c.bf16 %v524, %v523
    %v557 = vpack.c.bf16 %v526, %v525
    %v558 = vpack.c.bf16 %v528, %v527
    %v559 = vpack.c.bf16 %v530, %v529
    %v560 = vpack.c.bf16 %v532, %v531
    %v561 = vpack.c.bf16 %v534, %v533
    %v562 = vpack.c.bf16 %v536, %v535
    %v563 = vpack.c.bf16 %v538, %v537
    %v564 = vpack.c.bf16 %v540, %v539
    %v565 = vpack.c.bf16 %v542, %v541
    %v566 = vpack.c.bf16 %v544, %v543
    %v567 = vpack.c.bf16 %v546, %v545
    %v568 = vpack.c.bf16 %v548, %v547
    %v582 = vunpack.c.l.b16 %v556
    %v583 = vunpack.c.h.b16 %v556
    %v584 = vunpack.c.l.b16 %v557
    %v585 = vunpack.c.h.b16 %v557
    %v586 = vunpack.c.l.b16 %v558
    %v587 = vunpack.c.h.b16 %v558
    %v588 = vunpack.c.l.b16 %v559
    %v589 = vunpack.c.h.b16 %v559
    %v590 = vunpack.c.l.b16 %v560
    %v591 = vunpack.c.h.b16 %v560
    %v592 = vunpack.c.l.b16 %v561
    %v593 = vunpack.c.h.b16 %v561
    %v594 = vunpack.c.l.b16 %v562
    %v595 = vunpack.c.h.b16 %v562
    %v596 = vunpack.c.l.b16 %v563
    %v597 = vunpack.c.h.b16 %v563
    %v598 = vunpack.c.l.b16 %v564
    %v599 = vunpack.c.h.b16 %v564
    %v600 = vunpack.c.l.b16 %v565
    %v601 = vunpack.c.h.b16 %v565
    %v602 = vunpack.c.l.b16 %v566
    %v603 = vunpack.c.h.b16 %v566
    %v604 = vunpack.c.l.b16 %v567
    %v605 = vunpack.c.h.b16 %v567
    %v606 = vunpack.c.l.b16 %v568
    %v607 = vunpack.c.h.b16 %v568
    %v608 = vpack.c.b16 %v582, %v582
    %v609 = vpack.c.b16 %v583, %v583
    %v610 = vpack.c.b16 %v584, %v584
    %v611 = vpack.c.b16 %v585, %v585
    %v612 = vpack.c.b16 %v586, %v586
    %v613 = vpack.c.b16 %v587, %v587
    %v614 = vpack.c.b16 %v588, %v588
    %v615 = vpack.c.b16 %v589, %v589
    %v616 = vpack.c.b16 %v590, %v590
    %v617 = vpack.c.b16 %v591, %v591
    %v618 = vpack.c.b16 %v592, %v592
    %v619 = vpack.c.b16 %v593, %v593
    %v620 = vpack.c.b16 %v594, %v594
    %v621 = vpack.c.b16 %v595, %v595
    %v622 = vpack.c.b16 %v596, %v596
    %v623 = vpack.c.b16 %v597, %v597
    %v624 = vpack.c.b16 %v598, %v598
    %v625 = vpack.c.b16 %v599, %v599
    %v626 = vpack.c.b16 %v600, %v600
    %v627 = vpack.c.b16 %v601, %v601
    %v628 = vpack.c.b16 %v602, %v602
    %v629 = vpack.c.b16 %v603, %v603
    %v630 = vpack.c.b16 %v604, %v604
    %v631 = vpack.c.b16 %v605, %v605
    %v632 = vpack.c.b16 %v606, %v606
    %v633 = vpack.c.b16 %v607, %v607
    %vm634 = vsmask.f32 5392
    %vm635 = vmor %vm551, %vm634
    %v637 = vshrl.u32 %v608, 16
    %v639 = vrot.slane %v637, 6
    %v640 = vshll.u32 %v608, 16
    %v642 = vrot.slane %v640, 7
    %v643 = vor.u32 %v639, %v642
    %v644 = vrot.slane %v643, 4
    %v646 = vshrl.u32 %v609, 16
    %v648 = vrot.slane %v646, 6
    %v649 = vshll.u32 %v609, 16
    %v651 = vrot.slane %v649, 7
    %v652 = vor.u32 %v648, %v651
    %v653 = vsel %vm635, %v644, %v652
    %v654 = vrot.slane %v652, 4
    %v656 = vshrl.u32 %v610, 16
    %v658 = vrot.slane %v656, 6
    %v659 = vshll.u32 %v610, 16
    %v661 = vrot.slane %v659, 7
    %v662 = vor.u32 %v658, %v661
    %v663 = vsel %vm635, %v654, %v662
    %v664 = vrot.slane %v662, 4
    %v666 = vshrl.u32 %v611, 16
    %v668 = vrot.slane %v666, 6
    %v669 = vshll.u32 %v611, 16
    %v671 = vrot.slane %v669, 7
    %v672 = vor.u32 %v668, %v671
    %v673 = vsel %vm635, %v664, %v672
    %v674 = vrot.slane %v672, 4
    %v676 = vshrl.u32 %v612, 16
    %v678 = vrot.slane %v676, 6
    %v679 = vshll.u32 %v612, 16
    %v681 = vrot.slane %v679, 7
    %v682 = vor.u32 %v678, %v681
    %v683 = vsel %vm635, %v674, %v682
    %v684 = vrot.slane %v682, 4
    %v686 = vshrl.u32 %v613, 16
    %v688 = vrot.slane %v686, 6
    %v689 = vshll.u32 %v613, 16
    %v691 = vrot.slane %v689, 7
    %v692 = vor.u32 %v688, %v691
    %v693 = vsel %vm635, %v684, %v692
    %v694 = vrot.slane %v692, 4
    %v696 = vshrl.u32 %v614, 16
    %v698 = vrot.slane %v696, 6
    %v699 = vshll.u32 %v614, 16
    %v701 = vrot.slane %v699, 7
    %v702 = vor.u32 %v698, %v701
    %v703 = vsel %vm635, %v694, %v702
    %v704 = vrot.slane %v702, 4
    %v706 = vshrl.u32 %v615, 16
    %v708 = vrot.slane %v706, 6
    %v709 = vshll.u32 %v615, 16
    %v711 = vrot.slane %v709, 7
    %v712 = vor.u32 %v708, %v711
    %v713 = vsel %vm635, %v704, %v712
    %v714 = vrot.slane %v712, 4
    %v716 = vshrl.u32 %v616, 16
    %v718 = vrot.slane %v716, 6
    %v719 = vshll.u32 %v616, 16
    %v721 = vrot.slane %v719, 7
    %v722 = vor.u32 %v718, %v721
    %v723 = vsel %vm635, %v714, %v722
    %v724 = vrot.slane %v722, 4
    %v726 = vshrl.u32 %v617, 16
    %v728 = vrot.slane %v726, 6
    %v729 = vshll.u32 %v617, 16
    %v731 = vrot.slane %v729, 7
    %v732 = vor.u32 %v728, %v731
    %v733 = vsel %vm635, %v724, %v732
    %v734 = vrot.slane %v732, 4
    %v736 = vshrl.u32 %v618, 16
    %v738 = vrot.slane %v736, 6
    %v739 = vshll.u32 %v618, 16
    %v741 = vrot.slane %v739, 7
    %v742 = vor.u32 %v738, %v741
    %v743 = vsel %vm635, %v734, %v742
    %v744 = vrot.slane %v742, 4
    %v746 = vshrl.u32 %v619, 16
    %v748 = vrot.slane %v746, 6
    %v749 = vshll.u32 %v619, 16
    %v751 = vrot.slane %v749, 7
    %v752 = vor.u32 %v748, %v751
    %v753 = vsel %vm635, %v744, %v752
    %v754 = vrot.slane %v752, 4
    %v756 = vshrl.u32 %v620, 16
    %v758 = vrot.slane %v756, 6
    %v759 = vshll.u32 %v620, 16
    %v761 = vrot.slane %v759, 7
    %v762 = vor.u32 %v758, %v761
    %v763 = vsel %vm635, %v754, %v762
    %v764 = vrot.slane %v762, 4
    %v766 = vshrl.u32 %v621, 16
    %v768 = vrot.slane %v766, 6
    %v769 = vshll.u32 %v621, 16
    %v771 = vrot.slane %v769, 7
    %v772 = vor.u32 %v768, %v771
    %v773 = vsel %vm635, %v764, %v772
    %v774 = vrot.slane %v772, 4
    %v776 = vshrl.u32 %v622, 16
    %v778 = vrot.slane %v776, 6
    %v779 = vshll.u32 %v622, 16
    %v781 = vrot.slane %v779, 7
    %v782 = vor.u32 %v778, %v781
    %v783 = vsel %vm635, %v774, %v782
    %v784 = vrot.slane %v782, 4
    %v786 = vshrl.u32 %v623, 16
    %v788 = vrot.slane %v786, 6
    %v789 = vshll.u32 %v623, 16
    %v791 = vrot.slane %v789, 7
    %v792 = vor.u32 %v788, %v791
    %v793 = vsel %vm635, %v784, %v792
    %v794 = vrot.slane %v792, 4
    %v796 = vshrl.u32 %v624, 16
    %v798 = vrot.slane %v796, 6
    %v799 = vshll.u32 %v624, 16
    %v801 = vrot.slane %v799, 7
    %v802 = vor.u32 %v798, %v801
    %v803 = vsel %vm635, %v794, %v802
    %v804 = vrot.slane %v802, 4
    %v806 = vshrl.u32 %v625, 16
    %v808 = vrot.slane %v806, 6
    %v809 = vshll.u32 %v625, 16
    %v811 = vrot.slane %v809, 7
    %v812 = vor.u32 %v808, %v811
    %v813 = vsel %vm635, %v804, %v812
    %v814 = vrot.slane %v812, 4
    %v816 = vshrl.u32 %v626, 16
    %v818 = vrot.slane %v816, 6
    %v819 = vshll.u32 %v626, 16
    %v821 = vrot.slane %v819, 7
    %v822 = vor.u32 %v818, %v821
    %v823 = vsel %vm635, %v814, %v822
    %v824 = vrot.slane %v822, 4
    %v826 = vshrl.u32 %v627, 16
    %v828 = vrot.slane %v826, 6
    %v829 = vshll.u32 %v627, 16
    %v831 = vrot.slane %v829, 7
    %v832 = vor.u32 %v828, %v831
    %v833 = vsel %vm635, %v824, %v832
    %v834 = vrot.slane %v832, 4
    %v836 = vshrl.u32 %v628, 16
    %v838 = vrot.slane %v836, 6
    %v839 = vshll.u32 %v628, 16
    %v841 = vrot.slane %v839, 7
    %v842 = vor.u32 %v838, %v841
    %v843 = vsel %vm635, %v834, %v842
    %v844 = vrot.slane %v842, 4
    %v846 = vshrl.u32 %v629, 16
    %v848 = vrot.slane %v846, 6
    %v849 = vshll.u32 %v629, 16
    %v851 = vrot.slane %v849, 7
    %v852 = vor.u32 %v848, %v851
    %v853 = vsel %vm635, %v844, %v852
    %v854 = vrot.slane %v852, 4
    %v856 = vshrl.u32 %v630, 16
    %v858 = vrot.slane %v856, 6
    %v859 = vshll.u32 %v630, 16
    %v861 = vrot.slane %v859, 7
    %v862 = vor.u32 %v858, %v861
    %v863 = vsel %vm635, %v854, %v862
    %v864 = vrot.slane %v862, 4
    %v866 = vshrl.u32 %v631, 16
    %v868 = vrot.slane %v866, 6
    %v869 = vshll.u32 %v631, 16
    %v871 = vrot.slane %v869, 7
    %v872 = vor.u32 %v868, %v871
    %v873 = vsel %vm635, %v864, %v872
    %v874 = vrot.slane %v872, 4
    %v876 = vshrl.u32 %v632, 16
    %v878 = vrot.slane %v876, 6
    %v879 = vshll.u32 %v632, 16
    %v881 = vrot.slane %v879, 7
    %v882 = vor.u32 %v878, %v881
    %v883 = vsel %vm635, %v874, %v882
    %v884 = vrot.slane %v882, 4
    %v886 = vshrl.u32 %v633, 16
    %v888 = vrot.slane %v886, 6
    %v889 = vshll.u32 %v633, 16
    %v891 = vrot.slane %v889, 7
    %v892 = vor.u32 %v888, %v891
    %v893 = vsel %vm635, %v884, %v892
    %v894 = vrot.slane %v892, 4
    %vm922 = vcmask 1043457
    %vm923 = vsmask.f32 7942
    %vm924 = vmand %vm922, %vm923
    %v925 = vld [vmem:[#allocation2 + $0x4] sm:$0xe]
    %v926 = vsel %vm924, %v643, %v925
    %927 = vst [vmem:[#allocation2 + $0x4] sm:$0xe] %v926
    %928 = vst [vmem:[#allocation2 + $0x8] sm:$0xf] %v653
    %929 = vst [vmem:[#allocation2 + $0xc] sm:$0xf] %v663
    %930 = vst [vmem:[#allocation2 + $0x10] sm:$0xf] %v673
    %931 = vst [vmem:[#allocation2 + $0x14] sm:$0xf] %v683
    %932 = vst [vmem:[#allocation2 + $0x18] sm:$0xf] %v693
    %933 = vst [vmem:[#allocation2 + $0x1c] sm:$0xf] %v703
    %934 = vst [vmem:[#allocation2 + $0x20] sm:$0xf] %v713
    %935 = vst [vmem:[#allocation2 + $0x24] sm:$0xf] %v723
    %936 = vst [vmem:[#allocation2 + $0x28] sm:$0xf] %v733
    %937 = vst [vmem:[#allocation2 + $0x2c] sm:$0xf] %v743
    %938 = vst [vmem:[#allocation2 + $0x30] sm:$0xf] %v753
    %939 = vst [vmem:[#allocation2 + $0x34] sm:$0xf] %v763
    %940 = vst [vmem:[#allocation2 + $0x38] sm:$0xf] %v773
    %941 = vst [vmem:[#allocation2 + $0x3c] sm:$0xf] %v783
    %942 = vst [vmem:[#allocation2 + $0x40] sm:$0xf] %v793
    %943 = vst [vmem:[#allocation2 + $0x44] sm:$0xf] %v803
    %944 = vst [vmem:[#allocation2 + $0x48] sm:$0xf] %v813
    %945 = vst [vmem:[#allocation2 + $0x4c] sm:$0xf] %v823
    %946 = vst [vmem:[#allocation2 + $0x50] sm:$0xf] %v833
    %947 = vst [vmem:[#allocation2 + $0x54] sm:$0xf] %v843
    %948 = vst [vmem:[#allocation2 + $0x58] sm:$0xf] %v853
    %949 = vst [vmem:[#allocation2 + $0x5c] sm:$0xf] %v863
    %950 = vst [vmem:[#allocation2 + $0x60] sm:$0xf] %v873
    %951 = vst [vmem:[#allocation2 + $0x64] sm:$0xf] %v883
    %952 = vst [vmem:[#allocation2 + $0x68] sm:$0xf] %v893
    %v953 = vld [vmem:[#allocation2 + $0x6c] sm:$0x3]
    %v954 = vsel %vm552, %v894, %v953
    %955 = vst [vmem:[#allocation2 + $0x6c] sm:$0x3] %v954
    %v956 = vld [vmem:[%s5] sm:$0x1]
    %v958 = vlaneseq
    %v959 = vshrl.u32 %v958, 7
    %v960 = vsub.s32 0, %v959
    %v961 = vrot.slane %v956, %v960
    %v963 = vld [vmem:[#allocation2] sm:$0xf]
    %v964 = vld [vmem:[#allocation2 + $0x4] sm:$0xf]
    %v965 = vld [vmem:[#allocation2 + $0x8] sm:$0xf]
    %v966 = vld [vmem:[#allocation2 + $0xc] sm:$0xf]
    %v967 = vld [vmem:[#allocation2 + $0x10] sm:$0xf]
    %v968 = vld [vmem:[#allocation2 + $0x14] sm:$0xf]
    %v969 = vld [vmem:[#allocation2 + $0x18] sm:$0xf]
    %v970 = vld [vmem:[#allocation2 + $0x1c] sm:$0xf]
    %v971 = vld [vmem:[#allocation2 + $0x20] sm:$0xf]
    %v972 = vld [vmem:[#allocation2 + $0x24] sm:$0xf]
    %v973 = vld [vmem:[#allocation2 + $0x28] sm:$0xf]
    %v974 = vld [vmem:[#allocation2 + $0x2c] sm:$0xf]
    %v975 = vld [vmem:[#allocation2 + $0x30] sm:$0xf]
    %v976 = vld [vmem:[#allocation2 + $0x34] sm:$0xf]
    %v977 = vld [vmem:[#allocation2 + $0x38] sm:$0xf]
    %v978 = vld [vmem:[#allocation2 + $0x3c] sm:$0xf]
    %v979 = vld [vmem:[#allocation2 + $0x40] sm:$0xf]
    %v980 = vld [vmem:[#allocation2 + $0x44] sm:$0xf]
    %v981 = vld [vmem:[#allocation2 + $0x48] sm:$0xf]
    %v982 = vld [vmem:[#allocation2 + $0x4c] sm:$0xf]
    %v983 = vld [vmem:[#allocation2 + $0x50] sm:$0xf]
    %v984 = vld [vmem:[#allocation2 + $0x54] sm:$0xf]
    %v985 = vld [vmem:[#allocation2 + $0x58] sm:$0xf]
    %v986 = vld [vmem:[#allocation2 + $0x5c] sm:$0xf]
    %v987 = vld [vmem:[#allocation2 + $0x60] sm:$0xf]
    %v988 = vld [vmem:[#allocation2 + $0x64] sm:$0xf]
    %v989 = vld [vmem:[#allocation3] sm:$0xf]
    %v990 = vld [vmem:[#allocation3 + $0x4] sm:$0xf]
    %v991 = vld [vmem:[#allocation3 + $0x8] sm:$0xf]
    %v992 = vld [vmem:[#allocation3 + $0xc] sm:$0xf]
    %v993 = vld [vmem:[#allocation3 + $0x10] sm:$0xf]
    %v994 = vld [vmem:[#allocation3 + $0x14] sm:$0xf]
    %v995 = vld [vmem:[#allocation3 + $0x18] sm:$0xf]
    %v996 = vld [vmem:[#allocation3 + $0x1c] sm:$0xf]
    %v997 = vld [vmem:[#allocation3 + $0x20] sm:$0xf]
    %v998 = vld [vmem:[#allocation3 + $0x24] sm:$0xf]
    %v999 = vld [vmem:[#allocation3 + $0x28] sm:$0xf]
    %v1000 = vld [vmem:[#allocation3 + $0x2c] sm:$0xf]
    %v1001 = vld [vmem:[#allocation3 + $0x30] sm:$0xf]
    %v1002 = vld [vmem:[#allocation3 + $0x34] sm:$0xf]
    %v1003 = vld [vmem:[#allocation3 + $0x38] sm:$0xf]
    %v1004 = vld [vmem:[#allocation3 + $0x3c] sm:$0xf]
    %v1031 = vunpack.c.l.b16 %v963
    %v1032 = vunpack.c.l.b16 %v964
    %v1033 = vunpack.c.l.b16 %v965
    %v1034 = vunpack.c.l.b16 %v966
    %v1035 = vunpack.c.l.b16 %v967
    %v1036 = vunpack.c.l.b16 %v968
    %v1037 = vunpack.c.l.b16 %v969
    %v1038 = vunpack.c.l.b16 %v970
    %v1039 = vunpack.c.l.b16 %v971
    %v1040 = vunpack.c.l.b16 %v972
    %v1041 = vunpack.c.l.b16 %v973
    %v1042 = vunpack.c.l.b16 %v974
    %v1043 = vunpack.c.l.b16 %v975
    %v1044 = vunpack.c.l.b16 %v976
    %v1045 = vunpack.c.l.b16 %v977
    %v1046 = vunpack.c.l.b16 %v978
    %v1047 = vunpack.c.l.b16 %v979
    %v1048 = vunpack.c.l.b16 %v980
    %v1049 = vunpack.c.l.b16 %v981
    %v1050 = vunpack.c.l.b16 %v982
    %v1051 = vunpack.c.l.b16 %v983
    %v1052 = vunpack.c.l.b16 %v984
    %v1053 = vunpack.c.l.b16 %v985
    %v1054 = vunpack.c.l.b16 %v986
    %v1055 = vunpack.c.l.b16 %v987
    %v1056 = vunpack.c.l.b16 %v988
    %v1057 = vpack.c.b16 %v1032, %v1031
    %v1058 = vpack.c.b16 %v1034, %v1033
    %v1059 = vpack.c.b16 %v1036, %v1035
    %v1060 = vpack.c.b16 %v1038, %v1037
    %v1061 = vpack.c.b16 %v1040, %v1039
    %v1062 = vpack.c.b16 %v1042, %v1041
    %v1063 = vpack.c.b16 %v1044, %v1043
    %v1064 = vpack.c.b16 %v1046, %v1045
    %v1065 = vpack.c.b16 %v1048, %v1047
    %v1066 = vpack.c.b16 %v1050, %v1049
    %v1067 = vpack.c.b16 %v1052, %v1051
    %v1068 = vpack.c.b16 %v1054, %v1053
    %v1069 = vpack.c.b16 %v1056, %v1055
    %v1099 = vunpack.c.l.b16 %v989
    %v1100 = vunpack.c.l.b16 %v990
    %v1101 = vunpack.c.l.b16 %v991
    %v1102 = vunpack.c.l.b16 %v992
    %v1103 = vunpack.c.l.b16 %v993
    %v1104 = vunpack.c.l.b16 %v994
    %v1105 = vunpack.c.l.b16 %v995
    %v1106 = vunpack.c.l.b16 %v996
    %v1107 = vunpack.c.l.b16 %v997
    %v1108 = vunpack.c.l.b16 %v998
    %v1109 = vunpack.c.l.b16 %v999
    %v1110 = vunpack.c.l.b16 %v1000
    %v1111 = vunpack.c.l.b16 %v1001
    %v1112 = vunpack.c.l.b16 %v1002
    %v1113 = vunpack.c.l.b16 %v1003
    %v1114 = vunpack.c.l.b16 %v1004
    %v1115 = vpack.c.b16 %v1100, %v1099
    %v1116 = vpack.c.b16 %v1102, %v1101
    %v1117 = vpack.c.b16 %v1104, %v1103
    %v1118 = vpack.c.b16 %v1106, %v1105
    %v1119 = vpack.c.b16 %v1108, %v1107
    %v1120 = vpack.c.b16 %v1110, %v1109
    %v1121 = vpack.c.b16 %v1112, %v1111
    %v1122 = vpack.c.b16 %v1114, %v1113
    %1131 = vmatprep.subr.bf16.mxu0 0
    %1132 = vmatpush1.bf16.msra.mxu0 %v1115
    %1133 = vmatprep.subr.bf16.mxu0 0
    %1134 = vmatpush1.bf16.msra.mxu0 %v1116
    %1135 = vmatprep.subr.bf16.mxu0 0
    %1136 = vmatpush1.bf16.msra.mxu0 %v1117
    %1137 = vmatprep.subr.bf16.mxu0 0
    %1138 = vmatpush1.bf16.msra.mxu0 %v1118
    %1139 = vmatprep.subr.bf16.mxu0 0
    %1140 = vmatpush1.bf16.msra.mxu0 %v1119
    %1141 = vmatprep.subr.bf16.mxu0 0
    %1142 = vmatpush1.bf16.msra.mxu0 %v1120
    %1143 = vmatprep.subr.bf16.mxu0 0
    %1144 = vmatpush1.bf16.msra.mxu0 %v1121
    %1145 = vmatprep.subr.bf16.mxu0 0
    %1146 = vmatpush1.bf16.msra.mxu0 %v1122
    %1147 = vmatprep.subr.bf16.mxu0 0
    %1148 = vmatpush1.bf16.msra.mxu0 0
    %1149 = vmatprep.subr.bf16.mxu0 0
    %1150 = vmatpush1.bf16.msra.mxu0 0
    %1151 = vmatprep.subr.bf16.mxu0 0
    %1152 = vmatpush1.bf16.msra.mxu0 0
    %1153 = vmatprep.subr.bf16.mxu0 0
    %1154 = vmatpush1.bf16.msra.mxu0 0
    %1155 = vmatprep.subr.bf16.mxu0 0
    %1156 = vmatpush1.bf16.msra.mxu0 0
    %1157 = vmatprep.subr.bf16.mxu0 0
    %1158 = vmatpush1.bf16.msra.mxu0 0
    %1159 = vmatprep.subr.bf16.mxu0 0
    %1160 = vmatpush1.bf16.msra.mxu0 0
    %1161 = vmatprep.subr.bf16.mxu0 0
    %1162 = vmatpush1.bf16.msra.mxu0 0
    %1163 = vmatprep.mubr.bf16.mxu0 0
    %1164 = vmatmul.mubr.bf16.gmra.mrb[0].mxu0 %v1057
    %v1165 = vpop.f32.mrb[0].mxu0
    %v1166 = vadd.f32 0.0, %v1165
    %v1167 = vpop.f32.mrb[0].mxu0
    %v1168 = vpop.f32.mrb[0].mxu0
    %v1169 = vadd.f32 0.0, %v1168
    %v1170 = vpop.f32.mrb[0].mxu0
    %1171 = vmatprep.mubr.bf16.mxu0 0
    %1172 = vmatmul.mubr.bf16.gmra.mrb[0].mxu0 %v1058
    %v1173 = vpop.f32.mrb[0].mxu0
    %v1174 = vadd.f32 0.0, %v1173
    %v1175 = vpop.f32.mrb[0].mxu0
    %v1176 = vpop.f32.mrb[0].mxu0
    %v1177 = vadd.f32 0.0, %v1176
    %v1178 = vpop.f32.mrb[0].mxu0
    %1179 = vmatprep.mubr.bf16.mxu0 0
    %1180 = vmatmul.mubr.bf16.gmra.mrb[0].mxu0 %v1059
    %v1181 = vpop.f32.mrb[0].mxu0
    %v1182 = vadd.f32 0.0, %v1181
    %v1183 = vpop.f32.mrb[0].mxu0
    %v1184 = vpop.f32.mrb[0].mxu0
    %v1185 = vadd.f32 0.0, %v1184
    %v1186 = vpop.f32.mrb[0].mxu0
    %1187 = vmatprep.mubr.bf16.mxu0 0
    %1188 = vmatmul.mubr.bf16.gmra.mrb[0].mxu0 %v1060
    %v1189 = vpop.f32.mrb[0].mxu0
    %v1190 = vadd.f32 0.0, %v1189
    %v1191 = vpop.f32.mrb[0].mxu0
    %v1192 = vpop.f32.mrb[0].mxu0
    %v1193 = vadd.f32 0.0, %v1192
    %v1194 = vpop.f32.mrb[0].mxu0
    %1195 = vmatprep.mubr.bf16.mxu0 0
    %1196 = vmatmul.mubr.bf16.gmra.mrb[0].mxu0 %v1061
    %v1197 = vpop.f32.mrb[0].mxu0
    %v1198 = vadd.f32 0.0, %v1197
    %v1199 = vpop.f32.mrb[0].mxu0
    %v1200 = vpop.f32.mrb[0].mxu0
    %v1201 = vadd.f32 0.0, %v1200
    %v1202 = vpop.f32.mrb[0].mxu0
    %1203 = vmatprep.mubr.bf16.mxu0 0
    %1204 = vmatmul.mubr.bf16.gmra.mrb[0].mxu0 %v1062
    %v1205 = vpop.f32.mrb[0].mxu0
    %v1206 = vadd.f32 0.0, %v1205
    %v1207 = vpop.f32.mrb[0].mxu0
    %v1208 = vpop.f32.mrb[0].mxu0
    %v1209 = vadd.f32 0.0, %v1208
    %v1210 = vpop.f32.mrb[0].mxu0
    %1211 = vmatprep.mubr.bf16.mxu0 0
    %1212 = vmatmul.mubr.bf16.gmra.mrb[0].mxu0 %v1063
    %v1213 = vpop.f32.mrb[0].mxu0
    %v1214 = vadd.f32 0.0, %v1213
    %v1215 = vpop.f32.mrb[0].mxu0
    %v1216 = vpop.f32.mrb[0].mxu0
    %v1217 = vadd.f32 0.0, %v1216
    %v1218 = vpop.f32.mrb[0].mxu0
    %1219 = vmatprep.mubr.bf16.mxu0 0
    %1220 = vmatmul.mubr.bf16.gmra.mrb[0].mxu0 %v1064
    %v1221 = vpop.f32.mrb[0].mxu0
    %v1222 = vadd.f32 0.0, %v1221
    %v1223 = vpop.f32.mrb[0].mxu0
    %v1224 = vpop.f32.mrb[0].mxu0
    %v1225 = vadd.f32 0.0, %v1224
    %v1226 = vpop.f32.mrb[0].mxu0
    %1227 = vmatprep.mubr.bf16.mxu0 0
    %1228 = vmatmul.mubr.bf16.gmra.mrb[0].mxu0 %v1065
    %v1229 = vpop.f32.mrb[0].mxu0
    %v1230 = vadd.f32 0.0, %v1229
    %v1231 = vpop.f32.mrb[0].mxu0
    %v1232 = vpop.f32.mrb[0].mxu0
    %v1233 = vadd.f32 0.0, %v1232
    %v1234 = vpop.f32.mrb[0].mxu0
    %1235 = vmatprep.mubr.bf16.mxu0 0
    %1236 = vmatmul.mubr.bf16.gmra.mrb[0].mxu0 %v1066
    %v1237 = vpop.f32.mrb[0].mxu0
    %v1238 = vadd.f32 0.0, %v1237
    %v1239 = vpop.f32.mrb[0].mxu0
    %v1240 = vpop.f32.mrb[0].mxu0
    %v1241 = vadd.f32 0.0, %v1240
    %v1242 = vpop.f32.mrb[0].mxu0
    %1243 = vmatprep.mubr.bf16.mxu0 0
    %1244 = vmatmul.mubr.bf16.gmra.mrb[0].mxu0 %v1067
    %v1245 = vpop.f32.mrb[0].mxu0
    %v1246 = vadd.f32 0.0, %v1245
    %v1247 = vpop.f32.mrb[0].mxu0
    %v1248 = vpop.f32.mrb[0].mxu0
    %v1249 = vadd.f32 0.0, %v1248
    %v1250 = vpop.f32.mrb[0].mxu0
    %1251 = vmatprep.mubr.bf16.mxu0 0
    %1252 = vmatmul.mubr.bf16.gmra.mrb[0].mxu0 %v1068
    %v1253 = vpop.f32.mrb[0].mxu0
    %v1254 = vadd.f32 0.0, %v1253
    %v1255 = vpop.f32.mrb[0].mxu0
    %v1256 = vpop.f32.mrb[0].mxu0
    %v1257 = vadd.f32 0.0, %v1256
    %v1258 = vpop.f32.mrb[0].mxu0
    %1259 = vmatprep.mubr.bf16.mxu0 0
    %1260 = vmatmul.mubr.bf16.gmra.mrb[0].mxu0 %v1069
    %v1261 = vpop.f32.mrb[0].mxu0
    %v1262 = vadd.f32 0.0, %v1261
    %v1263 = vpop.f32.mrb[0].mxu0
    %v1264 = vpop.f32.mrb[0].mxu0
    %v1265 = vadd.f32 0.0, %v1264
    %v1266 = vpop.f32.mrb[0].mxu0
    %1267 = vdwg.mxu0
    %v1268 = vadd.f32 %v961, %v1166
    %v1269 = vadd.f32 %v961, %v1169
    %v1270 = vadd.f32 %v961, %v1174
    %v1271 = vadd.f32 %v961, %v1177
    %v1272 = vadd.f32 %v961, %v1182
    %v1273 = vadd.f32 %v961, %v1185
    %v1274 = vadd.f32 %v961, %v1190
    %v1275 = vadd.f32 %v961, %v1193
    %v1276 = vadd.f32 %v961, %v1198
    %v1277 = vadd.f32 %v961, %v1201
    %v1278 = vadd.f32 %v961, %v1206
    %v1279 = vadd.f32 %v961, %v1209
    %v1280 = vadd.f32 %v961, %v1214
    %v1281 = vadd.f32 %v961, %v1217
    %v1282 = vadd.f32 %v961, %v1222
    %v1283 = vadd.f32 %v961, %v1225
    %v1284 = vadd.f32 %v961, %v1230
    %v1285 = vadd.f32 %v961, %v1233
    %v1286 = vadd.f32 %v961, %v1238
    %v1287 = vadd.f32 %v961, %v1241
    %v1288 = vadd.f32 %v961, %v1246
    %v1289 = vadd.f32 %v961, %v1249
    %v1290 = vadd.f32 %v961, %v1254
    %v1291 = vadd.f32 %v961, %v1257
    %v1292 = vadd.f32 %v961, %v1262
    %v1293 = vadd.f32 %v961, %v1265
    %v1294 = vld [vmem:[#allocation2] sm:$0xf]
    %v1295 = vld [vmem:[#allocation2 + $0x4] sm:$0xf]
    %v1296 = vld [vmem:[#allocation2 + $0x8] sm:$0xf]
    %v1297 = vld [vmem:[#allocation2 + $0xc] sm:$0xf]
    %v1298 = vld [vmem:[#allocation2 + $0x10] sm:$0xf]
    %v1299 = vld [vmem:[#allocation2 + $0x14] sm:$0xf]
    %v1300 = vld [vmem:[#allocation2 + $0x18] sm:$0xf]
    %v1301 = vld [vmem:[#allocation2 + $0x1c] sm:$0xf]
    %v1302 = vld [vmem:[#allocation2 + $0x20] sm:$0xf]
    %v1303 = vld [vmem:[#allocation2 + $0x24] sm:$0xf]
    %v1304 = vld [vmem:[#allocation2 + $0x28] sm:$0xf]
    %v1305 = vld [vmem:[#allocation2 + $0x2c] sm:$0xf]
    %v1306 = vld [vmem:[#allocation2 + $0x30] sm:$0xf]
    %v1307 = vld [vmem:[#allocation2 + $0x34] sm:$0xf]
    %v1308 = vld [vmem:[#allocation2 + $0x38] sm:$0xf]
    %v1309 = vld [vmem:[#allocation2 + $0x3c] sm:$0xf]
    %v1310 = vld [vmem:[#allocation2 + $0x40] sm:$0xf]
    %v1311 = vld [vmem:[#allocation2 + $0x44] sm:$0xf]
    %v1312 = vld [vmem:[#allocation2 + $0x48] sm:$0xf]
    %v1313 = vld [vmem:[#allocation2 + $0x4c] sm:$0xf]
    %v1314 = vld [vmem:[#allocation2 + $0x50] sm:$0xf]
    %v1315 = vld [vmem:[#allocation2 + $0x54] sm:$0xf]
    %v1316 = vld [vmem:[#allocation2 + $0x58] sm:$0xf]
    %v1317 = vld [vmem:[#allocation2 + $0x5c] sm:$0xf]
    %v1318 = vld [vmem:[#allocation2 + $0x60] sm:$0xf]
    %v1319 = vld [vmem:[#allocation2 + $0x64] sm:$0xf]
    %v1320 = vld [vmem:[#allocation2 + $0x68] sm:$0x1]
    %s1321 = scalar_lea.vmem [#allocation3], 64
    %v1322 = vld [vmem:[%s1321] sm:$0xf]
    %v1323 = vld [vmem:[%s1321 + $0x4] sm:$0xf]
    %v1324 = vld [vmem:[%s1321 + $0x8] sm:$0xf]
    %v1325 = vld [vmem:[%s1321 + $0xc] sm:$0xf]
    %v1326 = vld [vmem:[%s1321 + $0x10] sm:$0xf]
    %v1327 = vld [vmem:[%s1321 + $0x14] sm:$0xf]
    %v1328 = vld [vmem:[%s1321 + $0x18] sm:$0xf]
    %v1329 = vld [vmem:[%s1321 + $0x1c] sm:$0xf]
    %v1330 = vld [vmem:[%s1321 + $0x20] sm:$0xf]
    %v1331 = vld [vmem:[%s1321 + $0x24] sm:$0xf]
    %v1332 = vld [vmem:[%s1321 + $0x28] sm:$0xf]
    %v1333 = vld [vmem:[%s1321 + $0x2c] sm:$0xf]
    %v1334 = vld [vmem:[%s1321 + $0x30] sm:$0xf]
    %v1335 = vld [vmem:[%s1321 + $0x34] sm:$0xf]
    %v1336 = vld [vmem:[%s1321 + $0x38] sm:$0xf]
    %v1337 = vld [vmem:[%s1321 + $0x3c] sm:$0xf]
    %v1365 = vunpack.c.l.b16 %v1294
    %v1366 = vunpack.c.l.b16 %v1295
    %v1367 = vunpack.c.l.b16 %v1296
    %v1368 = vunpack.c.l.b16 %v1297
    %v1369 = vunpack.c.l.b16 %v1298
    %v1370 = vunpack.c.l.b16 %v1299
    %v1371 = vunpack.c.l.b16 %v1300
    %v1372 = vunpack.c.l.b16 %v1301
    %v1373 = vunpack.c.l.b16 %v1302
    %v1374 = vunpack.c.l.b16 %v1303
    %v1375 = vunpack.c.l.b16 %v1304
    %v1376 = vunpack.c.l.b16 %v1305
    %v1377 = vunpack.c.l.b16 %v1306
    %v1378 = vunpack.c.l.b16 %v1307
    %v1379 = vunpack.c.l.b16 %v1308
    %v1380 = vunpack.c.l.b16 %v1309
    %v1381 = vunpack.c.l.b16 %v1310
    %v1382 = vunpack.c.l.b16 %v1311
    %v1383 = vunpack.c.l.b16 %v1312
    %v1384 = vunpack.c.l.b16 %v1313
    %v1385 = vunpack.c.l.b16 %v1314
    %v1386 = vunpack.c.l.b16 %v1315
    %v1387 = vunpack.c.l.b16 %v1316
    %v1388 = vunpack.c.l.b16 %v1317
    %v1389 = vunpack.c.l.b16 %v1318
    %v1390 = vunpack.c.l.b16 %v1319
    %v1391 = vunpack.c.l.b16 %v1320
    %v1392 = vpack.c.b16 %v1366, %v1365
    %v1393 = vpack.c.b16 %v1368, %v1367
    %v1394 = vpack.c.b16 %v1370, %v1369
    %v1395 = vpack.c.b16 %v1372, %v1371
    %v1396 = vpack.c.b16 %v1374, %v1373
    %v1397 = vpack.c.b16 %v1376, %v1375
    %v1398 = vpack.c.b16 %v1378, %v1377
    %v1399 = vpack.c.b16 %v1380, %v1379
    %v1400 = vpack.c.b16 %v1382, %v1381
    %v1401 = vpack.c.b16 %v1384, %v1383
    %v1402 = vpack.c.b16 %v1386, %v1385
    %v1403 = vpack.c.b16 %v1388, %v1387
    %v1404 = vpack.c.b16 %v1390, %v1389
    %v1405 = vpack.c.b16 %v1391, %v1391
    %vm1406 = vsmask.f32 7424
    %v1408 = vshrl.u32 %v1392, 16
    %v1410 = vshll.u32 %v1392, 16
    %v1412 = vrot.slane %v1410, 1
    %v1413 = vor.u32 %v1408, %v1412
    %v1415 = vshll.u32 %v1393, 16
    %v1417 = vrot.slane %v1415, 1
    %v1418 = vsel %vm1406, %v1413, %v1417
    %v1419 = vshrl.u32 %v1393, 16
    %v1421 = vor.u32 %v1419, %v1417
    %v1423 = vshll.u32 %v1394, 16
    %v1425 = vrot.slane %v1423, 1
    %v1426 = vsel %vm1406, %v1421, %v1425
    %v1427 = vshrl.u32 %v1394, 16
    %v1429 = vor.u32 %v1427, %v1425
    %v1431 = vshll.u32 %v1395, 16
    %v1433 = vrot.slane %v1431, 1
    %v1434 = vsel %vm1406, %v1429, %v1433
    %v1435 = vshrl.u32 %v1395, 16
    %v1437 = vor.u32 %v1435, %v1433
    %v1439 = vshll.u32 %v1396, 16
    %v1441 = vrot.slane %v1439, 1
    %v1442 = vsel %vm1406, %v1437, %v1441
    %v1443 = vshrl.u32 %v1396, 16
    %v1445 = vor.u32 %v1443, %v1441
    %v1447 = vshll.u32 %v1397, 16
    %v1449 = vrot.slane %v1447, 1
    %v1450 = vsel %vm1406, %v1445, %v1449
    %v1451 = vshrl.u32 %v1397, 16
    %v1453 = vor.u32 %v1451, %v1449
    %v1455 = vshll.u32 %v1398, 16
    %v1457 = vrot.slane %v1455, 1
    %v1458 = vsel %vm1406, %v1453, %v1457
    %v1459 = vshrl.u32 %v1398, 16
    %v1461 = vor.u32 %v1459, %v1457
    %v1463 = vshll.u32 %v1399, 16
    %v1465 = vrot.slane %v1463, 1
    %v1466 = vsel %vm1406, %v1461, %v1465
    %v1467 = vshrl.u32 %v1399, 16
    %v1469 = vor.u32 %v1467, %v1465
    %v1471 = vshll.u32 %v1400, 16
    %v1473 = vrot.slane %v1471, 1
    %v1474 = vsel %vm1406, %v1469, %v1473
    %v1475 = vshrl.u32 %v1400, 16
    %v1477 = vor.u32 %v1475, %v1473
    %v1479 = vshll.u32 %v1401, 16
    %v1481 = vrot.slane %v1479, 1
    %v1482 = vsel %vm1406, %v1477, %v1481
    %v1483 = vshrl.u32 %v1401, 16
    %v1485 = vor.u32 %v1483, %v1481
    %v1487 = vshll.u32 %v1402, 16
    %v1489 = vrot.slane %v1487, 1
    %v1490 = vsel %vm1406, %v1485, %v1489
    %v1491 = vshrl.u32 %v1402, 16
    %v1493 = vor.u32 %v1491, %v1489
    %v1495 = vshll.u32 %v1403, 16
    %v1497 = vrot.slane %v1495, 1
    %v1498 = vsel %vm1406, %v1493, %v1497
    %v1499 = vshrl.u32 %v1403, 16
    %v1501 = vor.u32 %v1499, %v1497
    %v1503 = vshll.u32 %v1404, 16
    %v1505 = vrot.slane %v1503, 1
    %v1506 = vsel %vm1406, %v1501, %v1505
    %v1507 = vshrl.u32 %v1404, 16
    %v1509 = vor.u32 %v1507, %v1505
    %v1511 = vshll.u32 %v1405, 16
    %v1513 = vrot.slane %v1511, 1
    %v1514 = vsel %vm1406, %v1509, %v1513
    %v1544 = vunpack.c.l.b16 %v1322
    %v1545 = vunpack.c.l.b16 %v1323
    %v1546 = vunpack.c.l.b16 %v1324
    %v1547 = vunpack.c.l.b16 %v1325
    %v1548 = vunpack.c.l.b16 %v1326
    %v1549 = vunpack.c.l.b16 %v1327
    %v1550 = vunpack.c.l.b16 %v1328
    %v1551 = vunpack.c.l.b16 %v1329
    %v1552 = vunpack.c.l.b16 %v1330
    %v1553 = vunpack.c.l.b16 %v1331
    %v1554 = vunpack.c.l.b16 %v1332
    %v1555 = vunpack.c.l.b16 %v1333
    %v1556 = vunpack.c.l.b16 %v1334
    %v1557 = vunpack.c.l.b16 %v1335
    %v1558 = vunpack.c.l.b16 %v1336
    %v1559 = vunpack.c.l.b16 %v1337
    %v1560 = vpack.c.b16 %v1545, %v1544
    %v1561 = vpack.c.b16 %v1547, %v1546
    %v1562 = vpack.c.b16 %v1549, %v1548
    %v1563 = vpack.c.b16 %v1551, %v1550
    %v1564 = vpack.c.b16 %v1553, %v1552
    %v1565 = vpack.c.b16 %v1555, %v1554
    %v1566 = vpack.c.b16 %v1557, %v1556
    %v1567 = vpack.c.b16 %v1559, %v1558
    %1576 = vmatprep.subr.bf16.mxu0 0
    %1577 = vmatpush1.bf16.msra.mxu0 %v1560
    %1578 = vmatprep.subr.bf16.mxu0 0
    %1579 = vmatpush1.bf16.msra.mxu0 %v1561
    %1580 = vmatprep.subr.bf16.mxu0 0
    %1581 = vmatpush1.bf16.msra.mxu0 %v1562
    %1582 = vmatprep.subr.bf16.mxu0 0
    %1583 = vmatpush1.bf16.msra.mxu0 %v1563
    %1584 = vmatprep.subr.bf16.mxu0 0
    %1585 = vmatpush1.bf16.msra.mxu0 %v1564
    %1586 = vmatprep.subr.bf16.mxu0 0
    %1587 = vmatpush1.bf16.msra.mxu0 %v1565
    %1588 = vmatprep.subr.bf16.mxu0 0
    %1589 = vmatpush1.bf16.msra.mxu0 %v1566
    %1590 = vmatprep.subr.bf16.mxu0 0
    %1591 = vmatpush1.bf16.msra.mxu0 %v1567
    %1592 = vmatprep.subr.bf16.mxu0 0
    %1593 = vmatpush1.bf16.msra.mxu0 0
    %1594 = vmatprep.subr.bf16.mxu0 0
    %1595 = vmatpush1.bf16.msra.mxu0 0
    %1596 = vmatprep.subr.bf16.mxu0 0
    %1597 = vmatpush1.bf16.msra.mxu0 0
    %1598 = vmatprep.subr.bf16.mxu0 0
    %1599 = vmatpush1.bf16.msra.mxu0 0
    %1600 = vmatprep.subr.bf16.mxu0 0
    %1601 = vmatpush1.bf16.msra.mxu0 0
    %1602 = vmatprep.subr.bf16.mxu0 0
    %1603 = vmatpush1.bf16.msra.mxu0 0
    %1604 = vmatprep.subr.bf16.mxu0 0
    %1605 = vmatpush1.bf16.msra.mxu0 0
    %1606 = vmatprep.subr.bf16.mxu0 0
    %1607 = vmatpush1.bf16.msra.mxu0 0
    %1608 = vmatprep.mubr.bf16.mxu0 0
    %1609 = vmatmul.mubr.bf16.gmra.mrb[0].mxu0 %v1418
    %v1610 = vpop.f32.mrb[0].mxu0
    %v1611 = vadd.f32 0.0, %v1610
    %v1612 = vpop.f32.mrb[0].mxu0
    %v1613 = vpop.f32.mrb[0].mxu0
    %v1614 = vadd.f32 0.0, %v1613
    %v1615 = vpop.f32.mrb[0].mxu0
    %1616 = vmatprep.mubr.bf16.mxu0 0
    %1617 = vmatmul.mubr.bf16.gmra.mrb[0].mxu0 %v1426
    %v1618 = vpop.f32.mrb[0].mxu0
    %v1619 = vadd.f32 0.0, %v1618
    %v1620 = vpop.f32.mrb[0].mxu0
    %v1621 = vpop.f32.mrb[0].mxu0
    %v1622 = vadd.f32 0.0, %v1621
    %v1623 = vpop.f32.mrb[0].mxu0
    %1624 = vmatprep.mubr.bf16.mxu0 0
    %1625 = vmatmul.mubr.bf16.gmra.mrb[0].mxu0 %v1434
    %v1626 = vpop.f32.mrb[0].mxu0
    %v1627 = vadd.f32 0.0, %v1626
    %v1628 = vpop.f32.mrb[0].mxu0
    %v1629 = vpop.f32.mrb[0].mxu0
    %v1630 = vadd.f32 0.0, %v1629
    %v1631 = vpop.f32.mrb[0].mxu0
    %1632 = vmatprep.mubr.bf16.mxu0 0
    %1633 = vmatmul.mubr.bf16.gmra.mrb[0].mxu0 %v1442
    %v1634 = vpop.f32.mrb[0].mxu0
    %v1635 = vadd.f32 0.0, %v1634
    %v1636 = vpop.f32.mrb[0].mxu0
    %v1637 = vpop.f32.mrb[0].mxu0
    %v1638 = vadd.f32 0.0, %v1637
    %v1639 = vpop.f32.mrb[0].mxu0
    %1640 = vmatprep.mubr.bf16.mxu0 0
    %1641 = vmatmul.mubr.bf16.gmra.mrb[0].mxu0 %v1450
    %v1642 = vpop.f32.mrb[0].mxu0
    %v1643 = vadd.f32 0.0, %v1642
    %v1644 = vpop.f32.mrb[0].mxu0
    %v1645 = vpop.f32.mrb[0].mxu0
    %v1646 = vadd.f32 0.0, %v1645
    %v1647 = vpop.f32.mrb[0].mxu0
    %1648 = vmatprep.mubr.bf16.mxu0 0
    %1649 = vmatmul.mubr.bf16.gmra.mrb[0].mxu0 %v1458
    %v1650 = vpop.f32.mrb[0].mxu0
    %v1651 = vadd.f32 0.0, %v1650
    %v1652 = vpop.f32.mrb[0].mxu0
    %v1653 = vpop.f32.mrb[0].mxu0
    %v1654 = vadd.f32 0.0, %v1653
    %v1655 = vpop.f32.mrb[0].mxu0
    %1656 = vmatprep.mubr.bf16.mxu0 0
    %1657 = vmatmul.mubr.bf16.gmra.mrb[0].mxu0 %v1466
    %v1658 = vpop.f32.mrb[0].mxu0
    %v1659 = vadd.f32 0.0, %v1658
    %v1660 = vpop.f32.mrb[0].mxu0
    %v1661 = vpop.f32.mrb[0].mxu0
    %v1662 = vadd.f32 0.0, %v1661
    %v1663 = vpop.f32.mrb[0].mxu0
    %1664 = vmatprep.mubr.bf16.mxu0 0
    %1665 = vmatmul.mubr.bf16.gmra.mrb[0].mxu0 %v1474
    %v1666 = vpop.f32.mrb[0].mxu0
    %v1667 = vadd.f32 0.0, %v1666
    %v1668 = vpop.f32.mrb[0].mxu0
    %v1669 = vpop.f32.mrb[0].mxu0
    %v1670 = vadd.f32 0.0, %v1669
    %v1671 = vpop.f32.mrb[0].mxu0
    %1672 = vmatprep.mubr.bf16.mxu0 0
    %1673 = vmatmul.mubr.bf16.gmra.mrb[0].mxu0 %v1482
    %v1674 = vpop.f32.mrb[0].mxu0
    %v1675 = vadd.f32 0.0, %v1674
    %v1676 = vpop.f32.mrb[0].mxu0
    %v1677 = vpop.f32.mrb[0].mxu0
    %v1678 = vadd.f32 0.0, %v1677
    %v1679 = vpop.f32.mrb[0].mxu0
    %1680 = vmatprep.mubr.bf16.mxu0 0
    %1681 = vmatmul.mubr.bf16.gmra.mrb[0].mxu0 %v1490
    %v1682 = vpop.f32.mrb[0].mxu0
    %v1683 = vadd.f32 0.0, %v1682
    %v1684 = vpop.f32.mrb[0].mxu0
    %v1685 = vpop.f32.mrb[0].mxu0
    %v1686 = vadd.f32 0.0, %v1685
    %v1687 = vpop.f32.mrb[0].mxu0
    %1688 = vmatprep.mubr.bf16.mxu0 0
    %1689 = vmatmul.mubr.bf16.gmra.mrb[0].mxu0 %v1498
    %v1690 = vpop.f32.mrb[0].mxu0
    %v1691 = vadd.f32 0.0, %v1690
    %v1692 = vpop.f32.mrb[0].mxu0
    %v1693 = vpop.f32.mrb[0].mxu0
    %v1694 = vadd.f32 0.0, %v1693
    %v1695 = vpop.f32.mrb[0].mxu0
    %1696 = vmatprep.mubr.bf16.mxu0 0
    %1697 = vmatmul.mubr.bf16.gmra.mrb[0].mxu0 %v1506
    %v1698 = vpop.f32.mrb[0].mxu0
    %v1699 = vadd.f32 0.0, %v1698
    %v1700 = vpop.f32.mrb[0].mxu0
    %v1701 = vpop.f32.mrb[0].mxu0
    %v1702 = vadd.f32 0.0, %v1701
    %v1703 = vpop.f32.mrb[0].mxu0
    %1704 = vmatprep.mubr.bf16.mxu0 0
    %1705 = vmatmul.mubr.bf16.gmra.mrb[0].mxu0 %v1514
    %v1706 = vpop.f32.mrb[0].mxu0
    %v1707 = vadd.f32 0.0, %v1706
    %v1708 = vpop.f32.mrb[0].mxu0
    %v1709 = vpop.f32.mrb[0].mxu0
    %v1710 = vadd.f32 0.0, %v1709
    %v1711 = vpop.f32.mrb[0].mxu0
    %1712 = vdwg.mxu0
    %v1713 = vadd.f32 %v1268, %v1611
    %v1714 = vadd.f32 %v1269, %v1614
    %v1715 = vadd.f32 %v1270, %v1619
    %v1716 = vadd.f32 %v1271, %v1622
    %v1717 = vadd.f32 %v1272, %v1627
    %v1718 = vadd.f32 %v1273, %v1630
    %v1719 = vadd.f32 %v1274, %v1635
    %v1720 = vadd.f32 %v1275, %v1638
    %v1721 = vadd.f32 %v1276, %v1643
    %v1722 = vadd.f32 %v1277, %v1646
    %v1723 = vadd.f32 %v1278, %v1651
    %v1724 = vadd.f32 %v1279, %v1654
    %v1725 = vadd.f32 %v1280, %v1659
    %v1726 = vadd.f32 %v1281, %v1662
    %v1727 = vadd.f32 %v1282, %v1667
    %v1728 = vadd.f32 %v1283, %v1670
    %v1729 = vadd.f32 %v1284, %v1675
    %v1730 = vadd.f32 %v1285, %v1678
    %v1731 = vadd.f32 %v1286, %v1683
    %v1732 = vadd.f32 %v1287, %v1686
    %v1733 = vadd.f32 %v1288, %v1691
    %v1734 = vadd.f32 %v1289, %v1694
    %v1735 = vadd.f32 %v1290, %v1699
    %v1736 = vadd.f32 %v1291, %v1702
    %v1737 = vadd.f32 %v1292, %v1707
    %v1738 = vadd.f32 %v1293, %v1710
    %v1739 = vld [vmem:[#allocation2] sm:$0xe]
    %s1740 = scalar_lea.vmem [#allocation3], 128
    %v1741 = vld [vmem:[%s1740] sm:$0xf]
    %v1742 = vld [vmem:[%s1740 + $0x4] sm:$0xf]
    %v1743 = vld [vmem:[%s1740 + $0x8] sm:$0xf]
    %v1744 = vld [vmem:[%s1740 + $0xc] sm:$0xf]
    %v1745 = vld [vmem:[%s1740 + $0x10] sm:$0xf]
    %v1746 = vld [vmem:[%s1740 + $0x14] sm:$0xf]
    %v1747 = vld [vmem:[%s1740 + $0x18] sm:$0xf]
    %v1748 = vld [vmem:[%s1740 + $0x1c] sm:$0xf]
    %v1749 = vld [vmem:[%s1740 + $0x20] sm:$0xf]
    %v1750 = vld [vmem:[%s1740 + $0x24] sm:$0xf]
    %v1751 = vld [vmem:[%s1740 + $0x28] sm:$0xf]
    %v1752 = vld [vmem:[%s1740 + $0x2c] sm:$0xf]
    %v1753 = vld [vmem:[%s1740 + $0x30] sm:$0xf]
    %v1754 = vld [vmem:[%s1740 + $0x34] sm:$0xf]
    %v1755 = vld [vmem:[%s1740 + $0x38] sm:$0xf]
    %v1756 = vld [vmem:[%s1740 + $0x3c] sm:$0xf]
    %v1758 = vunpack.c.l.b16 %v1739
    %v1759 = vpack.c.b16 %v1366, %v1758
    %vm1760 = vcmask 1046528
    %v1761 = vrot.slane %v1759, 1
    %v1762 = vrot.slane %v1393, 1
    %v1763 = vsel %vm1760, %v1761, %v1762
    %v1764 = vrot.slane %v1394, 1
    %v1765 = vsel %vm1760, %v1762, %v1764
    %v1766 = vrot.slane %v1395, 1
    %v1767 = vsel %vm1760, %v1764, %v1766
    %v1768 = vrot.slane %v1396, 1
    %v1769 = vsel %vm1760, %v1766, %v1768
    %v1770 = vrot.slane %v1397, 1
    %v1771 = vsel %vm1760, %v1768, %v1770
    %v1772 = vrot.slane %v1398, 1
    %v1773 = vsel %vm1760, %v1770, %v1772
    %v1774 = vrot.slane %v1399, 1
    %v1775 = vsel %vm1760, %v1772, %v1774
    %v1776 = vrot.slane %v1400, 1
    %v1777 = vsel %vm1760, %v1774, %v1776
    %v1778 = vrot.slane %v1401, 1
    %v1779 = vsel %vm1760, %v1776, %v1778
    %v1780 = vrot.slane %v1402, 1
    %v1781 = vsel %vm1760, %v1778, %v1780
    %v1782 = vrot.slane %v1403, 1
    %v1783 = vsel %vm1760, %v1780, %v1782
    %v1784 = vrot.slane %v1404, 1
    %v1785 = vsel %vm1760, %v1782, %v1784
    %v1786 = vrot.slane %v1405, 1
    %v1787 = vsel %vm1760, %v1784, %v1786
    %v1817 = vunpack.c.l.b16 %v1741
    %v1818 = vunpack.c.l.b16 %v1742
    %v1819 = vunpack.c.l.b16 %v1743
    %v1820 = vunpack.c.l.b16 %v1744
    %v1821 = vunpack.c.l.b16 %v1745
    %v1822 = vunpack.c.l.b16 %v1746
    %v1823 = vunpack.c.l.b16 %v1747
    %v1824 = vunpack.c.l.b16 %v1748
    %v1825 = vunpack.c.l.b16 %v1749
    %v1826 = vunpack.c.l.b16 %v1750
    %v1827 = vunpack.c.l.b16 %v1751
    %v1828 = vunpack.c.l.b16 %v1752
    %v1829 = vunpack.c.l.b16 %v1753
    %v1830 = vunpack.c.l.b16 %v1754
    %v1831 = vunpack.c.l.b16 %v1755
    %v1832 = vunpack.c.l.b16 %v1756
    %v1833 = vpack.c.b16 %v1818, %v1817
    %v1834 = vpack.c.b16 %v1820, %v1819
    %v1835 = vpack.c.b16 %v1822, %v1821
    %v1836 = vpack.c.b16 %v1824, %v1823
    %v1837 = vpack.c.b16 %v1826, %v1825
    %v1838 = vpack.c.b16 %v1828, %v1827
    %v1839 = vpack.c.b16 %v1830, %v1829
    %v1840 = vpack.c.b16 %v1832, %v1831
    %1849 = vmatprep.subr.bf16.mxu0 0
    %1850 = vmatpush1.bf16.msra.mxu0 %v1833
    %1851 = vmatprep.subr.bf16.mxu0 0
    %1852 = vmatpush1.bf16.msra.mxu0 %v1834
    %1853 = vmatprep.subr.bf16.mxu0 0
    %1854 = vmatpush1.bf16.msra.mxu0 %v1835
    %1855 = vmatprep.subr.bf16.mxu0 0
    %1856 = vmatpush1.bf16.msra.mxu0 %v1836
    %1857 = vmatprep.subr.bf16.mxu0 0
    %1858 = vmatpush1.bf16.msra.mxu0 %v1837
    %1859 = vmatprep.subr.bf16.mxu0 0
    %1860 = vmatpush1.bf16.msra.mxu0 %v1838
    %1861 = vmatprep.subr.bf16.mxu0 0
    %1862 = vmatpush1.bf16.msra.mxu0 %v1839
    %1863 = vmatprep.subr.bf16.mxu0 0
    %1864 = vmatpush1.bf16.msra.mxu0 %v1840
    %1865 = vmatprep.subr.bf16.mxu0 0
    %1866 = vmatpush1.bf16.msra.mxu0 0
    %1867 = vmatprep.subr.bf16.mxu0 0
    %1868 = vmatpush1.bf16.msra.mxu0 0
    %1869 = vmatprep.subr.bf16.mxu0 0
    %1870 = vmatpush1.bf16.msra.mxu0 0
    %1871 = vmatprep.subr.bf16.mxu0 0
    %1872 = vmatpush1.bf16.msra.mxu0 0
    %1873 = vmatprep.subr.bf16.mxu0 0
    %1874 = vmatpush1.bf16.msra.mxu0 0
    %1875 = vmatprep.subr.bf16.mxu0 0
    %1876 = vmatpush1.bf16.msra.mxu0 0
    %1877 = vmatprep.subr.bf16.mxu0 0
    %1878 = vmatpush1.bf16.msra.mxu0 0
    %1879 = vmatprep.subr.bf16.mxu0 0
    %1880 = vmatpush1.bf16.msra.mxu0 0
    %1881 = vmatprep.mubr.bf16.mxu0 0
    %1882 = vmatmul.mubr.bf16.gmra.mrb[0].mxu0 %v1763
    %v1883 = vpop.f32.mrb[0].mxu0
    %v1884 = vadd.f32 0.0, %v1883
    %v1885 = vpop.f32.mrb[0].mxu0
    %v1886 = vpop.f32.mrb[0].mxu0
    %v1887 = vadd.f32 0.0, %v1886
    %v1888 = vpop.f32.mrb[0].mxu0
    %1889 = vmatprep.mubr.bf16.mxu0 0
    %1890 = vmatmul.mubr.bf16.gmra.mrb[0].mxu0 %v1765
    %v1891 = vpop.f32.mrb[0].mxu0
    %v1892 = vadd.f32 0.0, %v1891
    %v1893 = vpop.f32.mrb[0].mxu0
    %v1894 = vpop.f32.mrb[0].mxu0
    %v1895 = vadd.f32 0.0, %v1894
    %v1896 = vpop.f32.mrb[0].mxu0
    %1897 = vmatprep.mubr.bf16.mxu0 0
    %1898 = vmatmul.mubr.bf16.gmra.mrb[0].mxu0 %v1767
    %v1899 = vpop.f32.mrb[0].mxu0
    %v1900 = vadd.f32 0.0, %v1899
    %v1901 = vpop.f32.mrb[0].mxu0
    %v1902 = vpop.f32.mrb[0].mxu0
    %v1903 = vadd.f32 0.0, %v1902
    %v1904 = vpop.f32.mrb[0].mxu0
    %1905 = vmatprep.mubr.bf16.mxu0 0
    %1906 = vmatmul.mubr.bf16.gmra.mrb[0].mxu0 %v1769
    %v1907 = vpop.f32.mrb[0].mxu0
    %v1908 = vadd.f32 0.0, %v1907
    %v1909 = vpop.f32.mrb[0].mxu0
    %v1910 = vpop.f32.mrb[0].mxu0
    %v1911 = vadd.f32 0.0, %v1910
    %v1912 = vpop.f32.mrb[0].mxu0
    %1913 = vmatprep.mubr.bf16.mxu0 0
    %1914 = vmatmul.mubr.bf16.gmra.mrb[0].mxu0 %v1771
    %v1915 = vpop.f32.mrb[0].mxu0
    %v1916 = vadd.f32 0.0, %v1915
    %v1917 = vpop.f32.mrb[0].mxu0
    %v1918 = vpop.f32.mrb[0].mxu0
    %v1919 = vadd.f32 0.0, %v1918
    %v1920 = vpop.f32.mrb[0].mxu0
    %1921 = vmatprep.mubr.bf16.mxu0 0
    %1922 = vmatmul.mubr.bf16.gmra.mrb[0].mxu0 %v1773
    %v1923 = vpop.f32.mrb[0].mxu0
    %v1924 = vadd.f32 0.0, %v1923
    %v1925 = vpop.f32.mrb[0].mxu0
    %v1926 = vpop.f32.mrb[0].mxu0
    %v1927 = vadd.f32 0.0, %v1926
    %v1928 = vpop.f32.mrb[0].mxu0
    %1929 = vmatprep.mubr.bf16.mxu0 0
    %1930 = vmatmul.mubr.bf16.gmra.mrb[0].mxu0 %v1775
    %v1931 = vpop.f32.mrb[0].mxu0
    %v1932 = vadd.f32 0.0, %v1931
    %v1933 = vpop.f32.mrb[0].mxu0
    %v1934 = vpop.f32.mrb[0].mxu0
    %v1935 = vadd.f32 0.0, %v1934
    %v1936 = vpop.f32.mrb[0].mxu0
    %1937 = vmatprep.mubr.bf16.mxu0 0
    %1938 = vmatmul.mubr.bf16.gmra.mrb[0].mxu0 %v1777
    %v1939 = vpop.f32.mrb[0].mxu0
    %v1940 = vadd.f32 0.0, %v1939
    %v1941 = vpop.f32.mrb[0].mxu0
    %v1942 = vpop.f32.mrb[0].mxu0
    %v1943 = vadd.f32 0.0, %v1942
    %v1944 = vpop.f32.mrb[0].mxu0
    %1945 = vmatprep.mubr.bf16.mxu0 0
    %1946 = vmatmul.mubr.bf16.gmra.mrb[0].mxu0 %v1779
    %v1947 = vpop.f32.mrb[0].mxu0
    %v1948 = vadd.f32 0.0, %v1947
    %v1949 = vpop.f32.mrb[0].mxu0
    %v1950 = vpop.f32.mrb[0].mxu0
    %v1951 = vadd.f32 0.0, %v1950
    %v1952 = vpop.f32.mrb[0].mxu0
    %1953 = vmatprep.mubr.bf16.mxu0 0
    %1954 = vmatmul.mubr.bf16.gmra.mrb[0].mxu0 %v1781
    %v1955 = vpop.f32.mrb[0].mxu0
    %v1956 = vadd.f32 0.0, %v1955
    %v1957 = vpop.f32.mrb[0].mxu0
    %v1958 = vpop.f32.mrb[0].mxu0
    %v1959 = vadd.f32 0.0, %v1958
    %v1960 = vpop.f32.mrb[0].mxu0
    %1961 = vmatprep.mubr.bf16.mxu0 0
    %1962 = vmatmul.mubr.bf16.gmra.mrb[0].mxu0 %v1783
    %v1963 = vpop.f32.mrb[0].mxu0
    %v1964 = vadd.f32 0.0, %v1963
    %v1965 = vpop.f32.mrb[0].mxu0
    %v1966 = vpop.f32.mrb[0].mxu0
    %v1967 = vadd.f32 0.0, %v1966
    %v1968 = vpop.f32.mrb[0].mxu0
    %1969 = vmatprep.mubr.bf16.mxu0 0
    %1970 = vmatmul.mubr.bf16.gmra.mrb[0].mxu0 %v1785
    %v1971 = vpop.f32.mrb[0].mxu0
    %v1972 = vadd.f32 0.0, %v1971
    %v1973 = vpop.f32.mrb[0].mxu0
    %v1974 = vpop.f32.mrb[0].mxu0
    %v1975 = vadd.f32 0.0, %v1974
    %v1976 = vpop.f32.mrb[0].mxu0
    %1977 = vmatprep.mubr.bf16.mxu0 0
    %1978 = vmatmul.mubr.bf16.gmra.mrb[0].mxu0 %v1787
    %v1979 = vpop.f32.mrb[0].mxu0
    %v1980 = vadd.f32 0.0, %v1979
    %v1981 = vpop.f32.mrb[0].mxu0
    %v1982 = vpop.f32.mrb[0].mxu0
    %v1983 = vadd.f32 0.0, %v1982
    %v1984 = vpop.f32.mrb[0].mxu0
    %1985 = vdwg.mxu0
    %v1986 = vadd.f32 %v1713, %v1884
    %v1987 = vadd.f32 %v1714, %v1887
    %v1988 = vadd.f32 %v1715, %v1892
    %v1989 = vadd.f32 %v1716, %v1895
    %v1990 = vadd.f32 %v1717, %v1900
    %v1991 = vadd.f32 %v1718, %v1903
    %v1992 = vadd.f32 %v1719, %v1908
    %v1993 = vadd.f32 %v1720, %v1911
    %v1994 = vadd.f32 %v1721, %v1916
    %v1995 = vadd.f32 %v1722, %v1919
    %v1996 = vadd.f32 %v1723, %v1924
    %v1997 = vadd.f32 %v1724, %v1927
    %v1998 = vadd.f32 %v1725, %v1932
    %v1999 = vadd.f32 %v1726, %v1935
    %v2000 = vadd.f32 %v1727, %v1940
    %v2001 = vadd.f32 %v1728, %v1943
    %v2002 = vadd.f32 %v1729, %v1948
    %v2003 = vadd.f32 %v1730, %v1951
    %v2004 = vadd.f32 %v1731, %v1956
    %v2005 = vadd.f32 %v1732, %v1959
    %v2006 = vadd.f32 %v1733, %v1964
    %v2007 = vadd.f32 %v1734, %v1967
    %v2008 = vadd.f32 %v1735, %v1972
    %v2009 = vadd.f32 %v1736, %v1975
    %v2010 = vadd.f32 %v1737, %v1980
    %v2011 = vadd.f32 %v1738, %v1983
    %v2012 = vld [vmem:[#allocation2 + $0x4] sm:$0xe]
    %v2013 = vld [vmem:[#allocation2 + $0x8] sm:$0xf]
    %v2014 = vld [vmem:[#allocation2 + $0xc] sm:$0xf]
    %v2015 = vld [vmem:[#allocation2 + $0x10] sm:$0xf]
    %v2016 = vld [vmem:[#allocation2 + $0x14] sm:$0xf]
    %v2017 = vld [vmem:[#allocation2 + $0x18] sm:$0xf]
    %v2018 = vld [vmem:[#allocation2 + $0x1c] sm:$0xf]
    %v2019 = vld [vmem:[#allocation2 + $0x20] sm:$0xf]
    %v2020 = vld [vmem:[#allocation2 + $0x24] sm:$0xf]
    %v2021 = vld [vmem:[#allocation2 + $0x28] sm:$0xf]
    %v2022 = vld [vmem:[#allocation2 + $0x2c] sm:$0xf]
    %v2023 = vld [vmem:[#allocation2 + $0x30] sm:$0xf]
    %v2024 = vld [vmem:[#allocation2 + $0x34] sm:$0xf]
    %v2025 = vld [vmem:[#allocation2 + $0x38] sm:$0xf]
    %v2026 = vld [vmem:[#allocation2 + $0x3c] sm:$0xf]
    %v2027 = vld [vmem:[#allocation2 + $0x40] sm:$0xf]
    %v2028 = vld [vmem:[#allocation2 + $0x44] sm:$0xf]
    %v2029 = vld [vmem:[#allocation2 + $0x48] sm:$0xf]
    %v2030 = vld [vmem:[#allocation2 + $0x4c] sm:$0xf]
    %v2031 = vld [vmem:[#allocation2 + $0x50] sm:$0xf]
    %v2032 = vld [vmem:[#allocation2 + $0x54] sm:$0xf]
    %v2033 = vld [vmem:[#allocation2 + $0x58] sm:$0xf]
    %v2034 = vld [vmem:[#allocation2 + $0x5c] sm:$0xf]
    %v2035 = vld [vmem:[#allocation2 + $0x60] sm:$0xf]
    %v2036 = vld [vmem:[#allocation2 + $0x64] sm:$0xf]
    %v2037 = vld [vmem:[#allocation2 + $0x68] sm:$0xf]
    %v2038 = vld [vmem:[#allocation2 + $0x6c] sm:$0x1]
    %s2039 = scalar_lea.vmem [#allocation3], 192
    %v2040 = vld [vmem:[%s2039] sm:$0xf]
    %v2041 = vld [vmem:[%s2039 + $0x4] sm:$0xf]
    %v2042 = vld [vmem:[%s2039 + $0x8] sm:$0xf]
    %v2043 = vld [vmem:[%s2039 + $0xc] sm:$0xf]
    %v2044 = vld [vmem:[%s2039 + $0x10] sm:$0xf]
    %v2045 = vld [vmem:[%s2039 + $0x14] sm:$0xf]
    %v2046 = vld [vmem:[%s2039 + $0x18] sm:$0xf]
    %v2047 = vld [vmem:[%s2039 + $0x1c] sm:$0xf]
    %v2048 = vld [vmem:[%s2039 + $0x20] sm:$0xf]
    %v2049 = vld [vmem:[%s2039 + $0x24] sm:$0xf]
    %v2050 = vld [vmem:[%s2039 + $0x28] sm:$0xf]
    %v2051 = vld [vmem:[%s2039 + $0x2c] sm:$0xf]
    %v2052 = vld [vmem:[%s2039 + $0x30] sm:$0xf]
    %v2053 = vld [vmem:[%s2039 + $0x34] sm:$0xf]
    %v2054 = vld [vmem:[%s2039 + $0x38] sm:$0xf]
    %v2055 = vld [vmem:[%s2039 + $0x3c] sm:$0xf]
    %v2083 = vunpack.c.l.b16 %v2012
    %v2084 = vunpack.c.l.b16 %v2013
    %v2085 = vunpack.c.l.b16 %v2014
    %v2086 = vunpack.c.l.b16 %v2015
    %v2087 = vunpack.c.l.b16 %v2016
    %v2088 = vunpack.c.l.b16 %v2017
    %v2089 = vunpack.c.l.b16 %v2018
    %v2090 = vunpack.c.l.b16 %v2019
    %v2091 = vunpack.c.l.b16 %v2020
    %v2092 = vunpack.c.l.b16 %v2021
    %v2093 = vunpack.c.l.b16 %v2022
    %v2094 = vunpack.c.l.b16 %v2023
    %v2095 = vunpack.c.l.b16 %v2024
    %v2096 = vunpack.c.l.b16 %v2025
    %v2097 = vunpack.c.l.b16 %v2026
    %v2098 = vunpack.c.l.b16 %v2027
    %v2099 = vunpack.c.l.b16 %v2028
    %v2100 = vunpack.c.l.b16 %v2029
    %v2101 = vunpack.c.l.b16 %v2030
    %v2102 = vunpack.c.l.b16 %v2031
    %v2103 = vunpack.c.l.b16 %v2032
    %v2104 = vunpack.c.l.b16 %v2033
    %v2105 = vunpack.c.l.b16 %v2034
    %v2106 = vunpack.c.l.b16 %v2035
    %v2107 = vunpack.c.l.b16 %v2036
    %v2108 = vunpack.c.l.b16 %v2037
    %v2109 = vunpack.c.l.b16 %v2038
    %v2110 = vpack.c.b16 %v2084, %v2083
    %v2111 = vpack.c.b16 %v2086, %v2085
    %v2112 = vpack.c.b16 %v2088, %v2087
    %v2113 = vpack.c.b16 %v2090, %v2089
    %v2114 = vpack.c.b16 %v2092, %v2091
    %v2115 = vpack.c.b16 %v2094, %v2093
    %v2116 = vpack.c.b16 %v2096, %v2095
    %v2117 = vpack.c.b16 %v2098, %v2097
    %v2118 = vpack.c.b16 %v2100, %v2099
    %v2119 = vpack.c.b16 %v2102, %v2101
    %v2120 = vpack.c.b16 %v2104, %v2103
    %v2121 = vpack.c.b16 %v2106, %v2105
    %v2122 = vpack.c.b16 %v2108, %v2107
    %v2123 = vpack.c.b16 %v2109, %v2109
    %v2124 = vrot.slane %v2110, 1
    %v2125 = vrot.slane %v2111, 1
    %v2126 = vsel %vm1760, %v2124, %v2125
    %v2127 = vrot.slane %v2112, 1
    %v2128 = vsel %vm1760, %v2125, %v2127
    %v2129 = vrot.slane %v2113, 1
    %v2130 = vsel %vm1760, %v2127, %v2129
    %v2131 = vrot.slane %v2114, 1
    %v2132 = vsel %vm1760, %v2129, %v2131
    %v2133 = vrot.slane %v2115, 1
    %v2134 = vsel %vm1760, %v2131, %v2133
    %v2135 = vrot.slane %v2116, 1
    %v2136 = vsel %vm1760, %v2133, %v2135
    %v2137 = vrot.slane %v2117, 1
    %v2138 = vsel %vm1760, %v2135, %v2137
    %v2139 = vrot.slane %v2118, 1
    %v2140 = vsel %vm1760, %v2137, %v2139
    %v2141 = vrot.slane %v2119, 1
    %v2142 = vsel %vm1760, %v2139, %v2141
    %v2143 = vrot.slane %v2120, 1
    %v2144 = vsel %vm1760, %v2141, %v2143
    %v2145 = vrot.slane %v2121, 1
    %v2146 = vsel %vm1760, %v2143, %v2145
    %v2147 = vrot.slane %v2122, 1
    %v2148 = vsel %vm1760, %v2145, %v2147
    %v2149 = vrot.slane %v2123, 1
    %v2150 = vsel %vm1760, %v2147, %v2149
    %v2180 = vunpack.c.l.b16 %v2040
    %v2181 = vunpack.c.l.b16 %v2041
    %v2182 = vunpack.c.l.b16 %v2042
    %v2183 = vunpack.c.l.b16 %v2043
    %v2184 = vunpack.c.l.b16 %v2044
    %v2185 = vunpack.c.l.b16 %v2045
    %v2186 = vunpack.c.l.b16 %v2046
    %v2187 = vunpack.c.l.b16 %v2047
    %v2188 = vunpack.c.l.b16 %v2048
    %v2189 = vunpack.c.l.b16 %v2049
    %v2190 = vunpack.c.l.b16 %v2050
    %v2191 = vunpack.c.l.b16 %v2051
    %v2192 = vunpack.c.l.b16 %v2052
    %v2193 = vunpack.c.l.b16 %v2053
    %v2194 = vunpack.c.l.b16 %v2054
    %v2195 = vunpack.c.l.b16 %v2055
    %v2196 = vpack.c.b16 %v2181, %v2180
    %v2197 = vpack.c.b16 %v2183, %v2182
    %v2198 = vpack.c.b16 %v2185, %v2184
    %v2199 = vpack.c.b16 %v2187, %v2186
    %v2200 = vpack.c.b16 %v2189, %v2188
    %v2201 = vpack.c.b16 %v2191, %v2190
    %v2202 = vpack.c.b16 %v2193, %v2192
    %v2203 = vpack.c.b16 %v2195, %v2194
    %2212 = vmatprep.subr.bf16.mxu0 0
    %2213 = vmatpush1.bf16.msra.mxu0 %v2196
    %2214 = vmatprep.subr.bf16.mxu0 0
    %2215 = vmatpush1.bf16.msra.mxu0 %v2197
    %2216 = vmatprep.subr.bf16.mxu0 0
    %2217 = vmatpush1.bf16.msra.mxu0 %v2198
    %2218 = vmatprep.subr.bf16.mxu0 0
    %2219 = vmatpush1.bf16.msra.mxu0 %v2199
    %2220 = vmatprep.subr.bf16.mxu0 0
    %2221 = vmatpush1.bf16.msra.mxu0 %v2200
    %2222 = vmatprep.subr.bf16.mxu0 0
    %2223 = vmatpush1.bf16.msra.mxu0 %v2201
    %2224 = vmatprep.subr.bf16.mxu0 0
    %2225 = vmatpush1.bf16.msra.mxu0 %v2202
    %2226 = vmatprep.subr.bf16.mxu0 0
    %2227 = vmatpush1.bf16.msra.mxu0 %v2203
    %2228 = vmatprep.subr.bf16.mxu0 0
    %2229 = vmatpush1.bf16.msra.mxu0 0
    %2230 = vmatprep.subr.bf16.mxu0 0
    %2231 = vmatpush1.bf16.msra.mxu0 0
    %2232 = vmatprep.subr.bf16.mxu0 0
    %2233 = vmatpush1.bf16.msra.mxu0 0
    %2234 = vmatprep.subr.bf16.mxu0 0
    %2235 = vmatpush1.bf16.msra.mxu0 0
    %2236 = vmatprep.subr.bf16.mxu0 0
    %2237 = vmatpush1.bf16.msra.mxu0 0
    %2238 = vmatprep.subr.bf16.mxu0 0
    %2239 = vmatpush1.bf16.msra.mxu0 0
    %2240 = vmatprep.subr.bf16.mxu0 0
    %2241 = vmatpush1.bf16.msra.mxu0 0
    %2242 = vmatprep.subr.bf16.mxu0 0
    %2243 = vmatpush1.bf16.msra.mxu0 0
    %2244 = vmatprep.mubr.bf16.mxu0 0
    %2245 = vmatmul.mubr.bf16.gmra.mrb[0].mxu0 %v2126
    %v2246 = vpop.f32.mrb[0].mxu0
    %v2247 = vadd.f32 0.0, %v2246
    %v2248 = vpop.f32.mrb[0].mxu0
    %v2249 = vpop.f32.mrb[0].mxu0
    %v2250 = vadd.f32 0.0, %v2249
    %v2251 = vpop.f32.mrb[0].mxu0
    %2252 = vmatprep.mubr.bf16.mxu0 0
    %2253 = vmatmul.mubr.bf16.gmra.mrb[0].mxu0 %v2128
    %v2254 = vpop.f32.mrb[0].mxu0
    %v2255 = vadd.f32 0.0, %v2254
    %v2256 = vpop.f32.mrb[0].mxu0
    %v2257 = vpop.f32.mrb[0].mxu0
    %v2258 = vadd.f32 0.0, %v2257
    %v2259 = vpop.f32.mrb[0].mxu0
    %2260 = vmatprep.mubr.bf16.mxu0 0
    %2261 = vmatmul.mubr.bf16.gmra.mrb[0].mxu0 %v2130
    %v2262 = vpop.f32.mrb[0].mxu0
    %v2263 = vadd.f32 0.0, %v2262
    %v2264 = vpop.f32.mrb[0].mxu0
    %v2265 = vpop.f32.mrb[0].mxu0
    %v2266 = vadd.f32 0.0, %v2265
    %v2267 = vpop.f32.mrb[0].mxu0
    %2268 = vmatprep.mubr.bf16.mxu0 0
    %2269 = vmatmul.mubr.bf16.gmra.mrb[0].mxu0 %v2132
    %v2270 = vpop.f32.mrb[0].mxu0
    %v2271 = vadd.f32 0.0, %v2270
    %v2272 = vpop.f32.mrb[0].mxu0
    %v2273 = vpop.f32.mrb[0].mxu0
    %v2274 = vadd.f32 0.0, %v2273
    %v2275 = vpop.f32.mrb[0].mxu0
    %2276 = vmatprep.mubr.bf16.mxu0 0
    %2277 = vmatmul.mubr.bf16.gmra.mrb[0].mxu0 %v2134
    %v2278 = vpop.f32.mrb[0].mxu0
    %v2279 = vadd.f32 0.0, %v2278
    %v2280 = vpop.f32.mrb[0].mxu0
    %v2281 = vpop.f32.mrb[0].mxu0
    %v2282 = vadd.f32 0.0, %v2281
    %v2283 = vpop.f32.mrb[0].mxu0
    %2284 = vmatprep.mubr.bf16.mxu0 0
    %2285 = vmatmul.mubr.bf16.gmra.mrb[0].mxu0 %v2136
    %v2286 = vpop.f32.mrb[0].mxu0
    %v2287 = vadd.f32 0.0, %v2286
    %v2288 = vpop.f32.mrb[0].mxu0
    %v2289 = vpop.f32.mrb[0].mxu0
    %v2290 = vadd.f32 0.0, %v2289
    %v2291 = vpop.f32.mrb[0].mxu0
    %2292 = vmatprep.mubr.bf16.mxu0 0
    %2293 = vmatmul.mubr.bf16.gmra.mrb[0].mxu0 %v2138
    %v2294 = vpop.f32.mrb[0].mxu0
    %v2295 = vadd.f32 0.0, %v2294
    %v2296 = vpop.f32.mrb[0].mxu0
    %v2297 = vpop.f32.mrb[0].mxu0
    %v2298 = vadd.f32 0.0, %v2297
    %v2299 = vpop.f32.mrb[0].mxu0
    %2300 = vmatprep.mubr.bf16.mxu0 0
    %2301 = vmatmul.mubr.bf16.gmra.mrb[0].mxu0 %v2140
    %v2302 = vpop.f32.mrb[0].mxu0
    %v2303 = vadd.f32 0.0, %v2302
    %v2304 = vpop.f32.mrb[0].mxu0
    %v2305 = vpop.f32.mrb[0].mxu0
    %v2306 = vadd.f32 0.0, %v2305
    %v2307 = vpop.f32.mrb[0].mxu0
    %2308 = vmatprep.mubr.bf16.mxu0 0
    %2309 = vmatmul.mubr.bf16.gmra.mrb[0].mxu0 %v2142
    %v2310 = vpop.f32.mrb[0].mxu0
    %v2311 = vadd.f32 0.0, %v2310
    %v2312 = vpop.f32.mrb[0].mxu0
    %v2313 = vpop.f32.mrb[0].mxu0
    %v2314 = vadd.f32 0.0, %v2313
    %v2315 = vpop.f32.mrb[0].mxu0
    %2316 = vmatprep.mubr.bf16.mxu0 0
    %2317 = vmatmul.mubr.bf16.gmra.mrb[0].mxu0 %v2144
    %v2318 = vpop.f32.mrb[0].mxu0
    %v2319 = vadd.f32 0.0, %v2318
    %v2320 = vpop.f32.mrb[0].mxu0
    %v2321 = vpop.f32.mrb[0].mxu0
    %v2322 = vadd.f32 0.0, %v2321
    %v2323 = vpop.f32.mrb[0].mxu0
    %2324 = vmatprep.mubr.bf16.mxu0 0
    %2325 = vmatmul.mubr.bf16.gmra.mrb[0].mxu0 %v2146
    %v2326 = vpop.f32.mrb[0].mxu0
    %v2327 = vadd.f32 0.0, %v2326
    %v2328 = vpop.f32.mrb[0].mxu0
    %v2329 = vpop.f32.mrb[0].mxu0
    %v2330 = vadd.f32 0.0, %v2329
    %v2331 = vpop.f32.mrb[0].mxu0
    %2332 = vmatprep.mubr.bf16.mxu0 0
    %2333 = vmatmul.mubr.bf16.gmra.mrb[0].mxu0 %v2148
    %v2334 = vpop.f32.mrb[0].mxu0
    %v2335 = vadd.f32 0.0, %v2334
    %v2336 = vpop.f32.mrb[0].mxu0
    %v2337 = vpop.f32.mrb[0].mxu0
    %v2338 = vadd.f32 0.0, %v2337
    %v2339 = vpop.f32.mrb[0].mxu0
    %2340 = vmatprep.mubr.bf16.mxu0 0
    %2341 = vmatmul.mubr.bf16.gmra.mrb[0].mxu0 %v2150
    %v2342 = vpop.f32.mrb[0].mxu0
    %v2343 = vadd.f32 0.0, %v2342
    %v2344 = vpop.f32.mrb[0].mxu0
    %v2345 = vpop.f32.mrb[0].mxu0
    %v2346 = vadd.f32 0.0, %v2345
    %v2347 = vpop.f32.mrb[0].mxu0
    %2348 = vdwg.mxu0
    %v2349 = vadd.f32 %v1986, %v2247
    %v2350 = vadd.f32 %v1987, %v2250
    %v2351 = vadd.f32 %v1988, %v2255
    %v2352 = vadd.f32 %v1989, %v2258
    %v2353 = vadd.f32 %v1990, %v2263
    %v2354 = vadd.f32 %v1991, %v2266
    %v2355 = vadd.f32 %v1992, %v2271
    %v2356 = vadd.f32 %v1993, %v2274
    %v2357 = vadd.f32 %v1994, %v2279
    %v2358 = vadd.f32 %v1995, %v2282
    %v2359 = vadd.f32 %v1996, %v2287
    %v2360 = vadd.f32 %v1997, %v2290
    %v2361 = vadd.f32 %v1998, %v2295
    %v2362 = vadd.f32 %v1999, %v2298
    %v2363 = vadd.f32 %v2000, %v2303
    %v2364 = vadd.f32 %v2001, %v2306
    %v2365 = vadd.f32 %v2002, %v2311
    %v2366 = vadd.f32 %v2003, %v2314
    %v2367 = vadd.f32 %v2004, %v2319
    %v2368 = vadd.f32 %v2005, %v2322
    %v2369 = vadd.f32 %v2006, %v2327
    %v2370 = vadd.f32 %v2007, %v2330
    %v2371 = vadd.f32 %v2008, %v2335
    %v2372 = vadd.f32 %v2009, %v2338
    %v2373 = vadd.f32 %v2010, %v2343
    %v2374 = vadd.f32 %v2011, %v2346
    %v2375 = vld [vmem:[#allocation2 + $0x6c] sm:$0x3]
    %s2376 = scalar_lea.vmem [#allocation3], 256
    %v2377 = vld [vmem:[%s2376] sm:$0xf]
    %v2378 = vld [vmem:[%s2376 + $0x4] sm:$0xf]
    %v2379 = vld [vmem:[%s2376 + $0x8] sm:$0xf]
    %v2380 = vld [vmem:[%s2376 + $0xc] sm:$0xf]
    %v2381 = vld [vmem:[%s2376 + $0x10] sm:$0xf]
    %v2382 = vld [vmem:[%s2376 + $0x14] sm:$0xf]
    %v2383 = vld [vmem:[%s2376 + $0x18] sm:$0xf]
    %v2384 = vld [vmem:[%s2376 + $0x1c] sm:$0xf]
    %v2385 = vld [vmem:[%s2376 + $0x20] sm:$0xf]
    %v2386 = vld [vmem:[%s2376 + $0x24] sm:$0xf]
    %v2387 = vld [vmem:[%s2376 + $0x28] sm:$0xf]
    %v2388 = vld [vmem:[%s2376 + $0x2c] sm:$0xf]
    %v2389 = vld [vmem:[%s2376 + $0x30] sm:$0xf]
    %v2390 = vld [vmem:[%s2376 + $0x34] sm:$0xf]
    %v2391 = vld [vmem:[%s2376 + $0x38] sm:$0xf]
    %v2392 = vld [vmem:[%s2376 + $0x3c] sm:$0xf]
    %v2394 = vunpack.c.l.b16 %v2375
    %v2395 = vpack.c.b16 %v2394, %v2394
    %vm2396 = vsmask.f32 6400
    %v2398 = vshrl.u32 %v2110, 16
    %v2400 = vrot.slane %v2398, 1
    %v2401 = vshll.u32 %v2110, 16
    %v2403 = vrot.slane %v2401, 2
    %v2404 = vor.u32 %v2400, %v2403
    %v2406 = vshrl.u32 %v2111, 16
    %v2408 = vrot.slane %v2406, 1
    %v2409 = vshll.u32 %v2111, 16
    %v2411 = vrot.slane %v2409, 2
    %v2412 = vor.u32 %v2408, %v2411
    %v2413 = vsel %vm2396, %v2404, %v2412
    %v2415 = vshrl.u32 %v2112, 16
    %v2417 = vrot.slane %v2415, 1
    %v2418 = vshll.u32 %v2112, 16
    %v2420 = vrot.slane %v2418, 2
    %v2421 = vor.u32 %v2417, %v2420
    %v2422 = vsel %vm2396, %v2412, %v2421
    %v2424 = vshrl.u32 %v2113, 16
    %v2426 = vrot.slane %v2424, 1
    %v2427 = vshll.u32 %v2113, 16
    %v2429 = vrot.slane %v2427, 2
    %v2430 = vor.u32 %v2426, %v2429
    %v2431 = vsel %vm2396, %v2421, %v2430
    %v2433 = vshrl.u32 %v2114, 16
    %v2435 = vrot.slane %v2433, 1
    %v2436 = vshll.u32 %v2114, 16
    %v2438 = vrot.slane %v2436, 2
    %v2439 = vor.u32 %v2435, %v2438
    %v2440 = vsel %vm2396, %v2430, %v2439
    %v2442 = vshrl.u32 %v2115, 16
    %v2444 = vrot.slane %v2442, 1
    %v2445 = vshll.u32 %v2115, 16
    %v2447 = vrot.slane %v2445, 2
    %v2448 = vor.u32 %v2444, %v2447
    %v2449 = vsel %vm2396, %v2439, %v2448
    %v2451 = vshrl.u32 %v2116, 16
    %v2453 = vrot.slane %v2451, 1
    %v2454 = vshll.u32 %v2116, 16
    %v2456 = vrot.slane %v2454, 2
    %v2457 = vor.u32 %v2453, %v2456
    %v2458 = vsel %vm2396, %v2448, %v2457
    %v2460 = vshrl.u32 %v2117, 16
    %v2462 = vrot.slane %v2460, 1
    %v2463 = vshll.u32 %v2117, 16
    %v2465 = vrot.slane %v2463, 2
    %v2466 = vor.u32 %v2462, %v2465
    %v2467 = vsel %vm2396, %v2457, %v2466
    %v2469 = vshrl.u32 %v2118, 16
    %v2471 = vrot.slane %v2469, 1
    %v2472 = vshll.u32 %v2118, 16
    %v2474 = vrot.slane %v2472, 2
    %v2475 = vor.u32 %v2471, %v2474
    %v2476 = vsel %vm2396, %v2466, %v2475
    %v2478 = vshrl.u32 %v2119, 16
    %v2480 = vrot.slane %v2478, 1
    %v2481 = vshll.u32 %v2119, 16
    %v2483 = vrot.slane %v2481, 2
    %v2484 = vor.u32 %v2480, %v2483
    %v2485 = vsel %vm2396, %v2475, %v2484
    %v2487 = vshrl.u32 %v2120, 16
    %v2489 = vrot.slane %v2487, 1
    %v2490 = vshll.u32 %v2120, 16
    %v2492 = vrot.slane %v2490, 2
    %v2493 = vor.u32 %v2489, %v2492
    %v2494 = vsel %vm2396, %v2484, %v2493
    %v2496 = vshrl.u32 %v2121, 16
    %v2498 = vrot.slane %v2496, 1
    %v2499 = vshll.u32 %v2121, 16
    %v2501 = vrot.slane %v2499, 2
    %v2502 = vor.u32 %v2498, %v2501
    %v2503 = vsel %vm2396, %v2493, %v2502
    %v2505 = vshrl.u32 %v2122, 16
    %v2507 = vrot.slane %v2505, 1
    %v2508 = vshll.u32 %v2122, 16
    %v2510 = vrot.slane %v2508, 2
    %v2511 = vor.u32 %v2507, %v2510
    %v2512 = vsel %vm2396, %v2502, %v2511
    %v2514 = vshrl.u32 %v2395, 16
    %v2516 = vrot.slane %v2514, 1
    %v2517 = vshll.u32 %v2395, 16
    %v2519 = vrot.slane %v2517, 2
    %v2520 = vor.u32 %v2516, %v2519
    %v2521 = vsel %vm2396, %v2511, %v2520
    %v2551 = vunpack.c.l.b16 %v2377
    %v2552 = vunpack.c.l.b16 %v2378
    %v2553 = vunpack.c.l.b16 %v2379
    %v2554 = vunpack.c.l.b16 %v2380
    %v2555 = vunpack.c.l.b16 %v2381
    %v2556 = vunpack.c.l.b16 %v2382
    %v2557 = vunpack.c.l.b16 %v2383
    %v2558 = vunpack.c.l.b16 %v2384
    %v2559 = vunpack.c.l.b16 %v2385
    %v2560 = vunpack.c.l.b16 %v2386
    %v2561 = vunpack.c.l.b16 %v2387
    %v2562 = vunpack.c.l.b16 %v2388
    %v2563 = vunpack.c.l.b16 %v2389
    %v2564 = vunpack.c.l.b16 %v2390
    %v2565 = vunpack.c.l.b16 %v2391
    %v2566 = vunpack.c.l.b16 %v2392
    %v2567 = vpack.c.b16 %v2552, %v2551
    %v2568 = vpack.c.b16 %v2554, %v2553
    %v2569 = vpack.c.b16 %v2556, %v2555
    %v2570 = vpack.c.b16 %v2558, %v2557
    %v2571 = vpack.c.b16 %v2560, %v2559
    %v2572 = vpack.c.b16 %v2562, %v2561
    %v2573 = vpack.c.b16 %v2564, %v2563
    %v2574 = vpack.c.b16 %v2566, %v2565
    %2583 = vmatprep.subr.bf16.mxu0 0
    %2584 = vmatpush1.bf16.msra.mxu0 %v2567
    %2585 = vmatprep.subr.bf16.mxu0 0
    %2586 = vmatpush1.bf16.msra.mxu0 %v2568
    %2587 = vmatprep.subr.bf16.mxu0 0
    %2588 = vmatpush1.bf16.msra.mxu0 %v2569
    %2589 = vmatprep.subr.bf16.mxu0 0
    %2590 = vmatpush1.bf16.msra.mxu0 %v2570
    %2591 = vmatprep.subr.bf16.mxu0 0
    %2592 = vmatpush1.bf16.msra.mxu0 %v2571
    %2593 = vmatprep.subr.bf16.mxu0 0
    %2594 = vmatpush1.bf16.msra.mxu0 %v2572
    %2595 = vmatprep.subr.bf16.mxu0 0
    %2596 = vmatpush1.bf16.msra.mxu0 %v2573
    %2597 = vmatprep.subr.bf16.mxu0 0
    %2598 = vmatpush1.bf16.msra.mxu0 %v2574
    %2599 = vmatprep.subr.bf16.mxu0 0
    %2600 = vmatpush1.bf16.msra.mxu0 0
    %2601 = vmatprep.subr.bf16.mxu0 0
    %2602 = vmatpush1.bf16.msra.mxu0 0
    %2603 = vmatprep.subr.bf16.mxu0 0
    %2604 = vmatpush1.bf16.msra.mxu0 0
    %2605 = vmatprep.subr.bf16.mxu0 0
    %2606 = vmatpush1.bf16.msra.mxu0 0
    %2607 = vmatprep.subr.bf16.mxu0 0
    %2608 = vmatpush1.bf16.msra.mxu0 0
    %2609 = vmatprep.subr.bf16.mxu0 0
    %2610 = vmatpush1.bf16.msra.mxu0 0
    %2611 = vmatprep.subr.bf16.mxu0 0
    %2612 = vmatpush1.bf16.msra.mxu0 0
    %2613 = vmatprep.subr.bf16.mxu0 0
    %2614 = vmatpush1.bf16.msra.mxu0 0
    %2615 = vmatprep.mubr.bf16.mxu0 0
    %2616 = vmatmul.mubr.bf16.gmra.mrb[0].mxu0 %v2413
    %v2617 = vpop.f32.mrb[0].mxu0
    %v2618 = vadd.f32 0.0, %v2617
    %v2619 = vpop.f32.mrb[0].mxu0
    %v2620 = vpop.f32.mrb[0].mxu0
    %v2621 = vadd.f32 0.0, %v2620
    %v2622 = vpop.f32.mrb[0].mxu0
    %2623 = vmatprep.mubr.bf16.mxu0 0
    %2624 = vmatmul.mubr.bf16.gmra.mrb[0].mxu0 %v2422
    %v2625 = vpop.f32.mrb[0].mxu0
    %v2626 = vadd.f32 0.0, %v2625
    %v2627 = vpop.f32.mrb[0].mxu0
    %v2628 = vpop.f32.mrb[0].mxu0
    %v2629 = vadd.f32 0.0, %v2628
    %v2630 = vpop.f32.mrb[0].mxu0
    %2631 = vmatprep.mubr.bf16.mxu0 0
    %2632 = vmatmul.mubr.bf16.gmra.mrb[0].mxu0 %v2431
    %v2633 = vpop.f32.mrb[0].mxu0
    %v2634 = vadd.f32 0.0, %v2633
    %v2635 = vpop.f32.mrb[0].mxu0
    %v2636 = vpop.f32.mrb[0].mxu0
    %v2637 = vadd.f32 0.0, %v2636
    %v2638 = vpop.f32.mrb[0].mxu0
    %2639 = vmatprep.mubr.bf16.mxu0 0
    %2640 = vmatmul.mubr.bf16.gmra.mrb[0].mxu0 %v2440
    %v2641 = vpop.f32.mrb[0].mxu0
    %v2642 = vadd.f32 0.0, %v2641
    %v2643 = vpop.f32.mrb[0].mxu0
    %v2644 = vpop.f32.mrb[0].mxu0
    %v2645 = vadd.f32 0.0, %v2644
    %v2646 = vpop.f32.mrb[0].mxu0
    %2647 = vmatprep.mubr.bf16.mxu0 0
    %2648 = vmatmul.mubr.bf16.gmra.mrb[0].mxu0 %v2449
    %v2649 = vpop.f32.mrb[0].mxu0
    %v2650 = vadd.f32 0.0, %v2649
    %v2651 = vpop.f32.mrb[0].mxu0
    %v2652 = vpop.f32.mrb[0].mxu0
    %v2653 = vadd.f32 0.0, %v2652
    %v2654 = vpop.f32.mrb[0].mxu0
    %2655 = vmatprep.mubr.bf16.mxu0 0
    %2656 = vmatmul.mubr.bf16.gmra.mrb[0].mxu0 %v2458
    %v2657 = vpop.f32.mrb[0].mxu0
    %v2658 = vadd.f32 0.0, %v2657
    %v2659 = vpop.f32.mrb[0].mxu0
    %v2660 = vpop.f32.mrb[0].mxu0
    %v2661 = vadd.f32 0.0, %v2660
    %v2662 = vpop.f32.mrb[0].mxu0
    %2663 = vmatprep.mubr.bf16.mxu0 0
    %2664 = vmatmul.mubr.bf16.gmra.mrb[0].mxu0 %v2467
    %v2665 = vpop.f32.mrb[0].mxu0
    %v2666 = vadd.f32 0.0, %v2665
    %v2667 = vpop.f32.mrb[0].mxu0
    %v2668 = vpop.f32.mrb[0].mxu0
    %v2669 = vadd.f32 0.0, %v2668
    %v2670 = vpop.f32.mrb[0].mxu0
    %2671 = vmatprep.mubr.bf16.mxu0 0
    %2672 = vmatmul.mubr.bf16.gmra.mrb[0].mxu0 %v2476
    %v2673 = vpop.f32.mrb[0].mxu0
    %v2674 = vadd.f32 0.0, %v2673
    %v2675 = vpop.f32.mrb[0].mxu0
    %v2676 = vpop.f32.mrb[0].mxu0
    %v2677 = vadd.f32 0.0, %v2676
    %v2678 = vpop.f32.mrb[0].mxu0
    %2679 = vmatprep.mubr.bf16.mxu0 0
    %2680 = vmatmul.mubr.bf16.gmra.mrb[0].mxu0 %v2485
    %v2681 = vpop.f32.mrb[0].mxu0
    %v2682 = vadd.f32 0.0, %v2681
    %v2683 = vpop.f32.mrb[0].mxu0
    %v2684 = vpop.f32.mrb[0].mxu0
    %v2685 = vadd.f32 0.0, %v2684
    %v2686 = vpop.f32.mrb[0].mxu0
    %2687 = vmatprep.mubr.bf16.mxu0 0
    %2688 = vmatmul.mubr.bf16.gmra.mrb[0].mxu0 %v2494
    %v2689 = vpop.f32.mrb[0].mxu0
    %v2690 = vadd.f32 0.0, %v2689
    %v2691 = vpop.f32.mrb[0].mxu0
    %v2692 = vpop.f32.mrb[0].mxu0
    %v2693 = vadd.f32 0.0, %v2692
    %v2694 = vpop.f32.mrb[0].mxu0
    %2695 = vmatprep.mubr.bf16.mxu0 0
    %2696 = vmatmul.mubr.bf16.gmra.mrb[0].mxu0 %v2503
    %v2697 = vpop.f32.mrb[0].mxu0
    %v2698 = vadd.f32 0.0, %v2697
    %v2699 = vpop.f32.mrb[0].mxu0
    %v2700 = vpop.f32.mrb[0].mxu0
    %v2701 = vadd.f32 0.0, %v2700
    %v2702 = vpop.f32.mrb[0].mxu0
    %2703 = vmatprep.mubr.bf16.mxu0 0
    %2704 = vmatmul.mubr.bf16.gmra.mrb[0].mxu0 %v2512
    %v2705 = vpop.f32.mrb[0].mxu0
    %v2706 = vadd.f32 0.0, %v2705
    %v2707 = vpop.f32.mrb[0].mxu0
    %v2708 = vpop.f32.mrb[0].mxu0
    %v2709 = vadd.f32 0.0, %v2708
    %v2710 = vpop.f32.mrb[0].mxu0
    %2711 = vmatprep.mubr.bf16.mxu0 0
    %2712 = vmatmul.mubr.bf16.gmra.mrb[0].mxu0 %v2521
    %v2713 = vpop.f32.mrb[0].mxu0
    %v2714 = vadd.f32 0.0, %v2713
    %v2715 = vpop.f32.mrb[0].mxu0
    %v2716 = vpop.f32.mrb[0].mxu0
    %v2717 = vadd.f32 0.0, %v2716
    %v2718 = vpop.f32.mrb[0].mxu0
    %2719 = vdwg.mxu0
    %v2720 = vadd.f32 %v2349, %v2618
    %v2721 = vadd.f32 %v2350, %v2621
    %v2722 = vadd.f32 %v2351, %v2626
    %v2723 = vadd.f32 %v2352, %v2629
    %v2724 = vadd.f32 %v2353, %v2634
    %v2725 = vadd.f32 %v2354, %v2637
    %v2726 = vadd.f32 %v2355, %v2642
    %v2727 = vadd.f32 %v2356, %v2645
    %v2728 = vadd.f32 %v2357, %v2650
    %v2729 = vadd.f32 %v2358, %v2653
    %v2730 = vadd.f32 %v2359, %v2658
    %v2731 = vadd.f32 %v2360, %v2661
    %v2732 = vadd.f32 %v2361, %v2666
    %v2733 = vadd.f32 %v2362, %v2669
    %v2734 = vadd.f32 %v2363, %v2674
    %v2735 = vadd.f32 %v2364, %v2677
    %v2736 = vadd.f32 %v2365, %v2682
    %v2737 = vadd.f32 %v2366, %v2685
    %v2738 = vadd.f32 %v2367, %v2690
    %v2739 = vadd.f32 %v2368, %v2693
    %v2740 = vadd.f32 %v2369, %v2698
    %v2741 = vadd.f32 %v2370, %v2701
    %v2742 = vadd.f32 %v2371, %v2706
    %v2743 = vadd.f32 %v2372, %v2709
    %v2744 = vadd.f32 %v2373, %v2714
    %v2745 = vadd.f32 %v2374, %v2717
    %v2746 = vld [vmem:[#allocation2 + $0x4] sm:$0xc]
    %s2747 = scalar_lea.vmem [#allocation3], 320
    %v2748 = vld [vmem:[%s2747] sm:$0xf]
    %v2749 = vld [vmem:[%s2747 + $0x4] sm:$0xf]
    %v2750 = vld [vmem:[%s2747 + $0x8] sm:$0xf]
    %v2751 = vld [vmem:[%s2747 + $0xc] sm:$0xf]
    %v2752 = vld [vmem:[%s2747 + $0x10] sm:$0xf]
    %v2753 = vld [vmem:[%s2747 + $0x14] sm:$0xf]
    %v2754 = vld [vmem:[%s2747 + $0x18] sm:$0xf]
    %v2755 = vld [vmem:[%s2747 + $0x1c] sm:$0xf]
    %v2756 = vld [vmem:[%s2747 + $0x20] sm:$0xf]
    %v2757 = vld [vmem:[%s2747 + $0x24] sm:$0xf]
    %v2758 = vld [vmem:[%s2747 + $0x28] sm:$0xf]
    %v2759 = vld [vmem:[%s2747 + $0x2c] sm:$0xf]
    %v2760 = vld [vmem:[%s2747 + $0x30] sm:$0xf]
    %v2761 = vld [vmem:[%s2747 + $0x34] sm:$0xf]
    %v2762 = vld [vmem:[%s2747 + $0x38] sm:$0xf]
    %v2763 = vld [vmem:[%s2747 + $0x3c] sm:$0xf]
    %v2765 = vunpack.c.l.b16 %v2746
    %v2766 = vpack.c.b16 %v2084, %v2765
    %vm2767 = vcmask 1045504
    %v2768 = vrot.slane %v2766, 2
    %v2769 = vrot.slane %v2111, 2
    %v2770 = vsel %vm2767, %v2768, %v2769
    %v2771 = vrot.slane %v2112, 2
    %v2772 = vsel %vm2767, %v2769, %v2771
    %v2773 = vrot.slane %v2113, 2
    %v2774 = vsel %vm2767, %v2771, %v2773
    %v2775 = vrot.slane %v2114, 2
    %v2776 = vsel %vm2767, %v2773, %v2775
    %v2777 = vrot.slane %v2115, 2
    %v2778 = vsel %vm2767, %v2775, %v2777
    %v2779 = vrot.slane %v2116, 2
    %v2780 = vsel %vm2767, %v2777, %v2779
    %v2781 = vrot.slane %v2117, 2
    %v2782 = vsel %vm2767, %v2779, %v2781
    %v2783 = vrot.slane %v2118, 2
    %v2784 = vsel %vm2767, %v2781, %v2783
    %v2785 = vrot.slane %v2119, 2
    %v2786 = vsel %vm2767, %v2783, %v2785
    %v2787 = vrot.slane %v2120, 2
    %v2788 = vsel %vm2767, %v2785, %v2787
    %v2789 = vrot.slane %v2121, 2
    %v2790 = vsel %vm2767, %v2787, %v2789
    %v2791 = vrot.slane %v2122, 2
    %v2792 = vsel %vm2767, %v2789, %v2791
    %v2793 = vrot.slane %v2395, 2
    %v2794 = vsel %vm2767, %v2791, %v2793
    %v2824 = vunpack.c.l.b16 %v2748
    %v2825 = vunpack.c.l.b16 %v2749
    %v2826 = vunpack.c.l.b16 %v2750
    %v2827 = vunpack.c.l.b16 %v2751
    %v2828 = vunpack.c.l.b16 %v2752
    %v2829 = vunpack.c.l.b16 %v2753
    %v2830 = vunpack.c.l.b16 %v2754
    %v2831 = vunpack.c.l.b16 %v2755
    %v2832 = vunpack.c.l.b16 %v2756
    %v2833 = vunpack.c.l.b16 %v2757
    %v2834 = vunpack.c.l.b16 %v2758
    %v2835 = vunpack.c.l.b16 %v2759
    %v2836 = vunpack.c.l.b16 %v2760
    %v2837 = vunpack.c.l.b16 %v2761
    %v2838 = vunpack.c.l.b16 %v2762
    %v2839 = vunpack.c.l.b16 %v2763
    %v2840 = vpack.c.b16 %v2825, %v2824
    %v2841 = vpack.c.b16 %v2827, %v2826
    %v2842 = vpack.c.b16 %v2829, %v2828
    %v2843 = vpack.c.b16 %v2831, %v2830
    %v2844 = vpack.c.b16 %v2833, %v2832
    %v2845 = vpack.c.b16 %v2835, %v2834
    %v2846 = vpack.c.b16 %v2837, %v2836
    %v2847 = vpack.c.b16 %v2839, %v2838
    %2856 = vmatprep.subr.bf16.mxu0 0
    %2857 = vmatpush1.bf16.msra.mxu0 %v2840
    %2858 = vmatprep.subr.bf16.mxu0 0
    %2859 = vmatpush1.bf16.msra.mxu0 %v2841
    %2860 = vmatprep.subr.bf16.mxu0 0
    %2861 = vmatpush1.bf16.msra.mxu0 %v2842
    %2862 = vmatprep.subr.bf16.mxu0 0
    %2863 = vmatpush1.bf16.msra.mxu0 %v2843
    %2864 = vmatprep.subr.bf16.mxu0 0
    %2865 = vmatpush1.bf16.msra.mxu0 %v2844
    %2866 = vmatprep.subr.bf16.mxu0 0
    %2867 = vmatpush1.bf16.msra.mxu0 %v2845
    %2868 = vmatprep.subr.bf16.mxu0 0
    %2869 = vmatpush1.bf16.msra.mxu0 %v2846
    %2870 = vmatprep.subr.bf16.mxu0 0
    %2871 = vmatpush1.bf16.msra.mxu0 %v2847
    %2872 = vmatprep.subr.bf16.mxu0 0
    %2873 = vmatpush1.bf16.msra.mxu0 0
    %2874 = vmatprep.subr.bf16.mxu0 0
    %2875 = vmatpush1.bf16.msra.mxu0 0
    %2876 = vmatprep.subr.bf16.mxu0 0
    %2877 = vmatpush1.bf16.msra.mxu0 0
    %2878 = vmatprep.subr.bf16.mxu0 0
    %2879 = vmatpush1.bf16.msra.mxu0 0
    %2880 = vmatprep.subr.bf16.mxu0 0
    %2881 = vmatpush1.bf16.msra.mxu0 0
    %2882 = vmatprep.subr.bf16.mxu0 0
    %2883 = vmatpush1.bf16.msra.mxu0 0
    %2884 = vmatprep.subr.bf16.mxu0 0
    %2885 = vmatpush1.bf16.msra.mxu0 0
    %2886 = vmatprep.subr.bf16.mxu0 0
    %2887 = vmatpush1.bf16.msra.mxu0 0
    %2888 = vmatprep.mubr.bf16.mxu0 0
    %2889 = vmatmul.mubr.bf16.gmra.mrb[0].mxu0 %v2770
    %v2890 = vpop.f32.mrb[0].mxu0
    %v2891 = vadd.f32 0.0, %v2890
    %v2892 = vpop.f32.mrb[0].mxu0
    %v2893 = vpop.f32.mrb[0].mxu0
    %v2894 = vadd.f32 0.0, %v2893
    %v2895 = vpop.f32.mrb[0].mxu0
    %2896 = vmatprep.mubr.bf16.mxu0 0
    %2897 = vmatmul.mubr.bf16.gmra.mrb[0].mxu0 %v2772
    %v2898 = vpop.f32.mrb[0].mxu0
    %v2899 = vadd.f32 0.0, %v2898
    %v2900 = vpop.f32.mrb[0].mxu0
    %v2901 = vpop.f32.mrb[0].mxu0
    %v2902 = vadd.f32 0.0, %v2901
    %v2903 = vpop.f32.mrb[0].mxu0
    %2904 = vmatprep.mubr.bf16.mxu0 0
    %2905 = vmatmul.mubr.bf16.gmra.mrb[0].mxu0 %v2774
    %v2906 = vpop.f32.mrb[0].mxu0
    %v2907 = vadd.f32 0.0, %v2906
    %v2908 = vpop.f32.mrb[0].mxu0
    %v2909 = vpop.f32.mrb[0].mxu0
    %v2910 = vadd.f32 0.0, %v2909
    %v2911 = vpop.f32.mrb[0].mxu0
    %2912 = vmatprep.mubr.bf16.mxu0 0
    %2913 = vmatmul.mubr.bf16.gmra.mrb[0].mxu0 %v2776
    %v2914 = vpop.f32.mrb[0].mxu0
    %v2915 = vadd.f32 0.0, %v2914
    %v2916 = vpop.f32.mrb[0].mxu0
    %v2917 = vpop.f32.mrb[0].mxu0
    %v2918 = vadd.f32 0.0, %v2917
    %v2919 = vpop.f32.mrb[0].mxu0
    %2920 = vmatprep.mubr.bf16.mxu0 0
    %2921 = vmatmul.mubr.bf16.gmra.mrb[0].mxu0 %v2778
    %v2922 = vpop.f32.mrb[0].mxu0
    %v2923 = vadd.f32 0.0, %v2922
    %v2924 = vpop.f32.mrb[0].mxu0
    %v2925 = vpop.f32.mrb[0].mxu0
    %v2926 = vadd.f32 0.0, %v2925
    %v2927 = vpop.f32.mrb[0].mxu0
    %2928 = vmatprep.mubr.bf16.mxu0 0
    %2929 = vmatmul.mubr.bf16.gmra.mrb[0].mxu0 %v2780
    %v2930 = vpop.f32.mrb[0].mxu0
    %v2931 = vadd.f32 0.0, %v2930
    %v2932 = vpop.f32.mrb[0].mxu0
    %v2933 = vpop.f32.mrb[0].mxu0
    %v2934 = vadd.f32 0.0, %v2933
    %v2935 = vpop.f32.mrb[0].mxu0
    %2936 = vmatprep.mubr.bf16.mxu0 0
    %2937 = vmatmul.mubr.bf16.gmra.mrb[0].mxu0 %v2782
    %v2938 = vpop.f32.mrb[0].mxu0
    %v2939 = vadd.f32 0.0, %v2938
    %v2940 = vpop.f32.mrb[0].mxu0
    %v2941 = vpop.f32.mrb[0].mxu0
    %v2942 = vadd.f32 0.0, %v2941
    %v2943 = vpop.f32.mrb[0].mxu0
    %2944 = vmatprep.mubr.bf16.mxu0 0
    %2945 = vmatmul.mubr.bf16.gmra.mrb[0].mxu0 %v2784
    %v2946 = vpop.f32.mrb[0].mxu0
    %v2947 = vadd.f32 0.0, %v2946
    %v2948 = vpop.f32.mrb[0].mxu0
    %v2949 = vpop.f32.mrb[0].mxu0
    %v2950 = vadd.f32 0.0, %v2949
    %v2951 = vpop.f32.mrb[0].mxu0
    %2952 = vmatprep.mubr.bf16.mxu0 0
    %2953 = vmatmul.mubr.bf16.gmra.mrb[0].mxu0 %v2786
    %v2954 = vpop.f32.mrb[0].mxu0
    %v2955 = vadd.f32 0.0, %v2954
    %v2956 = vpop.f32.mrb[0].mxu0
    %v2957 = vpop.f32.mrb[0].mxu0
    %v2958 = vadd.f32 0.0, %v2957
    %v2959 = vpop.f32.mrb[0].mxu0
    %2960 = vmatprep.mubr.bf16.mxu0 0
    %2961 = vmatmul.mubr.bf16.gmra.mrb[0].mxu0 %v2788
    %v2962 = vpop.f32.mrb[0].mxu0
    %v2963 = vadd.f32 0.0, %v2962
    %v2964 = vpop.f32.mrb[0].mxu0
    %v2965 = vpop.f32.mrb[0].mxu0
    %v2966 = vadd.f32 0.0, %v2965
    %v2967 = vpop.f32.mrb[0].mxu0
    %2968 = vmatprep.mubr.bf16.mxu0 0
    %2969 = vmatmul.mubr.bf16.gmra.mrb[0].mxu0 %v2790
    %v2970 = vpop.f32.mrb[0].mxu0
    %v2971 = vadd.f32 0.0, %v2970
    %v2972 = vpop.f32.mrb[0].mxu0
    %v2973 = vpop.f32.mrb[0].mxu0
    %v2974 = vadd.f32 0.0, %v2973
    %v2975 = vpop.f32.mrb[0].mxu0
    %2976 = vmatprep.mubr.bf16.mxu0 0
    %2977 = vmatmul.mubr.bf16.gmra.mrb[0].mxu0 %v2792
    %v2978 = vpop.f32.mrb[0].mxu0
    %v2979 = vadd.f32 0.0, %v2978
    %v2980 = vpop.f32.mrb[0].mxu0
    %v2981 = vpop.f32.mrb[0].mxu0
    %v2982 = vadd.f32 0.0, %v2981
    %v2983 = vpop.f32.mrb[0].mxu0
    %2984 = vmatprep.mubr.bf16.mxu0 0
    %2985 = vmatmul.mubr.bf16.gmra.mrb[0].mxu0 %v2794
    %v2986 = vpop.f32.mrb[0].mxu0
    %v2987 = vadd.f32 0.0, %v2986
    %v2988 = vpop.f32.mrb[0].mxu0
    %v2989 = vpop.f32.mrb[0].mxu0
    %v2990 = vadd.f32 0.0, %v2989
    %v2991 = vpop.f32.mrb[0].mxu0
    %2992 = vdwg.mxu0
    %v2993 = vadd.f32 %v2720, %v2891
    %v2994 = vadd.f32 %v2721, %v2894
    %v2995 = vadd.f32 %v2722, %v2899
    %v2996 = vadd.f32 %v2723, %v2902
    %v2997 = vadd.f32 %v2724, %v2907
    %v2998 = vadd.f32 %v2725, %v2910
    %v2999 = vadd.f32 %v2726, %v2915
    %v3000 = vadd.f32 %v2727, %v2918
    %v3001 = vadd.f32 %v2728, %v2923
    %v3002 = vadd.f32 %v2729, %v2926
    %v3003 = vadd.f32 %v2730, %v2931
    %v3004 = vadd.f32 %v2731, %v2934
    %v3005 = vadd.f32 %v2732, %v2939
    %v3006 = vadd.f32 %v2733, %v2942
    %v3007 = vadd.f32 %v2734, %v2947
    %v3008 = vadd.f32 %v2735, %v2950
    %v3009 = vadd.f32 %v2736, %v2955
    %v3010 = vadd.f32 %v2737, %v2958
    %v3011 = vadd.f32 %v2738, %v2963
    %v3012 = vadd.f32 %v2739, %v2966
    %v3013 = vadd.f32 %v2740, %v2971
    %v3014 = vadd.f32 %v2741, %v2974
    %v3015 = vadd.f32 %v2742, %v2979
    %v3016 = vadd.f32 %v2743, %v2982
    %v3017 = vadd.f32 %v2744, %v2987
    %v3018 = vadd.f32 %v2745, %v2990
    %v3019 = vld [vmem:[#allocation2 + $0x8] sm:$0xc]
    %v3020 = vld [vmem:[#allocation2 + $0xc] sm:$0xf]
    %v3021 = vld [vmem:[#allocation2 + $0x10] sm:$0xf]
    %v3022 = vld [vmem:[#allocation2 + $0x14] sm:$0xf]
    %v3023 = vld [vmem:[#allocation2 + $0x18] sm:$0xf]
    %v3024 = vld [vmem:[#allocation2 + $0x1c] sm:$0xf]
    %v3025 = vld [vmem:[#allocation2 + $0x20] sm:$0xf]
    %v3026 = vld [vmem:[#allocation2 + $0x24] sm:$0xf]
    %v3027 = vld [vmem:[#allocation2 + $0x28] sm:$0xf]
    %v3028 = vld [vmem:[#allocation2 + $0x2c] sm:$0xf]
    %v3029 = vld [vmem:[#allocation2 + $0x30] sm:$0xf]
    %v3030 = vld [vmem:[#allocation2 + $0x34] sm:$0xf]
    %v3031 = vld [vmem:[#allocation2 + $0x38] sm:$0xf]
    %v3032 = vld [vmem:[#allocation2 + $0x3c] sm:$0xf]
    %v3033 = vld [vmem:[#allocation2 + $0x40] sm:$0xf]
    %v3034 = vld [vmem:[#allocation2 + $0x44] sm:$0xf]
    %v3035 = vld [vmem:[#allocation2 + $0x48] sm:$0xf]
    %v3036 = vld [vmem:[#allocation2 + $0x4c] sm:$0xf]
    %v3037 = vld [vmem:[#allocation2 + $0x50] sm:$0xf]
    %v3038 = vld [vmem:[#allocation2 + $0x54] sm:$0xf]
    %v3039 = vld [vmem:[#allocation2 + $0x58] sm:$0xf]
    %v3040 = vld [vmem:[#allocation2 + $0x5c] sm:$0xf]
    %v3041 = vld [vmem:[#allocation2 + $0x60] sm:$0xf]
    %v3042 = vld [vmem:[#allocation2 + $0x64] sm:$0xf]
    %v3043 = vld [vmem:[#allocation2 + $0x68] sm:$0xf]
    %v3044 = vld [vmem:[#allocation2 + $0x6c] sm:$0xf]
    %v3045 = vld [vmem:[#allocation2 + $0x70] sm:$0x3]
    %s3046 = scalar_lea.vmem [#allocation3], 384
    %v3047 = vld [vmem:[%s3046] sm:$0xf]
    %v3048 = vld [vmem:[%s3046 + $0x4] sm:$0xf]
    %v3049 = vld [vmem:[%s3046 + $0x8] sm:$0xf]
    %v3050 = vld [vmem:[%s3046 + $0xc] sm:$0xf]
    %v3051 = vld [vmem:[%s3046 + $0x10] sm:$0xf]
    %v3052 = vld [vmem:[%s3046 + $0x14] sm:$0xf]
    %v3053 = vld [vmem:[%s3046 + $0x18] sm:$0xf]
    %v3054 = vld [vmem:[%s3046 + $0x1c] sm:$0xf]
    %v3055 = vld [vmem:[%s3046 + $0x20] sm:$0xf]
    %v3056 = vld [vmem:[%s3046 + $0x24] sm:$0xf]
    %v3057 = vld [vmem:[%s3046 + $0x28] sm:$0xf]
    %v3058 = vld [vmem:[%s3046 + $0x2c] sm:$0xf]
    %v3059 = vld [vmem:[%s3046 + $0x30] sm:$0xf]
    %v3060 = vld [vmem:[%s3046 + $0x34] sm:$0xf]
    %v3061 = vld [vmem:[%s3046 + $0x38] sm:$0xf]
    %v3062 = vld [vmem:[%s3046 + $0x3c] sm:$0xf]
    %v3090 = vunpack.c.l.b16 %v3019
    %v3091 = vunpack.c.l.b16 %v3020
    %v3092 = vunpack.c.l.b16 %v3021
    %v3093 = vunpack.c.l.b16 %v3022
    %v3094 = vunpack.c.l.b16 %v3023
    %v3095 = vunpack.c.l.b16 %v3024
    %v3096 = vunpack.c.l.b16 %v3025
    %v3097 = vunpack.c.l.b16 %v3026
    %v3098 = vunpack.c.l.b16 %v3027
    %v3099 = vunpack.c.l.b16 %v3028
    %v3100 = vunpack.c.l.b16 %v3029
    %v3101 = vunpack.c.l.b16 %v3030
    %v3102 = vunpack.c.l.b16 %v3031
    %v3103 = vunpack.c.l.b16 %v3032
    %v3104 = vunpack.c.l.b16 %v3033
    %v3105 = vunpack.c.l.b16 %v3034
    %v3106 = vunpack.c.l.b16 %v3035
    %v3107 = vunpack.c.l.b16 %v3036
    %v3108 = vunpack.c.l.b16 %v3037
    %v3109 = vunpack.c.l.b16 %v3038
    %v3110 = vunpack.c.l.b16 %v3039
    %v3111 = vunpack.c.l.b16 %v3040
    %v3112 = vunpack.c.l.b16 %v3041
    %v3113 = vunpack.c.l.b16 %v3042
    %v3114 = vunpack.c.l.b16 %v3043
    %v3115 = vunpack.c.l.b16 %v3044
    %v3116 = vunpack.c.l.b16 %v3045
    %v3117 = vpack.c.b16 %v3091, %v3090
    %v3118 = vpack.c.b16 %v3093, %v3092
    %v3119 = vpack.c.b16 %v3095, %v3094
    %v3120 = vpack.c.b16 %v3097, %v3096
    %v3121 = vpack.c.b16 %v3099, %v3098
    %v3122 = vpack.c.b16 %v3101, %v3100
    %v3123 = vpack.c.b16 %v3103, %v3102
    %v3124 = vpack.c.b16 %v3105, %v3104
    %v3125 = vpack.c.b16 %v3107, %v3106
    %v3126 = vpack.c.b16 %v3109, %v3108
    %v3127 = vpack.c.b16 %v3111, %v3110
    %v3128 = vpack.c.b16 %v3113, %v3112
    %v3129 = vpack.c.b16 %v3115, %v3114
    %v3130 = vpack.c.b16 %v3116, %v3116
    %v3131 = vrot.slane %v3117, 2
    %v3132 = vrot.slane %v3118, 2
    %v3133 = vsel %vm2767, %v3131, %v3132
    %v3134 = vrot.slane %v3119, 2
    %v3135 = vsel %vm2767, %v3132, %v3134
    %v3136 = vrot.slane %v3120, 2
    %v3137 = vsel %vm2767, %v3134, %v3136
    %v3138 = vrot.slane %v3121, 2
    %v3139 = vsel %vm2767, %v3136, %v3138
    %v3140 = vrot.slane %v3122, 2
    %v3141 = vsel %vm2767, %v3138, %v3140
    %v3142 = vrot.slane %v3123, 2
    %v3143 = vsel %vm2767, %v3140, %v3142
    %v3144 = vrot.slane %v3124, 2
    %v3145 = vsel %vm2767, %v3142, %v3144
    %v3146 = vrot.slane %v3125, 2
    %v3147 = vsel %vm2767, %v3144, %v3146
    %v3148 = vrot.slane %v3126, 2
    %v3149 = vsel %vm2767, %v3146, %v3148
    %v3150 = vrot.slane %v3127, 2
    %v3151 = vsel %vm2767, %v3148, %v3150
    %v3152 = vrot.slane %v3128, 2
    %v3153 = vsel %vm2767, %v3150, %v3152
    %v3154 = vrot.slane %v3129, 2
    %v3155 = vsel %vm2767, %v3152, %v3154
    %v3156 = vrot.slane %v3130, 2
    %v3157 = vsel %vm2767, %v3154, %v3156
    %v3187 = vunpack.c.l.b16 %v3047
    %v3188 = vunpack.c.l.b16 %v3048
    %v3189 = vunpack.c.l.b16 %v3049
    %v3190 = vunpack.c.l.b16 %v3050
    %v3191 = vunpack.c.l.b16 %v3051
    %v3192 = vunpack.c.l.b16 %v3052
    %v3193 = vunpack.c.l.b16 %v3053
    %v3194 = vunpack.c.l.b16 %v3054
    %v3195 = vunpack.c.l.b16 %v3055
    %v3196 = vunpack.c.l.b16 %v3056
    %v3197 = vunpack.c.l.b16 %v3057
    %v3198 = vunpack.c.l.b16 %v3058
    %v3199 = vunpack.c.l.b16 %v3059
    %v3200 = vunpack.c.l.b16 %v3060
    %v3201 = vunpack.c.l.b16 %v3061
    %v3202 = vunpack.c.l.b16 %v3062
    %v3203 = vpack.c.b16 %v3188, %v3187
    %v3204 = vpack.c.b16 %v3190, %v3189
    %v3205 = vpack.c.b16 %v3192, %v3191
    %v3206 = vpack.c.b16 %v3194, %v3193
    %v3207 = vpack.c.b16 %v3196, %v3195
    %v3208 = vpack.c.b16 %v3198, %v3197
    %v3209 = vpack.c.b16 %v3200, %v3199
    %v3210 = vpack.c.b16 %v3202, %v3201
    %3219 = vmatprep.subr.bf16.mxu0 0
    %3220 = vmatpush1.bf16.msra.mxu0 %v3203
    %3221 = vmatprep.subr.bf16.mxu0 0
    %3222 = vmatpush1.bf16.msra.mxu0 %v3204
    %3223 = vmatprep.subr.bf16.mxu0 0
    %3224 = vmatpush1.bf16.msra.mxu0 %v3205
    %3225 = vmatprep.subr.bf16.mxu0 0
    %3226 = vmatpush1.bf16.msra.mxu0 %v3206
    %3227 = vmatprep.subr.bf16.mxu0 0
    %3228 = vmatpush1.bf16.msra.mxu0 %v3207
    %3229 = vmatprep.subr.bf16.mxu0 0
    %3230 = vmatpush1.bf16.msra.mxu0 %v3208
    %3231 = vmatprep.subr.bf16.mxu0 0
    %3232 = vmatpush1.bf16.msra.mxu0 %v3209
    %3233 = vmatprep.subr.bf16.mxu0 0
    %3234 = vmatpush1.bf16.msra.mxu0 %v3210
    %3235 = vmatprep.subr.bf16.mxu0 0
    %3236 = vmatpush1.bf16.msra.mxu0 0
    %3237 = vmatprep.subr.bf16.mxu0 0
    %3238 = vmatpush1.bf16.msra.mxu0 0
    %3239 = vmatprep.subr.bf16.mxu0 0
    %3240 = vmatpush1.bf16.msra.mxu0 0
    %3241 = vmatprep.subr.bf16.mxu0 0
    %3242 = vmatpush1.bf16.msra.mxu0 0
    %3243 = vmatprep.subr.bf16.mxu0 0
    %3244 = vmatpush1.bf16.msra.mxu0 0
    %3245 = vmatprep.subr.bf16.mxu0 0
    %3246 = vmatpush1.bf16.msra.mxu0 0
    %3247 = vmatprep.subr.bf16.mxu0 0
    %3248 = vmatpush1.bf16.msra.mxu0 0
    %3249 = vmatprep.subr.bf16.mxu0 0
    %3250 = vmatpush1.bf16.msra.mxu0 0
    %3251 = vmatprep.mubr.bf16.mxu0 0
    %3252 = vmatmul.mubr.bf16.gmra.mrb[0].mxu0 %v3133
    %v3253 = vpop.f32.mrb[0].mxu0
    %v3254 = vadd.f32 0.0, %v3253
    %v3255 = vpop.f32.mrb[0].mxu0
    %v3256 = vpop.f32.mrb[0].mxu0
    %v3257 = vadd.f32 0.0, %v3256
    %v3258 = vpop.f32.mrb[0].mxu0
    %3259 = vmatprep.mubr.bf16.mxu0 0
    %3260 = vmatmul.mubr.bf16.gmra.mrb[0].mxu0 %v3135
    %v3261 = vpop.f32.mrb[0].mxu0
    %v3262 = vadd.f32 0.0, %v3261
    %v3263 = vpop.f32.mrb[0].mxu0
    %v3264 = vpop.f32.mrb[0].mxu0
    %v3265 = vadd.f32 0.0, %v3264
    %v3266 = vpop.f32.mrb[0].mxu0
    %3267 = vmatprep.mubr.bf16.mxu0 0
    %3268 = vmatmul.mubr.bf16.gmra.mrb[0].mxu0 %v3137
    %v3269 = vpop.f32.mrb[0].mxu0
    %v3270 = vadd.f32 0.0, %v3269
    %v3271 = vpop.f32.mrb[0].mxu0
    %v3272 = vpop.f32.mrb[0].mxu0
    %v3273 = vadd.f32 0.0, %v3272
    %v3274 = vpop.f32.mrb[0].mxu0
    %3275 = vmatprep.mubr.bf16.mxu0 0
    %3276 = vmatmul.mubr.bf16.gmra.mrb[0].mxu0 %v3139
    %v3277 = vpop.f32.mrb[0].mxu0
    %v3278 = vadd.f32 0.0, %v3277
    %v3279 = vpop.f32.mrb[0].mxu0
    %v3280 = vpop.f32.mrb[0].mxu0
    %v3281 = vadd.f32 0.0, %v3280
    %v3282 = vpop.f32.mrb[0].mxu0
    %3283 = vmatprep.mubr.bf16.mxu0 0
    %3284 = vmatmul.mubr.bf16.gmra.mrb[0].mxu0 %v3141
    %v3285 = vpop.f32.mrb[0].mxu0
    %v3286 = vadd.f32 0.0, %v3285
    %v3287 = vpop.f32.mrb[0].mxu0
    %v3288 = vpop.f32.mrb[0].mxu0
    %v3289 = vadd.f32 0.0, %v3288
    %v3290 = vpop.f32.mrb[0].mxu0
    %3291 = vmatprep.mubr.bf16.mxu0 0
    %3292 = vmatmul.mubr.bf16.gmra.mrb[0].mxu0 %v3143
    %v3293 = vpop.f32.mrb[0].mxu0
    %v3294 = vadd.f32 0.0, %v3293
    %v3295 = vpop.f32.mrb[0].mxu0
    %v3296 = vpop.f32.mrb[0].mxu0
    %v3297 = vadd.f32 0.0, %v3296
    %v3298 = vpop.f32.mrb[0].mxu0
    %3299 = vmatprep.mubr.bf16.mxu0 0
    %3300 = vmatmul.mubr.bf16.gmra.mrb[0].mxu0 %v3145
    %v3301 = vpop.f32.mrb[0].mxu0
    %v3302 = vadd.f32 0.0, %v3301
    %v3303 = vpop.f32.mrb[0].mxu0
    %v3304 = vpop.f32.mrb[0].mxu0
    %v3305 = vadd.f32 0.0, %v3304
    %v3306 = vpop.f32.mrb[0].mxu0
    %3307 = vmatprep.mubr.bf16.mxu0 0
    %3308 = vmatmul.mubr.bf16.gmra.mrb[0].mxu0 %v3147
    %v3309 = vpop.f32.mrb[0].mxu0
    %v3310 = vadd.f32 0.0, %v3309
    %v3311 = vpop.f32.mrb[0].mxu0
    %v3312 = vpop.f32.mrb[0].mxu0
    %v3313 = vadd.f32 0.0, %v3312
    %v3314 = vpop.f32.mrb[0].mxu0
    %3315 = vmatprep.mubr.bf16.mxu0 0
    %3316 = vmatmul.mubr.bf16.gmra.mrb[0].mxu0 %v3149
    %v3317 = vpop.f32.mrb[0].mxu0
    %v3318 = vadd.f32 0.0, %v3317
    %v3319 = vpop.f32.mrb[0].mxu0
    %v3320 = vpop.f32.mrb[0].mxu0
    %v3321 = vadd.f32 0.0, %v3320
    %v3322 = vpop.f32.mrb[0].mxu0
    %3323 = vmatprep.mubr.bf16.mxu0 0
    %3324 = vmatmul.mubr.bf16.gmra.mrb[0].mxu0 %v3151
    %v3325 = vpop.f32.mrb[0].mxu0
    %v3326 = vadd.f32 0.0, %v3325
    %v3327 = vpop.f32.mrb[0].mxu0
    %v3328 = vpop.f32.mrb[0].mxu0
    %v3329 = vadd.f32 0.0, %v3328
    %v3330 = vpop.f32.mrb[0].mxu0
    %3331 = vmatprep.mubr.bf16.mxu0 0
    %3332 = vmatmul.mubr.bf16.gmra.mrb[0].mxu0 %v3153
    %v3333 = vpop.f32.mrb[0].mxu0
    %v3334 = vadd.f32 0.0, %v3333
    %v3335 = vpop.f32.mrb[0].mxu0
    %v3336 = vpop.f32.mrb[0].mxu0
    %v3337 = vadd.f32 0.0, %v3336
    %v3338 = vpop.f32.mrb[0].mxu0
    %3339 = vmatprep.mubr.bf16.mxu0 0
    %3340 = vmatmul.mubr.bf16.gmra.mrb[0].mxu0 %v3155
    %v3341 = vpop.f32.mrb[0].mxu0
    %v3342 = vadd.f32 0.0, %v3341
    %v3343 = vpop.f32.mrb[0].mxu0
    %v3344 = vpop.f32.mrb[0].mxu0
    %v3345 = vadd.f32 0.0, %v3344
    %v3346 = vpop.f32.mrb[0].mxu0
    %3347 = vmatprep.mubr.bf16.mxu0 0
    %3348 = vmatmul.mubr.bf16.gmra.mrb[0].mxu0 %v3157
    %v3349 = vpop.f32.mrb[0].mxu0
    %v3350 = vadd.f32 0.0, %v3349
    %v3351 = vpop.f32.mrb[0].mxu0
    %v3352 = vpop.f32.mrb[0].mxu0
    %v3353 = vadd.f32 0.0, %v3352
    %v3354 = vpop.f32.mrb[0].mxu0
    %3355 = vdwg.mxu0
    %v3356 = vadd.f32 %v2993, %v3254
    %v3357 = vadd.f32 %v2994, %v3257
    %v3358 = vadd.f32 %v2995, %v3262
    %v3359 = vadd.f32 %v2996, %v3265
    %v3360 = vadd.f32 %v2997, %v3270
    %v3361 = vadd.f32 %v2998, %v3273
    %v3362 = vadd.f32 %v2999, %v3278
    %v3363 = vadd.f32 %v3000, %v3281
    %v3364 = vadd.f32 %v3001, %v3286
    %v3365 = vadd.f32 %v3002, %v3289
    %v3366 = vadd.f32 %v3003, %v3294
    %v3367 = vadd.f32 %v3004, %v3297
    %v3368 = vadd.f32 %v3005, %v3302
    %v3369 = vadd.f32 %v3006, %v3305
    %v3370 = vadd.f32 %v3007, %v3310
    %v3371 = vadd.f32 %v3008, %v3313
    %v3372 = vadd.f32 %v3009, %v3318
    %v3373 = vadd.f32 %v3010, %v3321
    %v3374 = vadd.f32 %v3011, %v3326
    %v3375 = vadd.f32 %v3012, %v3329
    %v3376 = vadd.f32 %v3013, %v3334
    %v3377 = vadd.f32 %v3014, %v3337
    %v3378 = vadd.f32 %v3015, %v3342
    %v3379 = vadd.f32 %v3016, %v3345
    %v3380 = vadd.f32 %v3017, %v3350
    %v3381 = vadd.f32 %v3018, %v3353
    %v3382 = vld [vmem:[#allocation2 + $0x70] sm:$0x7]
    %s3383 = scalar_lea.vmem [#allocation3], 448
    %v3384 = vld [vmem:[%s3383] sm:$0xf]
    %v3385 = vld [vmem:[%s3383 + $0x4] sm:$0xf]
    %v3386 = vld [vmem:[%s3383 + $0x8] sm:$0xf]
    %v3387 = vld [vmem:[%s3383 + $0xc] sm:$0xf]
    %v3388 = vld [vmem:[%s3383 + $0x10] sm:$0xf]
    %v3389 = vld [vmem:[%s3383 + $0x14] sm:$0xf]
    %v3390 = vld [vmem:[%s3383 + $0x18] sm:$0xf]
    %v3391 = vld [vmem:[%s3383 + $0x1c] sm:$0xf]
    %v3392 = vld [vmem:[%s3383 + $0x20] sm:$0xf]
    %v3393 = vld [vmem:[%s3383 + $0x24] sm:$0xf]
    %v3394 = vld [vmem:[%s3383 + $0x28] sm:$0xf]
    %v3395 = vld [vmem:[%s3383 + $0x2c] sm:$0xf]
    %v3396 = vld [vmem:[%s3383 + $0x30] sm:$0xf]
    %v3397 = vld [vmem:[%s3383 + $0x34] sm:$0xf]
    %v3398 = vld [vmem:[%s3383 + $0x38] sm:$0xf]
    %v3399 = vld [vmem:[%s3383 + $0x3c] sm:$0xf]
    %v3401 = vunpack.c.l.b16 %v3382
    %v3402 = vpack.c.b16 %v3401, %v3401
    %vm3403 = vsmask.f32 5376
    %v3405 = vshrl.u32 %v3117, 16
    %v3407 = vrot.slane %v3405, 2
    %v3408 = vshll.u32 %v3117, 16
    %v3410 = vrot.slane %v3408, 3
    %v3411 = vor.u32 %v3407, %v3410
    %v3413 = vshrl.u32 %v3118, 16
    %v3415 = vrot.slane %v3413, 2
    %v3416 = vshll.u32 %v3118, 16
    %v3418 = vrot.slane %v3416, 3
    %v3419 = vor.u32 %v3415, %v3418
    %v3420 = vsel %vm3403, %v3411, %v3419
    %v3422 = vshrl.u32 %v3119, 16
    %v3424 = vrot.slane %v3422, 2
    %v3425 = vshll.u32 %v3119, 16
    %v3427 = vrot.slane %v3425, 3
    %v3428 = vor.u32 %v3424, %v3427
    %v3429 = vsel %vm3403, %v3419, %v3428
    %v3431 = vshrl.u32 %v3120, 16
    %v3433 = vrot.slane %v3431, 2
    %v3434 = vshll.u32 %v3120, 16
    %v3436 = vrot.slane %v3434, 3
    %v3437 = vor.u32 %v3433, %v3436
    %v3438 = vsel %vm3403, %v3428, %v3437
    %v3440 = vshrl.u32 %v3121, 16
    %v3442 = vrot.slane %v3440, 2
    %v3443 = vshll.u32 %v3121, 16
    %v3445 = vrot.slane %v3443, 3
    %v3446 = vor.u32 %v3442, %v3445
    %v3447 = vsel %vm3403, %v3437, %v3446
    %v3449 = vshrl.u32 %v3122, 16
    %v3451 = vrot.slane %v3449, 2
    %v3452 = vshll.u32 %v3122, 16
    %v3454 = vrot.slane %v3452, 3
    %v3455 = vor.u32 %v3451, %v3454
    %v3456 = vsel %vm3403, %v3446, %v3455
    %v3458 = vshrl.u32 %v3123, 16
    %v3460 = vrot.slane %v3458, 2
    %v3461 = vshll.u32 %v3123, 16
    %v3463 = vrot.slane %v3461, 3
    %v3464 = vor.u32 %v3460, %v3463
    %v3465 = vsel %vm3403, %v3455, %v3464
    %v3467 = vshrl.u32 %v3124, 16
    %v3469 = vrot.slane %v3467, 2
    %v3470 = vshll.u32 %v3124, 16
    %v3472 = vrot.slane %v3470, 3
    %v3473 = vor.u32 %v3469, %v3472
    %v3474 = vsel %vm3403, %v3464, %v3473
    %v3476 = vshrl.u32 %v3125, 16
    %v3478 = vrot.slane %v3476, 2
    %v3479 = vshll.u32 %v3125, 16
    %v3481 = vrot.slane %v3479, 3
    %v3482 = vor.u32 %v3478, %v3481
    %v3483 = vsel %vm3403, %v3473, %v3482
    %v3485 = vshrl.u32 %v3126, 16
    %v3487 = vrot.slane %v3485, 2
    %v3488 = vshll.u32 %v3126, 16
    %v3490 = vrot.slane %v3488, 3
    %v3491 = vor.u32 %v3487, %v3490
    %v3492 = vsel %vm3403, %v3482, %v3491
    %v3494 = vshrl.u32 %v3127, 16
    %v3496 = vrot.slane %v3494, 2
    %v3497 = vshll.u32 %v3127, 16
    %v3499 = vrot.slane %v3497, 3
    %v3500 = vor.u32 %v3496, %v3499
    %v3501 = vsel %vm3403, %v3491, %v3500
    %v3503 = vshrl.u32 %v3128, 16
    %v3505 = vrot.slane %v3503, 2
    %v3506 = vshll.u32 %v3128, 16
    %v3508 = vrot.slane %v3506, 3
    %v3509 = vor.u32 %v3505, %v3508
    %v3510 = vsel %vm3403, %v3500, %v3509
    %v3512 = vshrl.u32 %v3129, 16
    %v3514 = vrot.slane %v3512, 2
    %v3515 = vshll.u32 %v3129, 16
    %v3517 = vrot.slane %v3515, 3
    %v3518 = vor.u32 %v3514, %v3517
    %v3519 = vsel %vm3403, %v3509, %v3518
    %v3521 = vshrl.u32 %v3402, 16
    %v3523 = vrot.slane %v3521, 2
    %v3524 = vshll.u32 %v3402, 16
    %v3526 = vrot.slane %v3524, 3
    %v3527 = vor.u32 %v3523, %v3526
    %v3528 = vsel %vm3403, %v3518, %v3527
    %v3558 = vunpack.c.l.b16 %v3384
    %v3559 = vunpack.c.l.b16 %v3385
    %v3560 = vunpack.c.l.b16 %v3386
    %v3561 = vunpack.c.l.b16 %v3387
    %v3562 = vunpack.c.l.b16 %v3388
    %v3563 = vunpack.c.l.b16 %v3389
    %v3564 = vunpack.c.l.b16 %v3390
    %v3565 = vunpack.c.l.b16 %v3391
    %v3566 = vunpack.c.l.b16 %v3392
    %v3567 = vunpack.c.l.b16 %v3393
    %v3568 = vunpack.c.l.b16 %v3394
    %v3569 = vunpack.c.l.b16 %v3395
    %v3570 = vunpack.c.l.b16 %v3396
    %v3571 = vunpack.c.l.b16 %v3397
    %v3572 = vunpack.c.l.b16 %v3398
    %v3573 = vunpack.c.l.b16 %v3399
    %v3574 = vpack.c.b16 %v3559, %v3558
    %v3575 = vpack.c.b16 %v3561, %v3560
    %v3576 = vpack.c.b16 %v3563, %v3562
    %v3577 = vpack.c.b16 %v3565, %v3564
    %v3578 = vpack.c.b16 %v3567, %v3566
    %v3579 = vpack.c.b16 %v3569, %v3568
    %v3580 = vpack.c.b16 %v3571, %v3570
    %v3581 = vpack.c.b16 %v3573, %v3572
    %3590 = vmatprep.subr.bf16.mxu0 0
    %3591 = vmatpush1.bf16.msra.mxu0 %v3574
    %3592 = vmatprep.subr.bf16.mxu0 0
    %3593 = vmatpush1.bf16.msra.mxu0 %v3575
    %3594 = vmatprep.subr.bf16.mxu0 0
    %3595 = vmatpush1.bf16.msra.mxu0 %v3576
    %3596 = vmatprep.subr.bf16.mxu0 0
    %3597 = vmatpush1.bf16.msra.mxu0 %v3577
    %3598 = vmatprep.subr.bf16.mxu0 0
    %3599 = vmatpush1.bf16.msra.mxu0 %v3578
    %3600 = vmatprep.subr.bf16.mxu0 0
    %3601 = vmatpush1.bf16.msra.mxu0 %v3579
    %3602 = vmatprep.subr.bf16.mxu0 0
    %3603 = vmatpush1.bf16.msra.mxu0 %v3580
    %3604 = vmatprep.subr.bf16.mxu0 0
    %3605 = vmatpush1.bf16.msra.mxu0 %v3581
    %3606 = vmatprep.subr.bf16.mxu0 0
    %3607 = vmatpush1.bf16.msra.mxu0 0
    %3608 = vmatprep.subr.bf16.mxu0 0
    %3609 = vmatpush1.bf16.msra.mxu0 0
    %3610 = vmatprep.subr.bf16.mxu0 0
    %3611 = vmatpush1.bf16.msra.mxu0 0
    %3612 = vmatprep.subr.bf16.mxu0 0
    %3613 = vmatpush1.bf16.msra.mxu0 0
    %3614 = vmatprep.subr.bf16.mxu0 0
    %3615 = vmatpush1.bf16.msra.mxu0 0
    %3616 = vmatprep.subr.bf16.mxu0 0
    %3617 = vmatpush1.bf16.msra.mxu0 0
    %3618 = vmatprep.subr.bf16.mxu0 0
    %3619 = vmatpush1.bf16.msra.mxu0 0
    %3620 = vmatprep.subr.bf16.mxu0 0
    %3621 = vmatpush1.bf16.msra.mxu0 0
    %3622 = vmatprep.mubr.bf16.mxu0 0
    %3623 = vmatmul.mubr.bf16.gmra.mrb[0].mxu0 %v3420
    %v3624 = vpop.f32.mrb[0].mxu0
    %v3625 = vadd.f32 0.0, %v3624
    %v3626 = vpop.f32.mrb[0].mxu0
    %v3627 = vpop.f32.mrb[0].mxu0
    %v3628 = vadd.f32 0.0, %v3627
    %v3629 = vpop.f32.mrb[0].mxu0
    %3630 = vmatprep.mubr.bf16.mxu0 0
    %3631 = vmatmul.mubr.bf16.gmra.mrb[0].mxu0 %v3429
    %v3632 = vpop.f32.mrb[0].mxu0
    %v3633 = vadd.f32 0.0, %v3632
    %v3634 = vpop.f32.mrb[0].mxu0
    %v3635 = vpop.f32.mrb[0].mxu0
    %v3636 = vadd.f32 0.0, %v3635
    %v3637 = vpop.f32.mrb[0].mxu0
    %3638 = vmatprep.mubr.bf16.mxu0 0
    %3639 = vmatmul.mubr.bf16.gmra.mrb[0].mxu0 %v3438
    %v3640 = vpop.f32.mrb[0].mxu0
    %v3641 = vadd.f32 0.0, %v3640
    %v3642 = vpop.f32.mrb[0].mxu0
    %v3643 = vpop.f32.mrb[0].mxu0
    %v3644 = vadd.f32 0.0, %v3643
    %v3645 = vpop.f32.mrb[0].mxu0
    %3646 = vmatprep.mubr.bf16.mxu0 0
    %3647 = vmatmul.mubr.bf16.gmra.mrb[0].mxu0 %v3447
    %v3648 = vpop.f32.mrb[0].mxu0
    %v3649 = vadd.f32 0.0, %v3648
    %v3650 = vpop.f32.mrb[0].mxu0
    %v3651 = vpop.f32.mrb[0].mxu0
    %v3652 = vadd.f32 0.0, %v3651
    %v3653 = vpop.f32.mrb[0].mxu0
    %3654 = vmatprep.mubr.bf16.mxu0 0
    %3655 = vmatmul.mubr.bf16.gmra.mrb[0].mxu0 %v3456
    %v3656 = vpop.f32.mrb[0].mxu0
    %v3657 = vadd.f32 0.0, %v3656
    %v3658 = vpop.f32.mrb[0].mxu0
    %v3659 = vpop.f32.mrb[0].mxu0
    %v3660 = vadd.f32 0.0, %v3659
    %v3661 = vpop.f32.mrb[0].mxu0
    %3662 = vmatprep.mubr.bf16.mxu0 0
    %3663 = vmatmul.mubr.bf16.gmra.mrb[0].mxu0 %v3465
    %v3664 = vpop.f32.mrb[0].mxu0
    %v3665 = vadd.f32 0.0, %v3664
    %v3666 = vpop.f32.mrb[0].mxu0
    %v3667 = vpop.f32.mrb[0].mxu0
    %v3668 = vadd.f32 0.0, %v3667
    %v3669 = vpop.f32.mrb[0].mxu0
    %3670 = vmatprep.mubr.bf16.mxu0 0
    %3671 = vmatmul.mubr.bf16.gmra.mrb[0].mxu0 %v3474
    %v3672 = vpop.f32.mrb[0].mxu0
    %v3673 = vadd.f32 0.0, %v3672
    %v3674 = vpop.f32.mrb[0].mxu0
    %v3675 = vpop.f32.mrb[0].mxu0
    %v3676 = vadd.f32 0.0, %v3675
    %v3677 = vpop.f32.mrb[0].mxu0
    %3678 = vmatprep.mubr.bf16.mxu0 0
    %3679 = vmatmul.mubr.bf16.gmra.mrb[0].mxu0 %v3483
    %v3680 = vpop.f32.mrb[0].mxu0
    %v3681 = vadd.f32 0.0, %v3680
    %v3682 = vpop.f32.mrb[0].mxu0
    %v3683 = vpop.f32.mrb[0].mxu0
    %v3684 = vadd.f32 0.0, %v3683
    %v3685 = vpop.f32.mrb[0].mxu0
    %3686 = vmatprep.mubr.bf16.mxu0 0
    %3687 = vmatmul.mubr.bf16.gmra.mrb[0].mxu0 %v3492
    %v3688 = vpop.f32.mrb[0].mxu0
    %v3689 = vadd.f32 0.0, %v3688
    %v3690 = vpop.f32.mrb[0].mxu0
    %v3691 = vpop.f32.mrb[0].mxu0
    %v3692 = vadd.f32 0.0, %v3691
    %v3693 = vpop.f32.mrb[0].mxu0
    %3694 = vmatprep.mubr.bf16.mxu0 0
    %3695 = vmatmul.mubr.bf16.gmra.mrb[0].mxu0 %v3501
    %v3696 = vpop.f32.mrb[0].mxu0
    %v3697 = vadd.f32 0.0, %v3696
    %v3698 = vpop.f32.mrb[0].mxu0
    %v3699 = vpop.f32.mrb[0].mxu0
    %v3700 = vadd.f32 0.0, %v3699
    %v3701 = vpop.f32.mrb[0].mxu0
    %3702 = vmatprep.mubr.bf16.mxu0 0
    %3703 = vmatmul.mubr.bf16.gmra.mrb[0].mxu0 %v3510
    %v3704 = vpop.f32.mrb[0].mxu0
    %v3705 = vadd.f32 0.0, %v3704
    %v3706 = vpop.f32.mrb[0].mxu0
    %v3707 = vpop.f32.mrb[0].mxu0
    %v3708 = vadd.f32 0.0, %v3707
    %v3709 = vpop.f32.mrb[0].mxu0
    %3710 = vmatprep.mubr.bf16.mxu0 0
    %3711 = vmatmul.mubr.bf16.gmra.mrb[0].mxu0 %v3519
    %v3712 = vpop.f32.mrb[0].mxu0
    %v3713 = vadd.f32 0.0, %v3712
    %v3714 = vpop.f32.mrb[0].mxu0
    %v3715 = vpop.f32.mrb[0].mxu0
    %v3716 = vadd.f32 0.0, %v3715
    %v3717 = vpop.f32.mrb[0].mxu0
    %3718 = vmatprep.mubr.bf16.mxu0 0
    %3719 = vmatmul.mubr.bf16.gmra.mrb[0].mxu0 %v3528
    %v3720 = vpop.f32.mrb[0].mxu0
    %v3721 = vadd.f32 0.0, %v3720
    %v3722 = vpop.f32.mrb[0].mxu0
    %v3723 = vpop.f32.mrb[0].mxu0
    %v3724 = vadd.f32 0.0, %v3723
    %v3725 = vpop.f32.mrb[0].mxu0
    %3726 = vdwg.mxu0
    %v3727 = vadd.f32 %v3356, %v3625
    %v3728 = vadd.f32 %v3357, %v3628
    %v3729 = vadd.f32 %v3358, %v3633
    %v3730 = vadd.f32 %v3359, %v3636
    %v3731 = vadd.f32 %v3360, %v3641
    %v3732 = vadd.f32 %v3361, %v3644
    %v3733 = vadd.f32 %v3362, %v3649
    %v3734 = vadd.f32 %v3363, %v3652
    %v3735 = vadd.f32 %v3364, %v3657
    %v3736 = vadd.f32 %v3365, %v3660
    %v3737 = vadd.f32 %v3366, %v3665
    %v3738 = vadd.f32 %v3367, %v3668
    %v3739 = vadd.f32 %v3368, %v3673
    %v3740 = vadd.f32 %v3369, %v3676
    %v3741 = vadd.f32 %v3370, %v3681
    %v3742 = vadd.f32 %v3371, %v3684
    %v3743 = vadd.f32 %v3372, %v3689
    %v3744 = vadd.f32 %v3373, %v3692
    %v3745 = vadd.f32 %v3374, %v3697
    %v3746 = vadd.f32 %v3375, %v3700
    %v3747 = vadd.f32 %v3376, %v3705
    %v3748 = vadd.f32 %v3377, %v3708
    %v3749 = vadd.f32 %v3378, %v3713
    %v3750 = vadd.f32 %v3379, %v3716
    %v3751 = vadd.f32 %v3380, %v3721
    %v3752 = vadd.f32 %v3381, %v3724
    %v3753 = vld [vmem:[#allocation2 + $0x8] sm:$0x8]
    %s3754 = scalar_lea.vmem [#allocation3], 512
    %v3755 = vld [vmem:[%s3754] sm:$0xf]
    %v3756 = vld [vmem:[%s3754 + $0x4] sm:$0xf]
    %v3757 = vld [vmem:[%s3754 + $0x8] sm:$0xf]
    %v3758 = vld [vmem:[%s3754 + $0xc] sm:$0xf]
    %v3759 = vld [vmem:[%s3754 + $0x10] sm:$0xf]
    %v3760 = vld [vmem:[%s3754 + $0x14] sm:$0xf]
    %v3761 = vld [vmem:[%s3754 + $0x18] sm:$0xf]
    %v3762 = vld [vmem:[%s3754 + $0x1c] sm:$0xf]
    %v3763 = vld [vmem:[%s3754 + $0x20] sm:$0xf]
    %v3764 = vld [vmem:[%s3754 + $0x24] sm:$0xf]
    %v3765 = vld [vmem:[%s3754 + $0x28] sm:$0xf]
    %v3766 = vld [vmem:[%s3754 + $0x2c] sm:$0xf]
    %v3767 = vld [vmem:[%s3754 + $0x30] sm:$0xf]
    %v3768 = vld [vmem:[%s3754 + $0x34] sm:$0xf]
    %v3769 = vld [vmem:[%s3754 + $0x38] sm:$0xf]
    %v3770 = vld [vmem:[%s3754 + $0x3c] sm:$0xf]
    %v3772 = vunpack.c.l.b16 %v3753
    %v3773 = vpack.c.b16 %v3091, %v3772
    %vm3774 = vcmask 1044480
    %v3775 = vrot.slane %v3773, 3
    %v3776 = vrot.slane %v3118, 3
    %v3777 = vsel %vm3774, %v3775, %v3776
    %v3778 = vrot.slane %v3119, 3
    %v3779 = vsel %vm3774, %v3776, %v3778
    %v3780 = vrot.slane %v3120, 3
    %v3781 = vsel %vm3774, %v3778, %v3780
    %v3782 = vrot.slane %v3121, 3
    %v3783 = vsel %vm3774, %v3780, %v3782
    %v3784 = vrot.slane %v3122, 3
    %v3785 = vsel %vm3774, %v3782, %v3784
    %v3786 = vrot.slane %v3123, 3
    %v3787 = vsel %vm3774, %v3784, %v3786
    %v3788 = vrot.slane %v3124, 3
    %v3789 = vsel %vm3774, %v3786, %v3788
    %v3790 = vrot.slane %v3125, 3
    %v3791 = vsel %vm3774, %v3788, %v3790
    %v3792 = vrot.slane %v3126, 3
    %v3793 = vsel %vm3774, %v3790, %v3792
    %v3794 = vrot.slane %v3127, 3
    %v3795 = vsel %vm3774, %v3792, %v3794
    %v3796 = vrot.slane %v3128, 3
    %v3797 = vsel %vm3774, %v3794, %v3796
    %v3798 = vrot.slane %v3129, 3
    %v3799 = vsel %vm3774, %v3796, %v3798
    %v3800 = vrot.slane %v3402, 3
    %v3801 = vsel %vm3774, %v3798, %v3800
    %v3831 = vunpack.c.l.b16 %v3755
    %v3832 = vunpack.c.l.b16 %v3756
    %v3833 = vunpack.c.l.b16 %v3757
    %v3834 = vunpack.c.l.b16 %v3758
    %v3835 = vunpack.c.l.b16 %v3759
    %v3836 = vunpack.c.l.b16 %v3760
    %v3837 = vunpack.c.l.b16 %v3761
    %v3838 = vunpack.c.l.b16 %v3762
    %v3839 = vunpack.c.l.b16 %v3763
    %v3840 = vunpack.c.l.b16 %v3764
    %v3841 = vunpack.c.l.b16 %v3765
    %v3842 = vunpack.c.l.b16 %v3766
    %v3843 = vunpack.c.l.b16 %v3767
    %v3844 = vunpack.c.l.b16 %v3768
    %v3845 = vunpack.c.l.b16 %v3769
    %v3846 = vunpack.c.l.b16 %v3770
    %v3847 = vpack.c.b16 %v3832, %v3831
    %v3848 = vpack.c.b16 %v3834, %v3833
    %v3849 = vpack.c.b16 %v3836, %v3835
    %v3850 = vpack.c.b16 %v3838, %v3837
    %v3851 = vpack.c.b16 %v3840, %v3839
    %v3852 = vpack.c.b16 %v3842, %v3841
    %v3853 = vpack.c.b16 %v3844, %v3843
    %v3854 = vpack.c.b16 %v3846, %v3845
    %3863 = vmatprep.subr.bf16.mxu0 0
    %3864 = vmatpush1.bf16.msra.mxu0 %v3847
    %3865 = vmatprep.subr.bf16.mxu0 0
    %3866 = vmatpush1.bf16.msra.mxu0 %v3848
    %3867 = vmatprep.subr.bf16.mxu0 0
    %3868 = vmatpush1.bf16.msra.mxu0 %v3849
    %3869 = vmatprep.subr.bf16.mxu0 0
    %3870 = vmatpush1.bf16.msra.mxu0 %v3850
    %3871 = vmatprep.subr.bf16.mxu0 0
    %3872 = vmatpush1.bf16.msra.mxu0 %v3851
    %3873 = vmatprep.subr.bf16.mxu0 0
    %3874 = vmatpush1.bf16.msra.mxu0 %v3852
    %3875 = vmatprep.subr.bf16.mxu0 0
    %3876 = vmatpush1.bf16.msra.mxu0 %v3853
    %3877 = vmatprep.subr.bf16.mxu0 0
    %3878 = vmatpush1.bf16.msra.mxu0 %v3854
    %3879 = vmatprep.subr.bf16.mxu0 0
    %3880 = vmatpush1.bf16.msra.mxu0 0
    %3881 = vmatprep.subr.bf16.mxu0 0
    %3882 = vmatpush1.bf16.msra.mxu0 0
    %3883 = vmatprep.subr.bf16.mxu0 0
    %3884 = vmatpush1.bf16.msra.mxu0 0
    %3885 = vmatprep.subr.bf16.mxu0 0
    %3886 = vmatpush1.bf16.msra.mxu0 0
    %3887 = vmatprep.subr.bf16.mxu0 0
    %3888 = vmatpush1.bf16.msra.mxu0 0
    %3889 = vmatprep.subr.bf16.mxu0 0
    %3890 = vmatpush1.bf16.msra.mxu0 0
    %3891 = vmatprep.subr.bf16.mxu0 0
    %3892 = vmatpush1.bf16.msra.mxu0 0
    %3893 = vmatprep.subr.bf16.mxu0 0
    %3894 = vmatpush1.bf16.msra.mxu0 0
    %3895 = vmatprep.mubr.bf16.mxu0 0
    %3896 = vmatmul.mubr.bf16.gmra.mrb[0].mxu0 %v3777
    %v3897 = vpop.f32.mrb[0].mxu0
    %v3898 = vadd.f32 0.0, %v3897
    %v3899 = vpop.f32.mrb[0].mxu0
    %v3900 = vpop.f32.mrb[0].mxu0
    %v3901 = vadd.f32 0.0, %v3900
    %v3902 = vpop.f32.mrb[0].mxu0
    %3903 = vmatprep.mubr.bf16.mxu0 0
    %3904 = vmatmul.mubr.bf16.gmra.mrb[0].mxu0 %v3779
    %v3905 = vpop.f32.mrb[0].mxu0
    %v3906 = vadd.f32 0.0, %v3905
    %v3907 = vpop.f32.mrb[0].mxu0
    %v3908 = vpop.f32.mrb[0].mxu0
    %v3909 = vadd.f32 0.0, %v3908
    %v3910 = vpop.f32.mrb[0].mxu0
    %3911 = vmatprep.mubr.bf16.mxu0 0
    %3912 = vmatmul.mubr.bf16.gmra.mrb[0].mxu0 %v3781
    %v3913 = vpop.f32.mrb[0].mxu0
    %v3914 = vadd.f32 0.0, %v3913
    %v3915 = vpop.f32.mrb[0].mxu0
    %v3916 = vpop.f32.mrb[0].mxu0
    %v3917 = vadd.f32 0.0, %v3916
    %v3918 = vpop.f32.mrb[0].mxu0
    %3919 = vmatprep.mubr.bf16.mxu0 0
    %3920 = vmatmul.mubr.bf16.gmra.mrb[0].mxu0 %v3783
    %v3921 = vpop.f32.mrb[0].mxu0
    %v3922 = vadd.f32 0.0, %v3921
    %v3923 = vpop.f32.mrb[0].mxu0
    %v3924 = vpop.f32.mrb[0].mxu0
    %v3925 = vadd.f32 0.0, %v3924
    %v3926 = vpop.f32.mrb[0].mxu0
    %3927 = vmatprep.mubr.bf16.mxu0 0
    %3928 = vmatmul.mubr.bf16.gmra.mrb[0].mxu0 %v3785
    %v3929 = vpop.f32.mrb[0].mxu0
    %v3930 = vadd.f32 0.0, %v3929
    %v3931 = vpop.f32.mrb[0].mxu0
    %v3932 = vpop.f32.mrb[0].mxu0
    %v3933 = vadd.f32 0.0, %v3932
    %v3934 = vpop.f32.mrb[0].mxu0
    %3935 = vmatprep.mubr.bf16.mxu0 0
    %3936 = vmatmul.mubr.bf16.gmra.mrb[0].mxu0 %v3787
    %v3937 = vpop.f32.mrb[0].mxu0
    %v3938 = vadd.f32 0.0, %v3937
    %v3939 = vpop.f32.mrb[0].mxu0
    %v3940 = vpop.f32.mrb[0].mxu0
    %v3941 = vadd.f32 0.0, %v3940
    %v3942 = vpop.f32.mrb[0].mxu0
    %3943 = vmatprep.mubr.bf16.mxu0 0
    %3944 = vmatmul.mubr.bf16.gmra.mrb[0].mxu0 %v3789
    %v3945 = vpop.f32.mrb[0].mxu0
    %v3946 = vadd.f32 0.0, %v3945
    %v3947 = vpop.f32.mrb[0].mxu0
    %v3948 = vpop.f32.mrb[0].mxu0
    %v3949 = vadd.f32 0.0, %v3948
    %v3950 = vpop.f32.mrb[0].mxu0
    %3951 = vmatprep.mubr.bf16.mxu0 0
    %3952 = vmatmul.mubr.bf16.gmra.mrb[0].mxu0 %v3791
    %v3953 = vpop.f32.mrb[0].mxu0
    %v3954 = vadd.f32 0.0, %v3953
    %v3955 = vpop.f32.mrb[0].mxu0
    %v3956 = vpop.f32.mrb[0].mxu0
    %v3957 = vadd.f32 0.0, %v3956
    %v3958 = vpop.f32.mrb[0].mxu0
    %3959 = vmatprep.mubr.bf16.mxu0 0
    %3960 = vmatmul.mubr.bf16.gmra.mrb[0].mxu0 %v3793
    %v3961 = vpop.f32.mrb[0].mxu0
    %v3962 = vadd.f32 0.0, %v3961
    %v3963 = vpop.f32.mrb[0].mxu0
    %v3964 = vpop.f32.mrb[0].mxu0
    %v3965 = vadd.f32 0.0, %v3964
    %v3966 = vpop.f32.mrb[0].mxu0
    %3967 = vmatprep.mubr.bf16.mxu0 0
    %3968 = vmatmul.mubr.bf16.gmra.mrb[0].mxu0 %v3795
    %v3969 = vpop.f32.mrb[0].mxu0
    %v3970 = vadd.f32 0.0, %v3969
    %v3971 = vpop.f32.mrb[0].mxu0
    %v3972 = vpop.f32.mrb[0].mxu0
    %v3973 = vadd.f32 0.0, %v3972
    %v3974 = vpop.f32.mrb[0].mxu0
    %3975 = vmatprep.mubr.bf16.mxu0 0
    %3976 = vmatmul.mubr.bf16.gmra.mrb[0].mxu0 %v3797
    %v3977 = vpop.f32.mrb[0].mxu0
    %v3978 = vadd.f32 0.0, %v3977
    %v3979 = vpop.f32.mrb[0].mxu0
    %v3980 = vpop.f32.mrb[0].mxu0
    %v3981 = vadd.f32 0.0, %v3980
    %v3982 = vpop.f32.mrb[0].mxu0
    %3983 = vmatprep.mubr.bf16.mxu0 0
    %3984 = vmatmul.mubr.bf16.gmra.mrb[0].mxu0 %v3799
    %v3985 = vpop.f32.mrb[0].mxu0
    %v3986 = vadd.f32 0.0, %v3985
    %v3987 = vpop.f32.mrb[0].mxu0
    %v3988 = vpop.f32.mrb[0].mxu0
    %v3989 = vadd.f32 0.0, %v3988
    %v3990 = vpop.f32.mrb[0].mxu0
    %3991 = vmatprep.mubr.bf16.mxu0 0
    %3992 = vmatmul.mubr.bf16.gmra.mrb[0].mxu0 %v3801
    %v3993 = vpop.f32.mrb[0].mxu0
    %v3994 = vadd.f32 0.0, %v3993
    %v3995 = vpop.f32.mrb[0].mxu0
    %v3996 = vpop.f32.mrb[0].mxu0
    %v3997 = vadd.f32 0.0, %v3996
    %v3998 = vpop.f32.mrb[0].mxu0
    %3999 = vdwg.mxu0
    %v4000 = vadd.f32 %v3727, %v3898
    %v4001 = vadd.f32 %v3728, %v3901
    %v4002 = vadd.f32 %v3729, %v3906
    %v4003 = vadd.f32 %v3730, %v3909
    %v4004 = vadd.f32 %v3731, %v3914
    %v4005 = vadd.f32 %v3732, %v3917
    %v4006 = vadd.f32 %v3733, %v3922
    %v4007 = vadd.f32 %v3734, %v3925
    %v4008 = vadd.f32 %v3735, %v3930
    %v4009 = vadd.f32 %v3736, %v3933
    %v4010 = vadd.f32 %v3737, %v3938
    %v4011 = vadd.f32 %v3738, %v3941
    %v4012 = vadd.f32 %v3739, %v3946
    %v4013 = vadd.f32 %v3740, %v3949
    %v4014 = vadd.f32 %v3741, %v3954
    %v4015 = vadd.f32 %v3742, %v3957
    %v4016 = vadd.f32 %v3743, %v3962
    %v4017 = vadd.f32 %v3744, %v3965
    %v4018 = vadd.f32 %v3745, %v3970
    %v4019 = vadd.f32 %v3746, %v3973
    %v4020 = vadd.f32 %v3747, %v3978
    %v4021 = vadd.f32 %v3748, %v3981
    %v4022 = vadd.f32 %v3749, %v3986
    %v4023 = vadd.f32 %v3750, %v3989
    %v4024 = vadd.f32 %v3751, %v3994
    %v4025 = vadd.f32 %v3752, %v3997
    %v4026 = vld [vmem:[%s6] sm:$0x3]
    %vm4027 = vcmask 31744
    %v4028 = vsel %vm4027, %v132, 0
    %v4030 = vsel %vm4027, %v133, 0
    %v4032 = vsel %vm4027, %v134, 0
    %v4034 = vsel %vm4027, %v135, 0
    %v4036 = vsel %vm4027, %v136, 0
    %v4038 = vsel %vm4027, %v137, 0
    %v4040 = vsel %vm4027, %v138, 0
    %v4042 = vsel %vm4027, %v139, 0
    %v4044 = vsel %vm4027, %v140, 0
    %v4046 = vsel %vm4027, %v141, 0
    %v4048 = vsel %vm4027, %v142, 0
    %v4050 = vsel %vm4027, %v143, 0
    %v4052 = vsel %vm4027, %v144, 0
    %v4055 = vsel %vm200, %v4026, 0
    %4057 = vmatprep.subr.bf16.mxu0 0
    %4058 = vmatpush1.bf16.msra.mxu0 %v4055
    %4059 = vmatprep.subr.bf16.mxu0 0
    %4060 = vmatpush1.bf16.msra.mxu0 0
    %4061 = vmatprep.subr.bf16.mxu0 0
    %4062 = vmatpush1.bf16.msra.mxu0 0
    %4063 = vmatprep.subr.bf16.mxu0 0
    %4064 = vmatpush1.bf16.msra.mxu0 0
    %4065 = vmatprep.subr.bf16.mxu0 0
    %4066 = vmatpush1.bf16.msra.mxu0 0
    %4067 = vmatprep.subr.bf16.mxu0 0
    %4068 = vmatpush1.bf16.msra.mxu0 0
    %4069 = vmatprep.subr.bf16.mxu0 0
    %4070 = vmatpush1.bf16.msra.mxu0 0
    %4071 = vmatprep.subr.bf16.mxu0 0
    %4072 = vmatpush1.bf16.msra.mxu0 0
    %4073 = vmatprep.subr.bf16.mxu0 0
    %4074 = vmatpush1.bf16.msra.mxu0 0
    %4075 = vmatprep.subr.bf16.mxu0 0
    %4076 = vmatpush1.bf16.msra.mxu0 0
    %4077 = vmatprep.subr.bf16.mxu0 0
    %4078 = vmatpush1.bf16.msra.mxu0 0
    %4079 = vmatprep.subr.bf16.mxu0 0
    %4080 = vmatpush1.bf16.msra.mxu0 0
    %4081 = vmatprep.subr.bf16.mxu0 0
    %4082 = vmatpush1.bf16.msra.mxu0 0
    %4083 = vmatprep.subr.bf16.mxu0 0
    %4084 = vmatpush1.bf16.msra.mxu0 0
    %4085 = vmatprep.subr.bf16.mxu0 0
    %4086 = vmatpush1.bf16.msra.mxu0 0
    %4087 = vmatprep.subr.bf16.mxu0 0
    %4088 = vmatpush1.bf16.msra.mxu0 0
    %4089 = vmatprep.mubr.bf16.mxu0 0
    %4090 = vmatmul.mubr.bf16.gmra.mrb[0].mxu0 %v4028
    %v4091 = vpop.f32.mrb[0].mxu0
    %v4092 = vadd.f32 0.0, %v4091
    %v4093 = vpop.f32.mrb[0].mxu0
    %v4094 = vpop.f32.mrb[0].mxu0
    %v4095 = vadd.f32 0.0, %v4094
    %v4096 = vpop.f32.mrb[0].mxu0
    %4097 = vmatprep.mubr.bf16.mxu0 0
    %4098 = vmatmul.mubr.bf16.gmra.mrb[0].mxu0 %v4030
    %v4099 = vpop.f32.mrb[0].mxu0
    %v4100 = vadd.f32 0.0, %v4099
    %v4101 = vpop.f32.mrb[0].mxu0
    %v4102 = vpop.f32.mrb[0].mxu0
    %v4103 = vadd.f32 0.0, %v4102
    %v4104 = vpop.f32.mrb[0].mxu0
    %4105 = vmatprep.mubr.bf16.mxu0 0
    %4106 = vmatmul.mubr.bf16.gmra.mrb[0].mxu0 %v4032
    %v4107 = vpop.f32.mrb[0].mxu0
    %v4108 = vadd.f32 0.0, %v4107
    %v4109 = vpop.f32.mrb[0].mxu0
    %v4110 = vpop.f32.mrb[0].mxu0
    %v4111 = vadd.f32 0.0, %v4110
    %v4112 = vpop.f32.mrb[0].mxu0
    %4113 = vmatprep.mubr.bf16.mxu0 0
    %4114 = vmatmul.mubr.bf16.gmra.mrb[0].mxu0 %v4034
    %v4115 = vpop.f32.mrb[0].mxu0
    %v4116 = vadd.f32 0.0, %v4115
    %v4117 = vpop.f32.mrb[0].mxu0
    %v4118 = vpop.f32.mrb[0].mxu0
    %v4119 = vadd.f32 0.0, %v4118
    %v4120 = vpop.f32.mrb[0].mxu0
    %4121 = vmatprep.mubr.bf16.mxu0 0
    %4122 = vmatmul.mubr.bf16.gmra.mrb[0].mxu0 %v4036
    %v4123 = vpop.f32.mrb[0].mxu0
    %v4124 = vadd.f32 0.0, %v4123
    %v4125 = vpop.f32.mrb[0].mxu0
    %v4126 = vpop.f32.mrb[0].mxu0
    %v4127 = vadd.f32 0.0, %v4126
    %v4128 = vpop.f32.mrb[0].mxu0
    %4129 = vmatprep.mubr.bf16.mxu0 0
    %4130 = vmatmul.mubr.bf16.gmra.mrb[0].mxu0 %v4038
    %v4131 = vpop.f32.mrb[0].mxu0
    %v4132 = vadd.f32 0.0, %v4131
    %v4133 = vpop.f32.mrb[0].mxu0
    %v4134 = vpop.f32.mrb[0].mxu0
    %v4135 = vadd.f32 0.0, %v4134
    %v4136 = vpop.f32.mrb[0].mxu0
    %4137 = vmatprep.mubr.bf16.mxu0 0
    %4138 = vmatmul.mubr.bf16.gmra.mrb[0].mxu0 %v4040
    %v4139 = vpop.f32.mrb[0].mxu0
    %v4140 = vadd.f32 0.0, %v4139
    %v4141 = vpop.f32.mrb[0].mxu0
    %v4142 = vpop.f32.mrb[0].mxu0
    %v4143 = vadd.f32 0.0, %v4142
    %v4144 = vpop.f32.mrb[0].mxu0
    %4145 = vmatprep.mubr.bf16.mxu0 0
    %4146 = vmatmul.mubr.bf16.gmra.mrb[0].mxu0 %v4042
    %v4147 = vpop.f32.mrb[0].mxu0
    %v4148 = vadd.f32 0.0, %v4147
    %v4149 = vpop.f32.mrb[0].mxu0
    %v4150 = vpop.f32.mrb[0].mxu0
    %v4151 = vadd.f32 0.0, %v4150
    %v4152 = vpop.f32.mrb[0].mxu0
    %4153 = vmatprep.mubr.bf16.mxu0 0
    %4154 = vmatmul.mubr.bf16.gmra.mrb[0].mxu0 %v4044
    %v4155 = vpop.f32.mrb[0].mxu0
    %v4156 = vadd.f32 0.0, %v4155
    %v4157 = vpop.f32.mrb[0].mxu0
    %v4158 = vpop.f32.mrb[0].mxu0
    %v4159 = vadd.f32 0.0, %v4158
    %v4160 = vpop.f32.mrb[0].mxu0
    %4161 = vmatprep.mubr.bf16.mxu0 0
    %4162 = vmatmul.mubr.bf16.gmra.mrb[0].mxu0 %v4046
    %v4163 = vpop.f32.mrb[0].mxu0
    %v4164 = vadd.f32 0.0, %v4163
    %v4165 = vpop.f32.mrb[0].mxu0
    %v4166 = vpop.f32.mrb[0].mxu0
    %v4167 = vadd.f32 0.0, %v4166
    %v4168 = vpop.f32.mrb[0].mxu0
    %4169 = vmatprep.mubr.bf16.mxu0 0
    %4170 = vmatmul.mubr.bf16.gmra.mrb[0].mxu0 %v4048
    %v4171 = vpop.f32.mrb[0].mxu0
    %v4172 = vadd.f32 0.0, %v4171
    %v4173 = vpop.f32.mrb[0].mxu0
    %v4174 = vpop.f32.mrb[0].mxu0
    %v4175 = vadd.f32 0.0, %v4174
    %v4176 = vpop.f32.mrb[0].mxu0
    %4177 = vmatprep.mubr.bf16.mxu0 0
    %4178 = vmatmul.mubr.bf16.gmra.mrb[0].mxu0 %v4050
    %v4179 = vpop.f32.mrb[0].mxu0
    %v4180 = vadd.f32 0.0, %v4179
    %v4181 = vpop.f32.mrb[0].mxu0
    %v4182 = vpop.f32.mrb[0].mxu0
    %v4183 = vadd.f32 0.0, %v4182
    %v4184 = vpop.f32.mrb[0].mxu0
    %4185 = vmatprep.mubr.bf16.mxu0 0
    %4186 = vmatmul.mubr.bf16.gmra.mrb[0].mxu0 %v4052
    %v4187 = vpop.f32.mrb[0].mxu0
    %v4188 = vadd.f32 0.0, %v4187
    %v4189 = vpop.f32.mrb[0].mxu0
    %v4190 = vpop.f32.mrb[0].mxu0
    %v4191 = vadd.f32 0.0, %v4190
    %v4192 = vpop.f32.mrb[0].mxu0
    %4193 = vdwg.mxu0
    %v4194 = vadd.f32 %v4000, %v4092
    %v4195 = vadd.f32 %v4001, %v4095
    %v4196 = vadd.f32 %v4002, %v4100
    %v4197 = vadd.f32 %v4003, %v4103
    %v4198 = vadd.f32 %v4004, %v4108
    %v4199 = vadd.f32 %v4005, %v4111
    %v4200 = vadd.f32 %v4006, %v4116
    %v4201 = vadd.f32 %v4007, %v4119
    %v4202 = vadd.f32 %v4008, %v4124
    %v4203 = vadd.f32 %v4009, %v4127
    %v4204 = vadd.f32 %v4010, %v4132
    %v4205 = vadd.f32 %v4011, %v4135
    %v4206 = vadd.f32 %v4012, %v4140
    %v4207 = vadd.f32 %v4013, %v4143
    %v4208 = vadd.f32 %v4014, %v4148
    %v4209 = vadd.f32 %v4015, %v4151
    %v4210 = vadd.f32 %v4016, %v4156
    %v4211 = vadd.f32 %v4017, %v4159
    %v4212 = vadd.f32 %v4018, %v4164
    %v4213 = vadd.f32 %v4019, %v4167
    %v4214 = vadd.f32 %v4020, %v4172
    %v4215 = vadd.f32 %v4021, %v4175
    %v4216 = vadd.f32 %v4022, %v4180
    %v4217 = vadd.f32 %v4023, %v4183
    %v4218 = vadd.f32 %v4024, %v4188
    %v4219 = vadd.f32 %v4025, %v4191
    %v4220 = vmax.f32 %v4194, 0.0
    %v4221 = vmax.f32 %v4195, 0.0
    %v4222 = vmax.f32 %v4196, 0.0
    %v4223 = vmax.f32 %v4197, 0.0
    %v4224 = vmax.f32 %v4198, 0.0
    %v4225 = vmax.f32 %v4199, 0.0
    %v4226 = vmax.f32 %v4200, 0.0
    %v4227 = vmax.f32 %v4201, 0.0
    %v4228 = vmax.f32 %v4202, 0.0
    %v4229 = vmax.f32 %v4203, 0.0
    %v4230 = vmax.f32 %v4204, 0.0
    %v4231 = vmax.f32 %v4205, 0.0
    %v4232 = vmax.f32 %v4206, 0.0
    %v4233 = vmax.f32 %v4207, 0.0
    %v4234 = vmax.f32 %v4208, 0.0
    %v4235 = vmax.f32 %v4209, 0.0
    %v4236 = vmax.f32 %v4210, 0.0
    %v4237 = vmax.f32 %v4211, 0.0
    %v4238 = vmax.f32 %v4212, 0.0
    %v4239 = vmax.f32 %v4213, 0.0
    %v4240 = vmax.f32 %v4214, 0.0
    %v4241 = vmax.f32 %v4215, 0.0
    %v4242 = vmax.f32 %v4216, 0.0
    %v4243 = vmax.f32 %v4217, 0.0
    %v4244 = vmax.f32 %v4218, 0.0
    %v4245 = vmax.f32 %v4219, 0.0
    %v4246 = vpack.c.bf16 %v4221, %v4220
    %v4247 = vpack.c.bf16 %v4223, %v4222
    %v4248 = vpack.c.bf16 %v4225, %v4224
    %v4249 = vpack.c.bf16 %v4227, %v4226
    %v4250 = vpack.c.bf16 %v4229, %v4228
    %v4251 = vpack.c.bf16 %v4231, %v4230
    %v4252 = vpack.c.bf16 %v4233, %v4232
    %v4253 = vpack.c.bf16 %v4235, %v4234
    %v4254 = vpack.c.bf16 %v4237, %v4236
    %v4255 = vpack.c.bf16 %v4239, %v4238
    %v4256 = vpack.c.bf16 %v4241, %v4240
    %v4257 = vpack.c.bf16 %v4243, %v4242
    %v4258 = vpack.c.bf16 %v4245, %v4244
    %v4272 = vunpack.c.l.b16 %v4246
    %v4273 = vunpack.c.h.b16 %v4246
    %v4274 = vunpack.c.l.b16 %v4247
    %v4275 = vunpack.c.h.b16 %v4247
    %v4276 = vunpack.c.l.b16 %v4248
    %v4277 = vunpack.c.h.b16 %v4248
    %v4278 = vunpack.c.l.b16 %v4249
    %v4279 = vunpack.c.h.b16 %v4249
    %v4280 = vunpack.c.l.b16 %v4250
    %v4281 = vunpack.c.h.b16 %v4250
    %v4282 = vunpack.c.l.b16 %v4251
    %v4283 = vunpack.c.h.b16 %v4251
    %v4284 = vunpack.c.l.b16 %v4252
    %v4285 = vunpack.c.h.b16 %v4252
    %v4286 = vunpack.c.l.b16 %v4253
    %v4287 = vunpack.c.h.b16 %v4253
    %v4288 = vunpack.c.l.b16 %v4254
    %v4289 = vunpack.c.h.b16 %v4254
    %v4290 = vunpack.c.l.b16 %v4255
    %v4291 = vunpack.c.h.b16 %v4255
    %v4292 = vunpack.c.l.b16 %v4256
    %v4293 = vunpack.c.h.b16 %v4256
    %v4294 = vunpack.c.l.b16 %v4257
    %v4295 = vunpack.c.h.b16 %v4257
    %v4296 = vunpack.c.l.b16 %v4258
    %v4297 = vunpack.c.h.b16 %v4258
    %v4298 = vpack.c.b16 %v4272, %v4272
    %v4299 = vpack.c.b16 %v4273, %v4273
    %v4300 = vpack.c.b16 %v4274, %v4274
    %v4301 = vpack.c.b16 %v4275, %v4275
    %v4302 = vpack.c.b16 %v4276, %v4276
    %v4303 = vpack.c.b16 %v4277, %v4277
    %v4304 = vpack.c.b16 %v4278, %v4278
    %v4305 = vpack.c.b16 %v4279, %v4279
    %v4306 = vpack.c.b16 %v4280, %v4280
    %v4307 = vpack.c.b16 %v4281, %v4281
    %v4308 = vpack.c.b16 %v4282, %v4282
    %v4309 = vpack.c.b16 %v4283, %v4283
    %v4310 = vpack.c.b16 %v4284, %v4284
    %v4311 = vpack.c.b16 %v4285, %v4285
    %v4312 = vpack.c.b16 %v4286, %v4286
    %v4313 = vpack.c.b16 %v4287, %v4287
    %v4314 = vpack.c.b16 %v4288, %v4288
    %v4315 = vpack.c.b16 %v4289, %v4289
    %v4316 = vpack.c.b16 %v4290, %v4290
    %v4317 = vpack.c.b16 %v4291, %v4291
    %v4318 = vpack.c.b16 %v4292, %v4292
    %v4319 = vpack.c.b16 %v4293, %v4293
    %v4320 = vpack.c.b16 %v4294, %v4294
    %v4321 = vpack.c.b16 %v4295, %v4295
    %v4322 = vpack.c.b16 %v4296, %v4296
    %v4323 = vpack.c.b16 %v4297, %v4297
    %4350 = vst [vmem:[#allocation6] sm:$0xf] %v4298
    %4351 = vst [vmem:[#allocation6 + $0x4] sm:$0xf] %v4299
    %4352 = vst [vmem:[#allocation6 + $0x8] sm:$0xf] %v4300
    %4353 = vst [vmem:[#allocation6 + $0xc] sm:$0xf] %v4301
    %4354 = vst [vmem:[#allocation6 + $0x10] sm:$0xf] %v4302
    %4355 = vst [vmem:[#allocation6 + $0x14] sm:$0xf] %v4303
    %4356 = vst [vmem:[#allocation6 + $0x18] sm:$0xf] %v4304
    %4357 = vst [vmem:[#allocation6 + $0x1c] sm:$0xf] %v4305
    %4358 = vst [vmem:[#allocation6 + $0x20] sm:$0xf] %v4306
    %4359 = vst [vmem:[#allocation6 + $0x24] sm:$0xf] %v4307
    %4360 = vst [vmem:[#allocation6 + $0x28] sm:$0xf] %v4308
    %4361 = vst [vmem:[#allocation6 + $0x2c] sm:$0xf] %v4309
    %4362 = vst [vmem:[#allocation6 + $0x30] sm:$0xf] %v4310
    %4363 = vst [vmem:[#allocation6 + $0x34] sm:$0xf] %v4311
    %4364 = vst [vmem:[#allocation6 + $0x38] sm:$0xf] %v4312
    %4365 = vst [vmem:[#allocation6 + $0x3c] sm:$0xf] %v4313
    %4366 = vst [vmem:[#allocation6 + $0x40] sm:$0xf] %v4314
    %4367 = vst [vmem:[#allocation6 + $0x44] sm:$0xf] %v4315
    %4368 = vst [vmem:[#allocation6 + $0x48] sm:$0xf] %v4316
    %4369 = vst [vmem:[#allocation6 + $0x4c] sm:$0xf] %v4317
    %4370 = vst [vmem:[#allocation6 + $0x50] sm:$0xf] %v4318
    %4371 = vst [vmem:[#allocation6 + $0x54] sm:$0xf] %v4319
    %4372 = vst [vmem:[#allocation6 + $0x58] sm:$0xf] %v4320
    %4373 = vst [vmem:[#allocation6 + $0x5c] sm:$0xf] %v4321
    %4374 = vst [vmem:[#allocation6 + $0x60] sm:$0xf] %v4322
    %4375 = vst [vmem:[#allocation6 + $0x64] sm:$0xf] %v4323
    // Predicated region
    $region34: #{tpu_custom_call.1} parent=1 // pred_check
      _
    $region35: #{tpu_custom_call.1} parent=1 // pred_check_branch
      %4377 = sbr.rel (0) target = $region37
    $region36: #{tpu_custom_call.1} parent=1 // pred_region
      %s4379 = ssub.s32 1664, 1664
      %4380 = vsyncadd [#allocation5], %s4379
      %s4381 = sshll.u32 [#allocation6], 4
      %s4382 = int_to_ptr.vmem [resolvable:$true] %s4381
      %4387 = dma.vmem_to_hbm [thread:$0]  %s4382, 1664, %s7, [#allocation5], 64, 64, 4
    $region37: #{tpu_custom_call.1} parent=1 // pred_fallthru
      _
    // Predicated region
    $region38: #{tpu_custom_call.1} parent=1 // pred_check
      _
    $region39: #{tpu_custom_call.1} parent=1 // pred_check_branch
      %4389 = sbr.rel (0) target = $region41
    $region40: #{tpu_custom_call.1} parent=1 // pred_region
      %4390 = dma.done [#allocation5], 1664
    $region41: #{tpu_custom_call.1} parent=1 // pred_fallthru
      _
    %4391 = vsyncpa [#allocation4], 1
    %4392 = vsyncpa [#allocation5], 1

// kernel: tpu_custom_call.1
$region0: #{tpu_custom_call.1}
  #allocation0 [shape = 'u32[]', space=smem, size = 0x4, offset = 0x4, fixed_abs, tag = 'smem constant byte address 0x4 - core index']
  #allocation1 [shape = 'u32[144,128]{1,0:T(1,128)}', space=vmem, size = 0x12000, scoped, tag = 'internal scratch']
  #allocation2 [shape = 'bf16[236,128]{1,0:T(8,128)(2,1)}', space=vmem, size = 0xf000, scoped, tag = 'scratch operand']
  %s0 = inlined_call_operand.vmem [shape: bf16[208,36], index: 0, kind: input, shape index: {}]
  %s1 = inlined_call_operand.vmem [shape: f32[208,1], index: 1, kind: input, shape index: {}]
  %s2 = inlined_call_operand.vmem [shape: bf16[36,128], index: 2, kind: input, shape index: {}]
  %s3 = inlined_call_operand.vmem [shape: f32[1,128], index: 3, kind: input, shape index: {}]
  %s4 = inlined_call_operand.hbm [shape: bf16[9,128,128], index: 4, kind: input, shape index: {}]
  %s5 = inlined_call_operand.vmem [shape: f32[1,128], index: 5, kind: input, shape index: {}]
  %s6 = inlined_call_operand.vmem [shape: bf16[4,128], index: 6, kind: input, shape index: {}]
  %s7 = inlined_call_operand.hbm [shape: bf16[208,128], index: 7, kind: output, shape index: {}]
  %s8 = sld [smem:[#allocation0]]
  $region42: #{tpu_custom_call.1} parent=0
    _
  %s10 = ssub.s32 1, %s8
  %s11 = scalar_select 0, %s10, %s8
  $region1: #{tpu_custom_call.1} parent=0
    #allocation3 [shape = 'u8[294912]{0}', space=vmem, size = 0x48000, scoped, tag = 'input window, operand 4, single buffered']
    #allocation4 [shape = 's32[1]{0}', space=sflag, size = 0x4, scoped, tag = 'scoped memory for tpu_custom_call.1']
    #allocation5 [shape = 's32[1]{0}', space=sflag, size = 0x4, scoped, tag = 'scoped memory for tpu_custom_call.1']
    #allocation6 [shape = 'u8[53248]{0}', space=vmem, size = 0xd000, scoped, tag = 'output window, operand 0, single buffered']
    %12 = vsyncpa [#allocation4], 0
    %13 = vsyncpa [#allocation5], 0
    // Predicated region
    $region2: #{tpu_custom_call.1} parent=1 // pred_check
      _
    $region3: #{tpu_custom_call.1} parent=1 // pred_check_branch
      %15 = sbr.rel (0) target = $region5
    $region4: #{tpu_custom_call.1} parent=1 // pred_region
      _
    $region5: #{tpu_custom_call.1} parent=1 // pred_fallthru
      _
    // Predicated region
    $region6: #{tpu_custom_call.1} parent=1 // pred_check
      _
    $region7: #{tpu_custom_call.1} parent=1 // pred_check_branch
      %17 = sbr.rel (0) target = $region9
    $region8: #{tpu_custom_call.1} parent=1 // pred_region
      _
    $region9: #{tpu_custom_call.1} parent=1 // pred_fallthru
      _
    // Predicated region
    $region10: #{tpu_custom_call.1} parent=1 // pred_check
      _
    $region11: #{tpu_custom_call.1} parent=1 // pred_check_branch
      %19 = sbr.rel (0) target = $region13
    $region12: #{tpu_custom_call.1} parent=1 // pred_region
      _
    $region13: #{tpu_custom_call.1} parent=1 // pred_fallthru
      _
    // Predicated region
    $region14: #{tpu_custom_call.1} parent=1 // pred_check
      _
    $region15: #{tpu_custom_call.1} parent=1 // pred_check_branch
      %21 = sbr.rel (0) target = $region17
    $region16: #{tpu_custom_call.1} parent=1 // pred_region
      _
    $region17: #{tpu_custom_call.1} parent=1 // pred_fallthru
      _
    // Predicated region
    $region18: #{tpu_custom_call.1} parent=1 // pred_check
      _
    $region19: #{tpu_custom_call.1} parent=1 // pred_check_branch
      %23 = sbr.rel (0) target = $region21
    $region20: #{tpu_custom_call.1} parent=1 // pred_region
      %s25 = ssub.s32 9216, 9216
      %26 = vsyncadd [#allocation4], %s25
      %s27 = sshll.u32 [#allocation3], 4
      %s28 = int_to_ptr.vmem [resolvable:$true] %s27
      %33 = dma.hbm_to_vmem [thread:$0]  %s4, 9216, %s28, [#allocation4], 64, 64, 4
    $region21: #{tpu_custom_call.1} parent=1 // pred_fallthru
      _
    // Predicated region
    $region22: #{tpu_custom_call.1} parent=1 // pred_check
      _
    $region23: #{tpu_custom_call.1} parent=1 // pred_check_branch
      %35 = sbr.rel (0) target = $region25
    $region24: #{tpu_custom_call.1} parent=1 // pred_region
      _
    $region25: #{tpu_custom_call.1} parent=1 // pred_fallthru
      _
    // Predicated region
    $region26: #{tpu_custom_call.1} parent=1 // pred_check
      _
    $region27: #{tpu_custom_call.1} parent=1 // pred_check_branch
      %37 = sbr.rel (0) target = $region29
    $region28: #{tpu_custom_call.1} parent=1 // pred_region
      _
    $region29: #{tpu_custom_call.1} parent=1 // pred_fallthru
      _
    // Predicated region
    $region30: #{tpu_custom_call.1} parent=1 // pred_check
      _
    $region31: #{tpu_custom_call.1} parent=1 // pred_check_branch
      %39 = sbr.rel (0) target = $region33
    $region32: #{tpu_custom_call.1} parent=1 // pred_region
      %40 = dma.done [#allocation4], 9216
    $region33: #{tpu_custom_call.1} parent=1 // pred_fallthru
      _
    %v42 = vld [vmem:[%s0] sm:$0xf]
    %v43 = vld [vmem:[%s0 + $0x4] sm:$0xf]
    %v44 = vld [vmem:[%s0 + $0x8] sm:$0xf]
    %v45 = vld [vmem:[%s0 + $0xc] sm:$0xf]
    %v46 = vld [vmem:[%s0 + $0x10] sm:$0xf]
    %v47 = vld [vmem:[%s0 + $0x14] sm:$0xf]
    %v48 = vld [vmem:[%s0 + $0x18] sm:$0xf]
    %v49 = vld [vmem:[%s0 + $0x1c] sm:$0xf]
    %v50 = vld [vmem:[%s0 + $0x20] sm:$0xf]
    %v51 = vld [vmem:[%s0 + $0x24] sm:$0xf]
    %v52 = vld [vmem:[%s0 + $0x28] sm:$0xf]
    %v53 = vld [vmem:[%s0 + $0x2c] sm:$0xf]
    %v54 = vld [vmem:[%s0 + $0x30] sm:$0xf]
    %v55 = vld [vmem:[%s0 + $0x34] sm:$0xf]
    %v56 = vld [vmem:[%s0 + $0x38] sm:$0xf]
    %v57 = vld [vmem:[%s0 + $0x3c] sm:$0xf]
    %v58 = vld [vmem:[%s0 + $0x40] sm:$0xf]
    %v59 = vld [vmem:[%s0 + $0x44] sm:$0xf]
    %v60 = vld [vmem:[%s0 + $0x48] sm:$0xf]
    %v61 = vld [vmem:[%s0 + $0x4c] sm:$0xf]
    %v62 = vld [vmem:[%s0 + $0x50] sm:$0xf]
    %v63 = vld [vmem:[%s0 + $0x54] sm:$0xf]
    %v64 = vld [vmem:[%s0 + $0x58] sm:$0xf]
    %v65 = vld [vmem:[%s0 + $0x5c] sm:$0xf]
    %v66 = vld [vmem:[%s0 + $0x60] sm:$0xf]
    %v67 = vld [vmem:[%s0 + $0x64] sm:$0xf]
    %v68 = vld [vmem:[%s2] sm:$0xf]
    %v69 = vld [vmem:[%s2 + $0x4] sm:$0xf]
    %v70 = vld [vmem:[%s2 + $0x8] sm:$0xf]
    %v71 = vld [vmem:[%s2 + $0xc] sm:$0xf]
    %v72 = vld [vmem:[%s2 + $0x10] sm:$0x3]
    %v73 = vld [vmem:[%s3] sm:$0x1]
    %v75 = vlaneseq
    %v76 = vshrl.u32 %v75, 7
    %v77 = vsub.s32 0, %v76
    %v78 = vrot.slane %v73, %v77
    %v106 = vunpack.c.l.b16 %v42
    %v107 = vunpack.c.l.b16 %v43
    %v108 = vunpack.c.l.b16 %v44
    %v109 = vunpack.c.l.b16 %v45
    %v110 = vunpack.c.l.b16 %v46
    %v111 = vunpack.c.l.b16 %v47
    %v112 = vunpack.c.l.b16 %v48
    %v113 = vunpack.c.l.b16 %v49
    %v114 = vunpack.c.l.b16 %v50
    %v115 = vunpack.c.l.b16 %v51
    %v116 = vunpack.c.l.b16 %v52
    %v117 = vunpack.c.l.b16 %v53
    %v118 = vunpack.c.l.b16 %v54
    %v119 = vunpack.c.l.b16 %v55
    %v120 = vunpack.c.l.b16 %v56
    %v121 = vunpack.c.l.b16 %v57
    %v122 = vunpack.c.l.b16 %v58
    %v123 = vunpack.c.l.b16 %v59
    %v124 = vunpack.c.l.b16 %v60
    %v125 = vunpack.c.l.b16 %v61
    %v126 = vunpack.c.l.b16 %v62
    %v127 = vunpack.c.l.b16 %v63
    %v128 = vunpack.c.l.b16 %v64
    %v129 = vunpack.c.l.b16 %v65
    %v130 = vunpack.c.l.b16 %v66
    %v131 = vunpack.c.l.b16 %v67
    %v132 = vpack.c.b16 %v107, %v106
    %v133 = vpack.c.b16 %v109, %v108
    %v134 = vpack.c.b16 %v111, %v110
    %v135 = vpack.c.b16 %v113, %v112
    %v136 = vpack.c.b16 %v115, %v114
    %v137 = vpack.c.b16 %v117, %v116
    %v138 = vpack.c.b16 %v119, %v118
    %v139 = vpack.c.b16 %v121, %v120
    %v140 = vpack.c.b16 %v123, %v122
    %v141 = vpack.c.b16 %v125, %v124
    %v142 = vpack.c.b16 %v127, %v126
    %v143 = vpack.c.b16 %v129, %v128
    %v144 = vpack.c.b16 %v131, %v130
    %v150 = vunpack.c.l.b16 %v68
    %v151 = vunpack.c.l.b16 %v69
    %v152 = vunpack.c.l.b16 %v70
    %v153 = vunpack.c.l.b16 %v71
    %v154 = vunpack.c.l.b16 %v72
    %v155 = vpack.c.b16 %v151, %v150
    %v156 = vpack.c.b16 %v153, %v152
    %v157 = vpack.c.b16 %v154, %v154
    %vm160 = vcmask 293888
    %v162 = vsel %vm160, %v132, 0
    %v165 = vsel %vm160, %v133, 0
    %v168 = vsel %vm160, %v134, 0
    %v171 = vsel %vm160, %v135, 0
    %v174 = vsel %vm160, %v136, 0
    %v177 = vsel %vm160, %v137, 0
    %v180 = vsel %vm160, %v138, 0
    %v183 = vsel %vm160, %v139, 0
    %v186 = vsel %vm160, %v140, 0
    %v189 = vsel %vm160, %v141, 0
    %v192 = vsel %vm160, %v142, 0
    %v195 = vsel %vm160, %v143, 0
    %v198 = vsel %vm160, %v144, 0
    %vm200 = vcmask 1041408
    %v202 = vsel %vm200, %v157, 0
    %204 = vmatprep.subr.bf16.mxu0 0
    %205 = vmatpush1.bf16.msra.mxu0 %v155
    %206 = vmatprep.subr.bf16.mxu0 0
    %207 = vmatpush1.bf16.msra.mxu0 %v156
    %208 = vmatprep.subr.bf16.mxu0 0
    %209 = vmatpush1.bf16.msra.mxu0 %v202
    %210 = vmatprep.subr.bf16.mxu0 0
    %211 = vmatpush1.bf16.msra.mxu0 0
    %212 = vmatprep.subr.bf16.mxu0 0
    %213 = vmatpush1.bf16.msra.mxu0 0
    %214 = vmatprep.subr.bf16.mxu0 0
    %215 = vmatpush1.bf16.msra.mxu0 0
    %216 = vmatprep.subr.bf16.mxu0 0
    %217 = vmatpush1.bf16.msra.mxu0 0
    %218 = vmatprep.subr.bf16.mxu0 0
    %219 = vmatpush1.bf16.msra.mxu0 0
    %220 = vmatprep.subr.bf16.mxu0 0
    %221 = vmatpush1.bf16.msra.mxu0 0
    %222 = vmatprep.subr.bf16.mxu0 0
    %223 = vmatpush1.bf16.msra.mxu0 0
    %224 = vmatprep.subr.bf16.mxu0 0
    %225 = vmatpush1.bf16.msra.mxu0 0
    %226 = vmatprep.subr.bf16.mxu0 0
    %227 = vmatpush1.bf16.msra.mxu0 0
    %228 = vmatprep.subr.bf16.mxu0 0
    %229 = vmatpush1.bf16.msra.mxu0 0
    %230 = vmatprep.subr.bf16.mxu0 0
    %231 = vmatpush1.bf16.msra.mxu0 0
    %232 = vmatprep.subr.bf16.mxu0 0
    %233 = vmatpush1.bf16.msra.mxu0 0
    %234 = vmatprep.subr.bf16.mxu0 0
    %235 = vmatpush1.bf16.msra.mxu0 0
    %236 = vmatprep.mubr.bf16.mxu0 0
    %237 = vmatmul.mubr.bf16.gmra.mrb[0].mxu0 %v162
    %v238 = vpop.f32.mrb[0].mxu0
    %v239 = vadd.f32 %v78, %v238
    %v240 = vpop.f32.mrb[0].mxu0
    %v241 = vpop.f32.mrb[0].mxu0
    %v242 = vadd.f32 %v78, %v241
    %v243 = vpop.f32.mrb[0].mxu0
    %244 = vmatprep.mubr.bf16.mxu0 0
    %245 = vmatmul.mubr.bf16.gmra.mrb[0].mxu0 %v165
    %v246 = vpop.f32.mrb[0].mxu0
    %v247 = vadd.f32 %v78, %v246
    %v248 = vpop.f32.mrb[0].mxu0
    %v249 = vpop.f32.mrb[0].mxu0
    %v250 = vadd.f32 %v78, %v249
    %v251 = vpop.f32.mrb[0].mxu0
    %252 = vmatprep.mubr.bf16.mxu0 0
    %253 = vmatmul.mubr.bf16.gmra.mrb[0].mxu0 %v168
    %v254 = vpop.f32.mrb[0].mxu0
    %v255 = vadd.f32 %v78, %v254
    %v256 = vpop.f32.mrb[0].mxu0
    %v257 = vpop.f32.mrb[0].mxu0
    %v258 = vadd.f32 %v78, %v257
    %v259 = vpop.f32.mrb[0].mxu0
    %260 = vmatprep.mubr.bf16.mxu0 0
    %261 = vmatmul.mubr.bf16.gmra.mrb[0].mxu0 %v171
    %v262 = vpop.f32.mrb[0].mxu0
    %v263 = vadd.f32 %v78, %v262
    %v264 = vpop.f32.mrb[0].mxu0
    %v265 = vpop.f32.mrb[0].mxu0
    %v266 = vadd.f32 %v78, %v265
    %v267 = vpop.f32.mrb[0].mxu0
    %268 = vmatprep.mubr.bf16.mxu0 0
    %269 = vmatmul.mubr.bf16.gmra.mrb[0].mxu0 %v174
    %v270 = vpop.f32.mrb[0].mxu0
    %v271 = vadd.f32 %v78, %v270
    %v272 = vpop.f32.mrb[0].mxu0
    %v273 = vpop.f32.mrb[0].mxu0
    %v274 = vadd.f32 %v78, %v273
    %v275 = vpop.f32.mrb[0].mxu0
    %276 = vmatprep.mubr.bf16.mxu0 0
    %277 = vmatmul.mubr.bf16.gmra.mrb[0].mxu0 %v177
    %v278 = vpop.f32.mrb[0].mxu0
    %v279 = vadd.f32 %v78, %v278
    %v280 = vpop.f32.mrb[0].mxu0
    %v281 = vpop.f32.mrb[0].mxu0
    %v282 = vadd.f32 %v78, %v281
    %v283 = vpop.f32.mrb[0].mxu0
    %284 = vmatprep.mubr.bf16.mxu0 0
    %285 = vmatmul.mubr.bf16.gmra.mrb[0].mxu0 %v180
    %v286 = vpop.f32.mrb[0].mxu0
    %v287 = vadd.f32 %v78, %v286
    %v288 = vpop.f32.mrb[0].mxu0
    %v289 = vpop.f32.mrb[0].mxu0
    %v290 = vadd.f32 %v78, %v289
    %v291 = vpop.f32.mrb[0].mxu0
    %292 = vmatprep.mubr.bf16.mxu0 0
    %293 = vmatmul.mubr.bf16.gmra.mrb[0].mxu0 %v183
    %v294 = vpop.f32.mrb[0].mxu0
    %v295 = vadd.f32 %v78, %v294
    %v296 = vpop.f32.mrb[0].mxu0
    %v297 = vpop.f32.mrb[0].mxu0
    %v298 = vadd.f32 %v78, %v297
    %v299 = vpop.f32.mrb[0].mxu0
    %300 = vmatprep.mubr.bf16.mxu0 0
    %301 = vmatmul.mubr.bf16.gmra.mrb[0].mxu0 %v186
    %v302 = vpop.f32.mrb[0].mxu0
    %v303 = vadd.f32 %v78, %v302
    %v304 = vpop.f32.mrb[0].mxu0
    %v305 = vpop.f32.mrb[0].mxu0
    %v306 = vadd.f32 %v78, %v305
    %v307 = vpop.f32.mrb[0].mxu0
    %308 = vmatprep.mubr.bf16.mxu0 0
    %309 = vmatmul.mubr.bf16.gmra.mrb[0].mxu0 %v189
    %v310 = vpop.f32.mrb[0].mxu0
    %v311 = vadd.f32 %v78, %v310
    %v312 = vpop.f32.mrb[0].mxu0
    %v313 = vpop.f32.mrb[0].mxu0
    %v314 = vadd.f32 %v78, %v313
    %v315 = vpop.f32.mrb[0].mxu0
    %316 = vmatprep.mubr.bf16.mxu0 0
    %317 = vmatmul.mubr.bf16.gmra.mrb[0].mxu0 %v192
    %v318 = vpop.f32.mrb[0].mxu0
    %v319 = vadd.f32 %v78, %v318
    %v320 = vpop.f32.mrb[0].mxu0
    %v321 = vpop.f32.mrb[0].mxu0
    %v322 = vadd.f32 %v78, %v321
    %v323 = vpop.f32.mrb[0].mxu0
    %324 = vmatprep.mubr.bf16.mxu0 0
    %325 = vmatmul.mubr.bf16.gmra.mrb[0].mxu0 %v195
    %v326 = vpop.f32.mrb[0].mxu0
    %v327 = vadd.f32 %v78, %v326
    %v328 = vpop.f32.mrb[0].mxu0
    %v329 = vpop.f32.mrb[0].mxu0
    %v330 = vadd.f32 %v78, %v329
    %v331 = vpop.f32.mrb[0].mxu0
    %332 = vmatprep.mubr.bf16.mxu0 0
    %333 = vmatmul.mubr.bf16.gmra.mrb[0].mxu0 %v198
    %v334 = vpop.f32.mrb[0].mxu0
    %v335 = vadd.f32 %v78, %v334
    %v336 = vpop.f32.mrb[0].mxu0
    %v337 = vpop.f32.mrb[0].mxu0
    %v338 = vadd.f32 %v78, %v337
    %v339 = vpop.f32.mrb[0].mxu0
    %340 = vdwg.mxu0
    %v341 = vmax.f32 %v239, 0.0
    %v342 = vmax.f32 %v242, 0.0
    %v343 = vmax.f32 %v247, 0.0
    %v344 = vmax.f32 %v250, 0.0
    %v345 = vmax.f32 %v255, 0.0
    %v346 = vmax.f32 %v258, 0.0
    %v347 = vmax.f32 %v263, 0.0
    %v348 = vmax.f32 %v266, 0.0
    %v349 = vmax.f32 %v271, 0.0
    %v350 = vmax.f32 %v274, 0.0
    %v351 = vmax.f32 %v279, 0.0
    %v352 = vmax.f32 %v282, 0.0
    %v353 = vmax.f32 %v287, 0.0
    %v354 = vmax.f32 %v290, 0.0
    %v355 = vmax.f32 %v295, 0.0
    %v356 = vmax.f32 %v298, 0.0
    %v357 = vmax.f32 %v303, 0.0
    %v358 = vmax.f32 %v306, 0.0
    %v359 = vmax.f32 %v311, 0.0
    %v360 = vmax.f32 %v314, 0.0
    %v361 = vmax.f32 %v319, 0.0
    %v362 = vmax.f32 %v322, 0.0
    %v363 = vmax.f32 %v327, 0.0
    %v364 = vmax.f32 %v330, 0.0
    %v365 = vmax.f32 %v335, 0.0
    %v366 = vmax.f32 %v338, 0.0
    %v367 = vld [vmem:[%s1] sm:$0xff]
    %v368 = vld [vmem:[%s1 + $0x8] sm:$0xff]
    %v369 = vld [vmem:[%s1 + $0x10] sm:$0xff]
    %v370 = vld [vmem:[%s1 + $0x18] sm:$0xff]
    %v371 = vld [vmem:[%s1 + $0x20] sm:$0xff]
    %v372 = vld [vmem:[%s1 + $0x28] sm:$0xff]
    %v373 = vld [vmem:[%s1 + $0x30] sm:$0xff]
    %v374 = vld [vmem:[%s1 + $0x38] sm:$0xff]
    %v375 = vld [vmem:[%s1 + $0x40] sm:$0xff]
    %v376 = vld [vmem:[%s1 + $0x48] sm:$0xff]
    %v377 = vld [vmem:[%s1 + $0x50] sm:$0xff]
    %v378 = vld [vmem:[%s1 + $0x58] sm:$0xff]
    %v379 = vld [vmem:[%s1 + $0x60] sm:$0xff]
    %v380 = vld [vmem:[%s1 + $0x68] sm:$0xff]
    %v381 = vld [vmem:[%s1 + $0x70] sm:$0xff]
    %v382 = vld [vmem:[%s1 + $0x78] sm:$0xff]
    %v383 = vld [vmem:[%s1 + $0x80] sm:$0xff]
    %v384 = vld [vmem:[%s1 + $0x88] sm:$0xff]
    %v385 = vld [vmem:[%s1 + $0x90] sm:$0xff]
    %v386 = vld [vmem:[%s1 + $0x98] sm:$0xff]
    %v387 = vld [vmem:[%s1 + $0xa0] sm:$0xff]
    %v388 = vld [vmem:[%s1 + $0xa8] sm:$0xff]
    %v389 = vld [vmem:[%s1 + $0xb0] sm:$0xff]
    %v390 = vld [vmem:[%s1 + $0xb8] sm:$0xff]
    %v391 = vld [vmem:[%s1 + $0xc0] sm:$0xff]
    %v392 = vld [vmem:[%s1 + $0xc8] sm:$0xff]
    %394 = vset.pattern.permute.xlu0 0
    %395 = vperm.xlu0 %394, %v367
    %v396 = vpop.permute.xlu0 %395
    %399 = vset.pattern.permute.xlu0 0
    %400 = vperm.xlu0 %399, %v368
    %v401 = vpop.permute.xlu0 %400
    %404 = vset.pattern.permute.xlu0 0
    %405 = vperm.xlu0 %404, %v369
    %v406 = vpop.permute.xlu0 %405
    %409 = vset.pattern.permute.xlu0 0
    %410 = vperm.xlu0 %409, %v370
    %v411 = vpop.permute.xlu0 %410
    %414 = vset.pattern.permute.xlu0 0
    %415 = vperm.xlu0 %414, %v371
    %v416 = vpop.permute.xlu0 %415
    %419 = vset.pattern.permute.xlu0 0
    %420 = vperm.xlu0 %419, %v372
    %v421 = vpop.permute.xlu0 %420
    %424 = vset.pattern.permute.xlu0 0
    %425 = vperm.xlu0 %424, %v373
    %v426 = vpop.permute.xlu0 %425
    %429 = vset.pattern.permute.xlu0 0
    %430 = vperm.xlu0 %429, %v374
    %v431 = vpop.permute.xlu0 %430
    %434 = vset.pattern.permute.xlu0 0
    %435 = vperm.xlu0 %434, %v375
    %v436 = vpop.permute.xlu0 %435
    %439 = vset.pattern.permute.xlu0 0
    %440 = vperm.xlu0 %439, %v376
    %v441 = vpop.permute.xlu0 %440
    %444 = vset.pattern.permute.xlu0 0
    %445 = vperm.xlu0 %444, %v377
    %v446 = vpop.permute.xlu0 %445
    %449 = vset.pattern.permute.xlu0 0
    %450 = vperm.xlu0 %449, %v378
    %v451 = vpop.permute.xlu0 %450
    %454 = vset.pattern.permute.xlu0 0
    %455 = vperm.xlu0 %454, %v379
    %v456 = vpop.permute.xlu0 %455
    %459 = vset.pattern.permute.xlu0 0
    %460 = vperm.xlu0 %459, %v380
    %v461 = vpop.permute.xlu0 %460
    %464 = vset.pattern.permute.xlu0 0
    %465 = vperm.xlu0 %464, %v381
    %v466 = vpop.permute.xlu0 %465
    %469 = vset.pattern.permute.xlu0 0
    %470 = vperm.xlu0 %469, %v382
    %v471 = vpop.permute.xlu0 %470
    %474 = vset.pattern.permute.xlu0 0
    %475 = vperm.xlu0 %474, %v383
    %v476 = vpop.permute.xlu0 %475
    %479 = vset.pattern.permute.xlu0 0
    %480 = vperm.xlu0 %479, %v384
    %v481 = vpop.permute.xlu0 %480
    %484 = vset.pattern.permute.xlu0 0
    %485 = vperm.xlu0 %484, %v385
    %v486 = vpop.permute.xlu0 %485
    %489 = vset.pattern.permute.xlu0 0
    %490 = vperm.xlu0 %489, %v386
    %v491 = vpop.permute.xlu0 %490
    %494 = vset.pattern.permute.xlu0 0
    %495 = vperm.xlu0 %494, %v387
    %v496 = vpop.permute.xlu0 %495
    %499 = vset.pattern.permute.xlu0 0
    %500 = vperm.xlu0 %499, %v388
    %v501 = vpop.permute.xlu0 %500
    %504 = vset.pattern.permute.xlu0 0
    %505 = vperm.xlu0 %504, %v389
    %v506 = vpop.permute.xlu0 %505
    %509 = vset.pattern.permute.xlu0 0
    %510 = vperm.xlu0 %509, %v390
    %v511 = vpop.permute.xlu0 %510
    %514 = vset.pattern.permute.xlu0 0
    %515 = vperm.xlu0 %514, %v391
    %v516 = vpop.permute.xlu0 %515
    %519 = vset.pattern.permute.xlu0 0
    %520 = vperm.xlu0 %519, %v392
    %v521 = vpop.permute.xlu0 %520
    %v523 = vmul.f32 %v341, %v396
    %v524 = vmul.f32 %v342, %v401
    %v525 = vmul.f32 %v343, %v406
    %v526 = vmul.f32 %v344, %v411
    %v527 = vmul.f32 %v345, %v416
    %v528 = vmul.f32 %v346, %v421
    %v529 = vmul.f32 %v347, %v426
    %v530 = vmul.f32 %v348, %v431
    %v531 = vmul.f32 %v349, %v436
    %v532 = vmul.f32 %v350, %v441
    %v533 = vmul.f32 %v351, %v446
    %v534 = vmul.f32 %v352, %v451
    %v535 = vmul.f32 %v353, %v456
    %v536 = vmul.f32 %v354, %v461
    %v537 = vmul.f32 %v355, %v466
    %v538 = vmul.f32 %v356, %v471
    %v539 = vmul.f32 %v357, %v476
    %v540 = vmul.f32 %v358, %v481
    %v541 = vmul.f32 %v359, %v486
    %v542 = vmul.f32 %v360, %v491
    %v543 = vmul.f32 %v361, %v496
    %v544 = vmul.f32 %v362, %v501
    %v545 = vmul.f32 %v363, %v506
    %v546 = vmul.f32 %v364, %v511
    %v547 = vmul.f32 %v365, %v516
    %v548 = vmul.f32 %v366, %v521
    %549 = vst [vmem:[#allocation2] sm:$0xf] 0
    %vm550 = vcmask 1041408
    %vm551 = vsmask.f32 1280
    %vm552 = vmand %vm550, %vm551
    %v553 = vld [vmem:[#allocation2 + $0x4] sm:$0x3]
    %v554 = vsel %vm552, 0, %v553
    %555 = vst [vmem:[#allocation2 + $0x4] sm:$0x3] %v554
    %v556 = vpack.c.bf16 %v524, %v523
    %v557 = vpack.c.bf16 %v526, %v525
    %v558 = vpack.c.bf16 %v528, %v527
    %v559 = vpack.c.bf16 %v530, %v529
    %v560 = vpack.c.bf16 %v532, %v531
    %v561 = vpack.c.bf16 %v534, %v533
    %v562 = vpack.c.bf16 %v536, %v535
    %v563 = vpack.c.bf16 %v538, %v537
    %v564 = vpack.c.bf16 %v540, %v539
    %v565 = vpack.c.bf16 %v542, %v541
    %v566 = vpack.c.bf16 %v544, %v543
    %v567 = vpack.c.bf16 %v546, %v545
    %v568 = vpack.c.bf16 %v548, %v547
    %v582 = vunpack.c.l.b16 %v556
    %v583 = vunpack.c.h.b16 %v556
    %v584 = vunpack.c.l.b16 %v557
    %v585 = vunpack.c.h.b16 %v557
    %v586 = vunpack.c.l.b16 %v558
    %v587 = vunpack.c.h.b16 %v558
    %v588 = vunpack.c.l.b16 %v559
    %v589 = vunpack.c.h.b16 %v559
    %v590 = vunpack.c.l.b16 %v560
    %v591 = vunpack.c.h.b16 %v560
    %v592 = vunpack.c.l.b16 %v561
    %v593 = vunpack.c.h.b16 %v561
    %v594 = vunpack.c.l.b16 %v562
    %v595 = vunpack.c.h.b16 %v562
    %v596 = vunpack.c.l.b16 %v563
    %v597 = vunpack.c.h.b16 %v563
    %v598 = vunpack.c.l.b16 %v564
    %v599 = vunpack.c.h.b16 %v564
    %v600 = vunpack.c.l.b16 %v565
    %v601 = vunpack.c.h.b16 %v565
    %v602 = vunpack.c.l.b16 %v566
    %v603 = vunpack.c.h.b16 %v566
    %v604 = vunpack.c.l.b16 %v567
    %v605 = vunpack.c.h.b16 %v567
    %v606 = vunpack.c.l.b16 %v568
    %v607 = vunpack.c.h.b16 %v568
    %v608 = vpack.c.b16 %v582, %v582
    %v609 = vpack.c.b16 %v583, %v583
    %v610 = vpack.c.b16 %v584, %v584
    %v611 = vpack.c.b16 %v585, %v585
    %v612 = vpack.c.b16 %v586, %v586
    %v613 = vpack.c.b16 %v587, %v587
    %v614 = vpack.c.b16 %v588, %v588
    %v615 = vpack.c.b16 %v589, %v589
    %v616 = vpack.c.b16 %v590, %v590
    %v617 = vpack.c.b16 %v591, %v591
    %v618 = vpack.c.b16 %v592, %v592
    %v619 = vpack.c.b16 %v593, %v593
    %v620 = vpack.c.b16 %v594, %v594
    %v621 = vpack.c.b16 %v595, %v595
    %v622 = vpack.c.b16 %v596, %v596
    %v623 = vpack.c.b16 %v597, %v597
    %v624 = vpack.c.b16 %v598, %v598
    %v625 = vpack.c.b16 %v599, %v599
    %v626 = vpack.c.b16 %v600, %v600
    %v627 = vpack.c.b16 %v601, %v601
    %v628 = vpack.c.b16 %v602, %v602
    %v629 = vpack.c.b16 %v603, %v603
    %v630 = vpack.c.b16 %v604, %v604
    %v631 = vpack.c.b16 %v605, %v605
    %v632 = vpack.c.b16 %v606, %v606
    %v633 = vpack.c.b16 %v607, %v607
    %vm634 = vsmask.f32 5392
    %vm635 = vmor %vm551, %vm634
    %v637 = vshrl.u32 %v608, 16
    %v639 = vrot.slane %v637, 6
    %v640 = vshll.u32 %v608, 16
    %v642 = vrot.slane %v640, 7
    %v643 = vor.u32 %v639, %v642
    %v644 = vrot.slane %v643, 4
    %v646 = vshrl.u32 %v609, 16
    %v648 = vrot.slane %v646, 6
    %v649 = vshll.u32 %v609, 16
    %v651 = vrot.slane %v649, 7
    %v652 = vor.u32 %v648, %v651
    %v653 = vsel %vm635, %v644, %v652
    %v654 = vrot.slane %v652, 4
    %v656 = vshrl.u32 %v610, 16
    %v658 = vrot.slane %v656, 6
    %v659 = vshll.u32 %v610, 16
    %v661 = vrot.slane %v659, 7
    %v662 = vor.u32 %v658, %v661
    %v663 = vsel %vm635, %v654, %v662
    %v664 = vrot.slane %v662, 4
    %v666 = vshrl.u32 %v611, 16
    %v668 = vrot.slane %v666, 6
    %v669 = vshll.u32 %v611, 16
    %v671 = vrot.slane %v669, 7
    %v672 = vor.u32 %v668, %v671
    %v673 = vsel %vm635, %v664, %v672
    %v674 = vrot.slane %v672, 4
    %v676 = vshrl.u32 %v612, 16
    %v678 = vrot.slane %v676, 6
    %v679 = vshll.u32 %v612, 16
    %v681 = vrot.slane %v679, 7
    %v682 = vor.u32 %v678, %v681
    %v683 = vsel %vm635, %v674, %v682
    %v684 = vrot.slane %v682, 4
    %v686 = vshrl.u32 %v613, 16
    %v688 = vrot.slane %v686, 6
    %v689 = vshll.u32 %v613, 16
    %v691 = vrot.slane %v689, 7
    %v692 = vor.u32 %v688, %v691
    %v693 = vsel %vm635, %v684, %v692
    %v694 = vrot.slane %v692, 4
    %v696 = vshrl.u32 %v614, 16
    %v698 = vrot.slane %v696, 6
    %v699 = vshll.u32 %v614, 16
    %v701 = vrot.slane %v699, 7
    %v702 = vor.u32 %v698, %v701
    %v703 = vsel %vm635, %v694, %v702
    %v704 = vrot.slane %v702, 4
    %v706 = vshrl.u32 %v615, 16
    %v708 = vrot.slane %v706, 6
    %v709 = vshll.u32 %v615, 16
    %v711 = vrot.slane %v709, 7
    %v712 = vor.u32 %v708, %v711
    %v713 = vsel %vm635, %v704, %v712
    %v714 = vrot.slane %v712, 4
    %v716 = vshrl.u32 %v616, 16
    %v718 = vrot.slane %v716, 6
    %v719 = vshll.u32 %v616, 16
    %v721 = vrot.slane %v719, 7
    %v722 = vor.u32 %v718, %v721
    %v723 = vsel %vm635, %v714, %v722
    %v724 = vrot.slane %v722, 4
    %v726 = vshrl.u32 %v617, 16
    %v728 = vrot.slane %v726, 6
    %v729 = vshll.u32 %v617, 16
    %v731 = vrot.slane %v729, 7
    %v732 = vor.u32 %v728, %v731
    %v733 = vsel %vm635, %v724, %v732
    %v734 = vrot.slane %v732, 4
    %v736 = vshrl.u32 %v618, 16
    %v738 = vrot.slane %v736, 6
    %v739 = vshll.u32 %v618, 16
    %v741 = vrot.slane %v739, 7
    %v742 = vor.u32 %v738, %v741
    %v743 = vsel %vm635, %v734, %v742
    %v744 = vrot.slane %v742, 4
    %v746 = vshrl.u32 %v619, 16
    %v748 = vrot.slane %v746, 6
    %v749 = vshll.u32 %v619, 16
    %v751 = vrot.slane %v749, 7
    %v752 = vor.u32 %v748, %v751
    %v753 = vsel %vm635, %v744, %v752
    %v754 = vrot.slane %v752, 4
    %v756 = vshrl.u32 %v620, 16
    %v758 = vrot.slane %v756, 6
    %v759 = vshll.u32 %v620, 16
    %v761 = vrot.slane %v759, 7
    %v762 = vor.u32 %v758, %v761
    %v763 = vsel %vm635, %v754, %v762
    %v764 = vrot.slane %v762, 4
    %v766 = vshrl.u32 %v621, 16
    %v768 = vrot.slane %v766, 6
    %v769 = vshll.u32 %v621, 16
    %v771 = vrot.slane %v769, 7
    %v772 = vor.u32 %v768, %v771
    %v773 = vsel %vm635, %v764, %v772
    %v774 = vrot.slane %v772, 4
    %v776 = vshrl.u32 %v622, 16
    %v778 = vrot.slane %v776, 6
    %v779 = vshll.u32 %v622, 16
    %v781 = vrot.slane %v779, 7
    %v782 = vor.u32 %v778, %v781
    %v783 = vsel %vm635, %v774, %v782
    %v784 = vrot.slane %v782, 4
    %v786 = vshrl.u32 %v623, 16
    %v788 = vrot.slane %v786, 6
    %v789 = vshll.u32 %v623, 16
    %v791 = vrot.slane %v789, 7
    %v792 = vor.u32 %v788, %v791
    %v793 = vsel %vm635, %v784, %v792
    %v794 = vrot.slane %v792, 4
    %v796 = vshrl.u32 %v624, 16
    %v798 = vrot.slane %v796, 6
    %v799 = vshll.u32 %v624, 16
    %v801 = vrot.slane %v799, 7
    %v802 = vor.u32 %v798, %v801
    %v803 = vsel %vm635, %v794, %v802
    %v804 = vrot.slane %v802, 4
    %v806 = vshrl.u32 %v625, 16
    %v808 = vrot.slane %v806, 6
    %v809 = vshll.u32 %v625, 16
    %v811 = vrot.slane %v809, 7
    %v812 = vor.u32 %v808, %v811
    %v813 = vsel %vm635, %v804, %v812
    %v814 = vrot.slane %v812, 4
    %v816 = vshrl.u32 %v626, 16
    %v818 = vrot.slane %v816, 6
    %v819 = vshll.u32 %v626, 16
    %v821 = vrot.slane %v819, 7
    %v822 = vor.u32 %v818, %v821
    %v823 = vsel %vm635, %v814, %v822
    %v824 = vrot.slane %v822, 4
    %v826 = vshrl.u32 %v627, 16
    %v828 = vrot.slane %v826, 6
    %v829 = vshll.u32 %v627, 16
    %v831 = vrot.slane %v829, 7
    %v832 = vor.u32 %v828, %v831
    %v833 = vsel %vm635, %v824, %v832
    %v834 = vrot.slane %v832, 4
    %v836 = vshrl.u32 %v628, 16
    %v838 = vrot.slane %v836, 6
    %v839 = vshll.u32 %v628, 16
    %v841 = vrot.slane %v839, 7
    %v842 = vor.u32 %v838, %v841
    %v843 = vsel %vm635, %v834, %v842
    %v844 = vrot.slane %v842, 4
    %v846 = vshrl.u32 %v629, 16
    %v848 = vrot.slane %v846, 6
    %v849 = vshll.u32 %v629, 16
    %v851 = vrot.slane %v849, 7
    %v852 = vor.u32 %v848, %v851
    %v853 = vsel %vm635, %v844, %v852
    %v854 = vrot.slane %v852, 4
    %v856 = vshrl.u32 %v630, 16
    %v858 = vrot.slane %v856, 6
    %v859 = vshll.u32 %v630, 16
    %v861 = vrot.slane %v859, 7
    %v862 = vor.u32 %v858, %v861
    %v863 = vsel %vm635, %v854, %v862
    %v864 = vrot.slane %v862, 4
    %v866 = vshrl.u32 %v631, 16
    %v868 = vrot.slane %v866, 6
    %v869 = vshll.u32 %v631, 16
    %v871 = vrot.slane %v869, 7
    %v872 = vor.u32 %v868, %v871
    %v873 = vsel %vm635, %v864, %v872
    %v874 = vrot.slane %v872, 4
    %v876 = vshrl.u32 %v632, 16
    %v878 = vrot.slane %v876, 6
    %v879 = vshll.u32 %v632, 16
    %v881 = vrot.slane %v879, 7
    %v882 = vor.u32 %v878, %v881
    %v883 = vsel %vm635, %v874, %v882
    %v884 = vrot.slane %v882, 4
    %v886 = vshrl.u32 %v633, 16
    %v888 = vrot.slane %v886, 6
    %v889 = vshll.u32 %v633, 16
    %v891 = vrot.slane %v889, 7
    %v892 = vor.u32 %v888, %v891
    %v893 = vsel %vm635, %v884, %v892
    %v894 = vrot.slane %v892, 4
    %vm922 = vcmask 1043457
    %vm923 = vsmask.f32 7942
    %vm924 = vmand %vm922, %vm923
    %v925 = vld [vmem:[#allocation2 + $0x4] sm:$0xe]
    %v926 = vsel %vm924, %v643, %v925
    %927 = vst [vmem:[#allocation2 + $0x4] sm:$0xe] %v926
    %928 = vst [vmem:[#allocation2 + $0x8] sm:$0xf] %v653
    %929 = vst [vmem:[#allocation2 + $0xc] sm:$0xf] %v663
    %930 = vst [vmem:[#allocation2 + $0x10] sm:$0xf] %v673
    %931 = vst [vmem:[#allocation2 + $0x14] sm:$0xf] %v683
    %932 = vst [vmem:[#allocation2 + $0x18] sm:$0xf] %v693
    %933 = vst [vmem:[#allocation2 + $0x1c] sm:$0xf] %v703
    %934 = vst [vmem:[#allocation2 + $0x20] sm:$0xf] %v713
    %935 = vst [vmem:[#allocation2 + $0x24] sm:$0xf] %v723
    %936 = vst [vmem:[#allocation2 + $0x28] sm:$0xf] %v733
    %937 = vst [vmem:[#allocation2 + $0x2c] sm:$0xf] %v743
    %938 = vst [vmem:[#allocation2 + $0x30] sm:$0xf] %v753
    %939 = vst [vmem:[#allocation2 + $0x34] sm:$0xf] %v763
    %940 = vst [vmem:[#allocation2 + $0x38] sm:$0xf] %v773
    %941 = vst [vmem:[#allocation2 + $0x3c] sm:$0xf] %v783
    %942 = vst [vmem:[#allocation2 + $0x40] sm:$0xf] %v793
    %943 = vst [vmem:[#allocation2 + $0x44] sm:$0xf] %v803
    %944 = vst [vmem:[#allocation2 + $0x48] sm:$0xf] %v813
    %945 = vst [vmem:[#allocation2 + $0x4c] sm:$0xf] %v823
    %946 = vst [vmem:[#allocation2 + $0x50] sm:$0xf] %v833
    %947 = vst [vmem:[#allocation2 + $0x54] sm:$0xf] %v843
    %948 = vst [vmem:[#allocation2 + $0x58] sm:$0xf] %v853
    %949 = vst [vmem:[#allocation2 + $0x5c] sm:$0xf] %v863
    %950 = vst [vmem:[#allocation2 + $0x60] sm:$0xf] %v873
    %951 = vst [vmem:[#allocation2 + $0x64] sm:$0xf] %v883
    %952 = vst [vmem:[#allocation2 + $0x68] sm:$0xf] %v893
    %v953 = vld [vmem:[#allocation2 + $0x6c] sm:$0x3]
    %v954 = vsel %vm552, %v894, %v953
    %955 = vst [vmem:[#allocation2 + $0x6c] sm:$0x3] %v954
    %v956 = vld [vmem:[%s5] sm:$0x1]
    %v958 = vlaneseq
    %v959 = vshrl.u32 %v958, 7
    %v960 = vsub.s32 0, %v959
    %v961 = vrot.slane %v956, %v960
    %v963 = vld [vmem:[#allocation2] sm:$0xf]
    %v964 = vld [vmem:[#allocation2 + $0x4] sm:$0xf]
    %v965 = vld [vmem:[#allocation2 + $0x8] sm:$0xf]
    %v966 = vld [vmem:[#allocation2 + $0xc] sm:$0xf]
    %v967 = vld [vmem:[#allocation2 + $0x10] sm:$0xf]
    %v968 = vld [vmem:[#allocation2 + $0x14] sm:$0xf]
    %v969 = vld [vmem:[#allocation2 + $0x18] sm:$0xf]
    %v970 = vld [vmem:[#allocation2 + $0x1c] sm:$0xf]
    %v971 = vld [vmem:[#allocation2 + $0x20] sm:$0xf]
    %v972 = vld [vmem:[#allocation2 + $0x24] sm:$0xf]
    %v973 = vld [vmem:[#allocation2 + $0x28] sm:$0xf]
    %v974 = vld [vmem:[#allocation2 + $0x2c] sm:$0xf]
    %v975 = vld [vmem:[#allocation2 + $0x30] sm:$0xf]
    %v976 = vld [vmem:[#allocation2 + $0x34] sm:$0xf]
    %v977 = vld [vmem:[#allocation2 + $0x38] sm:$0xf]
    %v978 = vld [vmem:[#allocation2 + $0x3c] sm:$0xf]
    %v979 = vld [vmem:[#allocation2 + $0x40] sm:$0xf]
    %v980 = vld [vmem:[#allocation2 + $0x44] sm:$0xf]
    %v981 = vld [vmem:[#allocation2 + $0x48] sm:$0xf]
    %v982 = vld [vmem:[#allocation2 + $0x4c] sm:$0xf]
    %v983 = vld [vmem:[#allocation2 + $0x50] sm:$0xf]
    %v984 = vld [vmem:[#allocation2 + $0x54] sm:$0xf]
    %v985 = vld [vmem:[#allocation2 + $0x58] sm:$0xf]
    %v986 = vld [vmem:[#allocation2 + $0x5c] sm:$0xf]
    %v987 = vld [vmem:[#allocation2 + $0x60] sm:$0xf]
    %v988 = vld [vmem:[#allocation2 + $0x64] sm:$0xf]
    %v989 = vld [vmem:[#allocation3] sm:$0xf]
    %v990 = vld [vmem:[#allocation3 + $0x4] sm:$0xf]
    %v991 = vld [vmem:[#allocation3 + $0x8] sm:$0xf]
    %v992 = vld [vmem:[#allocation3 + $0xc] sm:$0xf]
    %v993 = vld [vmem:[#allocation3 + $0x10] sm:$0xf]
    %v994 = vld [vmem:[#allocation3 + $0x14] sm:$0xf]
    %v995 = vld [vmem:[#allocation3 + $0x18] sm:$0xf]
    %v996 = vld [vmem:[#allocation3 + $0x1c] sm:$0xf]
    %v997 = vld [vmem:[#allocation3 + $0x20] sm:$0xf]
    %v998 = vld [vmem:[#allocation3 + $0x24] sm:$0xf]
    %v999 = vld [vmem:[#allocation3 + $0x28] sm:$0xf]
    %v1000 = vld [vmem:[#allocation3 + $0x2c] sm:$0xf]
    %v1001 = vld [vmem:[#allocation3 + $0x30] sm:$0xf]
    %v1002 = vld [vmem:[#allocation3 + $0x34] sm:$0xf]
    %v1003 = vld [vmem:[#allocation3 + $0x38] sm:$0xf]
    %v1004 = vld [vmem:[#allocation3 + $0x3c] sm:$0xf]
    %v1031 = vunpack.c.l.b16 %v963
    %v1032 = vunpack.c.l.b16 %v964
    %v1033 = vunpack.c.l.b16 %v965
    %v1034 = vunpack.c.l.b16 %v966
    %v1035 = vunpack.c.l.b16 %v967
    %v1036 = vunpack.c.l.b16 %v968
    %v1037 = vunpack.c.l.b16 %v969
    %v1038 = vunpack.c.l.b16 %v970
    %v1039 = vunpack.c.l.b16 %v971
    %v1040 = vunpack.c.l.b16 %v972
    %v1041 = vunpack.c.l.b16 %v973
    %v1042 = vunpack.c.l.b16 %v974
    %v1043 = vunpack.c.l.b16 %v975
    %v1044 = vunpack.c.l.b16 %v976
    %v1045 = vunpack.c.l.b16 %v977
    %v1046 = vunpack.c.l.b16 %v978
    %v1047 = vunpack.c.l.b16 %v979
    %v1048 = vunpack.c.l.b16 %v980
    %v1049 = vunpack.c.l.b16 %v981
    %v1050 = vunpack.c.l.b16 %v982
    %v1051 = vunpack.c.l.b16 %v983
    %v1052 = vunpack.c.l.b16 %v984
    %v1053 = vunpack.c.l.b16 %v985
    %v1054 = vunpack.c.l.b16 %v986
    %v1055 = vunpack.c.l.b16 %v987
    %v1056 = vunpack.c.l.b16 %v988
    %v1057 = vpack.c.b16 %v1032, %v1031
    %v1058 = vpack.c.b16 %v1034, %v1033
    %v1059 = vpack.c.b16 %v1036, %v1035
    %v1060 = vpack.c.b16 %v1038, %v1037
    %v1061 = vpack.c.b16 %v1040, %v1039
    %v1062 = vpack.c.b16 %v1042, %v1041
    %v1063 = vpack.c.b16 %v1044, %v1043
    %v1064 = vpack.c.b16 %v1046, %v1045
    %v1065 = vpack.c.b16 %v1048, %v1047
    %v1066 = vpack.c.b16 %v1050, %v1049
    %v1067 = vpack.c.b16 %v1052, %v1051
    %v1068 = vpack.c.b16 %v1054, %v1053
    %v1069 = vpack.c.b16 %v1056, %v1055
    %v1099 = vunpack.c.l.b16 %v989
    %v1100 = vunpack.c.l.b16 %v990
    %v1101 = vunpack.c.l.b16 %v991
    %v1102 = vunpack.c.l.b16 %v992
    %v1103 = vunpack.c.l.b16 %v993
    %v1104 = vunpack.c.l.b16 %v994
    %v1105 = vunpack.c.l.b16 %v995
    %v1106 = vunpack.c.l.b16 %v996
    %v1107 = vunpack.c.l.b16 %v997
    %v1108 = vunpack.c.l.b16 %v998
    %v1109 = vunpack.c.l.b16 %v999
    %v1110 = vunpack.c.l.b16 %v1000
    %v1111 = vunpack.c.l.b16 %v1001
    %v1112 = vunpack.c.l.b16 %v1002
    %v1113 = vunpack.c.l.b16 %v1003
    %v1114 = vunpack.c.l.b16 %v1004
    %v1115 = vpack.c.b16 %v1100, %v1099
    %v1116 = vpack.c.b16 %v1102, %v1101
    %v1117 = vpack.c.b16 %v1104, %v1103
    %v1118 = vpack.c.b16 %v1106, %v1105
    %v1119 = vpack.c.b16 %v1108, %v1107
    %v1120 = vpack.c.b16 %v1110, %v1109
    %v1121 = vpack.c.b16 %v1112, %v1111
    %v1122 = vpack.c.b16 %v1114, %v1113
    %1131 = vmatprep.subr.bf16.mxu0 0
    %1132 = vmatpush1.bf16.msra.mxu0 %v1115
    %1133 = vmatprep.subr.bf16.mxu0 0
    %1134 = vmatpush1.bf16.msra.mxu0 %v1116
    %1135 = vmatprep.subr.bf16.mxu0 0
    %1136 = vmatpush1.bf16.msra.mxu0 %v1117
    %1137 = vmatprep.subr.bf16.mxu0 0
    %1138 = vmatpush1.bf16.msra.mxu0 %v1118
    %1139 = vmatprep.subr.bf16.mxu0 0
    %1140 = vmatpush1.bf16.msra.mxu0 %v1119
    %1141 = vmatprep.subr.bf16.mxu0 0
    %1142 = vmatpush1.bf16.msra.mxu0 %v1120
    %1143 = vmatprep.subr.bf16.mxu0 0
    %1144 = vmatpush1.bf16.msra.mxu0 %v1121
    %1145 = vmatprep.subr.bf16.mxu0 0
    %1146 = vmatpush1.bf16.msra.mxu0 %v1122
    %1147 = vmatprep.subr.bf16.mxu0 0
    %1148 = vmatpush1.bf16.msra.mxu0 0
    %1149 = vmatprep.subr.bf16.mxu0 0
    %1150 = vmatpush1.bf16.msra.mxu0 0
    %1151 = vmatprep.subr.bf16.mxu0 0
    %1152 = vmatpush1.bf16.msra.mxu0 0
    %1153 = vmatprep.subr.bf16.mxu0 0
    %1154 = vmatpush1.bf16.msra.mxu0 0
    %1155 = vmatprep.subr.bf16.mxu0 0
    %1156 = vmatpush1.bf16.msra.mxu0 0
    %1157 = vmatprep.subr.bf16.mxu0 0
    %1158 = vmatpush1.bf16.msra.mxu0 0
    %1159 = vmatprep.subr.bf16.mxu0 0
    %1160 = vmatpush1.bf16.msra.mxu0 0
    %1161 = vmatprep.subr.bf16.mxu0 0
    %1162 = vmatpush1.bf16.msra.mxu0 0
    %1163 = vmatprep.mubr.bf16.mxu0 0
    %1164 = vmatmul.mubr.bf16.gmra.mrb[0].mxu0 %v1057
    %v1165 = vpop.f32.mrb[0].mxu0
    %v1166 = vadd.f32 0.0, %v1165
    %v1167 = vpop.f32.mrb[0].mxu0
    %v1168 = vpop.f32.mrb[0].mxu0
    %v1169 = vadd.f32 0.0, %v1168
    %v1170 = vpop.f32.mrb[0].mxu0
    %1171 = vmatprep.mubr.bf16.mxu0 0
    %1172 = vmatmul.mubr.bf16.gmra.mrb[0].mxu0 %v1058
    %v1173 = vpop.f32.mrb[0].mxu0
    %v1174 = vadd.f32 0.0, %v1173
    %v1175 = vpop.f32.mrb[0].mxu0
    %v1176 = vpop.f32.mrb[0].mxu0
    %v1177 = vadd.f32 0.0, %v1176
    %v1178 = vpop.f32.mrb[0].mxu0
    %1179 = vmatprep.mubr.bf16.mxu0 0
    %1180 = vmatmul.mubr.bf16.gmra.mrb[0].mxu0 %v1059
    %v1181 = vpop.f32.mrb[0].mxu0
    %v1182 = vadd.f32 0.0, %v1181
    %v1183 = vpop.f32.mrb[0].mxu0
    %v1184 = vpop.f32.mrb[0].mxu0
    %v1185 = vadd.f32 0.0, %v1184
    %v1186 = vpop.f32.mrb[0].mxu0
    %1187 = vmatprep.mubr.bf16.mxu0 0
    %1188 = vmatmul.mubr.bf16.gmra.mrb[0].mxu0 %v1060
    %v1189 = vpop.f32.mrb[0].mxu0
    %v1190 = vadd.f32 0.0, %v1189
    %v1191 = vpop.f32.mrb[0].mxu0
    %v1192 = vpop.f32.mrb[0].mxu0
    %v1193 = vadd.f32 0.0, %v1192
    %v1194 = vpop.f32.mrb[0].mxu0
    %1195 = vmatprep.mubr.bf16.mxu0 0
    %1196 = vmatmul.mubr.bf16.gmra.mrb[0].mxu0 %v1061
    %v1197 = vpop.f32.mrb[0].mxu0
    %v1198 = vadd.f32 0.0, %v1197
    %v1199 = vpop.f32.mrb[0].mxu0
    %v1200 = vpop.f32.mrb[0].mxu0
    %v1201 = vadd.f32 0.0, %v1200
    %v1202 = vpop.f32.mrb[0].mxu0
    %1203 = vmatprep.mubr.bf16.mxu0 0
    %1204 = vmatmul.mubr.bf16.gmra.mrb[0].mxu0 %v1062
    %v1205 = vpop.f32.mrb[0].mxu0
    %v1206 = vadd.f32 0.0, %v1205
    %v1207 = vpop.f32.mrb[0].mxu0
    %v1208 = vpop.f32.mrb[0].mxu0
    %v1209 = vadd.f32 0.0, %v1208
    %v1210 = vpop.f32.mrb[0].mxu0
    %1211 = vmatprep.mubr.bf16.mxu0 0
    %1212 = vmatmul.mubr.bf16.gmra.mrb[0].mxu0 %v1063
    %v1213 = vpop.f32.mrb[0].mxu0
    %v1214 = vadd.f32 0.0, %v1213
    %v1215 = vpop.f32.mrb[0].mxu0
    %v1216 = vpop.f32.mrb[0].mxu0
    %v1217 = vadd.f32 0.0, %v1216
    %v1218 = vpop.f32.mrb[0].mxu0
    %1219 = vmatprep.mubr.bf16.mxu0 0
    %1220 = vmatmul.mubr.bf16.gmra.mrb[0].mxu0 %v1064
    %v1221 = vpop.f32.mrb[0].mxu0
    %v1222 = vadd.f32 0.0, %v1221
    %v1223 = vpop.f32.mrb[0].mxu0
    %v1224 = vpop.f32.mrb[0].mxu0
    %v1225 = vadd.f32 0.0, %v1224
    %v1226 = vpop.f32.mrb[0].mxu0
    %1227 = vmatprep.mubr.bf16.mxu0 0
    %1228 = vmatmul.mubr.bf16.gmra.mrb[0].mxu0 %v1065
    %v1229 = vpop.f32.mrb[0].mxu0
    %v1230 = vadd.f32 0.0, %v1229
    %v1231 = vpop.f32.mrb[0].mxu0
    %v1232 = vpop.f32.mrb[0].mxu0
    %v1233 = vadd.f32 0.0, %v1232
    %v1234 = vpop.f32.mrb[0].mxu0
    %1235 = vmatprep.mubr.bf16.mxu0 0
    %1236 = vmatmul.mubr.bf16.gmra.mrb[0].mxu0 %v1066
    %v1237 = vpop.f32.mrb[0].mxu0
    %v1238 = vadd.f32 0.0, %v1237
    %v1239 = vpop.f32.mrb[0].mxu0
    %v1240 = vpop.f32.mrb[0].mxu0
    %v1241 = vadd.f32 0.0, %v1240
    %v1242 = vpop.f32.mrb[0].mxu0
    %1243 = vmatprep.mubr.bf16.mxu0 0
    %1244 = vmatmul.mubr.bf16.gmra.mrb[0].mxu0 %v1067
    %v1245 = vpop.f32.mrb[0].mxu0
    %v1246 = vadd.f32 0.0, %v1245
    %v1247 = vpop.f32.mrb[0].mxu0
    %v1248 = vpop.f32.mrb[0].mxu0
    %v1249 = vadd.f32 0.0, %v1248
    %v1250 = vpop.f32.mrb[0].mxu0
    %1251 = vmatprep.mubr.bf16.mxu0 0
    %1252 = vmatmul.mubr.bf16.gmra.mrb[0].mxu0 %v1068
    %v1253 = vpop.f32.mrb[0].mxu0
    %v1254 = vadd.f32 0.0, %v1253
    %v1255 = vpop.f32.mrb[0].mxu0
    %v1256 = vpop.f32.mrb[0].mxu0
    %v1257 = vadd.f32 0.0, %v1256
    %v1258 = vpop.f32.mrb[0].mxu0
    %1259 = vmatprep.mubr.bf16.mxu0 0
    %1260 = vmatmul.mubr.bf16.gmra.mrb[0].mxu0 %v1069
    %v1261 = vpop.f32.mrb[0].mxu0
    %v1262 = vadd.f32 0.0, %v1261
    %v1263 = vpop.f32.mrb[0].mxu0
    %v1264 = vpop.f32.mrb[0].mxu0
    %v1265 = vadd.f32 0.0, %v1264
    %v1266 = vpop.f32.mrb[0].mxu0
    %1267 = vdwg.mxu0
    %v1268 = vadd.f32 %v961, %v1166
    %v1269 = vadd.f32 %v961, %v1169
    %v1270 = vadd.f32 %v961, %v1174
    %v1271 = vadd.f32 %v961, %v1177
    %v1272 = vadd.f32 %v961, %v1182
    %v1273 = vadd.f32 %v961, %v1185
    %v1274 = vadd.f32 %v961, %v1190
    %v1275 = vadd.f32 %v961, %v1193
    %v1276 = vadd.f32 %v961, %v1198
    %v1277 = vadd.f32 %v961, %v1201
    %v1278 = vadd.f32 %v961, %v1206
    %v1279 = vadd.f32 %v961, %v1209
    %v1280 = vadd.f32 %v961, %v1214
    %v1281 = vadd.f32 %v961, %v1217
    %v1282 = vadd.f32 %v961, %v1222
    %v1283 = vadd.f32 %v961, %v1225
    %v1284 = vadd.f32 %v961, %v1230
    %v1285 = vadd.f32 %v961, %v1233
    %v1286 = vadd.f32 %v961, %v1238
    %v1287 = vadd.f32 %v961, %v1241
    %v1288 = vadd.f32 %v961, %v1246
    %v1289 = vadd.f32 %v961, %v1249
    %v1290 = vadd.f32 %v961, %v1254
    %v1291 = vadd.f32 %v961, %v1257
    %v1292 = vadd.f32 %v961, %v1262
    %v1293 = vadd.f32 %v961, %v1265
    %v1294 = vld [vmem:[#allocation2] sm:$0xf]
    %v1295 = vld [vmem:[#allocation2 + $0x4] sm:$0xf]
    %v1296 = vld [vmem:[#allocation2 + $0x8] sm:$0xf]
    %v1297 = vld [vmem:[#allocation2 + $0xc] sm:$0xf]
    %v1298 = vld [vmem:[#allocation2 + $0x10] sm:$0xf]
    %v1299 = vld [vmem:[#allocation2 + $0x14] sm:$0xf]
    %v1300 = vld [vmem:[#allocation2 + $0x18] sm:$0xf]
    %v1301 = vld [vmem:[#allocation2 + $0x1c] sm:$0xf]
    %v1302 = vld [vmem:[#allocation2 + $0x20] sm:$0xf]
    %v1303 = vld [vmem:[#allocation2 + $0x24] sm:$0xf]
    %v1304 = vld [vmem:[#allocation2 + $0x28] sm:$0xf]
    %v1305 = vld [vmem:[#allocation2 + $0x2c] sm:$0xf]
    %v1306 = vld [vmem:[#allocation2 + $0x30] sm:$0xf]
    %v1307 = vld [vmem:[#allocation2 + $0x34] sm:$0xf]
    %v1308 = vld [vmem:[#allocation2 + $0x38] sm:$0xf]
    %v1309 = vld [vmem:[#allocation2 + $0x3c] sm:$0xf]
    %v1310 = vld [vmem:[#allocation2 + $0x40] sm:$0xf]
    %v1311 = vld [vmem:[#allocation2 + $0x44] sm:$0xf]
    %v1312 = vld [vmem:[#allocation2 + $0x48] sm:$0xf]
    %v1313 = vld [vmem:[#allocation2 + $0x4c] sm:$0xf]
    %v1314 = vld [vmem:[#allocation2 + $0x50] sm:$0xf]
    %v1315 = vld [vmem:[#allocation2 + $0x54] sm:$0xf]
    %v1316 = vld [vmem:[#allocation2 + $0x58] sm:$0xf]
    %v1317 = vld [vmem:[#allocation2 + $0x5c] sm:$0xf]
    %v1318 = vld [vmem:[#allocation2 + $0x60] sm:$0xf]
    %v1319 = vld [vmem:[#allocation2 + $0x64] sm:$0xf]
    %v1320 = vld [vmem:[#allocation2 + $0x68] sm:$0x1]
    %s1321 = scalar_lea.vmem [#allocation3], 64
    %v1322 = vld [vmem:[%s1321] sm:$0xf]
    %v1323 = vld [vmem:[%s1321 + $0x4] sm:$0xf]
    %v1324 = vld [vmem:[%s1321 + $0x8] sm:$0xf]
    %v1325 = vld [vmem:[%s1321 + $0xc] sm:$0xf]
    %v1326 = vld [vmem:[%s1321 + $0x10] sm:$0xf]
    %v1327 = vld [vmem:[%s1321 + $0x14] sm:$0xf]
    %v1328 = vld [vmem:[%s1321 + $0x18] sm:$0xf]
    %v1329 = vld [vmem:[%s1321 + $0x1c] sm:$0xf]
    %v1330 = vld [vmem:[%s1321 + $0x20] sm:$0xf]
    %v1331 = vld [vmem:[%s1321 + $0x24] sm:$0xf]
    %v1332 = vld [vmem:[%s1321 + $0x28] sm:$0xf]
    %v1333 = vld [vmem:[%s1321 + $0x2c] sm:$0xf]
    %v1334 = vld [vmem:[%s1321 + $0x30] sm:$0xf]
    %v1335 = vld [vmem:[%s1321 + $0x34] sm:$0xf]
    %v1336 = vld [vmem:[%s1321 + $0x38] sm:$0xf]
    %v1337 = vld [vmem:[%s1321 + $0x3c] sm:$0xf]
    %v1365 = vunpack.c.l.b16 %v1294
    %v1366 = vunpack.c.l.b16 %v1295
    %v1367 = vunpack.c.l.b16 %v1296
    %v1368 = vunpack.c.l.b16 %v1297
    %v1369 = vunpack.c.l.b16 %v1298
    %v1370 = vunpack.c.l.b16 %v1299
    %v1371 = vunpack.c.l.b16 %v1300
    %v1372 = vunpack.c.l.b16 %v1301
    %v1373 = vunpack.c.l.b16 %v1302
    %v1374 = vunpack.c.l.b16 %v1303
    %v1375 = vunpack.c.l.b16 %v1304
    %v1376 = vunpack.c.l.b16 %v1305
    %v1377 = vunpack.c.l.b16 %v1306
    %v1378 = vunpack.c.l.b16 %v1307
    %v1379 = vunpack.c.l.b16 %v1308
    %v1380 = vunpack.c.l.b16 %v1309
    %v1381 = vunpack.c.l.b16 %v1310
    %v1382 = vunpack.c.l.b16 %v1311
    %v1383 = vunpack.c.l.b16 %v1312
    %v1384 = vunpack.c.l.b16 %v1313
    %v1385 = vunpack.c.l.b16 %v1314
    %v1386 = vunpack.c.l.b16 %v1315
    %v1387 = vunpack.c.l.b16 %v1316
    %v1388 = vunpack.c.l.b16 %v1317
    %v1389 = vunpack.c.l.b16 %v1318
    %v1390 = vunpack.c.l.b16 %v1319
    %v1391 = vunpack.c.l.b16 %v1320
    %v1392 = vpack.c.b16 %v1366, %v1365
    %v1393 = vpack.c.b16 %v1368, %v1367
    %v1394 = vpack.c.b16 %v1370, %v1369
    %v1395 = vpack.c.b16 %v1372, %v1371
    %v1396 = vpack.c.b16 %v1374, %v1373
    %v1397 = vpack.c.b16 %v1376, %v1375
    %v1398 = vpack.c.b16 %v1378, %v1377
    %v1399 = vpack.c.b16 %v1380, %v1379
    %v1400 = vpack.c.b16 %v1382, %v1381
    %v1401 = vpack.c.b16 %v1384, %v1383
    %v1402 = vpack.c.b16 %v1386, %v1385
    %v1403 = vpack.c.b16 %v1388, %v1387
    %v1404 = vpack.c.b16 %v1390, %v1389
    %v1405 = vpack.c.b16 %v1391, %v1391
    %vm1406 = vsmask.f32 7424
    %v1408 = vshrl.u32 %v1392, 16
    %v1410 = vshll.u32 %v1392, 16
    %v1412 = vrot.slane %v1410, 1
    %v1413 = vor.u32 %v1408, %v1412
    %v1415 = vshll.u32 %v1393, 16
    %v1417 = vrot.slane %v1415, 1
    %v1418 = vsel %vm1406, %v1413, %v1417
    %v1419 = vshrl.u32 %v1393, 16
    %v1421 = vor.u32 %v1419, %v1417
    %v1423 = vshll.u32 %v1394, 16
    %v1425 = vrot.slane %v1423, 1
    %v1426 = vsel %vm1406, %v1421, %v1425
    %v1427 = vshrl.u32 %v1394, 16
    %v1429 = vor.u32 %v1427, %v1425
    %v1431 = vshll.u32 %v1395, 16
    %v1433 = vrot.slane %v1431, 1
    %v1434 = vsel %vm1406, %v1429, %v1433
    %v1435 = vshrl.u32 %v1395, 16
    %v1437 = vor.u32 %v1435, %v1433
    %v1439 = vshll.u32 %v1396, 16
    %v1441 = vrot.slane %v1439, 1
    %v1442 = vsel %vm1406, %v1437, %v1441
    %v1443 = vshrl.u32 %v1396, 16
    %v1445 = vor.u32 %v1443, %v1441
    %v1447 = vshll.u32 %v1397, 16
    %v1449 = vrot.slane %v1447, 1
    %v1450 = vsel %vm1406, %v1445, %v1449
    %v1451 = vshrl.u32 %v1397, 16
    %v1453 = vor.u32 %v1451, %v1449
    %v1455 = vshll.u32 %v1398, 16
    %v1457 = vrot.slane %v1455, 1
    %v1458 = vsel %vm1406, %v1453, %v1457
    %v1459 = vshrl.u32 %v1398, 16
    %v1461 = vor.u32 %v1459, %v1457
    %v1463 = vshll.u32 %v1399, 16
    %v1465 = vrot.slane %v1463, 1
    %v1466 = vsel %vm1406, %v1461, %v1465
    %v1467 = vshrl.u32 %v1399, 16
    %v1469 = vor.u32 %v1467, %v1465
    %v1471 = vshll.u32 %v1400, 16
    %v1473 = vrot.slane %v1471, 1
    %v1474 = vsel %vm1406, %v1469, %v1473
    %v1475 = vshrl.u32 %v1400, 16
    %v1477 = vor.u32 %v1475, %v1473
    %v1479 = vshll.u32 %v1401, 16
    %v1481 = vrot.slane %v1479, 1
    %v1482 = vsel %vm1406, %v1477, %v1481
    %v1483 = vshrl.u32 %v1401, 16
    %v1485 = vor.u32 %v1483, %v1481
    %v1487 = vshll.u32 %v1402, 16
    %v1489 = vrot.slane %v1487, 1
    %v1490 = vsel %vm1406, %v1485, %v1489
    %v1491 = vshrl.u32 %v1402, 16
    %v1493 = vor.u32 %v1491, %v1489
    %v1495 = vshll.u32 %v1403, 16
    %v1497 = vrot.slane %v1495, 1
    %v1498 = vsel %vm1406, %v1493, %v1497
    %v1499 = vshrl.u32 %v1403, 16
    %v1501 = vor.u32 %v1499, %v1497
    %v1503 = vshll.u32 %v1404, 16
    %v1505 = vrot.slane %v1503, 1
    %v1506 = vsel %vm1406, %v1501, %v1505
    %v1507 = vshrl.u32 %v1404, 16
    %v1509 = vor.u32 %v1507, %v1505
    %v1511 = vshll.u32 %v1405, 16
    %v1513 = vrot.slane %v1511, 1
    %v1514 = vsel %vm1406, %v1509, %v1513
    %v1544 = vunpack.c.l.b16 %v1322
    %v1545 = vunpack.c.l.b16 %v1323
    %v1546 = vunpack.c.l.b16 %v1324
    %v1547 = vunpack.c.l.b16 %v1325
    %v1548 = vunpack.c.l.b16 %v1326
    %v1549 = vunpack.c.l.b16 %v1327
    %v1550 = vunpack.c.l.b16 %v1328
    %v1551 = vunpack.c.l.b16 %v1329
    %v1552 = vunpack.c.l.b16 %v1330
    %v1553 = vunpack.c.l.b16 %v1331
    %v1554 = vunpack.c.l.b16 %v1332
    %v1555 = vunpack.c.l.b16 %v1333
    %v1556 = vunpack.c.l.b16 %v1334
    %v1557 = vunpack.c.l.b16 %v1335
    %v1558 = vunpack.c.l.b16 %v1336
    %v1559 = vunpack.c.l.b16 %v1337
    %v1560 = vpack.c.b16 %v1545, %v1544
    %v1561 = vpack.c.b16 %v1547, %v1546
    %v1562 = vpack.c.b16 %v1549, %v1548
    %v1563 = vpack.c.b16 %v1551, %v1550
    %v1564 = vpack.c.b16 %v1553, %v1552
    %v1565 = vpack.c.b16 %v1555, %v1554
    %v1566 = vpack.c.b16 %v1557, %v1556
    %v1567 = vpack.c.b16 %v1559, %v1558
    %1576 = vmatprep.subr.bf16.mxu0 0
    %1577 = vmatpush1.bf16.msra.mxu0 %v1560
    %1578 = vmatprep.subr.bf16.mxu0 0
    %1579 = vmatpush1.bf16.msra.mxu0 %v1561
    %1580 = vmatprep.subr.bf16.mxu0 0
    %1581 = vmatpush1.bf16.msra.mxu0 %v1562
    %1582 = vmatprep.subr.bf16.mxu0 0
    %1583 = vmatpush1.bf16.msra.mxu0 %v1563
    %1584 = vmatprep.subr.bf16.mxu0 0
    %1585 = vmatpush1.bf16.msra.mxu0 %v1564
    %1586 = vmatprep.subr.bf16.mxu0 0
    %1587 = vmatpush1.bf16.msra.mxu0 %v1565
    %1588 = vmatprep.subr.bf16.mxu0 0
    %1589 = vmatpush1.bf16.msra.mxu0 %v1566
    %1590 = vmatprep.subr.bf16.mxu0 0
    %1591 = vmatpush1.bf16.msra.mxu0 %v1567
    %1592 = vmatprep.subr.bf16.mxu0 0
    %1593 = vmatpush1.bf16.msra.mxu0 0
    %1594 = vmatprep.subr.bf16.mxu0 0
    %1595 = vmatpush1.bf16.msra.mxu0 0
    %1596 = vmatprep.subr.bf16.mxu0 0
    %1597 = vmatpush1.bf16.msra.mxu0 0
    %1598 = vmatprep.subr.bf16.mxu0 0
    %1599 = vmatpush1.bf16.msra.mxu0 0
    %1600 = vmatprep.subr.bf16.mxu0 0
    %1601 = vmatpush1.bf16.msra.mxu0 0
    %1602 = vmatprep.subr.bf16.mxu0 0
    %1603 = vmatpush1.bf16.msra.mxu0 0
    %1604 = vmatprep.subr.bf16.mxu0 0
    %1605 = vmatpush1.bf16.msra.mxu0 0
    %1606 = vmatprep.subr.bf16.mxu0 0
    %1607 = vmatpush1.bf16.msra.mxu0 0
    %1608 = vmatprep.mubr.bf16.mxu0 0
    %1609 = vmatmul.mubr.bf16.gmra.mrb[0].mxu0 %v1418
    %v1610 = vpop.f32.mrb[0].mxu0
    %v1611 = vadd.f32 0.0, %v1610
    %v1612 = vpop.f32.mrb[0].mxu0
    %v1613 = vpop.f32.mrb[0].mxu0
    %v1614 = vadd.f32 0.0, %v1613
    %v1615 = vpop.f32.mrb[0].mxu0
    %1616 = vmatprep.mubr.bf16.mxu0 0
    %1617 = vmatmul.mubr.bf16.gmra.mrb[0].mxu0 %v1426
    %v1618 = vpop.f32.mrb[0].mxu0
    %v1619 = vadd.f32 0.0, %v1618
    %v1620 = vpop.f32.mrb[0].mxu0
    %v1621 = vpop.f32.mrb[0].mxu0
    %v1622 = vadd.f32 0.0, %v1621
    %v1623 = vpop.f32.mrb[0].mxu0
    %1624 = vmatprep.mubr.bf16.mxu0 0
    %1625 = vmatmul.mubr.bf16.gmra.mrb[0].mxu0 %v1434
    %v1626 = vpop.f32.mrb[0].mxu0
    %v1627 = vadd.f32 0.0, %v1626
    %v1628 = vpop.f32.mrb[0].mxu0
    %v1629 = vpop.f32.mrb[0].mxu0
    %v1630 = vadd.f32 0.0, %v1629
    %v1631 = vpop.f32.mrb[0].mxu0
    %1632 = vmatprep.mubr.bf16.mxu0 0
    %1633 = vmatmul.mubr.bf16.gmra.mrb[0].mxu0 %v1442
    %v1634 = vpop.f32.mrb[0].mxu0
    %v1635 = vadd.f32 0.0, %v1634
    %v1636 = vpop.f32.mrb[0].mxu0
    %v1637 = vpop.f32.mrb[0].mxu0
    %v1638 = vadd.f32 0.0, %v1637
    %v1639 = vpop.f32.mrb[0].mxu0
    %1640 = vmatprep.mubr.bf16.mxu0 0
    %1641 = vmatmul.mubr.bf16.gmra.mrb[0].mxu0 %v1450
    %v1642 = vpop.f32.mrb[0].mxu0
    %v1643 = vadd.f32 0.0, %v1642
    %v1644 = vpop.f32.mrb[0].mxu0
    %v1645 = vpop.f32.mrb[0].mxu0
    %v1646 = vadd.f32 0.0, %v1645
    %v1647 = vpop.f32.mrb[0].mxu0
    %1648 = vmatprep.mubr.bf16.mxu0 0
    %1649 = vmatmul.mubr.bf16.gmra.mrb[0].mxu0 %v1458
    %v1650 = vpop.f32.mrb[0].mxu0
    %v1651 = vadd.f32 0.0, %v1650
    %v1652 = vpop.f32.mrb[0].mxu0
    %v1653 = vpop.f32.mrb[0].mxu0
    %v1654 = vadd.f32 0.0, %v1653
    %v1655 = vpop.f32.mrb[0].mxu0
    %1656 = vmatprep.mubr.bf16.mxu0 0
    %1657 = vmatmul.mubr.bf16.gmra.mrb[0].mxu0 %v1466
    %v1658 = vpop.f32.mrb[0].mxu0
    %v1659 = vadd.f32 0.0, %v1658
    %v1660 = vpop.f32.mrb[0].mxu0
    %v1661 = vpop.f32.mrb[0].mxu0
    %v1662 = vadd.f32 0.0, %v1661
    %v1663 = vpop.f32.mrb[0].mxu0
    %1664 = vmatprep.mubr.bf16.mxu0 0
    %1665 = vmatmul.mubr.bf16.gmra.mrb[0].mxu0 %v1474
    %v1666 = vpop.f32.mrb[0].mxu0
    %v1667 = vadd.f32 0.0, %v1666
    %v1668 = vpop.f32.mrb[0].mxu0
    %v1669 = vpop.f32.mrb[0].mxu0
    %v1670 = vadd.f32 0.0, %v1669
    %v1671 = vpop.f32.mrb[0].mxu0
    %1672 = vmatprep.mubr.bf16.mxu0 0
    %1673 = vmatmul.mubr.bf16.gmra.mrb[0].mxu0 %v1482
    %v1674 = vpop.f32.mrb[0].mxu0
    %v1675 = vadd.f32 0.0, %v1674
    %v1676 = vpop.f32.mrb[0].mxu0
    %v1677 = vpop.f32.mrb[0].mxu0
    %v1678 = vadd.f32 0.0, %v1677
    %v1679 = vpop.f32.mrb[0].mxu0
    %1680 = vmatprep.mubr.bf16.mxu0 0
    %1681 = vmatmul.mubr.bf16.gmra.mrb[0].mxu0 %v1490
    %v1682 = vpop.f32.mrb[0].mxu0
    %v1683 = vadd.f32 0.0, %v1682
    %v1684 = vpop.f32.mrb[0].mxu0
    %v1685 = vpop.f32.mrb[0].mxu0
    %v1686 = vadd.f32 0.0, %v1685
    %v1687 = vpop.f32.mrb[0].mxu0
    %1688 = vmatprep.mubr.bf16.mxu0 0
    %1689 = vmatmul.mubr.bf16.gmra.mrb[0].mxu0 %v1498
    %v1690 = vpop.f32.mrb[0].mxu0
    %v1691 = vadd.f32 0.0, %v1690
    %v1692 = vpop.f32.mrb[0].mxu0
    %v1693 = vpop.f32.mrb[0].mxu0
    %v1694 = vadd.f32 0.0, %v1693
    %v1695 = vpop.f32.mrb[0].mxu0
    %1696 = vmatprep.mubr.bf16.mxu0 0
    %1697 = vmatmul.mubr.bf16.gmra.mrb[0].mxu0 %v1506
    %v1698 = vpop.f32.mrb[0].mxu0
    %v1699 = vadd.f32 0.0, %v1698
    %v1700 = vpop.f32.mrb[0].mxu0
    %v1701 = vpop.f32.mrb[0].mxu0
    %v1702 = vadd.f32 0.0, %v1701
    %v1703 = vpop.f32.mrb[0].mxu0
    %1704 = vmatprep.mubr.bf16.mxu0 0
    %1705 = vmatmul.mubr.bf16.gmra.mrb[0].mxu0 %v1514
    %v1706 = vpop.f32.mrb[0].mxu0
    %v1707 = vadd.f32 0.0, %v1706
    %v1708 = vpop.f32.mrb[0].mxu0
    %v1709 = vpop.f32.mrb[0].mxu0
    %v1710 = vadd.f32 0.0, %v1709
    %v1711 = vpop.f32.mrb[0].mxu0
    %1712 = vdwg.mxu0
    %v1713 = vadd.f32 %v1268, %v1611
    %v1714 = vadd.f32 %v1269, %v1614
    %v1715 = vadd.f32 %v1270, %v1619
    %v1716 = vadd.f32 %v1271, %v1622
    %v1717 = vadd.f32 %v1272, %v1627
    %v1718 = vadd.f32 %v1273, %v1630
    %v1719 = vadd.f32 %v1274, %v1635
    %v1720 = vadd.f32 %v1275, %v1638
    %v1721 = vadd.f32 %v1276, %v1643
    %v1722 = vadd.f32 %v1277, %v1646
    %v1723 = vadd.f32 %v1278, %v1651
    %v1724 = vadd.f32 %v1279, %v1654
    %v1725 = vadd.f32 %v1280, %v1659
    %v1726 = vadd.f32 %v1281, %v1662
    %v1727 = vadd.f32 %v1282, %v1667
    %v1728 = vadd.f32 %v1283, %v1670
    %v1729 = vadd.f32 %v1284, %v1675
    %v1730 = vadd.f32 %v1285, %v1678
    %v1731 = vadd.f32 %v1286, %v1683
    %v1732 = vadd.f32 %v1287, %v1686
    %v1733 = vadd.f32 %v1288, %v1691
    %v1734 = vadd.f32 %v1289, %v1694
    %v1735 = vadd.f32 %v1290, %v1699
    %v1736 = vadd.f32 %v1291, %v1702
    %v1737 = vadd.f32 %v1292, %v1707
    %v1738 = vadd.f32 %v1293, %v1710
    %v1739 = vld [vmem:[#allocation2] sm:$0xe]
    %s1740 = scalar_lea.vmem [#allocation3], 128
    %v1741 = vld [vmem:[%s1740] sm:$0xf]
    %v1742 = vld [vmem:[%s1740 + $0x4] sm:$0xf]
    %v1743 = vld [vmem:[%s1740 + $0x8] sm:$0xf]
    %v1744 = vld [vmem:[%s1740 + $0xc] sm:$0xf]
    %v1745 = vld [vmem:[%s1740 + $0x10] sm:$0xf]
    %v1746 = vld [vmem:[%s1740 + $0x14] sm:$0xf]
    %v1747 = vld [vmem:[%s1740 + $0x18] sm:$0xf]
    %v1748 = vld [vmem:[%s1740 + $0x1c] sm:$0xf]
    %v1749 = vld [vmem:[%s1740 + $0x20] sm:$0xf]
    %v1750 = vld [vmem:[%s1740 + $0x24] sm:$0xf]
    %v1751 = vld [vmem:[%s1740 + $0x28] sm:$0xf]
    %v1752 = vld [vmem:[%s1740 + $0x2c] sm:$0xf]
    %v1753 = vld [vmem:[%s1740 + $0x30] sm:$0xf]
    %v1754 = vld [vmem:[%s1740 + $0x34] sm:$0xf]
    %v1755 = vld [vmem:[%s1740 + $0x38] sm:$0xf]
    %v1756 = vld [vmem:[%s1740 + $0x3c] sm:$0xf]
    %v1758 = vunpack.c.l.b16 %v1739
    %v1759 = vpack.c.b16 %v1366, %v1758
    %vm1760 = vcmask 1046528
    %v1761 = vrot.slane %v1759, 1
    %v1762 = vrot.slane %v1393, 1
    %v1763 = vsel %vm1760, %v1761, %v1762
    %v1764 = vrot.slane %v1394, 1
    %v1765 = vsel %vm1760, %v1762, %v1764
    %v1766 = vrot.slane %v1395, 1
    %v1767 = vsel %vm1760, %v1764, %v1766
    %v1768 = vrot.slane %v1396, 1
    %v1769 = vsel %vm1760, %v1766, %v1768
    %v1770 = vrot.slane %v1397, 1
    %v1771 = vsel %vm1760, %v1768, %v1770
    %v1772 = vrot.slane %v1398, 1
    %v1773 = vsel %vm1760, %v1770, %v1772
    %v1774 = vrot.slane %v1399, 1
    %v1775 = vsel %vm1760, %v1772, %v1774
    %v1776 = vrot.slane %v1400, 1
    %v1777 = vsel %vm1760, %v1774, %v1776
    %v1778 = vrot.slane %v1401, 1
    %v1779 = vsel %vm1760, %v1776, %v1778
    %v1780 = vrot.slane %v1402, 1
    %v1781 = vsel %vm1760, %v1778, %v1780
    %v1782 = vrot.slane %v1403, 1
    %v1783 = vsel %vm1760, %v1780, %v1782
    %v1784 = vrot.slane %v1404, 1
    %v1785 = vsel %vm1760, %v1782, %v1784
    %v1786 = vrot.slane %v1405, 1
    %v1787 = vsel %vm1760, %v1784, %v1786
    %v1817 = vunpack.c.l.b16 %v1741
    %v1818 = vunpack.c.l.b16 %v1742
    %v1819 = vunpack.c.l.b16 %v1743
    %v1820 = vunpack.c.l.b16 %v1744
    %v1821 = vunpack.c.l.b16 %v1745
    %v1822 = vunpack.c.l.b16 %v1746
    %v1823 = vunpack.c.l.b16 %v1747
    %v1824 = vunpack.c.l.b16 %v1748
    %v1825 = vunpack.c.l.b16 %v1749
    %v1826 = vunpack.c.l.b16 %v1750
    %v1827 = vunpack.c.l.b16 %v1751
    %v1828 = vunpack.c.l.b16 %v1752
    %v1829 = vunpack.c.l.b16 %v1753
    %v1830 = vunpack.c.l.b16 %v1754
    %v1831 = vunpack.c.l.b16 %v1755
    %v1832 = vunpack.c.l.b16 %v1756
    %v1833 = vpack.c.b16 %v1818, %v1817
    %v1834 = vpack.c.b16 %v1820, %v1819
    %v1835 = vpack.c.b16 %v1822, %v1821
    %v1836 = vpack.c.b16 %v1824, %v1823
    %v1837 = vpack.c.b16 %v1826, %v1825
    %v1838 = vpack.c.b16 %v1828, %v1827
    %v1839 = vpack.c.b16 %v1830, %v1829
    %v1840 = vpack.c.b16 %v1832, %v1831
    %1849 = vmatprep.subr.bf16.mxu0 0
    %1850 = vmatpush1.bf16.msra.mxu0 %v1833
    %1851 = vmatprep.subr.bf16.mxu0 0
    %1852 = vmatpush1.bf16.msra.mxu0 %v1834
    %1853 = vmatprep.subr.bf16.mxu0 0
    %1854 = vmatpush1.bf16.msra.mxu0 %v1835
    %1855 = vmatprep.subr.bf16.mxu0 0
    %1856 = vmatpush1.bf16.msra.mxu0 %v1836
    %1857 = vmatprep.subr.bf16.mxu0 0
    %1858 = vmatpush1.bf16.msra.mxu0 %v1837
    %1859 = vmatprep.subr.bf16.mxu0 0
    %1860 = vmatpush1.bf16.msra.mxu0 %v1838
    %1861 = vmatprep.subr.bf16.mxu0 0
    %1862 = vmatpush1.bf16.msra.mxu0 %v1839
    %1863 = vmatprep.subr.bf16.mxu0 0
    %1864 = vmatpush1.bf16.msra.mxu0 %v1840
    %1865 = vmatprep.subr.bf16.mxu0 0
    %1866 = vmatpush1.bf16.msra.mxu0 0
    %1867 = vmatprep.subr.bf16.mxu0 0
    %1868 = vmatpush1.bf16.msra.mxu0 0
    %1869 = vmatprep.subr.bf16.mxu0 0
    %1870 = vmatpush1.bf16.msra.mxu0 0
    %1871 = vmatprep.subr.bf16.mxu0 0
    %1872 = vmatpush1.bf16.msra.mxu0 0
    %1873 = vmatprep.subr.bf16.mxu0 0
    %1874 = vmatpush1.bf16.msra.mxu0 0
    %1875 = vmatprep.subr.bf16.mxu0 0
    %1876 = vmatpush1.bf16.msra.mxu0 0
    %1877 = vmatprep.subr.bf16.mxu0 0
    %1878 = vmatpush1.bf16.msra.mxu0 0
    %1879 = vmatprep.subr.bf16.mxu0 0
    %1880 = vmatpush1.bf16.msra.mxu0 0
    %1881 = vmatprep.mubr.bf16.mxu0 0
    %1882 = vmatmul.mubr.bf16.gmra.mrb[0].mxu0 %v1763
    %v1883 = vpop.f32.mrb[0].mxu0
    %v1884 = vadd.f32 0.0, %v1883
    %v1885 = vpop.f32.mrb[0].mxu0
    %v1886 = vpop.f32.mrb[0].mxu0
    %v1887 = vadd.f32 0.0, %v1886
    %v1888 = vpop.f32.mrb[0].mxu0
    %1889 = vmatprep.mubr.bf16.mxu0 0
    %1890 = vmatmul.mubr.bf16.gmra.mrb[0].mxu0 %v1765
    %v1891 = vpop.f32.mrb[0].mxu0
    %v1892 = vadd.f32 0.0, %v1891
    %v1893 = vpop.f32.mrb[0].mxu0
    %v1894 = vpop.f32.mrb[0].mxu0
    %v1895 = vadd.f32 0.0, %v1894
    %v1896 = vpop.f32.mrb[0].mxu0
    %1897 = vmatprep.mubr.bf16.mxu0 0
    %1898 = vmatmul.mubr.bf16.gmra.mrb[0].mxu0 %v1767
    %v1899 = vpop.f32.mrb[0].mxu0
    %v1900 = vadd.f32 0.0, %v1899
    %v1901 = vpop.f32.mrb[0].mxu0
    %v1902 = vpop.f32.mrb[0].mxu0
    %v1903 = vadd.f32 0.0, %v1902
    %v1904 = vpop.f32.mrb[0].mxu0
    %1905 = vmatprep.mubr.bf16.mxu0 0
    %1906 = vmatmul.mubr.bf16.gmra.mrb[0].mxu0 %v1769
    %v1907 = vpop.f32.mrb[0].mxu0
    %v1908 = vadd.f32 0.0, %v1907
    %v1909 = vpop.f32.mrb[0].mxu0
    %v1910 = vpop.f32.mrb[0].mxu0
    %v1911 = vadd.f32 0.0, %v1910
    %v1912 = vpop.f32.mrb[0].mxu0
    %1913 = vmatprep.mubr.bf16.mxu0 0
    %1914 = vmatmul.mubr.bf16.gmra.mrb[0].mxu0 %v1771
    %v1915 = vpop.f32.mrb[0].mxu0
    %v1916 = vadd.f32 0.0, %v1915
    %v1917 = vpop.f32.mrb[0].mxu0
    %v1918 = vpop.f32.mrb[0].mxu0
    %v1919 = vadd.f32 0.0, %v1918
    %v1920 = vpop.f32.mrb[0].mxu0
    %1921 = vmatprep.mubr.bf16.mxu0 0
    %1922 = vmatmul.mubr.bf16.gmra.mrb[0].mxu0 %v1773
    %v1923 = vpop.f32.mrb[0].mxu0
    %v1924 = vadd.f32 0.0, %v1923
    %v1925 = vpop.f32.mrb[0].mxu0
    %v1926 = vpop.f32.mrb[0].mxu0
    %v1927 = vadd.f32 0.0, %v1926
    %v1928 = vpop.f32.mrb[0].mxu0
    %1929 = vmatprep.mubr.bf16.mxu0 0
    %1930 = vmatmul.mubr.bf16.gmra.mrb[0].mxu0 %v1775
    %v1931 = vpop.f32.mrb[0].mxu0
    %v1932 = vadd.f32 0.0, %v1931
    %v1933 = vpop.f32.mrb[0].mxu0
    %v1934 = vpop.f32.mrb[0].mxu0
    %v1935 = vadd.f32 0.0, %v1934
    %v1936 = vpop.f32.mrb[0].mxu0
    %1937 = vmatprep.mubr.bf16.mxu0 0
    %1938 = vmatmul.mubr.bf16.gmra.mrb[0].mxu0 %v1777
    %v1939 = vpop.f32.mrb[0].mxu0
    %v1940 = vadd.f32 0.0, %v1939
    %v1941 = vpop.f32.mrb[0].mxu0
    %v1942 = vpop.f32.mrb[0].mxu0
    %v1943 = vadd.f32 0.0, %v1942
    %v1944 = vpop.f32.mrb[0].mxu0
    %1945 = vmatprep.mubr.bf16.mxu0 0
    %1946 = vmatmul.mubr.bf16.gmra.mrb[0].mxu0 %v1779
    %v1947 = vpop.f32.mrb[0].mxu0
    %v1948 = vadd.f32 0.0, %v1947
    %v1949 = vpop.f32.mrb[0].mxu0
    %v1950 = vpop.f32.mrb[0].mxu0
    %v1951 = vadd.f32 0.0, %v1950
    %v1952 = vpop.f32.mrb[0].mxu0
    %1953 = vmatprep.mubr.bf16.mxu0 0
    %1954 = vmatmul.mubr.bf16.gmra.mrb[0].mxu0 %v1781
    %v1955 = vpop.f32.mrb[0].mxu0
    %v1956 = vadd.f32 0.0, %v1955
    %v1957 = vpop.f32.mrb[0].mxu0
    %v1958 = vpop.f32.mrb[0].mxu0
    %v1959 = vadd.f32 0.0, %v1958
    %v1960 = vpop.f32.mrb[0].mxu0
    %1961 = vmatprep.mubr.bf16.mxu0 0
    %1962 = vmatmul.mubr.bf16.gmra.mrb[0].mxu0 %v1783
    %v1963 = vpop.f32.mrb[0].mxu0
    %v1964 = vadd.f32 0.0, %v1963
    %v1965 = vpop.f32.mrb[0].mxu0
    %v1966 = vpop.f32.mrb[0].mxu0
    %v1967 = vadd.f32 0.0, %v1966
    %v1968 = vpop.f32.mrb[0].mxu0
    %1969 = vmatprep.mubr.bf16.mxu0 0
    %1970 = vmatmul.mubr.bf16.gmra.mrb[0].mxu0 %v1785
    %v1971 = vpop.f32.mrb[0].mxu0
    %v1972 = vadd.f32 0.0, %v1971
    %v1973 = vpop.f32.mrb[0].mxu0
    %v1974 = vpop.f32.mrb[0].mxu0
    %v1975 = vadd.f32 0.0, %v1974
    %v1976 = vpop.f32.mrb[0].mxu0
    %1977 = vmatprep.mubr.bf16.mxu0 0
    %1978 = vmatmul.mubr.bf16.gmra.mrb[0].mxu0 %v1787
    %v1979 = vpop.f32.mrb[0].mxu0
    %v1980 = vadd.f32 0.0, %v1979
    %v1981 = vpop.f32.mrb[0].mxu0
    %v1982 = vpop.f32.mrb[0].mxu0
    %v1983 = vadd.f32 0.0, %v1982
    %v1984 = vpop.f32.mrb[0].mxu0
    %1985 = vdwg.mxu0
    %v1986 = vadd.f32 %v1713, %v1884
    %v1987 = vadd.f32 %v1714, %v1887
    %v1988 = vadd.f32 %v1715, %v1892
    %v1989 = vadd.f32 %v1716, %v1895
    %v1990 = vadd.f32 %v1717, %v1900
    %v1991 = vadd.f32 %v1718, %v1903
    %v1992 = vadd.f32 %v1719, %v1908
    %v1993 = vadd.f32 %v1720, %v1911
    %v1994 = vadd.f32 %v1721, %v1916
    %v1995 = vadd.f32 %v1722, %v1919
    %v1996 = vadd.f32 %v1723, %v1924
    %v1997 = vadd.f32 %v1724, %v1927
    %v1998 = vadd.f32 %v1725, %v1932
    %v1999 = vadd.f32 %v1726, %v1935
    %v2000 = vadd.f32 %v1727, %v1940
    %v2001 = vadd.f32 %v1728, %v1943
    %v2002 = vadd.f32 %v1729, %v1948
    %v2003 = vadd.f32 %v1730, %v1951
    %v2004 = vadd.f32 %v1731, %v1956
    %v2005 = vadd.f32 %v1732, %v1959
    %v2006 = vadd.f32 %v1733, %v1964
    %v2007 = vadd.f32 %v1734, %v1967
    %v2008 = vadd.f32 %v1735, %v1972
    %v2009 = vadd.f32 %v1736, %v1975
    %v2010 = vadd.f32 %v1737, %v1980
    %v2011 = vadd.f32 %v1738, %v1983
    %v2012 = vld [vmem:[#allocation2 + $0x4] sm:$0xe]
    %v2013 = vld [vmem:[#allocation2 + $0x8] sm:$0xf]
    %v2014 = vld [vmem:[#allocation2 + $0xc] sm:$0xf]
    %v2015 = vld [vmem:[#allocation2 + $0x10] sm:$0xf]
    %v2016 = vld [vmem:[#allocation2 + $0x14] sm:$0xf]
    %v2017 = vld [vmem:[#allocation2 + $0x18] sm:$0xf]
    %v2018 = vld [vmem:[#allocation2 + $0x1c] sm:$0xf]
    %v2019 = vld [vmem:[#allocation2 + $0x20] sm:$0xf]
    %v2020 = vld [vmem:[#allocation2 + $0x24] sm:$0xf]
    %v2021 = vld [vmem:[#allocation2 + $0x28] sm:$0xf]
    %v2022 = vld [vmem:[#allocation2 + $0x2c] sm:$0xf]
    %v2023 = vld [vmem:[#allocation2 + $0x30] sm:$0xf]
    %v2024 = vld [vmem:[#allocation2 + $0x34] sm:$0xf]
    %v2025 = vld [vmem:[#allocation2 + $0x38] sm:$0xf]
    %v2026 = vld [vmem:[#allocation2 + $0x3c] sm:$0xf]
    %v2027 = vld [vmem:[#allocation2 + $0x40] sm:$0xf]
    %v2028 = vld [vmem:[#allocation2 + $0x44] sm:$0xf]
    %v2029 = vld [vmem:[#allocation2 + $0x48] sm:$0xf]
    %v2030 = vld [vmem:[#allocation2 + $0x4c] sm:$0xf]
    %v2031 = vld [vmem:[#allocation2 + $0x50] sm:$0xf]
    %v2032 = vld [vmem:[#allocation2 + $0x54] sm:$0xf]
    %v2033 = vld [vmem:[#allocation2 + $0x58] sm:$0xf]
    %v2034 = vld [vmem:[#allocation2 + $0x5c] sm:$0xf]
    %v2035 = vld [vmem:[#allocation2 + $0x60] sm:$0xf]
    %v2036 = vld [vmem:[#allocation2 + $0x64] sm:$0xf]
    %v2037 = vld [vmem:[#allocation2 + $0x68] sm:$0xf]
    %v2038 = vld [vmem:[#allocation2 + $0x6c] sm:$0x1]
    %s2039 = scalar_lea.vmem [#allocation3], 192
    %v2040 = vld [vmem:[%s2039] sm:$0xf]
    %v2041 = vld [vmem:[%s2039 + $0x4] sm:$0xf]
    %v2042 = vld [vmem:[%s2039 + $0x8] sm:$0xf]
    %v2043 = vld [vmem:[%s2039 + $0xc] sm:$0xf]
    %v2044 = vld [vmem:[%s2039 + $0x10] sm:$0xf]
    %v2045 = vld [vmem:[%s2039 + $0x14] sm:$0xf]
    %v2046 = vld [vmem:[%s2039 + $0x18] sm:$0xf]
    %v2047 = vld [vmem:[%s2039 + $0x1c] sm:$0xf]
    %v2048 = vld [vmem:[%s2039 + $0x20] sm:$0xf]
    %v2049 = vld [vmem:[%s2039 + $0x24] sm:$0xf]
    %v2050 = vld [vmem:[%s2039 + $0x28] sm:$0xf]
    %v2051 = vld [vmem:[%s2039 + $0x2c] sm:$0xf]
    %v2052 = vld [vmem:[%s2039 + $0x30] sm:$0xf]
    %v2053 = vld [vmem:[%s2039 + $0x34] sm:$0xf]
    %v2054 = vld [vmem:[%s2039 + $0x38] sm:$0xf]
    %v2055 = vld [vmem:[%s2039 + $0x3c] sm:$0xf]
    %v2083 = vunpack.c.l.b16 %v2012
    %v2084 = vunpack.c.l.b16 %v2013
    %v2085 = vunpack.c.l.b16 %v2014
    %v2086 = vunpack.c.l.b16 %v2015
    %v2087 = vunpack.c.l.b16 %v2016
    %v2088 = vunpack.c.l.b16 %v2017
    %v2089 = vunpack.c.l.b16 %v2018
    %v2090 = vunpack.c.l.b16 %v2019
    %v2091 = vunpack.c.l.b16 %v2020
    %v2092 = vunpack.c.l.b16 %v2021
    %v2093 = vunpack.c.l.b16 %v2022
    %v2094 = vunpack.c.l.b16 %v2023
    %v2095 = vunpack.c.l.b16 %v2024
    %v2096 = vunpack.c.l.b16 %v2025
    %v2097 = vunpack.c.l.b16 %v2026
    %v2098 = vunpack.c.l.b16 %v2027
    %v2099 = vunpack.c.l.b16 %v2028
    %v2100 = vunpack.c.l.b16 %v2029
    %v2101 = vunpack.c.l.b16 %v2030
    %v2102 = vunpack.c.l.b16 %v2031
    %v2103 = vunpack.c.l.b16 %v2032
    %v2104 = vunpack.c.l.b16 %v2033
    %v2105 = vunpack.c.l.b16 %v2034
    %v2106 = vunpack.c.l.b16 %v2035
    %v2107 = vunpack.c.l.b16 %v2036
    %v2108 = vunpack.c.l.b16 %v2037
    %v2109 = vunpack.c.l.b16 %v2038
    %v2110 = vpack.c.b16 %v2084, %v2083
    %v2111 = vpack.c.b16 %v2086, %v2085
    %v2112 = vpack.c.b16 %v2088, %v2087
    %v2113 = vpack.c.b16 %v2090, %v2089
    %v2114 = vpack.c.b16 %v2092, %v2091
    %v2115 = vpack.c.b16 %v2094, %v2093
    %v2116 = vpack.c.b16 %v2096, %v2095
    %v2117 = vpack.c.b16 %v2098, %v2097
    %v2118 = vpack.c.b16 %v2100, %v2099
    %v2119 = vpack.c.b16 %v2102, %v2101
    %v2120 = vpack.c.b16 %v2104, %v2103
    %v2121 = vpack.c.b16 %v2106, %v2105
    %v2122 = vpack.c.b16 %v2108, %v2107
    %v2123 = vpack.c.b16 %v2109, %v2109
    %v2124 = vrot.slane %v2110, 1
    %v2125 = vrot.slane %v2111, 1
    %v2126 = vsel %vm1760, %v2124, %v2125
    %v2127 = vrot.slane %v2112, 1
    %v2128 = vsel %vm1760, %v2125, %v2127
    %v2129 = vrot.slane %v2113, 1
    %v2130 = vsel %vm1760, %v2127, %v2129
    %v2131 = vrot.slane %v2114, 1
    %v2132 = vsel %vm1760, %v2129, %v2131
    %v2133 = vrot.slane %v2115, 1
    %v2134 = vsel %vm1760, %v2131, %v2133
    %v2135 = vrot.slane %v2116, 1
    %v2136 = vsel %vm1760, %v2133, %v2135
    %v2137 = vrot.slane %v2117, 1
    %v2138 = vsel %vm1760, %v2135, %v2137
    %v2139 = vrot.slane %v2118, 1
    %v2140 = vsel %vm1760, %v2137, %v2139
    %v2141 = vrot.slane %v2119, 1
    %v2142 = vsel %vm1760, %v2139, %v2141
    %v2143 = vrot.slane %v2120, 1
    %v2144 = vsel %vm1760, %v2141, %v2143
    %v2145 = vrot.slane %v2121, 1
    %v2146 = vsel %vm1760, %v2143, %v2145
    %v2147 = vrot.slane %v2122, 1
    %v2148 = vsel %vm1760, %v2145, %v2147
    %v2149 = vrot.slane %v2123, 1
    %v2150 = vsel %vm1760, %v2147, %v2149
    %v2180 = vunpack.c.l.b16 %v2040
    %v2181 = vunpack.c.l.b16 %v2041
    %v2182 = vunpack.c.l.b16 %v2042
    %v2183 = vunpack.c.l.b16 %v2043
    %v2184 = vunpack.c.l.b16 %v2044
    %v2185 = vunpack.c.l.b16 %v2045
    %v2186 = vunpack.c.l.b16 %v2046
    %v2187 = vunpack.c.l.b16 %v2047
    %v2188 = vunpack.c.l.b16 %v2048
    %v2189 = vunpack.c.l.b16 %v2049
    %v2190 = vunpack.c.l.b16 %v2050
    %v2191 = vunpack.c.l.b16 %v2051
    %v2192 = vunpack.c.l.b16 %v2052
    %v2193 = vunpack.c.l.b16 %v2053
    %v2194 = vunpack.c.l.b16 %v2054
    %v2195 = vunpack.c.l.b16 %v2055
    %v2196 = vpack.c.b16 %v2181, %v2180
    %v2197 = vpack.c.b16 %v2183, %v2182
    %v2198 = vpack.c.b16 %v2185, %v2184
    %v2199 = vpack.c.b16 %v2187, %v2186
    %v2200 = vpack.c.b16 %v2189, %v2188
    %v2201 = vpack.c.b16 %v2191, %v2190
    %v2202 = vpack.c.b16 %v2193, %v2192
    %v2203 = vpack.c.b16 %v2195, %v2194
    %2212 = vmatprep.subr.bf16.mxu0 0
    %2213 = vmatpush1.bf16.msra.mxu0 %v2196
    %2214 = vmatprep.subr.bf16.mxu0 0
    %2215 = vmatpush1.bf16.msra.mxu0 %v2197
    %2216 = vmatprep.subr.bf16.mxu0 0
    %2217 = vmatpush1.bf16.msra.mxu0 %v2198
    %2218 = vmatprep.subr.bf16.mxu0 0
    %2219 = vmatpush1.bf16.msra.mxu0 %v2199
    %2220 = vmatprep.subr.bf16.mxu0 0
    %2221 = vmatpush1.bf16.msra.mxu0 %v2200
    %2222 = vmatprep.subr.bf16.mxu0 0
    %2223 = vmatpush1.bf16.msra.mxu0 %v2201
    %2224 = vmatprep.subr.bf16.mxu0 0
    %2225 = vmatpush1.bf16.msra.mxu0 %v2202
    %2226 = vmatprep.subr.bf16.mxu0 0
    %2227 = vmatpush1.bf16.msra.mxu0 %v2203
    %2228 = vmatprep.subr.bf16.mxu0 0
    %2229 = vmatpush1.bf16.msra.mxu0 0
    %2230 = vmatprep.subr.bf16.mxu0 0
    %2231 = vmatpush1.bf16.msra.mxu0 0
    %2232 = vmatprep.subr.bf16.mxu0 0
    %2233 = vmatpush1.bf16.msra.mxu0 0
    %2234 = vmatprep.subr.bf16.mxu0 0
    %2235 = vmatpush1.bf16.msra.mxu0 0
    %2236 = vmatprep.subr.bf16.mxu0 0
    %2237 = vmatpush1.bf16.msra.mxu0 0
    %2238 = vmatprep.subr.bf16.mxu0 0
    %2239 = vmatpush1.bf16.msra.mxu0 0
    %2240 = vmatprep.subr.bf16.mxu0 0
    %2241 = vmatpush1.bf16.msra.mxu0 0
    %2242 = vmatprep.subr.bf16.mxu0 0
    %2243 = vmatpush1.bf16.msra.mxu0 0
    %2244 = vmatprep.mubr.bf16.mxu0 0
    %2245 = vmatmul.mubr.bf16.gmra.mrb[0].mxu0 %v2126
    %v2246 = vpop.f32.mrb[0].mxu0
    %v2247 = vadd.f32 0.0, %v2246
    %v2248 = vpop.f32.mrb[0].mxu0
    %v2249 = vpop.f32.mrb[0].mxu0
    %v2250 = vadd.f32 0.0, %v2249
    %v2251 = vpop.f32.mrb[0].mxu0
    %2252 = vmatprep.mubr.bf16.mxu0 0
    %2253 = vmatmul.mubr.bf16.gmra.mrb[0].mxu0 %v2128
    %v2254 = vpop.f32.mrb[0].mxu0
    %v2255 = vadd.f32 0.0, %v2254
    %v2256 = vpop.f32.mrb[0].mxu0
    %v2257 = vpop.f32.mrb[0].mxu0
    %v2258 = vadd.f32 0.0, %v2257
    %v2259 = vpop.f32.mrb[0].mxu0
    %2260 = vmatprep.mubr.bf16.mxu0 0
    %2261 = vmatmul.mubr.bf16.gmra.mrb[0].mxu0 %v2130
    %v2262 = vpop.f32.mrb[0].mxu0
    %v2263 = vadd.f32 0.0, %v2262
    %v2264 = vpop.f32.mrb[0].mxu0
    %v2265 = vpop.f32.mrb[0].mxu0
    %v2266 = vadd.f32 0.0, %v2265
    %v2267 = vpop.f32.mrb[0].mxu0
    %2268 = vmatprep.mubr.bf16.mxu0 0
    %2269 = vmatmul.mubr.bf16.gmra.mrb[0].mxu0 %v2132
    %v2270 = vpop.f32.mrb[0].mxu0
    %v2271 = vadd.f32 0.0, %v2270
    %v2272 = vpop.f32.mrb[0].mxu0
    %v2273 = vpop.f32.mrb[0].mxu0
    %v2274 = vadd.f32 0.0, %v2273
    %v2275 = vpop.f32.mrb[0].mxu0
    %2276 = vmatprep.mubr.bf16.mxu0 0
    %2277 = vmatmul.mubr.bf16.gmra.mrb[0].mxu0 %v2134
    %v2278 = vpop.f32.mrb[0].mxu0
    %v2279 = vadd.f32 0.0, %v2278
    %v2280 = vpop.f32.mrb[0].mxu0
    %v2281 = vpop.f32.mrb[0].mxu0
    %v2282 = vadd.f32 0.0, %v2281
    %v2283 = vpop.f32.mrb[0].mxu0
    %2284 = vmatprep.mubr.bf16.mxu0 0
    %2285 = vmatmul.mubr.bf16.gmra.mrb[0].mxu0 %v2136
    %v2286 = vpop.f32.mrb[0].mxu0
    %v2287 = vadd.f32 0.0, %v2286
    %v2288 = vpop.f32.mrb[0].mxu0
    %v2289 = vpop.f32.mrb[0].mxu0
    %v2290 = vadd.f32 0.0, %v2289
    %v2291 = vpop.f32.mrb[0].mxu0
    %2292 = vmatprep.mubr.bf16.mxu0 0
    %2293 = vmatmul.mubr.bf16.gmra.mrb[0].mxu0 %v2138
    %v2294 = vpop.f32.mrb[0].mxu0
    %v2295 = vadd.f32 0.0, %v2294
    %v2296 = vpop.f32.mrb[0].mxu0
    %v2297 = vpop.f32.mrb[0].mxu0
    %v2298 = vadd.f32 0.0, %v2297
    %v2299 = vpop.f32.mrb[0].mxu0
    %2300 = vmatprep.mubr.bf16.mxu0 0
    %2301 = vmatmul.mubr.bf16.gmra.mrb[0].mxu0 %v2140
    %v2302 = vpop.f32.mrb[0].mxu0
    %v2303 = vadd.f32 0.0, %v2302
    %v2304 = vpop.f32.mrb[0].mxu0
    %v2305 = vpop.f32.mrb[0].mxu0
    %v2306 = vadd.f32 0.0, %v2305
    %v2307 = vpop.f32.mrb[0].mxu0
    %2308 = vmatprep.mubr.bf16.mxu0 0
    %2309 = vmatmul.mubr.bf16.gmra.mrb[0].mxu0 %v2142
    %v2310 = vpop.f32.mrb[0].mxu0
    %v2311 = vadd.f32 0.0, %v2310
    %v2312 = vpop.f32.mrb[0].mxu0
    %v2313 = vpop.f32.mrb[0].mxu0
    %v2314 = vadd.f32 0.0, %v2313
    %v2315 = vpop.f32.mrb[0].mxu0
    %2316 = vmatprep.mubr.bf16.mxu0 0
    %2317 = vmatmul.mubr.bf16.gmra.mrb[0].mxu0 %v2144
    %v2318 = vpop.f32.mrb[0].mxu0
    %v2319 = vadd.f32 0.0, %v2318
    %v2320 = vpop.f32.mrb[0].mxu0
    %v2321 = vpop.f32.mrb[0].mxu0
    %v2322 = vadd.f32 0.0, %v2321
    %v2323 = vpop.f32.mrb[0].mxu0
    %2324 = vmatprep.mubr.bf16.mxu0 0
    %2325 = vmatmul.mubr.bf16.gmra.mrb[0].mxu0 %v2146
    %v2326 = vpop.f32.mrb[0].mxu0
    %v2327 = vadd.f32 0.0, %v2326
    %v2328 = vpop.f32.mrb[0].mxu0
    %v2329 = vpop.f32.mrb[0].mxu0
    %v2330 = vadd.f32 0.0, %v2329
    %v2331 = vpop.f32.mrb[0].mxu0
    %2332 = vmatprep.mubr.bf16.mxu0 0
    %2333 = vmatmul.mubr.bf16.gmra.mrb[0].mxu0 %v2148
    %v2334 = vpop.f32.mrb[0].mxu0
    %v2335 = vadd.f32 0.0, %v2334
    %v2336 = vpop.f32.mrb[0].mxu0
    %v2337 = vpop.f32.mrb[0].mxu0
    %v2338 = vadd.f32 0.0, %v2337
    %v2339 = vpop.f32.mrb[0].mxu0
    %2340 = vmatprep.mubr.bf16.mxu0 0
    %2341 = vmatmul.mubr.bf16.gmra.mrb[0].mxu0 %v2150
    %v2342 = vpop.f32.mrb[0].mxu0
    %v2343 = vadd.f32 0.0, %v2342
    %v2344 = vpop.f32.mrb[0].mxu0
    %v2345 = vpop.f32.mrb[0].mxu0
    %v2346 = vadd.f32 0.0, %v2345
    %v2347 = vpop.f32.mrb[0].mxu0
    %2348 = vdwg.mxu0
    %v2349 = vadd.f32 %v1986, %v2247
    %v2350 = vadd.f32 %v1987, %v2250
    %v2351 = vadd.f32 %v1988, %v2255
    %v2352 = vadd.f32 %v1989, %v2258
    %v2353 = vadd.f32 %v1990, %v2263
    %v2354 = vadd.f32 %v1991, %v2266
    %v2355 = vadd.f32 %v1992, %v2271
    %v2356 = vadd.f32 %v1993, %v2274
    %v2357 = vadd.f32 %v1994, %v2279
    %v2358 = vadd.f32 %v1995, %v2282
    %v2359 = vadd.f32 %v1996, %v2287
    %v2360 = vadd.f32 %v1997, %v2290
    %v2361 = vadd.f32 %v1998, %v2295
    %v2362 = vadd.f32 %v1999, %v2298
    %v2363 = vadd.f32 %v2000, %v2303
    %v2364 = vadd.f32 %v2001, %v2306
    %v2365 = vadd.f32 %v2002, %v2311
    %v2366 = vadd.f32 %v2003, %v2314
    %v2367 = vadd.f32 %v2004, %v2319
    %v2368 = vadd.f32 %v2005, %v2322
    %v2369 = vadd.f32 %v2006, %v2327
    %v2370 = vadd.f32 %v2007, %v2330
    %v2371 = vadd.f32 %v2008, %v2335
    %v2372 = vadd.f32 %v2009, %v2338
    %v2373 = vadd.f32 %v2010, %v2343
    %v2374 = vadd.f32 %v2011, %v2346
    %v2375 = vld [vmem:[#allocation2 + $0x6c] sm:$0x3]
    %s2376 = scalar_lea.vmem [#allocation3], 256
    %v2377 = vld [vmem:[%s2376] sm:$0xf]
    %v2378 = vld [vmem:[%s2376 + $0x4] sm:$0xf]
    %v2379 = vld [vmem:[%s2376 + $0x8] sm:$0xf]
    %v2380 = vld [vmem:[%s2376 + $0xc] sm:$0xf]
    %v2381 = vld [vmem:[%s2376 + $0x10] sm:$0xf]
    %v2382 = vld [vmem:[%s2376 + $0x14] sm:$0xf]
    %v2383 = vld [vmem:[%s2376 + $0x18] sm:$0xf]
    %v2384 = vld [vmem:[%s2376 + $0x1c] sm:$0xf]
    %v2385 = vld [vmem:[%s2376 + $0x20] sm:$0xf]
    %v2386 = vld [vmem:[%s2376 + $0x24] sm:$0xf]
    %v2387 = vld [vmem:[%s2376 + $0x28] sm:$0xf]
    %v2388 = vld [vmem:[%s2376 + $0x2c] sm:$0xf]
    %v2389 = vld [vmem:[%s2376 + $0x30] sm:$0xf]
    %v2390 = vld [vmem:[%s2376 + $0x34] sm:$0xf]
    %v2391 = vld [vmem:[%s2376 + $0x38] sm:$0xf]
    %v2392 = vld [vmem:[%s2376 + $0x3c] sm:$0xf]
    %v2394 = vunpack.c.l.b16 %v2375
    %v2395 = vpack.c.b16 %v2394, %v2394
    %vm2396 = vsmask.f32 6400
    %v2398 = vshrl.u32 %v2110, 16
    %v2400 = vrot.slane %v2398, 1
    %v2401 = vshll.u32 %v2110, 16
    %v2403 = vrot.slane %v2401, 2
    %v2404 = vor.u32 %v2400, %v2403
    %v2406 = vshrl.u32 %v2111, 16
    %v2408 = vrot.slane %v2406, 1
    %v2409 = vshll.u32 %v2111, 16
    %v2411 = vrot.slane %v2409, 2
    %v2412 = vor.u32 %v2408, %v2411
    %v2413 = vsel %vm2396, %v2404, %v2412
    %v2415 = vshrl.u32 %v2112, 16
    %v2417 = vrot.slane %v2415, 1
    %v2418 = vshll.u32 %v2112, 16
    %v2420 = vrot.slane %v2418, 2
    %v2421 = vor.u32 %v2417, %v2420
    %v2422 = vsel %vm2396, %v2412, %v2421
    %v2424 = vshrl.u32 %v2113, 16
    %v2426 = vrot.slane %v2424, 1
    %v2427 = vshll.u32 %v2113, 16
    %v2429 = vrot.slane %v2427, 2
    %v2430 = vor.u32 %v2426, %v2429
    %v2431 = vsel %vm2396, %v2421, %v2430
    %v2433 = vshrl.u32 %v2114, 16
    %v2435 = vrot.slane %v2433, 1
    %v2436 = vshll.u32 %v2114, 16
    %v2438 = vrot.slane %v2436, 2
    %v2439 = vor.u32 %v2435, %v2438
    %v2440 = vsel %vm2396, %v2430, %v2439
    %v2442 = vshrl.u32 %v2115, 16
    %v2444 = vrot.slane %v2442, 1
    %v2445 = vshll.u32 %v2115, 16
    %v2447 = vrot.slane %v2445, 2
    %v2448 = vor.u32 %v2444, %v2447
    %v2449 = vsel %vm2396, %v2439, %v2448
    %v2451 = vshrl.u32 %v2116, 16
    %v2453 = vrot.slane %v2451, 1
    %v2454 = vshll.u32 %v2116, 16
    %v2456 = vrot.slane %v2454, 2
    %v2457 = vor.u32 %v2453, %v2456
    %v2458 = vsel %vm2396, %v2448, %v2457
    %v2460 = vshrl.u32 %v2117, 16
    %v2462 = vrot.slane %v2460, 1
    %v2463 = vshll.u32 %v2117, 16
    %v2465 = vrot.slane %v2463, 2
    %v2466 = vor.u32 %v2462, %v2465
    %v2467 = vsel %vm2396, %v2457, %v2466
    %v2469 = vshrl.u32 %v2118, 16
    %v2471 = vrot.slane %v2469, 1
    %v2472 = vshll.u32 %v2118, 16
    %v2474 = vrot.slane %v2472, 2
    %v2475 = vor.u32 %v2471, %v2474
    %v2476 = vsel %vm2396, %v2466, %v2475
    %v2478 = vshrl.u32 %v2119, 16
    %v2480 = vrot.slane %v2478, 1
    %v2481 = vshll.u32 %v2119, 16
    %v2483 = vrot.slane %v2481, 2
    %v2484 = vor.u32 %v2480, %v2483
    %v2485 = vsel %vm2396, %v2475, %v2484
    %v2487 = vshrl.u32 %v2120, 16
    %v2489 = vrot.slane %v2487, 1
    %v2490 = vshll.u32 %v2120, 16
    %v2492 = vrot.slane %v2490, 2
    %v2493 = vor.u32 %v2489, %v2492
    %v2494 = vsel %vm2396, %v2484, %v2493
    %v2496 = vshrl.u32 %v2121, 16
    %v2498 = vrot.slane %v2496, 1
    %v2499 = vshll.u32 %v2121, 16
    %v2501 = vrot.slane %v2499, 2
    %v2502 = vor.u32 %v2498, %v2501
    %v2503 = vsel %vm2396, %v2493, %v2502
    %v2505 = vshrl.u32 %v2122, 16
    %v2507 = vrot.slane %v2505, 1
    %v2508 = vshll.u32 %v2122, 16
    %v2510 = vrot.slane %v2508, 2
    %v2511 = vor.u32 %v2507, %v2510
    %v2512 = vsel %vm2396, %v2502, %v2511
    %v2514 = vshrl.u32 %v2395, 16
    %v2516 = vrot.slane %v2514, 1
    %v2517 = vshll.u32 %v2395, 16
    %v2519 = vrot.slane %v2517, 2
    %v2520 = vor.u32 %v2516, %v2519
    %v2521 = vsel %vm2396, %v2511, %v2520
    %v2551 = vunpack.c.l.b16 %v2377
    %v2552 = vunpack.c.l.b16 %v2378
    %v2553 = vunpack.c.l.b16 %v2379
    %v2554 = vunpack.c.l.b16 %v2380
    %v2555 = vunpack.c.l.b16 %v2381
    %v2556 = vunpack.c.l.b16 %v2382
    %v2557 = vunpack.c.l.b16 %v2383
    %v2558 = vunpack.c.l.b16 %v2384
    %v2559 = vunpack.c.l.b16 %v2385
    %v2560 = vunpack.c.l.b16 %v2386
    %v2561 = vunpack.c.l.b16 %v2387
    %v2562 = vunpack.c.l.b16 %v2388
    %v2563 = vunpack.c.l.b16 %v2389
    %v2564 = vunpack.c.l.b16 %v2390
    %v2565 = vunpack.c.l.b16 %v2391
    %v2566 = vunpack.c.l.b16 %v2392
    %v2567 = vpack.c.b16 %v2552, %v2551
    %v2568 = vpack.c.b16 %v2554, %v2553
    %v2569 = vpack.c.b16 %v2556, %v2555
    %v2570 = vpack.c.b16 %v2558, %v2557
    %v2571 = vpack.c.b16 %v2560, %v2559
    %v2572 = vpack.c.b16 %v2562, %v2561
    %v2573 = vpack.c.b16 %v2564, %v2563
    %v2574 = vpack.c.b16 %v2566, %v2565
    %2583 = vmatprep.subr.bf16.mxu0 0
    %2584 = vmatpush1.bf16.msra.mxu0 %v2567
    %2585 = vmatprep.subr.bf16.mxu0 0
    %2586 = vmatpush1.bf16.msra.mxu0 %v2568
    %2587 = vmatprep.subr.bf16.mxu0 0
    %2588 = vmatpush1.bf16.msra.mxu0 %v2569
    %2589 = vmatprep.subr.bf16.mxu0 0
    %2590 = vmatpush1.bf16.msra.mxu0 %v2570
    %2591 = vmatprep.subr.bf16.mxu0 0
    %2592 = vmatpush1.bf16.msra.mxu0 %v2571
    %2593 = vmatprep.subr.bf16.mxu0 0
    %2594 = vmatpush1.bf16.msra.mxu0 %v2572
    %2595 = vmatprep.subr.bf16.mxu0 0
    %2596 = vmatpush1.bf16.msra.mxu0 %v2573
    %2597 = vmatprep.subr.bf16.mxu0 0
    %2598 = vmatpush1.bf16.msra.mxu0 %v2574
    %2599 = vmatprep.subr.bf16.mxu0 0
    %2600 = vmatpush1.bf16.msra.mxu0 0
    %2601 = vmatprep.subr.bf16.mxu0 0
    %2602 = vmatpush1.bf16.msra.mxu0 0
    %2603 = vmatprep.subr.bf16.mxu0 0
    %2604 = vmatpush1.bf16.msra.mxu0 0
    %2605 = vmatprep.subr.bf16.mxu0 0
    %2606 = vmatpush1.bf16.msra.mxu0 0
    %2607 = vmatprep.subr.bf16.mxu0 0
    %2608 = vmatpush1.bf16.msra.mxu0 0
    %2609 = vmatprep.subr.bf16.mxu0 0
    %2610 = vmatpush1.bf16.msra.mxu0 0
    %2611 = vmatprep.subr.bf16.mxu0 0
    %2612 = vmatpush1.bf16.msra.mxu0 0
    %2613 = vmatprep.subr.bf16.mxu0 0
    %2614 = vmatpush1.bf16.msra.mxu0 0
    %2615 = vmatprep.mubr.bf16.mxu0 0
    %2616 = vmatmul.mubr.bf16.gmra.mrb[0].mxu0 %v2413
    %v2617 = vpop.f32.mrb[0].mxu0
    %v2618 = vadd.f32 0.0, %v2617
    %v2619 = vpop.f32.mrb[0].mxu0
    %v2620 = vpop.f32.mrb[0].mxu0
    %v2621 = vadd.f32 0.0, %v2620
    %v2622 = vpop.f32.mrb[0].mxu0
    %2623 = vmatprep.mubr.bf16.mxu0 0
    %2624 = vmatmul.mubr.bf16.gmra.mrb[0].mxu0 %v2422
    %v2625 = vpop.f32.mrb[0].mxu0
    %v2626 = vadd.f32 0.0, %v2625
    %v2627 = vpop.f32.mrb[0].mxu0
    %v2628 = vpop.f32.mrb[0].mxu0
    %v2629 = vadd.f32 0.0, %v2628
    %v2630 = vpop.f32.mrb[0].mxu0
    %2631 = vmatprep.mubr.bf16.mxu0 0
    %2632 = vmatmul.mubr.bf16.gmra.mrb[0].mxu0 %v2431
    %v2633 = vpop.f32.mrb[0].mxu0
    %v2634 = vadd.f32 0.0, %v2633
    %v2635 = vpop.f32.mrb[0].mxu0
    %v2636 = vpop.f32.mrb[0].mxu0
    %v2637 = vadd.f32 0.0, %v2636
    %v2638 = vpop.f32.mrb[0].mxu0
    %2639 = vmatprep.mubr.bf16.mxu0 0
    %2640 = vmatmul.mubr.bf16.gmra.mrb[0].mxu0 %v2440
    %v2641 = vpop.f32.mrb[0].mxu0
    %v2642 = vadd.f32 0.0, %v2641
    %v2643 = vpop.f32.mrb[0].mxu0
    %v2644 = vpop.f32.mrb[0].mxu0
    %v2645 = vadd.f32 0.0, %v2644
    %v2646 = vpop.f32.mrb[0].mxu0
    %2647 = vmatprep.mubr.bf16.mxu0 0
    %2648 = vmatmul.mubr.bf16.gmra.mrb[0].mxu0 %v2449
    %v2649 = vpop.f32.mrb[0].mxu0
    %v2650 = vadd.f32 0.0, %v2649
    %v2651 = vpop.f32.mrb[0].mxu0
    %v2652 = vpop.f32.mrb[0].mxu0
    %v2653 = vadd.f32 0.0, %v2652
    %v2654 = vpop.f32.mrb[0].mxu0
    %2655 = vmatprep.mubr.bf16.mxu0 0
    %2656 = vmatmul.mubr.bf16.gmra.mrb[0].mxu0 %v2458
    %v2657 = vpop.f32.mrb[0].mxu0
    %v2658 = vadd.f32 0.0, %v2657
    %v2659 = vpop.f32.mrb[0].mxu0
    %v2660 = vpop.f32.mrb[0].mxu0
    %v2661 = vadd.f32 0.0, %v2660
    %v2662 = vpop.f32.mrb[0].mxu0
    %2663 = vmatprep.mubr.bf16.mxu0 0
    %2664 = vmatmul.mubr.bf16.gmra.mrb[0].mxu0 %v2467
    %v2665 = vpop.f32.mrb[0].mxu0
    %v2666 = vadd.f32 0.0, %v2665
    %v2667 = vpop.f32.mrb[0].mxu0
    %v2668 = vpop.f32.mrb[0].mxu0
    %v2669 = vadd.f32 0.0, %v2668
    %v2670 = vpop.f32.mrb[0].mxu0
    %2671 = vmatprep.mubr.bf16.mxu0 0
    %2672 = vmatmul.mubr.bf16.gmra.mrb[0].mxu0 %v2476
    %v2673 = vpop.f32.mrb[0].mxu0
    %v2674 = vadd.f32 0.0, %v2673
    %v2675 = vpop.f32.mrb[0].mxu0
    %v2676 = vpop.f32.mrb[0].mxu0
    %v2677 = vadd.f32 0.0, %v2676
    %v2678 = vpop.f32.mrb[0].mxu0
    %2679 = vmatprep.mubr.bf16.mxu0 0
    %2680 = vmatmul.mubr.bf16.gmra.mrb[0].mxu0 %v2485
    %v2681 = vpop.f32.mrb[0].mxu0
    %v2682 = vadd.f32 0.0, %v2681
    %v2683 = vpop.f32.mrb[0].mxu0
    %v2684 = vpop.f32.mrb[0].mxu0
    %v2685 = vadd.f32 0.0, %v2684
    %v2686 = vpop.f32.mrb[0].mxu0
    %2687 = vmatprep.mubr.bf16.mxu0 0
    %2688 = vmatmul.mubr.bf16.gmra.mrb[0].mxu0 %v2494
    %v2689 = vpop.f32.mrb[0].mxu0
    %v2690 = vadd.f32 0.0, %v2689
    %v2691 = vpop.f32.mrb[0].mxu0
    %v2692 = vpop.f32.mrb[0].mxu0
    %v2693 = vadd.f32 0.0, %v2692
    %v2694 = vpop.f32.mrb[0].mxu0
    %2695 = vmatprep.mubr.bf16.mxu0 0
    %2696 = vmatmul.mubr.bf16.gmra.mrb[0].mxu0 %v2503
    %v2697 = vpop.f32.mrb[0].mxu0
    %v2698 = vadd.f32 0.0, %v2697
    %v2699 = vpop.f32.mrb[0].mxu0
    %v2700 = vpop.f32.mrb[0].mxu0
    %v2701 = vadd.f32 0.0, %v2700
    %v2702 = vpop.f32.mrb[0].mxu0
    %2703 = vmatprep.mubr.bf16.mxu0 0
    %2704 = vmatmul.mubr.bf16.gmra.mrb[0].mxu0 %v2512
    %v2705 = vpop.f32.mrb[0].mxu0
    %v2706 = vadd.f32 0.0, %v2705
    %v2707 = vpop.f32.mrb[0].mxu0
    %v2708 = vpop.f32.mrb[0].mxu0
    %v2709 = vadd.f32 0.0, %v2708
    %v2710 = vpop.f32.mrb[0].mxu0
    %2711 = vmatprep.mubr.bf16.mxu0 0
    %2712 = vmatmul.mubr.bf16.gmra.mrb[0].mxu0 %v2521
    %v2713 = vpop.f32.mrb[0].mxu0
    %v2714 = vadd.f32 0.0, %v2713
    %v2715 = vpop.f32.mrb[0].mxu0
    %v2716 = vpop.f32.mrb[0].mxu0
    %v2717 = vadd.f32 0.0, %v2716
    %v2718 = vpop.f32.mrb[0].mxu0
    %2719 = vdwg.mxu0
    %v2720 = vadd.f32 %v2349, %v2618
    %v2721 = vadd.f32 %v2350, %v2621
    %v2722 = vadd.f32 %v2351, %v2626
    %v2723 = vadd.f32 %v2352, %v2629
    %v2724 = vadd.f32 %v2353, %v2634
    %v2725 = vadd.f32 %v2354, %v2637
    %v2726 = vadd.f32 %v2355, %v2642
    %v2727 = vadd.f32 %v2356, %v2645
    %v2728 = vadd.f32 %v2357, %v2650
    %v2729 = vadd.f32 %v2358, %v2653
    %v2730 = vadd.f32 %v2359, %v2658
    %v2731 = vadd.f32 %v2360, %v2661
    %v2732 = vadd.f32 %v2361, %v2666
    %v2733 = vadd.f32 %v2362, %v2669
    %v2734 = vadd.f32 %v2363, %v2674
    %v2735 = vadd.f32 %v2364, %v2677
    %v2736 = vadd.f32 %v2365, %v2682
    %v2737 = vadd.f32 %v2366, %v2685
    %v2738 = vadd.f32 %v2367, %v2690
    %v2739 = vadd.f32 %v2368, %v2693
    %v2740 = vadd.f32 %v2369, %v2698
    %v2741 = vadd.f32 %v2370, %v2701
    %v2742 = vadd.f32 %v2371, %v2706
    %v2743 = vadd.f32 %v2372, %v2709
    %v2744 = vadd.f32 %v2373, %v2714
    %v2745 = vadd.f32 %v2374, %v2717
    %v2746 = vld [vmem:[#allocation2 + $0x4] sm:$0xc]
    %s2747 = scalar_lea.vmem [#allocation3], 320
    %v2748 = vld [vmem:[%s2747] sm:$0xf]
    %v2749 = vld [vmem:[%s2747 + $0x4] sm:$0xf]
    %v2750 = vld [vmem:[%s2747 + $0x8] sm:$0xf]
    %v2751 = vld [vmem:[%s2747 + $0xc] sm:$0xf]
    %v2752 = vld [vmem:[%s2747 + $0x10] sm:$0xf]
    %v2753 = vld [vmem:[%s2747 + $0x14] sm:$0xf]
    %v2754 = vld [vmem:[%s2747 + $0x18] sm:$0xf]
    %v2755 = vld [vmem:[%s2747 + $0x1c] sm:$0xf]
    %v2756 = vld [vmem:[%s2747 + $0x20] sm:$0xf]
    %v2757 = vld [vmem:[%s2747 + $0x24] sm:$0xf]
    %v2758 = vld [vmem:[%s2747 + $0x28] sm:$0xf]
    %v2759 = vld [vmem:[%s2747 + $0x2c] sm:$0xf]
    %v2760 = vld [vmem:[%s2747 + $0x30] sm:$0xf]
    %v2761 = vld [vmem:[%s2747 + $0x34] sm:$0xf]
    %v2762 = vld [vmem:[%s2747 + $0x38] sm:$0xf]
    %v2763 = vld [vmem:[%s2747 + $0x3c] sm:$0xf]
    %v2765 = vunpack.c.l.b16 %v2746
    %v2766 = vpack.c.b16 %v2084, %v2765
    %vm2767 = vcmask 1045504
    %v2768 = vrot.slane %v2766, 2
    %v2769 = vrot.slane %v2111, 2
    %v2770 = vsel %vm2767, %v2768, %v2769
    %v2771 = vrot.slane %v2112, 2
    %v2772 = vsel %vm2767, %v2769, %v2771
    %v2773 = vrot.slane %v2113, 2
    %v2774 = vsel %vm2767, %v2771, %v2773
    %v2775 = vrot.slane %v2114, 2
    %v2776 = vsel %vm2767, %v2773, %v2775
    %v2777 = vrot.slane %v2115, 2
    %v2778 = vsel %vm2767, %v2775, %v2777
    %v2779 = vrot.slane %v2116, 2
    %v2780 = vsel %vm2767, %v2777, %v2779
    %v2781 = vrot.slane %v2117, 2
    %v2782 = vsel %vm2767, %v2779, %v2781
    %v2783 = vrot.slane %v2118, 2
    %v2784 = vsel %vm2767, %v2781, %v2783
    %v2785 = vrot.slane %v2119, 2
    %v2786 = vsel %vm2767, %v2783, %v2785
    %v2787 = vrot.slane %v2120, 2
    %v2788 = vsel %vm2767, %v2785, %v2787
    %v2789 = vrot.slane %v2121, 2
    %v2790 = vsel %vm2767, %v2787, %v2789
    %v2791 = vrot.slane %v2122, 2
    %v2792 = vsel %vm2767, %v2789, %v2791
    %v2793 = vrot.slane %v2395, 2
    %v2794 = vsel %vm2767, %v2791, %v2793
    %v2824 = vunpack.c.l.b16 %v2748
    %v2825 = vunpack.c.l.b16 %v2749
    %v2826 = vunpack.c.l.b16 %v2750
    %v2827 = vunpack.c.l.b16 %v2751
    %v2828 = vunpack.c.l.b16 %v2752
    %v2829 = vunpack.c.l.b16 %v2753
    %v2830 = vunpack.c.l.b16 %v2754
    %v2831 = vunpack.c.l.b16 %v2755
    %v2832 = vunpack.c.l.b16 %v2756
    %v2833 = vunpack.c.l.b16 %v2757
    %v2834 = vunpack.c.l.b16 %v2758
    %v2835 = vunpack.c.l.b16 %v2759
    %v2836 = vunpack.c.l.b16 %v2760
    %v2837 = vunpack.c.l.b16 %v2761
    %v2838 = vunpack.c.l.b16 %v2762
    %v2839 = vunpack.c.l.b16 %v2763
    %v2840 = vpack.c.b16 %v2825, %v2824
    %v2841 = vpack.c.b16 %v2827, %v2826
    %v2842 = vpack.c.b16 %v2829, %v2828
    %v2843 = vpack.c.b16 %v2831, %v2830
    %v2844 = vpack.c.b16 %v2833, %v2832
    %v2845 = vpack.c.b16 %v2835, %v2834
    %v2846 = vpack.c.b16 %v2837, %v2836
    %v2847 = vpack.c.b16 %v2839, %v2838
    %2856 = vmatprep.subr.bf16.mxu0 0
    %2857 = vmatpush1.bf16.msra.mxu0 %v2840
    %2858 = vmatprep.subr.bf16.mxu0 0
    %2859 = vmatpush1.bf16.msra.mxu0 %v2841
    %2860 = vmatprep.subr.bf16.mxu0 0
    %2861 = vmatpush1.bf16.msra.mxu0 %v2842
    %2862 = vmatprep.subr.bf16.mxu0 0
    %2863 = vmatpush1.bf16.msra.mxu0 %v2843
    %2864 = vmatprep.subr.bf16.mxu0 0
    %2865 = vmatpush1.bf16.msra.mxu0 %v2844
    %2866 = vmatprep.subr.bf16.mxu0 0
    %2867 = vmatpush1.bf16.msra.mxu0 %v2845
    %2868 = vmatprep.subr.bf16.mxu0 0
    %2869 = vmatpush1.bf16.msra.mxu0 %v2846
    %2870 = vmatprep.subr.bf16.mxu0 0
    %2871 = vmatpush1.bf16.msra.mxu0 %v2847
    %2872 = vmatprep.subr.bf16.mxu0 0
    %2873 = vmatpush1.bf16.msra.mxu0 0
    %2874 = vmatprep.subr.bf16.mxu0 0
    %2875 = vmatpush1.bf16.msra.mxu0 0
    %2876 = vmatprep.subr.bf16.mxu0 0
    %2877 = vmatpush1.bf16.msra.mxu0 0
    %2878 = vmatprep.subr.bf16.mxu0 0
    %2879 = vmatpush1.bf16.msra.mxu0 0
    %2880 = vmatprep.subr.bf16.mxu0 0
    %2881 = vmatpush1.bf16.msra.mxu0 0
    %2882 = vmatprep.subr.bf16.mxu0 0
    %2883 = vmatpush1.bf16.msra.mxu0 0
    %2884 = vmatprep.subr.bf16.mxu0 0
    %2885 = vmatpush1.bf16.msra.mxu0 0
    %2886 = vmatprep.subr.bf16.mxu0 0
    %2887 = vmatpush1.bf16.msra.mxu0 0
    %2888 = vmatprep.mubr.bf16.mxu0 0
    %2889 = vmatmul.mubr.bf16.gmra.mrb[0].mxu0 %v2770
    %v2890 = vpop.f32.mrb[0].mxu0
    %v2891 = vadd.f32 0.0, %v2890
    %v2892 = vpop.f32.mrb[0].mxu0
    %v2893 = vpop.f32.mrb[0].mxu0
    %v2894 = vadd.f32 0.0, %v2893
    %v2895 = vpop.f32.mrb[0].mxu0
    %2896 = vmatprep.mubr.bf16.mxu0 0
    %2897 = vmatmul.mubr.bf16.gmra.mrb[0].mxu0 %v2772
    %v2898 = vpop.f32.mrb[0].mxu0
    %v2899 = vadd.f32 0.0, %v2898
    %v2900 = vpop.f32.mrb[0].mxu0
    %v2901 = vpop.f32.mrb[0].mxu0
    %v2902 = vadd.f32 0.0, %v2901
    %v2903 = vpop.f32.mrb[0].mxu0
    %2904 = vmatprep.mubr.bf16.mxu0 0
    %2905 = vmatmul.mubr.bf16.gmra.mrb[0].mxu0 %v2774
    %v2906 = vpop.f32.mrb[0].mxu0
    %v2907 = vadd.f32 0.0, %v2906
    %v2908 = vpop.f32.mrb[0].mxu0
    %v2909 = vpop.f32.mrb[0].mxu0
    %v2910 = vadd.f32 0.0, %v2909
    %v2911 = vpop.f32.mrb[0].mxu0
    %2912 = vmatprep.mubr.bf16.mxu0 0
    %2913 = vmatmul.mubr.bf16.gmra.mrb[0].mxu0 %v2776
    %v2914 = vpop.f32.mrb[0].mxu0
    %v2915 = vadd.f32 0.0, %v2914
    %v2916 = vpop.f32.mrb[0].mxu0
    %v2917 = vpop.f32.mrb[0].mxu0
    %v2918 = vadd.f32 0.0, %v2917
    %v2919 = vpop.f32.mrb[0].mxu0
    %2920 = vmatprep.mubr.bf16.mxu0 0
    %2921 = vmatmul.mubr.bf16.gmra.mrb[0].mxu0 %v2778
    %v2922 = vpop.f32.mrb[0].mxu0
    %v2923 = vadd.f32 0.0, %v2922
    %v2924 = vpop.f32.mrb[0].mxu0
    %v2925 = vpop.f32.mrb[0].mxu0
    %v2926 = vadd.f32 0.0, %v2925
    %v2927 = vpop.f32.mrb[0].mxu0
    %2928 = vmatprep.mubr.bf16.mxu0 0
    %2929 = vmatmul.mubr.bf16.gmra.mrb[0].mxu0 %v2780
    %v2930 = vpop.f32.mrb[0].mxu0
    %v2931 = vadd.f32 0.0, %v2930
    %v2932 = vpop.f32.mrb[0].mxu0
    %v2933 = vpop.f32.mrb[0].mxu0
    %v2934 = vadd.f32 0.0, %v2933
    %v2935 = vpop.f32.mrb[0].mxu0
    %2936 = vmatprep.mubr.bf16.mxu0 0
    %2937 = vmatmul.mubr.bf16.gmra.mrb[0].mxu0 %v2782
    %v2938 = vpop.f32.mrb[0].mxu0
    %v2939 = vadd.f32 0.0, %v2938
    %v2940 = vpop.f32.mrb[0].mxu0
    %v2941 = vpop.f32.mrb[0].mxu0
    %v2942 = vadd.f32 0.0, %v2941
    %v2943 = vpop.f32.mrb[0].mxu0
    %2944 = vmatprep.mubr.bf16.mxu0 0
    %2945 = vmatmul.mubr.bf16.gmra.mrb[0].mxu0 %v2784
    %v2946 = vpop.f32.mrb[0].mxu0
    %v2947 = vadd.f32 0.0, %v2946
    %v2948 = vpop.f32.mrb[0].mxu0
    %v2949 = vpop.f32.mrb[0].mxu0
    %v2950 = vadd.f32 0.0, %v2949
    %v2951 = vpop.f32.mrb[0].mxu0
    %2952 = vmatprep.mubr.bf16.mxu0 0
    %2953 = vmatmul.mubr.bf16.gmra.mrb[0].mxu0 %v2786
    %v2954 = vpop.f32.mrb[0].mxu0
    %v2955 = vadd.f32 0.0, %v2954
    %v2956 = vpop.f32.mrb[0].mxu0
    %v2957 = vpop.f32.mrb[0].mxu0
    %v2958 = vadd.f32 0.0, %v2957
    %v2959 = vpop.f32.mrb[0].mxu0
    %2960 = vmatprep.mubr.bf16.mxu0 0
    %2961 = vmatmul.mubr.bf16.gmra.mrb[0].mxu0 %v2788
    %v2962 = vpop.f32.mrb[0].mxu0
    %v2963 = vadd.f32 0.0, %v2962
    %v2964 = vpop.f32.mrb[0].mxu0
    %v2965 = vpop.f32.mrb[0].mxu0
    %v2966 = vadd.f32 0.0, %v2965
    %v2967 = vpop.f32.mrb[0].mxu0
    %2968 = vmatprep.mubr.bf16.mxu0 0
    %2969 = vmatmul.mubr.bf16.gmra.mrb[0].mxu0 %v2790
    %v2970 = vpop.f32.mrb[0].mxu0
    %v2971 = vadd.f32 0.0, %v2970
    %v2972 = vpop.f32.mrb[0].mxu0
    %v2973 = vpop.f32.mrb[0].mxu0
    %v2974 = vadd.f32 0.0, %v2973
    %v2975 = vpop.f32.mrb[0].mxu0
    %2976 = vmatprep.mubr.bf16.mxu0 0
    %2977 = vmatmul.mubr.bf16.gmra.mrb[0].mxu0 %v2792
    %v2978 = vpop.f32.mrb[0].mxu0
    %v2979 = vadd.f32 0.0, %v2978
    %v2980 = vpop.f32.mrb[0].mxu0
    %v2981 = vpop.f32.mrb[0].mxu0
    %v2982 = vadd.f32 0.0, %v2981
    %v2983 = vpop.f32.mrb[0].mxu0
    %2984 = vmatprep.mubr.bf16.mxu0 0
    %2985 = vmatmul.mubr.bf16.gmra.mrb[0].mxu0 %v2794
    %v2986 = vpop.f32.mrb[0].mxu0
    %v2987 = vadd.f32 0.0, %v2986
    %v2988 = vpop.f32.mrb[0].mxu0
    %v2989 = vpop.f32.mrb[0].mxu0
    %v2990 = vadd.f32 0.0, %v2989
    %v2991 = vpop.f32.mrb[0].mxu0
    %2992 = vdwg.mxu0
    %v2993 = vadd.f32 %v2720, %v2891
    %v2994 = vadd.f32 %v2721, %v2894
    %v2995 = vadd.f32 %v2722, %v2899
    %v2996 = vadd.f32 %v2723, %v2902
    %v2997 = vadd.f32 %v2724, %v2907
    %v2998 = vadd.f32 %v2725, %v2910
    %v2999 = vadd.f32 %v2726, %v2915
    %v3000 = vadd.f32 %v2727, %v2918
    %v3001 = vadd.f32 %v2728, %v2923
    %v3002 = vadd.f32 %v2729, %v2926
    %v3003 = vadd.f32 %v2730, %v2931
    %v3004 = vadd.f32 %v2731, %v2934
    %v3005 = vadd.f32 %v2732, %v2939
    %v3006 = vadd.f32 %v2733, %v2942
    %v3007 = vadd.f32 %v2734, %v2947
    %v3008 = vadd.f32 %v2735, %v2950
    %v3009 = vadd.f32 %v2736, %v2955
    %v3010 = vadd.f32 %v2737, %v2958
    %v3011 = vadd.f32 %v2738, %v2963
    %v3012 = vadd.f32 %v2739, %v2966
    %v3013 = vadd.f32 %v2740, %v2971
    %v3014 = vadd.f32 %v2741, %v2974
    %v3015 = vadd.f32 %v2742, %v2979
    %v3016 = vadd.f32 %v2743, %v2982
    %v3017 = vadd.f32 %v2744, %v2987
    %v3018 = vadd.f32 %v2745, %v2990
    %v3019 = vld [vmem:[#allocation2 + $0x8] sm:$0xc]
    %v3020 = vld [vmem:[#allocation2 + $0xc] sm:$0xf]
    %v3021 = vld [vmem:[#allocation2 + $0x10] sm:$0xf]
    %v3022 = vld [vmem:[#allocation2 + $0x14] sm:$0xf]
    %v3023 = vld [vmem:[#allocation2 + $0x18] sm:$0xf]
    %v3024 = vld [vmem:[#allocation2 + $0x1c] sm:$0xf]
    %v3025 = vld [vmem:[#allocation2 + $0x20] sm:$0xf]
    %v3026 = vld [vmem:[#allocation2 + $0x24] sm:$0xf]
    %v3027 = vld [vmem:[#allocation2 + $0x28] sm:$0xf]
    %v3028 = vld [vmem:[#allocation2 + $0x2c] sm:$0xf]
    %v3029 = vld [vmem:[#allocation2 + $0x30] sm:$0xf]
    %v3030 = vld [vmem:[#allocation2 + $0x34] sm:$0xf]
    %v3031 = vld [vmem:[#allocation2 + $0x38] sm:$0xf]
    %v3032 = vld [vmem:[#allocation2 + $0x3c] sm:$0xf]
    %v3033 = vld [vmem:[#allocation2 + $0x40] sm:$0xf]
    %v3034 = vld [vmem:[#allocation2 + $0x44] sm:$0xf]
    %v3035 = vld [vmem:[#allocation2 + $0x48] sm:$0xf]
    %v3036 = vld [vmem:[#allocation2 + $0x4c] sm:$0xf]
    %v3037 = vld [vmem:[#allocation2 + $0x50] sm:$0xf]
    %v3038 = vld [vmem:[#allocation2 + $0x54] sm:$0xf]
    %v3039 = vld [vmem:[#allocation2 + $0x58] sm:$0xf]
    %v3040 = vld [vmem:[#allocation2 + $0x5c] sm:$0xf]
    %v3041 = vld [vmem:[#allocation2 + $0x60] sm:$0xf]
    %v3042 = vld [vmem:[#allocation2 + $0x64] sm:$0xf]
    %v3043 = vld [vmem:[#allocation2 + $0x68] sm:$0xf]
    %v3044 = vld [vmem:[#allocation2 + $0x6c] sm:$0xf]
    %v3045 = vld [vmem:[#allocation2 + $0x70] sm:$0x3]
    %s3046 = scalar_lea.vmem [#allocation3], 384
    %v3047 = vld [vmem:[%s3046] sm:$0xf]
    %v3048 = vld [vmem:[%s3046 + $0x4] sm:$0xf]
    %v3049 = vld [vmem:[%s3046 + $0x8] sm:$0xf]
    %v3050 = vld [vmem:[%s3046 + $0xc] sm:$0xf]
    %v3051 = vld [vmem:[%s3046 + $0x10] sm:$0xf]
    %v3052 = vld [vmem:[%s3046 + $0x14] sm:$0xf]
    %v3053 = vld [vmem:[%s3046 + $0x18] sm:$0xf]
    %v3054 = vld [vmem:[%s3046 + $0x1c] sm:$0xf]
    %v3055 = vld [vmem:[%s3046 + $0x20] sm:$0xf]
    %v3056 = vld [vmem:[%s3046 + $0x24] sm:$0xf]
    %v3057 = vld [vmem:[%s3046 + $0x28] sm:$0xf]
    %v3058 = vld [vmem:[%s3046 + $0x2c] sm:$0xf]
    %v3059 = vld [vmem:[%s3046 + $0x30] sm:$0xf]
    %v3060 = vld [vmem:[%s3046 + $0x34] sm:$0xf]
    %v3061 = vld [vmem:[%s3046 + $0x38] sm:$0xf]
    %v3062 = vld [vmem:[%s3046 + $0x3c] sm:$0xf]
    %v3090 = vunpack.c.l.b16 %v3019
    %v3091 = vunpack.c.l.b16 %v3020
    %v3092 = vunpack.c.l.b16 %v3021
    %v3093 = vunpack.c.l.b16 %v3022
    %v3094 = vunpack.c.l.b16 %v3023
    %v3095 = vunpack.c.l.b16 %v3024
    %v3096 = vunpack.c.l.b16 %v3025
    %v3097 = vunpack.c.l.b16 %v3026
    %v3098 = vunpack.c.l.b16 %v3027
    %v3099 = vunpack.c.l.b16 %v3028
    %v3100 = vunpack.c.l.b16 %v3029
    %v3101 = vunpack.c.l.b16 %v3030
    %v3102 = vunpack.c.l.b16 %v3031
    %v3103 = vunpack.c.l.b16 %v3032
    %v3104 = vunpack.c.l.b16 %v3033
    %v3105 = vunpack.c.l.b16 %v3034
    %v3106 = vunpack.c.l.b16 %v3035
    %v3107 = vunpack.c.l.b16 %v3036
    %v3108 = vunpack.c.l.b16 %v3037
    %v3109 = vunpack.c.l.b16 %v3038
    %v3110 = vunpack.c.l.b16 %v3039
    %v3111 = vunpack.c.l.b16 %v3040
    %v3112 = vunpack.c.l.b16 %v3041
    %v3113 = vunpack.c.l.b16 %v3042
    %v3114 = vunpack.c.l.b16 %v3043
    %v3115 = vunpack.c.l.b16 %v3044
    %v3116 = vunpack.c.l.b16 %v3045
    %v3117 = vpack.c.b16 %v3091, %v3090
    %v3118 = vpack.c.b16 %v3093, %v3092
    %v3119 = vpack.c.b16 %v3095, %v3094
    %v3120 = vpack.c.b16 %v3097, %v3096
    %v3121 = vpack.c.b16 %v3099, %v3098
    %v3122 = vpack.c.b16 %v3101, %v3100
    %v3123 = vpack.c.b16 %v3103, %v3102
    %v3124 = vpack.c.b16 %v3105, %v3104
    %v3125 = vpack.c.b16 %v3107, %v3106
    %v3126 = vpack.c.b16 %v3109, %v3108
    %v3127 = vpack.c.b16 %v3111, %v3110
    %v3128 = vpack.c.b16 %v3113, %v3112
    %v3129 = vpack.c.b16 %v3115, %v3114
    %v3130 = vpack.c.b16 %v3116, %v3116
    %v3131 = vrot.slane %v3117, 2
    %v3132 = vrot.slane %v3118, 2
    %v3133 = vsel %vm2767, %v3131, %v3132
    %v3134 = vrot.slane %v3119, 2
    %v3135 = vsel %vm2767, %v3132, %v3134
    %v3136 = vrot.slane %v3120, 2
    %v3137 = vsel %vm2767, %v3134, %v3136
    %v3138 = vrot.slane %v3121, 2
    %v3139 = vsel %vm2767, %v3136, %v3138
    %v3140 = vrot.slane %v3122, 2
    %v3141 = vsel %vm2767, %v3138, %v3140
    %v3142 = vrot.slane %v3123, 2
    %v3143 = vsel %vm2767, %v3140, %v3142
    %v3144 = vrot.slane %v3124, 2
    %v3145 = vsel %vm2767, %v3142, %v3144
    %v3146 = vrot.slane %v3125, 2
    %v3147 = vsel %vm2767, %v3144, %v3146
    %v3148 = vrot.slane %v3126, 2
    %v3149 = vsel %vm2767, %v3146, %v3148
    %v3150 = vrot.slane %v3127, 2
    %v3151 = vsel %vm2767, %v3148, %v3150
    %v3152 = vrot.slane %v3128, 2
    %v3153 = vsel %vm2767, %v3150, %v3152
    %v3154 = vrot.slane %v3129, 2
    %v3155 = vsel %vm2767, %v3152, %v3154
    %v3156 = vrot.slane %v3130, 2
    %v3157 = vsel %vm2767, %v3154, %v3156
    %v3187 = vunpack.c.l.b16 %v3047
    %v3188 = vunpack.c.l.b16 %v3048
    %v3189 = vunpack.c.l.b16 %v3049
    %v3190 = vunpack.c.l.b16 %v3050
    %v3191 = vunpack.c.l.b16 %v3051
    %v3192 = vunpack.c.l.b16 %v3052
    %v3193 = vunpack.c.l.b16 %v3053
    %v3194 = vunpack.c.l.b16 %v3054
    %v3195 = vunpack.c.l.b16 %v3055
    %v3196 = vunpack.c.l.b16 %v3056
    %v3197 = vunpack.c.l.b16 %v3057
    %v3198 = vunpack.c.l.b16 %v3058
    %v3199 = vunpack.c.l.b16 %v3059
    %v3200 = vunpack.c.l.b16 %v3060
    %v3201 = vunpack.c.l.b16 %v3061
    %v3202 = vunpack.c.l.b16 %v3062
    %v3203 = vpack.c.b16 %v3188, %v3187
    %v3204 = vpack.c.b16 %v3190, %v3189
    %v3205 = vpack.c.b16 %v3192, %v3191
    %v3206 = vpack.c.b16 %v3194, %v3193
    %v3207 = vpack.c.b16 %v3196, %v3195
    %v3208 = vpack.c.b16 %v3198, %v3197
    %v3209 = vpack.c.b16 %v3200, %v3199
    %v3210 = vpack.c.b16 %v3202, %v3201
    %3219 = vmatprep.subr.bf16.mxu0 0
    %3220 = vmatpush1.bf16.msra.mxu0 %v3203
    %3221 = vmatprep.subr.bf16.mxu0 0
    %3222 = vmatpush1.bf16.msra.mxu0 %v3204
    %3223 = vmatprep.subr.bf16.mxu0 0
    %3224 = vmatpush1.bf16.msra.mxu0 %v3205
    %3225 = vmatprep.subr.bf16.mxu0 0
    %3226 = vmatpush1.bf16.msra.mxu0 %v3206
    %3227 = vmatprep.subr.bf16.mxu0 0
    %3228 = vmatpush1.bf16.msra.mxu0 %v3207
    %3229 = vmatprep.subr.bf16.mxu0 0
    %3230 = vmatpush1.bf16.msra.mxu0 %v3208
    %3231 = vmatprep.subr.bf16.mxu0 0
    %3232 = vmatpush1.bf16.msra.mxu0 %v3209
    %3233 = vmatprep.subr.bf16.mxu0 0
    %3234 = vmatpush1.bf16.msra.mxu0 %v3210
    %3235 = vmatprep.subr.bf16.mxu0 0
    %3236 = vmatpush1.bf16.msra.mxu0 0
    %3237 = vmatprep.subr.bf16.mxu0 0
    %3238 = vmatpush1.bf16.msra.mxu0 0
    %3239 = vmatprep.subr.bf16.mxu0 0
    %3240 = vmatpush1.bf16.msra.mxu0 0
    %3241 = vmatprep.subr.bf16.mxu0 0
    %3242 = vmatpush1.bf16.msra.mxu0 0
    %3243 = vmatprep.subr.bf16.mxu0 0
    %3244 = vmatpush1.bf16.msra.mxu0 0
    %3245 = vmatprep.subr.bf16.mxu0 0
    %3246 = vmatpush1.bf16.msra.mxu0 0
    %3247 = vmatprep.subr.bf16.mxu0 0
    %3248 = vmatpush1.bf16.msra.mxu0 0
    %3249 = vmatprep.subr.bf16.mxu0 0
    %3250 = vmatpush1.bf16.msra.mxu0 0
    %3251 = vmatprep.mubr.bf16.mxu0 0
    %3252 = vmatmul.mubr.bf16.gmra.mrb[0].mxu0 %v3133
    %v3253 = vpop.f32.mrb[0].mxu0
    %v3254 = vadd.f32 0.0, %v3253
    %v3255 = vpop.f32.mrb[0].mxu0
    %v3256 = vpop.f32.mrb[0].mxu0
    %v3257 = vadd.f32 0.0, %v3256
    %v3258 = vpop.f32.mrb[0].mxu0
    %3259 = vmatprep.mubr.bf16.mxu0 0
    %3260 = vmatmul.mubr.bf16.gmra.mrb[0].mxu0 %v3135
    %v3261 = vpop.f32.mrb[0].mxu0
    %v3262 = vadd.f32 0.0, %v3261
    %v3263 = vpop.f32.mrb[0].mxu0
    %v3264 = vpop.f32.mrb[0].mxu0
    %v3265 = vadd.f32 0.0, %v3264
    %v3266 = vpop.f32.mrb[0].mxu0
    %3267 = vmatprep.mubr.bf16.mxu0 0
    %3268 = vmatmul.mubr.bf16.gmra.mrb[0].mxu0 %v3137
    %v3269 = vpop.f32.mrb[0].mxu0
    %v3270 = vadd.f32 0.0, %v3269
    %v3271 = vpop.f32.mrb[0].mxu0
    %v3272 = vpop.f32.mrb[0].mxu0
    %v3273 = vadd.f32 0.0, %v3272
    %v3274 = vpop.f32.mrb[0].mxu0
    %3275 = vmatprep.mubr.bf16.mxu0 0
    %3276 = vmatmul.mubr.bf16.gmra.mrb[0].mxu0 %v3139
    %v3277 = vpop.f32.mrb[0].mxu0
    %v3278 = vadd.f32 0.0, %v3277
    %v3279 = vpop.f32.mrb[0].mxu0
    %v3280 = vpop.f32.mrb[0].mxu0
    %v3281 = vadd.f32 0.0, %v3280
    %v3282 = vpop.f32.mrb[0].mxu0
    %3283 = vmatprep.mubr.bf16.mxu0 0
    %3284 = vmatmul.mubr.bf16.gmra.mrb[0].mxu0 %v3141
    %v3285 = vpop.f32.mrb[0].mxu0
    %v3286 = vadd.f32 0.0, %v3285
    %v3287 = vpop.f32.mrb[0].mxu0
    %v3288 = vpop.f32.mrb[0].mxu0
    %v3289 = vadd.f32 0.0, %v3288
    %v3290 = vpop.f32.mrb[0].mxu0
    %3291 = vmatprep.mubr.bf16.mxu0 0
    %3292 = vmatmul.mubr.bf16.gmra.mrb[0].mxu0 %v3143
    %v3293 = vpop.f32.mrb[0].mxu0
    %v3294 = vadd.f32 0.0, %v3293
    %v3295 = vpop.f32.mrb[0].mxu0
    %v3296 = vpop.f32.mrb[0].mxu0
    %v3297 = vadd.f32 0.0, %v3296
    %v3298 = vpop.f32.mrb[0].mxu0
    %3299 = vmatprep.mubr.bf16.mxu0 0
    %3300 = vmatmul.mubr.bf16.gmra.mrb[0].mxu0 %v3145
    %v3301 = vpop.f32.mrb[0].mxu0
    %v3302 = vadd.f32 0.0, %v3301
    %v3303 = vpop.f32.mrb[0].mxu0
    %v3304 = vpop.f32.mrb[0].mxu0
    %v3305 = vadd.f32 0.0, %v3304
    %v3306 = vpop.f32.mrb[0].mxu0
    %3307 = vmatprep.mubr.bf16.mxu0 0
    %3308 = vmatmul.mubr.bf16.gmra.mrb[0].mxu0 %v3147
    %v3309 = vpop.f32.mrb[0].mxu0
    %v3310 = vadd.f32 0.0, %v3309
    %v3311 = vpop.f32.mrb[0].mxu0
    %v3312 = vpop.f32.mrb[0].mxu0
    %v3313 = vadd.f32 0.0, %v3312
    %v3314 = vpop.f32.mrb[0].mxu0
    %3315 = vmatprep.mubr.bf16.mxu0 0
    %3316 = vmatmul.mubr.bf16.gmra.mrb[0].mxu0 %v3149
    %v3317 = vpop.f32.mrb[0].mxu0
    %v3318 = vadd.f32 0.0, %v3317
    %v3319 = vpop.f32.mrb[0].mxu0
    %v3320 = vpop.f32.mrb[0].mxu0
    %v3321 = vadd.f32 0.0, %v3320
    %v3322 = vpop.f32.mrb[0].mxu0
    %3323 = vmatprep.mubr.bf16.mxu0 0
    %3324 = vmatmul.mubr.bf16.gmra.mrb[0].mxu0 %v3151
    %v3325 = vpop.f32.mrb[0].mxu0
    %v3326 = vadd.f32 0.0, %v3325
    %v3327 = vpop.f32.mrb[0].mxu0
    %v3328 = vpop.f32.mrb[0].mxu0
    %v3329 = vadd.f32 0.0, %v3328
    %v3330 = vpop.f32.mrb[0].mxu0
    %3331 = vmatprep.mubr.bf16.mxu0 0
    %3332 = vmatmul.mubr.bf16.gmra.mrb[0].mxu0 %v3153
    %v3333 = vpop.f32.mrb[0].mxu0
    %v3334 = vadd.f32 0.0, %v3333
    %v3335 = vpop.f32.mrb[0].mxu0
    %v3336 = vpop.f32.mrb[0].mxu0
    %v3337 = vadd.f32 0.0, %v3336
    %v3338 = vpop.f32.mrb[0].mxu0
    %3339 = vmatprep.mubr.bf16.mxu0 0
    %3340 = vmatmul.mubr.bf16.gmra.mrb[0].mxu0 %v3155
    %v3341 = vpop.f32.mrb[0].mxu0
    %v3342 = vadd.f32 0.0, %v3341
    %v3343 = vpop.f32.mrb[0].mxu0
    %v3344 = vpop.f32.mrb[0].mxu0
    %v3345 = vadd.f32 0.0, %v3344
    %v3346 = vpop.f32.mrb[0].mxu0
    %3347 = vmatprep.mubr.bf16.mxu0 0
    %3348 = vmatmul.mubr.bf16.gmra.mrb[0].mxu0 %v3157
    %v3349 = vpop.f32.mrb[0].mxu0
    %v3350 = vadd.f32 0.0, %v3349
    %v3351 = vpop.f32.mrb[0].mxu0
    %v3352 = vpop.f32.mrb[0].mxu0
    %v3353 = vadd.f32 0.0, %v3352
    %v3354 = vpop.f32.mrb[0].mxu0
    %3355 = vdwg.mxu0
    %v3356 = vadd.f32 %v2993, %v3254
    %v3357 = vadd.f32 %v2994, %v3257
    %v3358 = vadd.f32 %v2995, %v3262
    %v3359 = vadd.f32 %v2996, %v3265
    %v3360 = vadd.f32 %v2997, %v3270
    %v3361 = vadd.f32 %v2998, %v3273
    %v3362 = vadd.f32 %v2999, %v3278
    %v3363 = vadd.f32 %v3000, %v3281
    %v3364 = vadd.f32 %v3001, %v3286
    %v3365 = vadd.f32 %v3002, %v3289
    %v3366 = vadd.f32 %v3003, %v3294
    %v3367 = vadd.f32 %v3004, %v3297
    %v3368 = vadd.f32 %v3005, %v3302
    %v3369 = vadd.f32 %v3006, %v3305
    %v3370 = vadd.f32 %v3007, %v3310
    %v3371 = vadd.f32 %v3008, %v3313
    %v3372 = vadd.f32 %v3009, %v3318
    %v3373 = vadd.f32 %v3010, %v3321
    %v3374 = vadd.f32 %v3011, %v3326
    %v3375 = vadd.f32 %v3012, %v3329
    %v3376 = vadd.f32 %v3013, %v3334
    %v3377 = vadd.f32 %v3014, %v3337
    %v3378 = vadd.f32 %v3015, %v3342
    %v3379 = vadd.f32 %v3016, %v3345
    %v3380 = vadd.f32 %v3017, %v3350
    %v3381 = vadd.f32 %v3018, %v3353
    %v3382 = vld [vmem:[#allocation2 + $0x70] sm:$0x7]
    %s3383 = scalar_lea.vmem [#allocation3], 448
    %v3384 = vld [vmem:[%s3383] sm:$0xf]
    %v3385 = vld [vmem:[%s3383 + $0x4] sm:$0xf]
    %v3386 = vld [vmem:[%s3383 + $0x8] sm:$0xf]
    %v3387 = vld [vmem:[%s3383 + $0xc] sm:$0xf]
    %v3388 = vld [vmem:[%s3383 + $0x10] sm:$0xf]
    %v3389 = vld [vmem:[%s3383 + $0x14] sm:$0xf]
    %v3390 = vld [vmem:[%s3383 + $0x18] sm:$0xf]
    %v3391 = vld [vmem:[%s3383 + $0x1c] sm:$0xf]
    %v3392 = vld [vmem:[%s3383 + $0x20] sm:$0xf]
    %v3393 = vld [vmem:[%s3383 + $0x24] sm:$0xf]
    %v3394 = vld [vmem:[%s3383 + $0x28] sm:$0xf]
    %v3395 = vld [vmem:[%s3383 + $0x2c] sm:$0xf]
    %v3396 = vld [vmem:[%s3383 + $0x30] sm:$0xf]
    %v3397 = vld [vmem:[%s3383 + $0x34] sm:$0xf]
    %v3398 = vld [vmem:[%s3383 + $0x38] sm:$0xf]
    %v3399 = vld [vmem:[%s3383 + $0x3c] sm:$0xf]
    %v3401 = vunpack.c.l.b16 %v3382
    %v3402 = vpack.c.b16 %v3401, %v3401
    %vm3403 = vsmask.f32 5376
    %v3405 = vshrl.u32 %v3117, 16
    %v3407 = vrot.slane %v3405, 2
    %v3408 = vshll.u32 %v3117, 16
    %v3410 = vrot.slane %v3408, 3
    %v3411 = vor.u32 %v3407, %v3410
    %v3413 = vshrl.u32 %v3118, 16
    %v3415 = vrot.slane %v3413, 2
    %v3416 = vshll.u32 %v3118, 16
    %v3418 = vrot.slane %v3416, 3
    %v3419 = vor.u32 %v3415, %v3418
    %v3420 = vsel %vm3403, %v3411, %v3419
    %v3422 = vshrl.u32 %v3119, 16
    %v3424 = vrot.slane %v3422, 2
    %v3425 = vshll.u32 %v3119, 16
    %v3427 = vrot.slane %v3425, 3
    %v3428 = vor.u32 %v3424, %v3427
    %v3429 = vsel %vm3403, %v3419, %v3428
    %v3431 = vshrl.u32 %v3120, 16
    %v3433 = vrot.slane %v3431, 2
    %v3434 = vshll.u32 %v3120, 16
    %v3436 = vrot.slane %v3434, 3
    %v3437 = vor.u32 %v3433, %v3436
    %v3438 = vsel %vm3403, %v3428, %v3437
    %v3440 = vshrl.u32 %v3121, 16
    %v3442 = vrot.slane %v3440, 2
    %v3443 = vshll.u32 %v3121, 16
    %v3445 = vrot.slane %v3443, 3
    %v3446 = vor.u32 %v3442, %v3445
    %v3447 = vsel %vm3403, %v3437, %v3446
    %v3449 = vshrl.u32 %v3122, 16
    %v3451 = vrot.slane %v3449, 2
    %v3452 = vshll.u32 %v3122, 16
    %v3454 = vrot.slane %v3452, 3
    %v3455 = vor.u32 %v3451, %v3454
    %v3456 = vsel %vm3403, %v3446, %v3455
    %v3458 = vshrl.u32 %v3123, 16
    %v3460 = vrot.slane %v3458, 2
    %v3461 = vshll.u32 %v3123, 16
    %v3463 = vrot.slane %v3461, 3
    %v3464 = vor.u32 %v3460, %v3463
    %v3465 = vsel %vm3403, %v3455, %v3464
    %v3467 = vshrl.u32 %v3124, 16
    %v3469 = vrot.slane %v3467, 2
    %v3470 = vshll.u32 %v3124, 16
    %v3472 = vrot.slane %v3470, 3
    %v3473 = vor.u32 %v3469, %v3472
    %v3474 = vsel %vm3403, %v3464, %v3473
    %v3476 = vshrl.u32 %v3125, 16
    %v3478 = vrot.slane %v3476, 2
    %v3479 = vshll.u32 %v3125, 16
    %v3481 = vrot.slane %v3479, 3
    %v3482 = vor.u32 %v3478, %v3481
    %v3483 = vsel %vm3403, %v3473, %v3482
    %v3485 = vshrl.u32 %v3126, 16
    %v3487 = vrot.slane %v3485, 2
    %v3488 = vshll.u32 %v3126, 16
    %v3490 = vrot.slane %v3488, 3
    %v3491 = vor.u32 %v3487, %v3490
    %v3492 = vsel %vm3403, %v3482, %v3491
    %v3494 = vshrl.u32 %v3127, 16
    %v3496 = vrot.slane %v3494, 2
    %v3497 = vshll.u32 %v3127, 16
    %v3499 = vrot.slane %v3497, 3
    %v3500 = vor.u32 %v3496, %v3499
    %v3501 = vsel %vm3403, %v3491, %v3500
    %v3503 = vshrl.u32 %v3128, 16
    %v3505 = vrot.slane %v3503, 2
    %v3506 = vshll.u32 %v3128, 16
    %v3508 = vrot.slane %v3506, 3
    %v3509 = vor.u32 %v3505, %v3508
    %v3510 = vsel %vm3403, %v3500, %v3509
    %v3512 = vshrl.u32 %v3129, 16
    %v3514 = vrot.slane %v3512, 2
    %v3515 = vshll.u32 %v3129, 16
    %v3517 = vrot.slane %v3515, 3
    %v3518 = vor.u32 %v3514, %v3517
    %v3519 = vsel %vm3403, %v3509, %v3518
    %v3521 = vshrl.u32 %v3402, 16
    %v3523 = vrot.slane %v3521, 2
    %v3524 = vshll.u32 %v3402, 16
    %v3526 = vrot.slane %v3524, 3
    %v3527 = vor.u32 %v3523, %v3526
    %v3528 = vsel %vm3403, %v3518, %v3527
    %v3558 = vunpack.c.l.b16 %v3384
    %v3559 = vunpack.c.l.b16 %v3385
    %v3560 = vunpack.c.l.b16 %v3386
    %v3561 = vunpack.c.l.b16 %v3387
    %v3562 = vunpack.c.l.b16 %v3388
    %v3563 = vunpack.c.l.b16 %v3389
    %v3564 = vunpack.c.l.b16 %v3390
    %v3565 = vunpack.c.l.b16 %v3391
    %v3566 = vunpack.c.l.b16 %v3392
    %v3567 = vunpack.c.l.b16 %v3393
    %v3568 = vunpack.c.l.b16 %v3394
    %v3569 = vunpack.c.l.b16 %v3395
    %v3570 = vunpack.c.l.b16 %v3396
    %v3571 = vunpack.c.l.b16 %v3397
    %v3572 = vunpack.c.l.b16 %v3398
    %v3573 = vunpack.c.l.b16 %v3399
    %v3574 = vpack.c.b16 %v3559, %v3558
    %v3575 = vpack.c.b16 %v3561, %v3560
    %v3576 = vpack.c.b16 %v3563, %v3562
    %v3577 = vpack.c.b16 %v3565, %v3564
    %v3578 = vpack.c.b16 %v3567, %v3566
    %v3579 = vpack.c.b16 %v3569, %v3568
    %v3580 = vpack.c.b16 %v3571, %v3570
    %v3581 = vpack.c.b16 %v3573, %v3572
    %3590 = vmatprep.subr.bf16.mxu0 0
    %3591 = vmatpush1.bf16.msra.mxu0 %v3574
    %3592 = vmatprep.subr.bf16.mxu0 0
    %3593 = vmatpush1.bf16.msra.mxu0 %v3575
    %3594 = vmatprep.subr.bf16.mxu0 0
    %3595 = vmatpush1.bf16.msra.mxu0 %v3576
    %3596 = vmatprep.subr.bf16.mxu0 0
    %3597 = vmatpush1.bf16.msra.mxu0 %v3577
    %3598 = vmatprep.subr.bf16.mxu0 0
    %3599 = vmatpush1.bf16.msra.mxu0 %v3578
    %3600 = vmatprep.subr.bf16.mxu0 0
    %3601 = vmatpush1.bf16.msra.mxu0 %v3579
    %3602 = vmatprep.subr.bf16.mxu0 0
    %3603 = vmatpush1.bf16.msra.mxu0 %v3580
    %3604 = vmatprep.subr.bf16.mxu0 0
    %3605 = vmatpush1.bf16.msra.mxu0 %v3581
    %3606 = vmatprep.subr.bf16.mxu0 0
    %3607 = vmatpush1.bf16.msra.mxu0 0
    %3608 = vmatprep.subr.bf16.mxu0 0
    %3609 = vmatpush1.bf16.msra.mxu0 0
    %3610 = vmatprep.subr.bf16.mxu0 0
    %3611 = vmatpush1.bf16.msra.mxu0 0
    %3612 = vmatprep.subr.bf16.mxu0 0
    %3613 = vmatpush1.bf16.msra.mxu0 0
    %3614 = vmatprep.subr.bf16.mxu0 0
    %3615 = vmatpush1.bf16.msra.mxu0 0
    %3616 = vmatprep.subr.bf16.mxu0 0
    %3617 = vmatpush1.bf16.msra.mxu0 0
    %3618 = vmatprep.subr.bf16.mxu0 0
    %3619 = vmatpush1.bf16.msra.mxu0 0
    %3620 = vmatprep.subr.bf16.mxu0 0
    %3621 = vmatpush1.bf16.msra.mxu0 0
    %3622 = vmatprep.mubr.bf16.mxu0 0
    %3623 = vmatmul.mubr.bf16.gmra.mrb[0].mxu0 %v3420
    %v3624 = vpop.f32.mrb[0].mxu0
    %v3625 = vadd.f32 0.0, %v3624
    %v3626 = vpop.f32.mrb[0].mxu0
    %v3627 = vpop.f32.mrb[0].mxu0
    %v3628 = vadd.f32 0.0, %v3627
    %v3629 = vpop.f32.mrb[0].mxu0
    %3630 = vmatprep.mubr.bf16.mxu0 0
    %3631 = vmatmul.mubr.bf16.gmra.mrb[0].mxu0 %v3429
    %v3632 = vpop.f32.mrb[0].mxu0
    %v3633 = vadd.f32 0.0, %v3632
    %v3634 = vpop.f32.mrb[0].mxu0
    %v3635 = vpop.f32.mrb[0].mxu0
    %v3636 = vadd.f32 0.0, %v3635
    %v3637 = vpop.f32.mrb[0].mxu0
    %3638 = vmatprep.mubr.bf16.mxu0 0
    %3639 = vmatmul.mubr.bf16.gmra.mrb[0].mxu0 %v3438
    %v3640 = vpop.f32.mrb[0].mxu0
    %v3641 = vadd.f32 0.0, %v3640
    %v3642 = vpop.f32.mrb[0].mxu0
    %v3643 = vpop.f32.mrb[0].mxu0
    %v3644 = vadd.f32 0.0, %v3643
    %v3645 = vpop.f32.mrb[0].mxu0
    %3646 = vmatprep.mubr.bf16.mxu0 0
    %3647 = vmatmul.mubr.bf16.gmra.mrb[0].mxu0 %v3447
    %v3648 = vpop.f32.mrb[0].mxu0
    %v3649 = vadd.f32 0.0, %v3648
    %v3650 = vpop.f32.mrb[0].mxu0
    %v3651 = vpop.f32.mrb[0].mxu0
    %v3652 = vadd.f32 0.0, %v3651
    %v3653 = vpop.f32.mrb[0].mxu0
    %3654 = vmatprep.mubr.bf16.mxu0 0
    %3655 = vmatmul.mubr.bf16.gmra.mrb[0].mxu0 %v3456
    %v3656 = vpop.f32.mrb[0].mxu0
    %v3657 = vadd.f32 0.0, %v3656
    %v3658 = vpop.f32.mrb[0].mxu0
    %v3659 = vpop.f32.mrb[0].mxu0
    %v3660 = vadd.f32 0.0, %v3659
    %v3661 = vpop.f32.mrb[0].mxu0
    %3662 = vmatprep.mubr.bf16.mxu0 0
    %3663 = vmatmul.mubr.bf16.gmra.mrb[0].mxu0 %v3465
    %v3664 = vpop.f32.mrb[0].mxu0
    %v3665 = vadd.f32 0.0, %v3664
    %v3666 = vpop.f32.mrb[0].mxu0
    %v3667 = vpop.f32.mrb[0].mxu0
    %v3668 = vadd.f32 0.0, %v3667
    %v3669 = vpop.f32.mrb[0].mxu0
    %3670 = vmatprep.mubr.bf16.mxu0 0
    %3671 = vmatmul.mubr.bf16.gmra.mrb[0].mxu0 %v3474
    %v3672 = vpop.f32.mrb[0].mxu0
    %v3673 = vadd.f32 0.0, %v3672
    %v3674 = vpop.f32.mrb[0].mxu0
    %v3675 = vpop.f32.mrb[0].mxu0
    %v3676 = vadd.f32 0.0, %v3675
    %v3677 = vpop.f32.mrb[0].mxu0
    %3678 = vmatprep.mubr.bf16.mxu0 0
    %3679 = vmatmul.mubr.bf16.gmra.mrb[0].mxu0 %v3483
    %v3680 = vpop.f32.mrb[0].mxu0
    %v3681 = vadd.f32 0.0, %v3680
    %v3682 = vpop.f32.mrb[0].mxu0
    %v3683 = vpop.f32.mrb[0].mxu0
    %v3684 = vadd.f32 0.0, %v3683
    %v3685 = vpop.f32.mrb[0].mxu0
    %3686 = vmatprep.mubr.bf16.mxu0 0
    %3687 = vmatmul.mubr.bf16.gmra.mrb[0].mxu0 %v3492
    %v3688 = vpop.f32.mrb[0].mxu0
    %v3689 = vadd.f32 0.0, %v3688
    %v3690 = vpop.f32.mrb[0].mxu0
    %v3691 = vpop.f32.mrb[0].mxu0
    %v3692 = vadd.f32 0.0, %v3691
    %v3693 = vpop.f32.mrb[0].mxu0
    %3694 = vmatprep.mubr.bf16.mxu0 0
    %3695 = vmatmul.mubr.bf16.gmra.mrb[0].mxu0 %v3501
    %v3696 = vpop.f32.mrb[0].mxu0
    %v3697 = vadd.f32 0.0, %v3696
    %v3698 = vpop.f32.mrb[0].mxu0
    %v3699 = vpop.f32.mrb[0].mxu0
    %v3700 = vadd.f32 0.0, %v3699
    %v3701 = vpop.f32.mrb[0].mxu0
    %3702 = vmatprep.mubr.bf16.mxu0 0
    %3703 = vmatmul.mubr.bf16.gmra.mrb[0].mxu0 %v3510
    %v3704 = vpop.f32.mrb[0].mxu0
    %v3705 = vadd.f32 0.0, %v3704
    %v3706 = vpop.f32.mrb[0].mxu0
    %v3707 = vpop.f32.mrb[0].mxu0
    %v3708 = vadd.f32 0.0, %v3707
    %v3709 = vpop.f32.mrb[0].mxu0
    %3710 = vmatprep.mubr.bf16.mxu0 0
    %3711 = vmatmul.mubr.bf16.gmra.mrb[0].mxu0 %v3519
    %v3712 = vpop.f32.mrb[0].mxu0
    %v3713 = vadd.f32 0.0, %v3712
    %v3714 = vpop.f32.mrb[0].mxu0
    %v3715 = vpop.f32.mrb[0].mxu0
    %v3716 = vadd.f32 0.0, %v3715
    %v3717 = vpop.f32.mrb[0].mxu0
    %3718 = vmatprep.mubr.bf16.mxu0 0
    %3719 = vmatmul.mubr.bf16.gmra.mrb[0].mxu0 %v3528
    %v3720 = vpop.f32.mrb[0].mxu0
    %v3721 = vadd.f32 0.0, %v3720
    %v3722 = vpop.f32.mrb[0].mxu0
    %v3723 = vpop.f32.mrb[0].mxu0
    %v3724 = vadd.f32 0.0, %v3723
    %v3725 = vpop.f32.mrb[0].mxu0
    %3726 = vdwg.mxu0
    %v3727 = vadd.f32 %v3356, %v3625
    %v3728 = vadd.f32 %v3357, %v3628
    %v3729 = vadd.f32 %v3358, %v3633
    %v3730 = vadd.f32 %v3359, %v3636
    %v3731 = vadd.f32 %v3360, %v3641
    %v3732 = vadd.f32 %v3361, %v3644
    %v3733 = vadd.f32 %v3362, %v3649
    %v3734 = vadd.f32 %v3363, %v3652
    %v3735 = vadd.f32 %v3364, %v3657
    %v3736 = vadd.f32 %v3365, %v3660
    %v3737 = vadd.f32 %v3366, %v3665
    %v3738 = vadd.f32 %v3367, %v3668
    %v3739 = vadd.f32 %v3368, %v3673
    %v3740 = vadd.f32 %v3369, %v3676
    %v3741 = vadd.f32 %v3370, %v3681
    %v3742 = vadd.f32 %v3371, %v3684
    %v3743 = vadd.f32 %v3372, %v3689
    %v3744 = vadd.f32 %v3373, %v3692
    %v3745 = vadd.f32 %v3374, %v3697
    %v3746 = vadd.f32 %v3375, %v3700
    %v3747 = vadd.f32 %v3376, %v3705
    %v3748 = vadd.f32 %v3377, %v3708
    %v3749 = vadd.f32 %v3378, %v3713
    %v3750 = vadd.f32 %v3379, %v3716
    %v3751 = vadd.f32 %v3380, %v3721
    %v3752 = vadd.f32 %v3381, %v3724
    %v3753 = vld [vmem:[#allocation2 + $0x8] sm:$0x8]
    %s3754 = scalar_lea.vmem [#allocation3], 512
    %v3755 = vld [vmem:[%s3754] sm:$0xf]
    %v3756 = vld [vmem:[%s3754 + $0x4] sm:$0xf]
    %v3757 = vld [vmem:[%s3754 + $0x8] sm:$0xf]
    %v3758 = vld [vmem:[%s3754 + $0xc] sm:$0xf]
    %v3759 = vld [vmem:[%s3754 + $0x10] sm:$0xf]
    %v3760 = vld [vmem:[%s3754 + $0x14] sm:$0xf]
    %v3761 = vld [vmem:[%s3754 + $0x18] sm:$0xf]
    %v3762 = vld [vmem:[%s3754 + $0x1c] sm:$0xf]
    %v3763 = vld [vmem:[%s3754 + $0x20] sm:$0xf]
    %v3764 = vld [vmem:[%s3754 + $0x24] sm:$0xf]
    %v3765 = vld [vmem:[%s3754 + $0x28] sm:$0xf]
    %v3766 = vld [vmem:[%s3754 + $0x2c] sm:$0xf]
    %v3767 = vld [vmem:[%s3754 + $0x30] sm:$0xf]
    %v3768 = vld [vmem:[%s3754 + $0x34] sm:$0xf]
    %v3769 = vld [vmem:[%s3754 + $0x38] sm:$0xf]
    %v3770 = vld [vmem:[%s3754 + $0x3c] sm:$0xf]
    %v3772 = vunpack.c.l.b16 %v3753
    %v3773 = vpack.c.b16 %v3091, %v3772
    %vm3774 = vcmask 1044480
    %v3775 = vrot.slane %v3773, 3
    %v3776 = vrot.slane %v3118, 3
    %v3777 = vsel %vm3774, %v3775, %v3776
    %v3778 = vrot.slane %v3119, 3
    %v3779 = vsel %vm3774, %v3776, %v3778
    %v3780 = vrot.slane %v3120, 3
    %v3781 = vsel %vm3774, %v3778, %v3780
    %v3782 = vrot.slane %v3121, 3
    %v3783 = vsel %vm3774, %v3780, %v3782
    %v3784 = vrot.slane %v3122, 3
    %v3785 = vsel %vm3774, %v3782, %v3784
    %v3786 = vrot.slane %v3123, 3
    %v3787 = vsel %vm3774, %v3784, %v3786
    %v3788 = vrot.slane %v3124, 3
    %v3789 = vsel %vm3774, %v3786, %v3788
    %v3790 = vrot.slane %v3125, 3
    %v3791 = vsel %vm3774, %v3788, %v3790
    %v3792 = vrot.slane %v3126, 3
    %v3793 = vsel %vm3774, %v3790, %v3792
    %v3794 = vrot.slane %v3127, 3
    %v3795 = vsel %vm3774, %v3792, %v3794
    %v3796 = vrot.slane %v3128, 3
    %v3797 = vsel %vm3774, %v3794, %v3796
    %v3798 = vrot.slane %v3129, 3
    %v3799 = vsel %vm3774, %v3796, %v3798
    %v3800 = vrot.slane %v3402, 3
    %v3801 = vsel %vm3774, %v3798, %v3800
    %v3831 = vunpack.c.l.b16 %v3755
    %v3832 = vunpack.c.l.b16 %v3756
    %v3833 = vunpack.c.l.b16 %v3757
    %v3834 = vunpack.c.l.b16 %v3758
    %v3835 = vunpack.c.l.b16 %v3759
    %v3836 = vunpack.c.l.b16 %v3760
    %v3837 = vunpack.c.l.b16 %v3761
    %v3838 = vunpack.c.l.b16 %v3762
    %v3839 = vunpack.c.l.b16 %v3763
    %v3840 = vunpack.c.l.b16 %v3764
    %v3841 = vunpack.c.l.b16 %v3765
    %v3842 = vunpack.c.l.b16 %v3766
    %v3843 = vunpack.c.l.b16 %v3767
    %v3844 = vunpack.c.l.b16 %v3768
    %v3845 = vunpack.c.l.b16 %v3769
    %v3846 = vunpack.c.l.b16 %v3770
    %v3847 = vpack.c.b16 %v3832, %v3831
    %v3848 = vpack.c.b16 %v3834, %v3833
    %v3849 = vpack.c.b16 %v3836, %v3835
    %v3850 = vpack.c.b16 %v3838, %v3837
    %v3851 = vpack.c.b16 %v3840, %v3839
    %v3852 = vpack.c.b16 %v3842, %v3841
    %v3853 = vpack.c.b16 %v3844, %v3843
    %v3854 = vpack.c.b16 %v3846, %v3845
    %3863 = vmatprep.subr.bf16.mxu0 0
    %3864 = vmatpush1.bf16.msra.mxu0 %v3847
    %3865 = vmatprep.subr.bf16.mxu0 0
    %3866 = vmatpush1.bf16.msra.mxu0 %v3848
    %3867 = vmatprep.subr.bf16.mxu0 0
    %3868 = vmatpush1.bf16.msra.mxu0 %v3849
    %3869 = vmatprep.subr.bf16.mxu0 0
    %3870 = vmatpush1.bf16.msra.mxu0 %v3850
    %3871 = vmatprep.subr.bf16.mxu0 0
    %3872 = vmatpush1.bf16.msra.mxu0 %v3851
    %3873 = vmatprep.subr.bf16.mxu0 0
    %3874 = vmatpush1.bf16.msra.mxu0 %v3852
    %3875 = vmatprep.subr.bf16.mxu0 0
    %3876 = vmatpush1.bf16.msra.mxu0 %v3853
    %3877 = vmatprep.subr.bf16.mxu0 0
    %3878 = vmatpush1.bf16.msra.mxu0 %v3854
    %3879 = vmatprep.subr.bf16.mxu0 0
    %3880 = vmatpush1.bf16.msra.mxu0 0
    %3881 = vmatprep.subr.bf16.mxu0 0
    %3882 = vmatpush1.bf16.msra.mxu0 0
    %3883 = vmatprep.subr.bf16.mxu0 0
    %3884 = vmatpush1.bf16.msra.mxu0 0
    %3885 = vmatprep.subr.bf16.mxu0 0
    %3886 = vmatpush1.bf16.msra.mxu0 0
    %3887 = vmatprep.subr.bf16.mxu0 0
    %3888 = vmatpush1.bf16.msra.mxu0 0
    %3889 = vmatprep.subr.bf16.mxu0 0
    %3890 = vmatpush1.bf16.msra.mxu0 0
    %3891 = vmatprep.subr.bf16.mxu0 0
    %3892 = vmatpush1.bf16.msra.mxu0 0
    %3893 = vmatprep.subr.bf16.mxu0 0
    %3894 = vmatpush1.bf16.msra.mxu0 0
    %3895 = vmatprep.mubr.bf16.mxu0 0
    %3896 = vmatmul.mubr.bf16.gmra.mrb[0].mxu0 %v3777
    %v3897 = vpop.f32.mrb[0].mxu0
    %v3898 = vadd.f32 0.0, %v3897
    %v3899 = vpop.f32.mrb[0].mxu0
    %v3900 = vpop.f32.mrb[0].mxu0
    %v3901 = vadd.f32 0.0, %v3900
    %v3902 = vpop.f32.mrb[0].mxu0
    %3903 = vmatprep.mubr.bf16.mxu0 0
    %3904 = vmatmul.mubr.bf16.gmra.mrb[0].mxu0 %v3779
    %v3905 = vpop.f32.mrb[0].mxu0
    %v3906 = vadd.f32 0.0, %v3905
    %v3907 = vpop.f32.mrb[0].mxu0
    %v3908 = vpop.f32.mrb[0].mxu0
    %v3909 = vadd.f32 0.0, %v3908
    %v3910 = vpop.f32.mrb[0].mxu0
    %3911 = vmatprep.mubr.bf16.mxu0 0
    %3912 = vmatmul.mubr.bf16.gmra.mrb[0].mxu0 %v3781
    %v3913 = vpop.f32.mrb[0].mxu0
    %v3914 = vadd.f32 0.0, %v3913
    %v3915 = vpop.f32.mrb[0].mxu0
    %v3916 = vpop.f32.mrb[0].mxu0
    %v3917 = vadd.f32 0.0, %v3916
    %v3918 = vpop.f32.mrb[0].mxu0
    %3919 = vmatprep.mubr.bf16.mxu0 0
    %3920 = vmatmul.mubr.bf16.gmra.mrb[0].mxu0 %v3783
    %v3921 = vpop.f32.mrb[0].mxu0
    %v3922 = vadd.f32 0.0, %v3921
    %v3923 = vpop.f32.mrb[0].mxu0
    %v3924 = vpop.f32.mrb[0].mxu0
    %v3925 = vadd.f32 0.0, %v3924
    %v3926 = vpop.f32.mrb[0].mxu0
    %3927 = vmatprep.mubr.bf16.mxu0 0
    %3928 = vmatmul.mubr.bf16.gmra.mrb[0].mxu0 %v3785
    %v3929 = vpop.f32.mrb[0].mxu0
    %v3930 = vadd.f32 0.0, %v3929
    %v3931 = vpop.f32.mrb[0].mxu0
    %v3932 = vpop.f32.mrb[0].mxu0
    %v3933 = vadd.f32 0.0, %v3932
    %v3934 = vpop.f32.mrb[0].mxu0
    %3935 = vmatprep.mubr.bf16.mxu0 0
    %3936 = vmatmul.mubr.bf16.gmra.mrb[0].mxu0 %v3787
    %v3937 = vpop.f32.mrb[0].mxu0
    %v3938 = vadd.f32 0.0, %v3937
    %v3939 = vpop.f32.mrb[0].mxu0
    %v3940 = vpop.f32.mrb[0].mxu0
    %v3941 = vadd.f32 0.0, %v3940
    %v3942 = vpop.f32.mrb[0].mxu0
    %3943 = vmatprep.mubr.bf16.mxu0 0
    %3944 = vmatmul.mubr.bf16.gmra.mrb[0].mxu0 %v3789
    %v3945 = vpop.f32.mrb[0].mxu0
    %v3946 = vadd.f32 0.0, %v3945
    %v3947 = vpop.f32.mrb[0].mxu0
    %v3948 = vpop.f32.mrb[0].mxu0
    %v3949 = vadd.f32 0.0, %v3948
    %v3950 = vpop.f32.mrb[0].mxu0
    %3951 = vmatprep.mubr.bf16.mxu0 0
    %3952 = vmatmul.mubr.bf16.gmra.mrb[0].mxu0 %v3791
    %v3953 = vpop.f32.mrb[0].mxu0
    %v3954 = vadd.f32 0.0, %v3953
    %v3955 = vpop.f32.mrb[0].mxu0
    %v3956 = vpop.f32.mrb[0].mxu0
    %v3957 = vadd.f32 0.0, %v3956
    %v3958 = vpop.f32.mrb[0].mxu0
    %3959 = vmatprep.mubr.bf16.mxu0 0
    %3960 = vmatmul.mubr.bf16.gmra.mrb[0].mxu0 %v3793
    %v3961 = vpop.f32.mrb[0].mxu0
    %v3962 = vadd.f32 0.0, %v3961
    %v3963 = vpop.f32.mrb[0].mxu0
    %v3964 = vpop.f32.mrb[0].mxu0
    %v3965 = vadd.f32 0.0, %v3964
    %v3966 = vpop.f32.mrb[0].mxu0
    %3967 = vmatprep.mubr.bf16.mxu0 0
    %3968 = vmatmul.mubr.bf16.gmra.mrb[0].mxu0 %v3795
    %v3969 = vpop.f32.mrb[0].mxu0
    %v3970 = vadd.f32 0.0, %v3969
    %v3971 = vpop.f32.mrb[0].mxu0
    %v3972 = vpop.f32.mrb[0].mxu0
    %v3973 = vadd.f32 0.0, %v3972
    %v3974 = vpop.f32.mrb[0].mxu0
    %3975 = vmatprep.mubr.bf16.mxu0 0
    %3976 = vmatmul.mubr.bf16.gmra.mrb[0].mxu0 %v3797
    %v3977 = vpop.f32.mrb[0].mxu0
    %v3978 = vadd.f32 0.0, %v3977
    %v3979 = vpop.f32.mrb[0].mxu0
    %v3980 = vpop.f32.mrb[0].mxu0
    %v3981 = vadd.f32 0.0, %v3980
    %v3982 = vpop.f32.mrb[0].mxu0
    %3983 = vmatprep.mubr.bf16.mxu0 0
    %3984 = vmatmul.mubr.bf16.gmra.mrb[0].mxu0 %v3799
    %v3985 = vpop.f32.mrb[0].mxu0
    %v3986 = vadd.f32 0.0, %v3985
    %v3987 = vpop.f32.mrb[0].mxu0
    %v3988 = vpop.f32.mrb[0].mxu0
    %v3989 = vadd.f32 0.0, %v3988
    %v3990 = vpop.f32.mrb[0].mxu0
    %3991 = vmatprep.mubr.bf16.mxu0 0
    %3992 = vmatmul.mubr.bf16.gmra.mrb[0].mxu0 %v3801
    %v3993 = vpop.f32.mrb[0].mxu0
    %v3994 = vadd.f32 0.0, %v3993
    %v3995 = vpop.f32.mrb[0].mxu0
    %v3996 = vpop.f32.mrb[0].mxu0
    %v3997 = vadd.f32 0.0, %v3996
    %v3998 = vpop.f32.mrb[0].mxu0
    %3999 = vdwg.mxu0
    %v4000 = vadd.f32 %v3727, %v3898
    %v4001 = vadd.f32 %v3728, %v3901
    %v4002 = vadd.f32 %v3729, %v3906
    %v4003 = vadd.f32 %v3730, %v3909
    %v4004 = vadd.f32 %v3731, %v3914
    %v4005 = vadd.f32 %v3732, %v3917
    %v4006 = vadd.f32 %v3733, %v3922
    %v4007 = vadd.f32 %v3734, %v3925
    %v4008 = vadd.f32 %v3735, %v3930
    %v4009 = vadd.f32 %v3736, %v3933
    %v4010 = vadd.f32 %v3737, %v3938
    %v4011 = vadd.f32 %v3738, %v3941
    %v4012 = vadd.f32 %v3739, %v3946
    %v4013 = vadd.f32 %v3740, %v3949
    %v4014 = vadd.f32 %v3741, %v3954
    %v4015 = vadd.f32 %v3742, %v3957
    %v4016 = vadd.f32 %v3743, %v3962
    %v4017 = vadd.f32 %v3744, %v3965
    %v4018 = vadd.f32 %v3745, %v3970
    %v4019 = vadd.f32 %v3746, %v3973
    %v4020 = vadd.f32 %v3747, %v3978
    %v4021 = vadd.f32 %v3748, %v3981
    %v4022 = vadd.f32 %v3749, %v3986
    %v4023 = vadd.f32 %v3750, %v3989
    %v4024 = vadd.f32 %v3751, %v3994
    %v4025 = vadd.f32 %v3752, %v3997
    %v4026 = vld [vmem:[%s6] sm:$0x3]
    %vm4027 = vcmask 31744
    %v4028 = vsel %vm4027, %v132, 0
    %v4030 = vsel %vm4027, %v133, 0
    %v4032 = vsel %vm4027, %v134, 0
    %v4034 = vsel %vm4027, %v135, 0
    %v4036 = vsel %vm4027, %v136, 0
    %v4038 = vsel %vm4027, %v137, 0
    %v4040 = vsel %vm4027, %v138, 0
    %v4042 = vsel %vm4027, %v139, 0
    %v4044 = vsel %vm4027, %v140, 0
    %v4046 = vsel %vm4027, %v141, 0
    %v4048 = vsel %vm4027, %v142, 0
    %v4050 = vsel %vm4027, %v143, 0
    %v4052 = vsel %vm4027, %v144, 0
    %v4055 = vsel %vm200, %v4026, 0
    %4057 = vmatprep.subr.bf16.mxu0 0
    %4058 = vmatpush1.bf16.msra.mxu0 %v4055
    %4059 = vmatprep.subr.bf16.mxu0 0
    %4060 = vmatpush1.bf16.msra.mxu0 0
    %4061 = vmatprep.subr.bf16.mxu0 0
    %4062 = vmatpush1.bf16.msra.mxu0 0
    %4063 = vmatprep.subr.bf16.mxu0 0
    %4064 = vmatpush1.bf16.msra.mxu0 0
    %4065 = vmatprep.subr.bf16.mxu0 0
    %4066 = vmatpush1.bf16.msra.mxu0 0
    %4067 = vmatprep.subr.bf16.mxu0 0
    %4068 = vmatpush1.bf16.msra.mxu0 0
    %4069 = vmatprep.subr.bf16.mxu0 0
    %4070 = vmatpush1.bf16.msra.mxu0 0
    %4071 = vmatprep.subr.bf16.mxu0 0
    %4072 = vmatpush1.bf16.msra.mxu0 0
    %4073 = vmatprep.subr.bf16.mxu0 0
    %4074 = vmatpush1.bf16.msra.mxu0 0
    %4075 = vmatprep.subr.bf16.mxu0 0
    %4076 = vmatpush1.bf16.msra.mxu0 0
    %4077 = vmatprep.subr.bf16.mxu0 0
    %4078 = vmatpush1.bf16.msra.mxu0 0
    %4079 = vmatprep.subr.bf16.mxu0 0
    %4080 = vmatpush1.bf16.msra.mxu0 0
    %4081 = vmatprep.subr.bf16.mxu0 0
    %4082 = vmatpush1.bf16.msra.mxu0 0
    %4083 = vmatprep.subr.bf16.mxu0 0
    %4084 = vmatpush1.bf16.msra.mxu0 0
    %4085 = vmatprep.subr.bf16.mxu0 0
    %4086 = vmatpush1.bf16.msra.mxu0 0
    %4087 = vmatprep.subr.bf16.mxu0 0
    %4088 = vmatpush1.bf16.msra.mxu0 0
    %4089 = vmatprep.mubr.bf16.mxu0 0
    %4090 = vmatmul.mubr.bf16.gmra.mrb[0].mxu0 %v4028
    %v4091 = vpop.f32.mrb[0].mxu0
    %v4092 = vadd.f32 0.0, %v4091
    %v4093 = vpop.f32.mrb[0].mxu0
    %v4094 = vpop.f32.mrb[0].mxu0
    %v4095 = vadd.f32 0.0, %v4094
    %v4096 = vpop.f32.mrb[0].mxu0
    %4097 = vmatprep.mubr.bf16.mxu0 0
    %4098 = vmatmul.mubr.bf16.gmra.mrb[0].mxu0 %v4030
    %v4099 = vpop.f32.mrb[0].mxu0
    %v4100 = vadd.f32 0.0, %v4099
    %v4101 = vpop.f32.mrb[0].mxu0
    %v4102 = vpop.f32.mrb[0].mxu0
    %v4103 = vadd.f32 0.0, %v4102
    %v4104 = vpop.f32.mrb[0].mxu0
    %4105 = vmatprep.mubr.bf16.mxu0 0
    %4106 = vmatmul.mubr.bf16.gmra.mrb[0].mxu0 %v4032
    %v4107 = vpop.f32.mrb[0].mxu0
    %v4108 = vadd.f32 0.0, %v4107
    %v4109 = vpop.f32.mrb[0].mxu0
    %v4110 = vpop.f32.mrb[0].mxu0
    %v4111 = vadd.f32 0.0, %v4110
    %v4112 = vpop.f32.mrb[0].mxu0
    %4113 = vmatprep.mubr.bf16.mxu0 0
    %4114 = vmatmul.mubr.bf16.gmra.mrb[0].mxu0 %v4034
    %v4115 = vpop.f32.mrb[0].mxu0
    %v4116 = vadd.f32 0.0, %v4115
    %v4117 = vpop.f32.mrb[0].mxu0
    %v4118 = vpop.f32.mrb[0].mxu0
    %v4119 = vadd.f32 0.0, %v4118
    %v4120 = vpop.f32.mrb[0].mxu0
    %4121 = vmatprep.mubr.bf16.mxu0 0
    %4122 = vmatmul.mubr.bf16.gmra.mrb[0].mxu0 %v4036
    %v4123 = vpop.f32.mrb[0].mxu0
    %v4124 = vadd.f32 0.0, %v4123
    %v4125 = vpop.f32.mrb[0].mxu0
    %v4126 = vpop.f32.mrb[0].mxu0
    %v4127 = vadd.f32 0.0, %v4126
    %v4128 = vpop.f32.mrb[0].mxu0
    %4129 = vmatprep.mubr.bf16.mxu0 0
    %4130 = vmatmul.mubr.bf16.gmra.mrb[0].mxu0 %v4038
    %v4131 = vpop.f32.mrb[0].mxu0
    %v4132 = vadd.f32 0.0, %v4131
    %v4133 = vpop.f32.mrb[0].mxu0
    %v4134 = vpop.f32.mrb[0].mxu0
    %v4135 = vadd.f32 0.0, %v4134
    %v4136 = vpop.f32.mrb[0].mxu0
    %4137 = vmatprep.mubr.bf16.mxu0 0
    %4138 = vmatmul.mubr.bf16.gmra.mrb[0].mxu0 %v4040
    %v4139 = vpop.f32.mrb[0].mxu0
    %v4140 = vadd.f32 0.0, %v4139
    %v4141 = vpop.f32.mrb[0].mxu0
    %v4142 = vpop.f32.mrb[0].mxu0
    %v4143 = vadd.f32 0.0, %v4142
    %v4144 = vpop.f32.mrb[0].mxu0
    %4145 = vmatprep.mubr.bf16.mxu0 0
    %4146 = vmatmul.mubr.bf16.gmra.mrb[0].mxu0 %v4042
    %v4147 = vpop.f32.mrb[0].mxu0
    %v4148 = vadd.f32 0.0, %v4147
    %v4149 = vpop.f32.mrb[0].mxu0
    %v4150 = vpop.f32.mrb[0].mxu0
    %v4151 = vadd.f32 0.0, %v4150
    %v4152 = vpop.f32.mrb[0].mxu0
    %4153 = vmatprep.mubr.bf16.mxu0 0
    %4154 = vmatmul.mubr.bf16.gmra.mrb[0].mxu0 %v4044
    %v4155 = vpop.f32.mrb[0].mxu0
    %v4156 = vadd.f32 0.0, %v4155
    %v4157 = vpop.f32.mrb[0].mxu0
    %v4158 = vpop.f32.mrb[0].mxu0
    %v4159 = vadd.f32 0.0, %v4158
    %v4160 = vpop.f32.mrb[0].mxu0
    %4161 = vmatprep.mubr.bf16.mxu0 0
    %4162 = vmatmul.mubr.bf16.gmra.mrb[0].mxu0 %v4046
    %v4163 = vpop.f32.mrb[0].mxu0
    %v4164 = vadd.f32 0.0, %v4163
    %v4165 = vpop.f32.mrb[0].mxu0
    %v4166 = vpop.f32.mrb[0].mxu0
    %v4167 = vadd.f32 0.0, %v4166
    %v4168 = vpop.f32.mrb[0].mxu0
    %4169 = vmatprep.mubr.bf16.mxu0 0
    %4170 = vmatmul.mubr.bf16.gmra.mrb[0].mxu0 %v4048
    %v4171 = vpop.f32.mrb[0].mxu0
    %v4172 = vadd.f32 0.0, %v4171
    %v4173 = vpop.f32.mrb[0].mxu0
    %v4174 = vpop.f32.mrb[0].mxu0
    %v4175 = vadd.f32 0.0, %v4174
    %v4176 = vpop.f32.mrb[0].mxu0
    %4177 = vmatprep.mubr.bf16.mxu0 0
    %4178 = vmatmul.mubr.bf16.gmra.mrb[0].mxu0 %v4050
    %v4179 = vpop.f32.mrb[0].mxu0
    %v4180 = vadd.f32 0.0, %v4179
    %v4181 = vpop.f32.mrb[0].mxu0
    %v4182 = vpop.f32.mrb[0].mxu0
    %v4183 = vadd.f32 0.0, %v4182
    %v4184 = vpop.f32.mrb[0].mxu0
    %4185 = vmatprep.mubr.bf16.mxu0 0
    %4186 = vmatmul.mubr.bf16.gmra.mrb[0].mxu0 %v4052
    %v4187 = vpop.f32.mrb[0].mxu0
    %v4188 = vadd.f32 0.0, %v4187
    %v4189 = vpop.f32.mrb[0].mxu0
    %v4190 = vpop.f32.mrb[0].mxu0
    %v4191 = vadd.f32 0.0, %v4190
    %v4192 = vpop.f32.mrb[0].mxu0
    %4193 = vdwg.mxu0
    %v4194 = vadd.f32 %v4000, %v4092
    %v4195 = vadd.f32 %v4001, %v4095
    %v4196 = vadd.f32 %v4002, %v4100
    %v4197 = vadd.f32 %v4003, %v4103
    %v4198 = vadd.f32 %v4004, %v4108
    %v4199 = vadd.f32 %v4005, %v4111
    %v4200 = vadd.f32 %v4006, %v4116
    %v4201 = vadd.f32 %v4007, %v4119
    %v4202 = vadd.f32 %v4008, %v4124
    %v4203 = vadd.f32 %v4009, %v4127
    %v4204 = vadd.f32 %v4010, %v4132
    %v4205 = vadd.f32 %v4011, %v4135
    %v4206 = vadd.f32 %v4012, %v4140
    %v4207 = vadd.f32 %v4013, %v4143
    %v4208 = vadd.f32 %v4014, %v4148
    %v4209 = vadd.f32 %v4015, %v4151
    %v4210 = vadd.f32 %v4016, %v4156
    %v4211 = vadd.f32 %v4017, %v4159
    %v4212 = vadd.f32 %v4018, %v4164
    %v4213 = vadd.f32 %v4019, %v4167
    %v4214 = vadd.f32 %v4020, %v4172
    %v4215 = vadd.f32 %v4021, %v4175
    %v4216 = vadd.f32 %v4022, %v4180
    %v4217 = vadd.f32 %v4023, %v4183
    %v4218 = vadd.f32 %v4024, %v4188
    %v4219 = vadd.f32 %v4025, %v4191
    %v4220 = vmax.f32 %v4194, 0.0
    %v4221 = vmax.f32 %v4195, 0.0
    %v4222 = vmax.f32 %v4196, 0.0
    %v4223 = vmax.f32 %v4197, 0.0
    %v4224 = vmax.f32 %v4198, 0.0
    %v4225 = vmax.f32 %v4199, 0.0
    %v4226 = vmax.f32 %v4200, 0.0
    %v4227 = vmax.f32 %v4201, 0.0
    %v4228 = vmax.f32 %v4202, 0.0
    %v4229 = vmax.f32 %v4203, 0.0
    %v4230 = vmax.f32 %v4204, 0.0
    %v4231 = vmax.f32 %v4205, 0.0
    %v4232 = vmax.f32 %v4206, 0.0
    %v4233 = vmax.f32 %v4207, 0.0
    %v4234 = vmax.f32 %v4208, 0.0
    %v4235 = vmax.f32 %v4209, 0.0
    %v4236 = vmax.f32 %v4210, 0.0
    %v4237 = vmax.f32 %v4211, 0.0
    %v4238 = vmax.f32 %v4212, 0.0
    %v4239 = vmax.f32 %v4213, 0.0
    %v4240 = vmax.f32 %v4214, 0.0
    %v4241 = vmax.f32 %v4215, 0.0
    %v4242 = vmax.f32 %v4216, 0.0
    %v4243 = vmax.f32 %v4217, 0.0
    %v4244 = vmax.f32 %v4218, 0.0
    %v4245 = vmax.f32 %v4219, 0.0
    %v4246 = vpack.c.bf16 %v4221, %v4220
    %v4247 = vpack.c.bf16 %v4223, %v4222
    %v4248 = vpack.c.bf16 %v4225, %v4224
    %v4249 = vpack.c.bf16 %v4227, %v4226
    %v4250 = vpack.c.bf16 %v4229, %v4228
    %v4251 = vpack.c.bf16 %v4231, %v4230
    %v4252 = vpack.c.bf16 %v4233, %v4232
    %v4253 = vpack.c.bf16 %v4235, %v4234
    %v4254 = vpack.c.bf16 %v4237, %v4236
    %v4255 = vpack.c.bf16 %v4239, %v4238
    %v4256 = vpack.c.bf16 %v4241, %v4240
    %v4257 = vpack.c.bf16 %v4243, %v4242
    %v4258 = vpack.c.bf16 %v4245, %v4244
    %v4272 = vunpack.c.l.b16 %v4246
    %v4273 = vunpack.c.h.b16 %v4246
    %v4274 = vunpack.c.l.b16 %v4247
    %v4275 = vunpack.c.h.b16 %v4247
    %v4276 = vunpack.c.l.b16 %v4248
    %v4277 = vunpack.c.h.b16 %v4248
    %v4278 = vunpack.c.l.b16 %v4249
    %v4279 = vunpack.c.h.b16 %v4249
    %v4280 = vunpack.c.l.b16 %v4250
    %v4281 = vunpack.c.h.b16 %v4250
    %v4282 = vunpack.c.l.b16 %v4251
    %v4283 = vunpack.c.h.b16 %v4251
    %v4284 = vunpack.c.l.b16 %v4252
    %v4285 = vunpack.c.h.b16 %v4252
    %v4286 = vunpack.c.l.b16 %v4253
    %v4287 = vunpack.c.h.b16 %v4253
    %v4288 = vunpack.c.l.b16 %v4254
    %v4289 = vunpack.c.h.b16 %v4254
    %v4290 = vunpack.c.l.b16 %v4255
    %v4291 = vunpack.c.h.b16 %v4255
    %v4292 = vunpack.c.l.b16 %v4256
    %v4293 = vunpack.c.h.b16 %v4256
    %v4294 = vunpack.c.l.b16 %v4257
    %v4295 = vunpack.c.h.b16 %v4257
    %v4296 = vunpack.c.l.b16 %v4258
    %v4297 = vunpack.c.h.b16 %v4258
    %v4298 = vpack.c.b16 %v4272, %v4272
    %v4299 = vpack.c.b16 %v4273, %v4273
    %v4300 = vpack.c.b16 %v4274, %v4274
    %v4301 = vpack.c.b16 %v4275, %v4275
    %v4302 = vpack.c.b16 %v4276, %v4276
    %v4303 = vpack.c.b16 %v4277, %v4277
    %v4304 = vpack.c.b16 %v4278, %v4278
    %v4305 = vpack.c.b16 %v4279, %v4279
    %v4306 = vpack.c.b16 %v4280, %v4280
    %v4307 = vpack.c.b16 %v4281, %v4281
    %v4308 = vpack.c.b16 %v4282, %v4282
    %v4309 = vpack.c.b16 %v4283, %v4283
    %v4310 = vpack.c.b16 %v4284, %v4284
    %v4311 = vpack.c.b16 %v4285, %v4285
    %v4312 = vpack.c.b16 %v4286, %v4286
    %v4313 = vpack.c.b16 %v4287, %v4287
    %v4314 = vpack.c.b16 %v4288, %v4288
    %v4315 = vpack.c.b16 %v4289, %v4289
    %v4316 = vpack.c.b16 %v4290, %v4290
    %v4317 = vpack.c.b16 %v4291, %v4291
    %v4318 = vpack.c.b16 %v4292, %v4292
    %v4319 = vpack.c.b16 %v4293, %v4293
    %v4320 = vpack.c.b16 %v4294, %v4294
    %v4321 = vpack.c.b16 %v4295, %v4295
    %v4322 = vpack.c.b16 %v4296, %v4296
    %v4323 = vpack.c.b16 %v4297, %v4297
    %4350 = vst [vmem:[#allocation6] sm:$0xf] %v4298
    %4351 = vst [vmem:[#allocation6 + $0x4] sm:$0xf] %v4299
    %4352 = vst [vmem:[#allocation6 + $0x8] sm:$0xf] %v4300
    %4353 = vst [vmem:[#allocation6 + $0xc] sm:$0xf] %v4301
    %4354 = vst [vmem:[#allocation6 + $0x10] sm:$0xf] %v4302
    %4355 = vst [vmem:[#allocation6 + $0x14] sm:$0xf] %v4303
    %4356 = vst [vmem:[#allocation6 + $0x18] sm:$0xf] %v4304
    %4357 = vst [vmem:[#allocation6 + $0x1c] sm:$0xf] %v4305
    %4358 = vst [vmem:[#allocation6 + $0x20] sm:$0xf] %v4306
    %4359 = vst [vmem:[#allocation6 + $0x24] sm:$0xf] %v4307
    %4360 = vst [vmem:[#allocation6 + $0x28] sm:$0xf] %v4308
    %4361 = vst [vmem:[#allocation6 + $0x2c] sm:$0xf] %v4309
    %4362 = vst [vmem:[#allocation6 + $0x30] sm:$0xf] %v4310
    %4363 = vst [vmem:[#allocation6 + $0x34] sm:$0xf] %v4311
    %4364 = vst [vmem:[#allocation6 + $0x38] sm:$0xf] %v4312
    %4365 = vst [vmem:[#allocation6 + $0x3c] sm:$0xf] %v4313
    %4366 = vst [vmem:[#allocation6 + $0x40] sm:$0xf] %v4314
    %4367 = vst [vmem:[#allocation6 + $0x44] sm:$0xf] %v4315
    %4368 = vst [vmem:[#allocation6 + $0x48] sm:$0xf] %v4316
    %4369 = vst [vmem:[#allocation6 + $0x4c] sm:$0xf] %v4317
    %4370 = vst [vmem:[#allocation6 + $0x50] sm:$0xf] %v4318
    %4371 = vst [vmem:[#allocation6 + $0x54] sm:$0xf] %v4319
    %4372 = vst [vmem:[#allocation6 + $0x58] sm:$0xf] %v4320
    %4373 = vst [vmem:[#allocation6 + $0x5c] sm:$0xf] %v4321
    %4374 = vst [vmem:[#allocation6 + $0x60] sm:$0xf] %v4322
    %4375 = vst [vmem:[#allocation6 + $0x64] sm:$0xf] %v4323
    // Predicated region
    $region34: #{tpu_custom_call.1} parent=1 // pred_check
      _
    $region35: #{tpu_custom_call.1} parent=1 // pred_check_branch
      %4377 = sbr.rel (0) target = $region37
    $region36: #{tpu_custom_call.1} parent=1 // pred_region
      %s4379 = ssub.s32 1664, 1664
      %4380 = vsyncadd [#allocation5], %s4379
      %s4381 = sshll.u32 [#allocation6], 4
      %s4382 = int_to_ptr.vmem [resolvable:$true] %s4381
      %4387 = dma.vmem_to_hbm [thread:$0]  %s4382, 1664, %s7, [#allocation5], 64, 64, 4
    $region37: #{tpu_custom_call.1} parent=1 // pred_fallthru
      _
    // Predicated region
    $region38: #{tpu_custom_call.1} parent=1 // pred_check
      _
    $region39: #{tpu_custom_call.1} parent=1 // pred_check_branch
      %4389 = sbr.rel (0) target = $region41
    $region40: #{tpu_custom_call.1} parent=1 // pred_region
      %4390 = dma.done [#allocation5], 1664
    $region41: #{tpu_custom_call.1} parent=1 // pred_fallthru
      _
    %4391 = vsyncpa [#allocation4], 1
    %4392 = vsyncpa [#allocation5], 1

</llo_original>
